<compile_context>
chip_gen: v6e
topology: v6e:2x2x1
jax: 0.10.0
libtpu: 0.0.40
codegen_flags: <defaults>
</compile_context>

<pallas_src>
import functools

import jax
import jax.numpy as jnp
from jax.experimental import pallas as pl
from jax.experimental.pallas import tpu as pltpu

# ---- module constants (small example shapes consistent with the module) ----
BLOCK_SIZE = 128                    # seq length T (forward implies T == block_size)
N_EMBD = 256                        # embedding dim C
NUM_HEADS = 8
HEAD_SIZE = N_EMBD // NUM_HEADS     # 32
BATCH = 2


def _device_kind():
    try:
        return jax.devices()[0].device_kind.lower()
    except Exception:
        return ""


def _single_tensorcore():
    # v7x has 2 TensorCores per chip -> keep one batch element per grid step there.
    # v5e / v6e are single-TC -> collapse the batch into one grid step.
    return "v7" not in _device_kind()


def _has_bf16_eup():
    # v5 generation EUP has no bf16 path; keep the softmax exp in f32 there.
    return "v5" not in _device_kind()


def _fused_heads_kernel(x_ref, w_ref, o_ref, *, num_heads, head_size, bf16_exp):
    # x_ref: (nb, T, C) f32      w_ref: (C, 3*NH*H) bf16, packed [K | Q*scale | V]
    # o_ref: (nb, T, NH*H)
    nb, T, C = x_ref.shape
    HH = num_heads * head_size

    # Single cast of the activations; weight is already bf16 (pre-cast on host).
    x = x_ref[...].reshape(nb * T, C).astype(jnp.bfloat16)     # (nb*T, C)
    w = w_ref[...]                                             # (C, 3*NH*H) bf16

    # One wide projection matmul for K, Q, V of all heads (scale already folded
    # into the Q columns of w).
    kqv = jnp.dot(x, w, preferred_element_type=jnp.float32)    # (nb*T, 3*NH*H) f32

    # One slab cast to bf16 for everything that feeds the MXU downstream.
    qk = kqv[:, :2 * HH].astype(jnp.bfloat16)                  # (nb*T, 2*NH*H) bf16
    k_all = qk[:, :HH]                                         # (nb*T, NH*H)
    q_all = qk[:, HH:]                                         # (nb*T, NH*H)
    v_all = kqv[:, 2 * HH:].astype(jnp.bfloat16)               # (nb*T, NH*H)

    # Causal mask: built once per grid step, reused by every (batch, head).
    row = jax.lax.broadcasted_iota(jnp.int32, (T, T), 0)
    col = jax.lax.broadcasted_iota(jnp.int32, (T, T), 1)
    causal = col <= row

    for b in range(nb):                                        # static unrolled
        rb = slice(b * T, (b + 1) * T)
        for h in range(num_heads):                             # static unrolled
            sl = slice(h * head_size, (h + 1) * head_size)
            qh = q_all[rb, sl]                                 # (T, H) bf16
            kh = k_all[rb, sl]                                 # (T, H) bf16
            vh = v_all[rb, sl]                                 # (T, H) bf16

            # q @ k^T without an explicit transpose: contract last dims.
            wei = jax.lax.dot_general(
                qh, kh,
                dimension_numbers=(((1,), (1,)), ((), ())),
                preferred_element_type=jnp.float32)            # (T, T) f32

            wei = jnp.where(causal, wei, -jnp.inf)
            wei = wei - jnp.max(wei, axis=-1, keepdims=True)

            if bf16_exp:
                # bf16 exp (v6e/v7x EUP); row-sum accumulates in f32.
                p = jnp.exp(wei.astype(jnp.bfloat16))          # (T, T) bf16
                l = jnp.sum(p, axis=-1, keepdims=True, dtype=jnp.float32)
            else:
                p32 = jnp.exp(wei)
                l = jnp.sum(p32, axis=-1, keepdims=True)
                p = p32.astype(jnp.bfloat16)

            inv_l = pl.reciprocal(l, approx=True)              # (T, 1) f32, EUP

            # dropout: eval mode -> identity.
            # Normalize AFTER the PV matmul: (P @ V) * (1/l) per row.
            o = jnp.dot(p, vh, preferred_element_type=jnp.float32)   # (T, H) f32
            o = o * inv_l

            # Store each head's result immediately (bounds live ranges, overlaps
            # stores with later heads' compute).
            o_ref[b, :, sl] = o.astype(o_ref.dtype)


def fused_heads_forward(x, wk, wq, wv, *, num_heads=NUM_HEADS,
                        collapse_batch=None, bf16_exp=None):
    """x: (B, T, C).  wk/wq/wv: (C, NH*H), i.e. the per-head nn.Linear weights
    (stored input-major, W.T) concatenated along the output dim.
    Returns (B, T, NH*H); columns [h*H:(h+1)*H] == Head_h(x) (eval mode)."""
    B, T, C = x.shape
    NHH = wk.shape[1]
    head_size = NHH // num_heads
    scale = head_size ** (-0.5)

    # Host-side (grid-invariant) prep: fold the attention scale into the Q
    # weight columns, pack [K | Q*scale | V], and pre-cast to bf16 once.
    wkqv = jnp.concatenate([wk, wq * scale, wv], axis=1).astype(jnp.bfloat16)

    if collapse_batch is None:
        collapse_batch = _single_tensorcore()
    if bf16_exp is None:
        bf16_exp = _has_bf16_eup()

    nb = B if collapse_batch else 1          # batch elements per grid step
    nsteps = B // nb

    kernel = functools.partial(_fused_heads_kernel, num_heads=num_heads,
                               head_size=head_size, bf16_exp=bf16_exp)

    return pl.pallas_call(
        kernel,
        out_shape=jax.ShapeDtypeStruct((B, T, NHH), x.dtype),
        grid=(nsteps,),
        in_specs=[
            pl.BlockSpec((nb, T, C), lambda i: (i, 0, 0)),       # activations
            pl.BlockSpec((C, 3 * NHH), lambda i: (0, 0)),        # packed bf16 weights
        ],
        out_specs=pl.BlockSpec((nb, T, NHH), lambda i: (i, 0, 0)),
        compiler_params=pltpu.CompilerParams(
            dimension_semantics=(("parallel",) if nsteps > 1 else ("arbitrary",))),
    )(x, wkqv)


def head_reference(x, wk_h, wq_h, wv_h):
    """Pure-JAX f32 reference matching one PyTorch Head.forward (eval mode)."""
    k = x @ wk_h
    q = x @ wq_h
    v = x @ wv_h
    wei = (q @ jnp.swapaxes(k, -2, -1)) * (k.shape[-1] ** -0.5)
    T = x.shape[1]
    tril = jnp.tril(jnp.ones((T, T), dtype=bool))
    wei = jnp.where(tril, wei, -jnp.inf)
    wei = jax.nn.softmax(wei, axis=-1)
    return wei @ v


if __name__ == "__main__":
    key = jax.random.PRNGKey(0)
    kx, kk, kq, kv = jax.random.split(key, 4)

    x = jax.random.normal(kx, (BATCH, BLOCK_SIZE, N_EMBD), dtype=jnp.float32)

    # nn.Linear(n_embd, head_size, bias=False) weights for all NUM_HEADS heads,
    # stored input-major (C, H) and concatenated along the output dim.
    bound = 1.0 / (N_EMBD ** 0.5)
    wk = jax.random.uniform(kk, (N_EMBD, NUM_HEADS * HEAD_SIZE), jnp.float32, -bound, bound)
    wq = jax.random.uniform(kq, (N_EMBD, NUM_HEADS * HEAD_SIZE), jnp.float32, -bound, bound)
    wv = jax.random.uniform(kv, (N_EMBD, NUM_HEADS * HEAD_SIZE), jnp.float32, -bound, bound)

    out = fused_heads_forward(x, wk, wq, wv)
    out = jax.block_until_ready(out)
    assert out.shape == (BATCH, BLOCK_SIZE, NUM_HEADS * HEAD_SIZE)

    # Per-head reference: each 32-wide output slice must equal a standalone Head.
    refs = []
    for h in range(NUM_HEADS):
        sl = slice(h * HEAD_SIZE, (h + 1) * HEAD_SIZE)
        refs.append(head_reference(x, wk[:, sl], wq[:, sl], wv[:, sl]))
    ref = jnp.concatenate(refs, axis=-1)

    # bf16 matmul inputs / bf16 exp (f32 accumulation) + approx reciprocal
    # -> relaxed tolerance vs the pure-f32 reference.
    assert jnp.allclose(out, ref, atol=2e-2, rtol=2e-2), (
        float(jnp.max(jnp.abs(out - ref))))

    print("KERNEL_OK")
</pallas_src>

<mosaic_0001>
module attributes {stable_mosaic.version = 11 : i64} {
  func.func @_fused_heads_kernel(%arg0: i32, %arg1: memref<2x128x256xf32, #tpu.memory_space<vmem>>, %arg2: memref<256x768xbf16, #tpu.memory_space<vmem>>, %arg3: memref<2x128x256xf32, #tpu.memory_space<vmem>>) attributes {dimension_semantics = [#tpu.dimension_semantics<arbitrary>], iteration_bounds = array<i64: 1>, scalar_prefetch = 0 : i64, scratch_operands = 0 : i64, tpu.core_type = #tpu.core_type<tc>, window_params = [{transform_indices = @transform_0, window_bounds = array<i64: 2, 128, 256>}, {pipeline_mode = #tpu.pipeline_mode<synchronous>, transform_indices = @transform_1, window_bounds = array<i64: 256, 768>}, {transform_indices = @transform_2, window_bounds = array<i64: 2, 128, 256>}]} {
    %c0 = arith.constant 0 : index
    %c0_0 = arith.constant 0 : index
    %c0_1 = arith.constant 0 : index
    %0 = vector.load %arg1[%c0, %c0_0, %c0_1] : memref<2x128x256xf32, #tpu.memory_space<vmem>>, vector<2x128x256xf32>
    %1 = vector.shape_cast %0 : vector<2x128x256xf32> to vector<256x256xf32>
    %2 = arith.truncf %1 : vector<256x256xf32> to vector<256x256xbf16>
    %c0_2 = arith.constant 0 : index
    %c0_3 = arith.constant 0 : index
    %3 = vector.load %arg2[%c0_2, %c0_3] : memref<256x768xbf16, #tpu.memory_space<vmem>>, vector<256x768xbf16>
    %cst = arith.constant dense<0.000000e+00> : vector<256x768xf32>
    %4 = tpu.matmul %2, %3, %cst {dimension_numbers = #tpu.dot_dimension_numbers<[1], [0], [0], [1], [0, 0, 1, 1], [], []>} : vector<256x256xbf16>, vector<256x768xbf16>, vector<256x768xf32> -> vector<256x768xf32>
    %5 = vector.extract_strided_slice %4 {offsets = [0, 0], sizes = [256, 512], strides = [1, 1]} : vector<256x768xf32> to vector<256x512xf32>
    %6 = arith.truncf %5 : vector<256x512xf32> to vector<256x512xbf16>
    %7 = vector.extract_strided_slice %6 {offsets = [0, 0], sizes = [256, 256], strides = [1, 1]} : vector<256x512xbf16> to vector<256x256xbf16>
    %8 = vector.extract_strided_slice %6 {offsets = [0, 256], sizes = [256, 256], strides = [1, 1]} : vector<256x512xbf16> to vector<256x256xbf16>
    %9 = vector.extract_strided_slice %4 {offsets = [0, 512], sizes = [256, 256], strides = [1, 1]} : vector<256x768xf32> to vector<256x256xf32>
    %10 = arith.truncf %9 : vector<256x256xf32> to vector<256x256xbf16>
    %11 = tpu.iota {dimensions = array<i32: 0>} : vector<128x128xi32>
    %12 = tpu.iota {dimensions = array<i32: 1>} : vector<128x128xi32>
    %13 = arith.cmpi sle, %12, %11 : vector<128x128xi32>
    %14 = vector.extract_strided_slice %8 {offsets = [0, 0], sizes = [128, 32], strides = [1, 1]} : vector<256x256xbf16> to vector<128x32xbf16>
    %15 = vector.extract_strided_slice %7 {offsets = [0, 0], sizes = [128, 32], strides = [1, 1]} : vector<256x256xbf16> to vector<128x32xbf16>
    %16 = vector.extract_strided_slice %10 {offsets = [0, 0], sizes = [128, 32], strides = [1, 1]} : vector<256x256xbf16> to vector<128x32xbf16>
    %cst_4 = arith.constant dense<0.000000e+00> : vector<128x128xf32>
    %17 = tpu.matmul %14, %15, %cst_4 {dimension_numbers = #tpu.dot_dimension_numbers<[1], [1], [0], [0], [0, 0, 1, 0], [], []>} : vector<128x32xbf16>, vector<128x32xbf16>, vector<128x128xf32> -> vector<128x128xf32>
    %cst_5 = arith.constant 0xFF800000 : f32
    %18 = vector.broadcast %cst_5 : f32 to vector<128x128xf32>
    %19 = arith.select %13, %17, %18 : vector<128x128xi1>, vector<128x128xf32>
    %cst_6 = arith.constant dense<0xFF800000> : vector<128xf32>
    %20 = vector.multi_reduction <maximumf>, %19, %cst_6 [1] : vector<128x128xf32> to vector<128xf32>
    %21 = vector.shape_cast %20 : vector<128xf32> to vector<128x1xf32>
    %22 = vector.broadcast %21 : vector<128x1xf32> to vector<128x128xf32>
    %23 = arith.subf %19, %22 : vector<128x128xf32>
    %24 = arith.truncf %23 : vector<128x128xf32> to vector<128x128xbf16>
    %25 = math.exp %24 : vector<128x128xbf16>
    %26 = arith.extf %25 : vector<128x128xbf16> to vector<128x128xf32>
    %cst_7 = arith.constant dense<0.000000e+00> : vector<128xf32>
    %27 = vector.multi_reduction <add>, %26, %cst_7 [1] : vector<128x128xf32> to vector<128xf32>
    %28 = vector.shape_cast %27 : vector<128xf32> to vector<128x1xf32>
    %29 = tpu.reciprocal %28 {approx = true} : vector<128x1xf32> -> vector<128x1xf32>
    %cst_8 = arith.constant dense<0.000000e+00> : vector<128x32xf32>
    %30 = tpu.matmul %25, %16, %cst_8 {dimension_numbers = #tpu.dot_dimension_numbers<[1], [0], [0], [1], [0, 0, 1, 1], [], []>} : vector<128x128xbf16>, vector<128x32xbf16>, vector<128x32xf32> -> vector<128x32xf32>
    %31 = vector.broadcast %29 : vector<128x1xf32> to vector<128x32xf32>
    %32 = arith.mulf %30, %31 : vector<128x32xf32>
    %c0_9 = arith.constant 0 : index
    %c0_10 = arith.constant 0 : index
    %c0_11 = arith.constant 0 : index
    %33 = vector.load %arg3[%c0_9, %c0_10, %c0_11] : memref<2x128x256xf32, #tpu.memory_space<vmem>>, vector<1x128x32xf32>
    %34 = vector.shape_cast %33 : vector<1x128x32xf32> to vector<128x32xf32>
    %35 = vector.shape_cast %32 : vector<128x32xf32> to vector<1x128x32xf32>
    tpu.vector_store %arg3[%c0_9, %c0_10, %c0_11], %35 {strides = array<i32>} : memref<2x128x256xf32, #tpu.memory_space<vmem>>, vector<1x128x32xf32>,
    %36 = vector.extract_strided_slice %8 {offsets = [0, 32], sizes = [128, 32], strides = [1, 1]} : vector<256x256xbf16> to vector<128x32xbf16>
    %37 = vector.extract_strided_slice %7 {offsets = [0, 32], sizes = [128, 32], strides = [1, 1]} : vector<256x256xbf16> to vector<128x32xbf16>
    %38 = vector.extract_strided_slice %10 {offsets = [0, 32], sizes = [128, 32], strides = [1, 1]} : vector<256x256xbf16> to vector<128x32xbf16>
    %cst_12 = arith.constant dense<0.000000e+00> : vector<128x128xf32>
    %39 = tpu.matmul %36, %37, %cst_12 {dimension_numbers = #tpu.dot_dimension_numbers<[1], [1], [0], [0], [0, 0, 1, 0], [], []>} : vector<128x32xbf16>, vector<128x32xbf16>, vector<128x128xf32> -> vector<128x128xf32>
    %cst_13 = arith.constant 0xFF800000 : f32
    %40 = vector.broadcast %cst_13 : f32 to vector<128x128xf32>
    %41 = arith.select %13, %39, %40 : vector<128x128xi1>, vector<128x128xf32>
    %cst_14 = arith.constant dense<0xFF800000> : vector<128xf32>
    %42 = vector.multi_reduction <maximumf>, %41, %cst_14 [1] : vector<128x128xf32> to vector<128xf32>
    %43 = vector.shape_cast %42 : vector<128xf32> to vector<128x1xf32>
    %44 = vector.broadcast %43 : vector<128x1xf32> to vector<128x128xf32>
    %45 = arith.subf %41, %44 : vector<128x128xf32>
    %46 = arith.truncf %45 : vector<128x128xf32> to vector<128x128xbf16>
    %47 = math.exp %46 : vector<128x128xbf16>
    %48 = arith.extf %47 : vector<128x128xbf16> to vector<128x128xf32>
    %cst_15 = arith.constant dense<0.000000e+00> : vector<128xf32>
    %49 = vector.multi_reduction <add>, %48, %cst_15 [1] : vector<128x128xf32> to vector<128xf32>
    %50 = vector.shape_cast %49 : vector<128xf32> to vector<128x1xf32>
    %51 = tpu.reciprocal %50 {approx = true} : vector<128x1xf32> -> vector<128x1xf32>
    %cst_16 = arith.constant dense<0.000000e+00> : vector<128x32xf32>
    %52 = tpu.matmul %47, %38, %cst_16 {dimension_numbers = #tpu.dot_dimension_numbers<[1], [0], [0], [1], [0, 0, 1, 1], [], []>} : vector<128x128xbf16>, vector<128x32xbf16>, vector<128x32xf32> -> vector<128x32xf32>
    %53 = vector.broadcast %51 : vector<128x1xf32> to vector<128x32xf32>
    %54 = arith.mulf %52, %53 : vector<128x32xf32>
    %c0_17 = arith.constant 0 : index
    %c0_18 = arith.constant 0 : index
    %c32 = arith.constant 32 : index
    %55 = vector.load %arg3[%c0_17, %c0_18, %c32] : memref<2x128x256xf32, #tpu.memory_space<vmem>>, vector<1x128x32xf32>
    %56 = vector.shape_cast %55 : vector<1x128x32xf32> to vector<128x32xf32>
    %57 = vector.shape_cast %54 : vector<128x32xf32> to vector<1x128x32xf32>
    tpu.vector_store %arg3[%c0_17, %c0_18, %c32], %57 {strides = array<i32>} : memref<2x128x256xf32, #tpu.memory_space<vmem>>, vector<1x128x32xf32>,
    %58 = vector.extract_strided_slice %8 {offsets = [0, 64], sizes = [128, 32], strides = [1, 1]} : vector<256x256xbf16> to vector<128x32xbf16>
    %59 = vector.extract_strided_slice %7 {offsets = [0, 64], sizes = [128, 32], strides = [1, 1]} : vector<256x256xbf16> to vector<128x32xbf16>
    %60 = vector.extract_strided_slice %10 {offsets = [0, 64], sizes = [128, 32], strides = [1, 1]} : vector<256x256xbf16> to vector<128x32xbf16>
    %cst_19 = arith.constant dense<0.000000e+00> : vector<128x128xf32>
    %61 = tpu.matmul %58, %59, %cst_19 {dimension_numbers = #tpu.dot_dimension_numbers<[1], [1], [0], [0], [0, 0, 1, 0], [], []>} : vector<128x32xbf16>, vector<128x32xbf16>, vector<128x128xf32> -> vector<128x128xf32>
    %cst_20 = arith.constant 0xFF800000 : f32
    %62 = vector.broadcast %cst_20 : f32 to vector<128x128xf32>
    %63 = arith.select %13, %61, %62 : vector<128x128xi1>, vector<128x128xf32>
    %cst_21 = arith.constant dense<0xFF800000> : vector<128xf32>
    %64 = vector.multi_reduction <maximumf>, %63, %cst_21 [1] : vector<128x128xf32> to vector<128xf32>
    %65 = vector.shape_cast %64 : vector<128xf32> to vector<128x1xf32>
    %66 = vector.broadcast %65 : vector<128x1xf32> to vector<128x128xf32>
    %67 = arith.subf %63, %66 : vector<128x128xf32>
    %68 = arith.truncf %67 : vector<128x128xf32> to vector<128x128xbf16>
    %69 = math.exp %68 : vector<128x128xbf16>
    %70 = arith.extf %69 : vector<128x128xbf16> to vector<128x128xf32>
    %cst_22 = arith.constant dense<0.000000e+00> : vector<128xf32>
    %71 = vector.multi_reduction <add>, %70, %cst_22 [1] : vector<128x128xf32> to vector<128xf32>
    %72 = vector.shape_cast %71 : vector<128xf32> to vector<128x1xf32>
    %73 = tpu.reciprocal %72 {approx = true} : vector<128x1xf32> -> vector<128x1xf32>
    %cst_23 = arith.constant dense<0.000000e+00> : vector<128x32xf32>
    %74 = tpu.matmul %69, %60, %cst_23 {dimension_numbers = #tpu.dot_dimension_numbers<[1], [0], [0], [1], [0, 0, 1, 1], [], []>} : vector<128x128xbf16>, vector<128x32xbf16>, vector<128x32xf32> -> vector<128x32xf32>
    %75 = vector.broadcast %73 : vector<128x1xf32> to vector<128x32xf32>
    %76 = arith.mulf %74, %75 : vector<128x32xf32>
    %c0_24 = arith.constant 0 : index
    %c0_25 = arith.constant 0 : index
    %c64 = arith.constant 64 : index
    %77 = vector.load %arg3[%c0_24, %c0_25, %c64] : memref<2x128x256xf32, #tpu.memory_space<vmem>>, vector<1x128x32xf32>
    %78 = vector.shape_cast %77 : vector<1x128x32xf32> to vector<128x32xf32>
    %79 = vector.shape_cast %76 : vector<128x32xf32> to vector<1x128x32xf32>
    tpu.vector_store %arg3[%c0_24, %c0_25, %c64], %79 {strides = array<i32>} : memref<2x128x256xf32, #tpu.memory_space<vmem>>, vector<1x128x32xf32>,
    %80 = vector.extract_strided_slice %8 {offsets = [0, 96], sizes = [128, 32], strides = [1, 1]} : vector<256x256xbf16> to vector<128x32xbf16>
    %81 = vector.extract_strided_slice %7 {offsets = [0, 96], sizes = [128, 32], strides = [1, 1]} : vector<256x256xbf16> to vector<128x32xbf16>
    %82 = vector.extract_strided_slice %10 {offsets = [0, 96], sizes = [128, 32], strides = [1, 1]} : vector<256x256xbf16> to vector<128x32xbf16>
    %cst_26 = arith.constant dense<0.000000e+00> : vector<128x128xf32>
    %83 = tpu.matmul %80, %81, %cst_26 {dimension_numbers = #tpu.dot_dimension_numbers<[1], [1], [0], [0], [0, 0, 1, 0], [], []>} : vector<128x32xbf16>, vector<128x32xbf16>, vector<128x128xf32> -> vector<128x128xf32>
    %cst_27 = arith.constant 0xFF800000 : f32
    %84 = vector.broadcast %cst_27 : f32 to vector<128x128xf32>
    %85 = arith.select %13, %83, %84 : vector<128x128xi1>, vector<128x128xf32>
    %cst_28 = arith.constant dense<0xFF800000> : vector<128xf32>
    %86 = vector.multi_reduction <maximumf>, %85, %cst_28 [1] : vector<128x128xf32> to vector<128xf32>
    %87 = vector.shape_cast %86 : vector<128xf32> to vector<128x1xf32>
    %88 = vector.broadcast %87 : vector<128x1xf32> to vector<128x128xf32>
    %89 = arith.subf %85, %88 : vector<128x128xf32>
    %90 = arith.truncf %89 : vector<128x128xf32> to vector<128x128xbf16>
    %91 = math.exp %90 : vector<128x128xbf16>
    %92 = arith.extf %91 : vector<128x128xbf16> to vector<128x128xf32>
    %cst_29 = arith.constant dense<0.000000e+00> : vector<128xf32>
    %93 = vector.multi_reduction <add>, %92, %cst_29 [1] : vector<128x128xf32> to vector<128xf32>
    %94 = vector.shape_cast %93 : vector<128xf32> to vector<128x1xf32>
    %95 = tpu.reciprocal %94 {approx = true} : vector<128x1xf32> -> vector<128x1xf32>
    %cst_30 = arith.constant dense<0.000000e+00> : vector<128x32xf32>
    %96 = tpu.matmul %91, %82, %cst_30 {dimension_numbers = #tpu.dot_dimension_numbers<[1], [0], [0], [1], [0, 0, 1, 1], [], []>} : vector<128x128xbf16>, vector<128x32xbf16>, vector<128x32xf32> -> vector<128x32xf32>
    %97 = vector.broadcast %95 : vector<128x1xf32> to vector<128x32xf32>
    %98 = arith.mulf %96, %97 : vector<128x32xf32>
    %c0_31 = arith.constant 0 : index
    %c0_32 = arith.constant 0 : index
    %c96 = arith.constant 96 : index
    %99 = vector.load %arg3[%c0_31, %c0_32, %c96] : memref<2x128x256xf32, #tpu.memory_space<vmem>>, vector<1x128x32xf32>
    %100 = vector.shape_cast %99 : vector<1x128x32xf32> to vector<128x32xf32>
    %101 = vector.shape_cast %98 : vector<128x32xf32> to vector<1x128x32xf32>
    tpu.vector_store %arg3[%c0_31, %c0_32, %c96], %101 {strides = array<i32>} : memref<2x128x256xf32, #tpu.memory_space<vmem>>, vector<1x128x32xf32>,
    %102 = vector.extract_strided_slice %8 {offsets = [0, 128], sizes = [128, 32], strides = [1, 1]} : vector<256x256xbf16> to vector<128x32xbf16>
    %103 = vector.extract_strided_slice %7 {offsets = [0, 128], sizes = [128, 32], strides = [1, 1]} : vector<256x256xbf16> to vector<128x32xbf16>
    %104 = vector.extract_strided_slice %10 {offsets = [0, 128], sizes = [128, 32], strides = [1, 1]} : vector<256x256xbf16> to vector<128x32xbf16>
    %cst_33 = arith.constant dense<0.000000e+00> : vector<128x128xf32>
    %105 = tpu.matmul %102, %103, %cst_33 {dimension_numbers = #tpu.dot_dimension_numbers<[1], [1], [0], [0], [0, 0, 1, 0], [], []>} : vector<128x32xbf16>, vector<128x32xbf16>, vector<128x128xf32> -> vector<128x128xf32>
    %cst_34 = arith.constant 0xFF800000 : f32
    %106 = vector.broadcast %cst_34 : f32 to vector<128x128xf32>
    %107 = arith.select %13, %105, %106 : vector<128x128xi1>, vector<128x128xf32>
    %cst_35 = arith.constant dense<0xFF800000> : vector<128xf32>
    %108 = vector.multi_reduction <maximumf>, %107, %cst_35 [1] : vector<128x128xf32> to vector<128xf32>
    %109 = vector.shape_cast %108 : vector<128xf32> to vector<128x1xf32>
    %110 = vector.broadcast %109 : vector<128x1xf32> to vector<128x128xf32>
    %111 = arith.subf %107, %110 : vector<128x128xf32>
    %112 = arith.truncf %111 : vector<128x128xf32> to vector<128x128xbf16>
    %113 = math.exp %112 : vector<128x128xbf16>
    %114 = arith.extf %113 : vector<128x128xbf16> to vector<128x128xf32>
    %cst_36 = arith.constant dense<0.000000e+00> : vector<128xf32>
    %115 = vector.multi_reduction <add>, %114, %cst_36 [1] : vector<128x128xf32> to vector<128xf32>
    %116 = vector.shape_cast %115 : vector<128xf32> to vector<128x1xf32>
    %117 = tpu.reciprocal %116 {approx = true} : vector<128x1xf32> -> vector<128x1xf32>
    %cst_37 = arith.constant dense<0.000000e+00> : vector<128x32xf32>
    %118 = tpu.matmul %113, %104, %cst_37 {dimension_numbers = #tpu.dot_dimension_numbers<[1], [0], [0], [1], [0, 0, 1, 1], [], []>} : vector<128x128xbf16>, vector<128x32xbf16>, vector<128x32xf32> -> vector<128x32xf32>
    %119 = vector.broadcast %117 : vector<128x1xf32> to vector<128x32xf32>
    %120 = arith.mulf %118, %119 : vector<128x32xf32>
    %c0_38 = arith.constant 0 : index
    %c0_39 = arith.constant 0 : index
    %c128 = arith.constant 128 : index
    %121 = vector.load %arg3[%c0_38, %c0_39, %c128] : memref<2x128x256xf32, #tpu.memory_space<vmem>>, vector<1x128x32xf32>
    %122 = vector.shape_cast %121 : vector<1x128x32xf32> to vector<128x32xf32>
    %123 = vector.shape_cast %120 : vector<128x32xf32> to vector<1x128x32xf32>
    tpu.vector_store %arg3[%c0_38, %c0_39, %c128], %123 {strides = array<i32>} : memref<2x128x256xf32, #tpu.memory_space<vmem>>, vector<1x128x32xf32>,
    %124 = vector.extract_strided_slice %8 {offsets = [0, 160], sizes = [128, 32], strides = [1, 1]} : vector<256x256xbf16> to vector<128x32xbf16>
    %125 = vector.extract_strided_slice %7 {offsets = [0, 160], sizes = [128, 32], strides = [1, 1]} : vector<256x256xbf16> to vector<128x32xbf16>
    %126 = vector.extract_strided_slice %10 {offsets = [0, 160], sizes = [128, 32], strides = [1, 1]} : vector<256x256xbf16> to vector<128x32xbf16>
    %cst_40 = arith.constant dense<0.000000e+00> : vector<128x128xf32>
    %127 = tpu.matmul %124, %125, %cst_40 {dimension_numbers = #tpu.dot_dimension_numbers<[1], [1], [0], [0], [0, 0, 1, 0], [], []>} : vector<128x32xbf16>, vector<128x32xbf16>, vector<128x128xf32> -> vector<128x128xf32>
    %cst_41 = arith.constant 0xFF800000 : f32
    %128 = vector.broadcast %cst_41 : f32 to vector<128x128xf32>
    %129 = arith.select %13, %127, %128 : vector<128x128xi1>, vector<128x128xf32>
    %cst_42 = arith.constant dense<0xFF800000> : vector<128xf32>
    %130 = vector.multi_reduction <maximumf>, %129, %cst_42 [1] : vector<128x128xf32> to vector<128xf32>
    %131 = vector.shape_cast %130 : vector<128xf32> to vector<128x1xf32>
    %132 = vector.broadcast %131 : vector<128x1xf32> to vector<128x128xf32>
    %133 = arith.subf %129, %132 : vector<128x128xf32>
    %134 = arith.truncf %133 : vector<128x128xf32> to vector<128x128xbf16>
    %135 = math.exp %134 : vector<128x128xbf16>
    %136 = arith.extf %135 : vector<128x128xbf16> to vector<128x128xf32>
    %cst_43 = arith.constant dense<0.000000e+00> : vector<128xf32>
    %137 = vector.multi_reduction <add>, %136, %cst_43 [1] : vector<128x128xf32> to vector<128xf32>
    %138 = vector.shape_cast %137 : vector<128xf32> to vector<128x1xf32>
    %139 = tpu.reciprocal %138 {approx = true} : vector<128x1xf32> -> vector<128x1xf32>
    %cst_44 = arith.constant dense<0.000000e+00> : vector<128x32xf32>
    %140 = tpu.matmul %135, %126, %cst_44 {dimension_numbers = #tpu.dot_dimension_numbers<[1], [0], [0], [1], [0, 0, 1, 1], [], []>} : vector<128x128xbf16>, vector<128x32xbf16>, vector<128x32xf32> -> vector<128x32xf32>
    %141 = vector.broadcast %139 : vector<128x1xf32> to vector<128x32xf32>
    %142 = arith.mulf %140, %141 : vector<128x32xf32>
    %c0_45 = arith.constant 0 : index
    %c0_46 = arith.constant 0 : index
    %c160 = arith.constant 160 : index
    %143 = vector.load %arg3[%c0_45, %c0_46, %c160] : memref<2x128x256xf32, #tpu.memory_space<vmem>>, vector<1x128x32xf32>
    %144 = vector.shape_cast %143 : vector<1x128x32xf32> to vector<128x32xf32>
    %145 = vector.shape_cast %142 : vector<128x32xf32> to vector<1x128x32xf32>
    tpu.vector_store %arg3[%c0_45, %c0_46, %c160], %145 {strides = array<i32>} : memref<2x128x256xf32, #tpu.memory_space<vmem>>, vector<1x128x32xf32>,
    %146 = vector.extract_strided_slice %8 {offsets = [0, 192], sizes = [128, 32], strides = [1, 1]} : vector<256x256xbf16> to vector<128x32xbf16>
    %147 = vector.extract_strided_slice %7 {offsets = [0, 192], sizes = [128, 32], strides = [1, 1]} : vector<256x256xbf16> to vector<128x32xbf16>
    %148 = vector.extract_strided_slice %10 {offsets = [0, 192], sizes = [128, 32], strides = [1, 1]} : vector<256x256xbf16> to vector<128x32xbf16>
    %cst_47 = arith.constant dense<0.000000e+00> : vector<128x128xf32>
    %149 = tpu.matmul %146, %147, %cst_47 {dimension_numbers = #tpu.dot_dimension_numbers<[1], [1], [0], [0], [0, 0, 1, 0], [], []>} : vector<128x32xbf16>, vector<128x32xbf16>, vector<128x128xf32> -> vector<128x128xf32>
    %cst_48 = arith.constant 0xFF800000 : f32
    %150 = vector.broadcast %cst_48 : f32 to vector<128x128xf32>
    %151 = arith.select %13, %149, %150 : vector<128x128xi1>, vector<128x128xf32>
    %cst_49 = arith.constant dense<0xFF800000> : vector<128xf32>
    %152 = vector.multi_reduction <maximumf>, %151, %cst_49 [1] : vector<128x128xf32> to vector<128xf32>
    %153 = vector.shape_cast %152 : vector<128xf32> to vector<128x1xf32>
    %154 = vector.broadcast %153 : vector<128x1xf32> to vector<128x128xf32>
    %155 = arith.subf %151, %154 : vector<128x128xf32>
    %156 = arith.truncf %155 : vector<128x128xf32> to vector<128x128xbf16>
    %157 = math.exp %156 : vector<128x128xbf16>
    %158 = arith.extf %157 : vector<128x128xbf16> to vector<128x128xf32>
    %cst_50 = arith.constant dense<0.000000e+00> : vector<128xf32>
    %159 = vector.multi_reduction <add>, %158, %cst_50 [1] : vector<128x128xf32> to vector<128xf32>
    %160 = vector.shape_cast %159 : vector<128xf32> to vector<128x1xf32>
    %161 = tpu.reciprocal %160 {approx = true} : vector<128x1xf32> -> vector<128x1xf32>
    %cst_51 = arith.constant dense<0.000000e+00> : vector<128x32xf32>
    %162 = tpu.matmul %157, %148, %cst_51 {dimension_numbers = #tpu.dot_dimension_numbers<[1], [0], [0], [1], [0, 0, 1, 1], [], []>} : vector<128x128xbf16>, vector<128x32xbf16>, vector<128x32xf32> -> vector<128x32xf32>
    %163 = vector.broadcast %161 : vector<128x1xf32> to vector<128x32xf32>
    %164 = arith.mulf %162, %163 : vector<128x32xf32>
    %c0_52 = arith.constant 0 : index
    %c0_53 = arith.constant 0 : index
    %c192 = arith.constant 192 : index
    %165 = vector.load %arg3[%c0_52, %c0_53, %c192] : memref<2x128x256xf32, #tpu.memory_space<vmem>>, vector<1x128x32xf32>
    %166 = vector.shape_cast %165 : vector<1x128x32xf32> to vector<128x32xf32>
    %167 = vector.shape_cast %164 : vector<128x32xf32> to vector<1x128x32xf32>
    tpu.vector_store %arg3[%c0_52, %c0_53, %c192], %167 {strides = array<i32>} : memref<2x128x256xf32, #tpu.memory_space<vmem>>, vector<1x128x32xf32>,
    %168 = vector.extract_strided_slice %8 {offsets = [0, 224], sizes = [128, 32], strides = [1, 1]} : vector<256x256xbf16> to vector<128x32xbf16>
    %169 = vector.extract_strided_slice %7 {offsets = [0, 224], sizes = [128, 32], strides = [1, 1]} : vector<256x256xbf16> to vector<128x32xbf16>
    %170 = vector.extract_strided_slice %10 {offsets = [0, 224], sizes = [128, 32], strides = [1, 1]} : vector<256x256xbf16> to vector<128x32xbf16>
    %cst_54 = arith.constant dense<0.000000e+00> : vector<128x128xf32>
    %171 = tpu.matmul %168, %169, %cst_54 {dimension_numbers = #tpu.dot_dimension_numbers<[1], [1], [0], [0], [0, 0, 1, 0], [], []>} : vector<128x32xbf16>, vector<128x32xbf16>, vector<128x128xf32> -> vector<128x128xf32>
    %cst_55 = arith.constant 0xFF800000 : f32
    %172 = vector.broadcast %cst_55 : f32 to vector<128x128xf32>
    %173 = arith.select %13, %171, %172 : vector<128x128xi1>, vector<128x128xf32>
    %cst_56 = arith.constant dense<0xFF800000> : vector<128xf32>
    %174 = vector.multi_reduction <maximumf>, %173, %cst_56 [1] : vector<128x128xf32> to vector<128xf32>
    %175 = vector.shape_cast %174 : vector<128xf32> to vector<128x1xf32>
    %176 = vector.broadcast %175 : vector<128x1xf32> to vector<128x128xf32>
    %177 = arith.subf %173, %176 : vector<128x128xf32>
    %178 = arith.truncf %177 : vector<128x128xf32> to vector<128x128xbf16>
    %179 = math.exp %178 : vector<128x128xbf16>
    %180 = arith.extf %179 : vector<128x128xbf16> to vector<128x128xf32>
    %cst_57 = arith.constant dense<0.000000e+00> : vector<128xf32>
    %181 = vector.multi_reduction <add>, %180, %cst_57 [1] : vector<128x128xf32> to vector<128xf32>
    %182 = vector.shape_cast %181 : vector<128xf32> to vector<128x1xf32>
    %183 = tpu.reciprocal %182 {approx = true} : vector<128x1xf32> -> vector<128x1xf32>
    %cst_58 = arith.constant dense<0.000000e+00> : vector<128x32xf32>
    %184 = tpu.matmul %179, %170, %cst_58 {dimension_numbers = #tpu.dot_dimension_numbers<[1], [0], [0], [1], [0, 0, 1, 1], [], []>} : vector<128x128xbf16>, vector<128x32xbf16>, vector<128x32xf32> -> vector<128x32xf32>
    %185 = vector.broadcast %183 : vector<128x1xf32> to vector<128x32xf32>
    %186 = arith.mulf %184, %185 : vector<128x32xf32>
    %c0_59 = arith.constant 0 : index
    %c0_60 = arith.constant 0 : index
    %c224 = arith.constant 224 : index
    %187 = vector.load %arg3[%c0_59, %c0_60, %c224] : memref<2x128x256xf32, #tpu.memory_space<vmem>>, vector<1x128x32xf32>
    %188 = vector.shape_cast %187 : vector<1x128x32xf32> to vector<128x32xf32>
    %189 = vector.shape_cast %186 : vector<128x32xf32> to vector<1x128x32xf32>
    tpu.vector_store %arg3[%c0_59, %c0_60, %c224], %189 {strides = array<i32>} : memref<2x128x256xf32, #tpu.memory_space<vmem>>, vector<1x128x32xf32>,
    %190 = vector.extract_strided_slice %8 {offsets = [128, 0], sizes = [128, 32], strides = [1, 1]} : vector<256x256xbf16> to vector<128x32xbf16>
    %191 = vector.extract_strided_slice %7 {offsets = [128, 0], sizes = [128, 32], strides = [1, 1]} : vector<256x256xbf16> to vector<128x32xbf16>
    %192 = vector.extract_strided_slice %10 {offsets = [128, 0], sizes = [128, 32], strides = [1, 1]} : vector<256x256xbf16> to vector<128x32xbf16>
    %cst_61 = arith.constant dense<0.000000e+00> : vector<128x128xf32>
    %193 = tpu.matmul %190, %191, %cst_61 {dimension_numbers = #tpu.dot_dimension_numbers<[1], [1], [0], [0], [0, 0, 1, 0], [], []>} : vector<128x32xbf16>, vector<128x32xbf16>, vector<128x128xf32> -> vector<128x128xf32>
    %cst_62 = arith.constant 0xFF800000 : f32
    %194 = vector.broadcast %cst_62 : f32 to vector<128x128xf32>
    %195 = arith.select %13, %193, %194 : vector<128x128xi1>, vector<128x128xf32>
    %cst_63 = arith.constant dense<0xFF800000> : vector<128xf32>
    %196 = vector.multi_reduction <maximumf>, %195, %cst_63 [1] : vector<128x128xf32> to vector<128xf32>
    %197 = vector.shape_cast %196 : vector<128xf32> to vector<128x1xf32>
    %198 = vector.broadcast %197 : vector<128x1xf32> to vector<128x128xf32>
    %199 = arith.subf %195, %198 : vector<128x128xf32>
    %200 = arith.truncf %199 : vector<128x128xf32> to vector<128x128xbf16>
    %201 = math.exp %200 : vector<128x128xbf16>
    %202 = arith.extf %201 : vector<128x128xbf16> to vector<128x128xf32>
    %cst_64 = arith.constant dense<0.000000e+00> : vector<128xf32>
    %203 = vector.multi_reduction <add>, %202, %cst_64 [1] : vector<128x128xf32> to vector<128xf32>
    %204 = vector.shape_cast %203 : vector<128xf32> to vector<128x1xf32>
    %205 = tpu.reciprocal %204 {approx = true} : vector<128x1xf32> -> vector<128x1xf32>
    %cst_65 = arith.constant dense<0.000000e+00> : vector<128x32xf32>
    %206 = tpu.matmul %201, %192, %cst_65 {dimension_numbers = #tpu.dot_dimension_numbers<[1], [0], [0], [1], [0, 0, 1, 1], [], []>} : vector<128x128xbf16>, vector<128x32xbf16>, vector<128x32xf32> -> vector<128x32xf32>
    %207 = vector.broadcast %205 : vector<128x1xf32> to vector<128x32xf32>
    %208 = arith.mulf %206, %207 : vector<128x32xf32>
    %c1 = arith.constant 1 : index
    %c0_66 = arith.constant 0 : index
    %c0_67 = arith.constant 0 : index
    %209 = vector.load %arg3[%c1, %c0_66, %c0_67] : memref<2x128x256xf32, #tpu.memory_space<vmem>>, vector<1x128x32xf32>
    %210 = vector.shape_cast %209 : vector<1x128x32xf32> to vector<128x32xf32>
    %211 = vector.shape_cast %208 : vector<128x32xf32> to vector<1x128x32xf32>
    tpu.vector_store %arg3[%c1, %c0_66, %c0_67], %211 {strides = array<i32>} : memref<2x128x256xf32, #tpu.memory_space<vmem>>, vector<1x128x32xf32>,
    %212 = vector.extract_strided_slice %8 {offsets = [128, 32], sizes = [128, 32], strides = [1, 1]} : vector<256x256xbf16> to vector<128x32xbf16>
    %213 = vector.extract_strided_slice %7 {offsets = [128, 32], sizes = [128, 32], strides = [1, 1]} : vector<256x256xbf16> to vector<128x32xbf16>
    %214 = vector.extract_strided_slice %10 {offsets = [128, 32], sizes = [128, 32], strides = [1, 1]} : vector<256x256xbf16> to vector<128x32xbf16>
    %cst_68 = arith.constant dense<0.000000e+00> : vector<128x128xf32>
    %215 = tpu.matmul %212, %213, %cst_68 {dimension_numbers = #tpu.dot_dimension_numbers<[1], [1], [0], [0], [0, 0, 1, 0], [], []>} : vector<128x32xbf16>, vector<128x32xbf16>, vector<128x128xf32> -> vector<128x128xf32>
    %cst_69 = arith.constant 0xFF800000 : f32
    %216 = vector.broadcast %cst_69 : f32 to vector<128x128xf32>
    %217 = arith.select %13, %215, %216 : vector<128x128xi1>, vector<128x128xf32>
    %cst_70 = arith.constant dense<0xFF800000> : vector<128xf32>
    %218 = vector.multi_reduction <maximumf>, %217, %cst_70 [1] : vector<128x128xf32> to vector<128xf32>
    %219 = vector.shape_cast %218 : vector<128xf32> to vector<128x1xf32>
    %220 = vector.broadcast %219 : vector<128x1xf32> to vector<128x128xf32>
    %221 = arith.subf %217, %220 : vector<128x128xf32>
    %222 = arith.truncf %221 : vector<128x128xf32> to vector<128x128xbf16>
    %223 = math.exp %222 : vector<128x128xbf16>
    %224 = arith.extf %223 : vector<128x128xbf16> to vector<128x128xf32>
    %cst_71 = arith.constant dense<0.000000e+00> : vector<128xf32>
    %225 = vector.multi_reduction <add>, %224, %cst_71 [1] : vector<128x128xf32> to vector<128xf32>
    %226 = vector.shape_cast %225 : vector<128xf32> to vector<128x1xf32>
    %227 = tpu.reciprocal %226 {approx = true} : vector<128x1xf32> -> vector<128x1xf32>
    %cst_72 = arith.constant dense<0.000000e+00> : vector<128x32xf32>
    %228 = tpu.matmul %223, %214, %cst_72 {dimension_numbers = #tpu.dot_dimension_numbers<[1], [0], [0], [1], [0, 0, 1, 1], [], []>} : vector<128x128xbf16>, vector<128x32xbf16>, vector<128x32xf32> -> vector<128x32xf32>
    %229 = vector.broadcast %227 : vector<128x1xf32> to vector<128x32xf32>
    %230 = arith.mulf %228, %229 : vector<128x32xf32>
    %c1_73 = arith.constant 1 : index
    %c0_74 = arith.constant 0 : index
    %c32_75 = arith.constant 32 : index
    %231 = vector.load %arg3[%c1_73, %c0_74, %c32_75] : memref<2x128x256xf32, #tpu.memory_space<vmem>>, vector<1x128x32xf32>
    %232 = vector.shape_cast %231 : vector<1x128x32xf32> to vector<128x32xf32>
    %233 = vector.shape_cast %230 : vector<128x32xf32> to vector<1x128x32xf32>
    tpu.vector_store %arg3[%c1_73, %c0_74, %c32_75], %233 {strides = array<i32>} : memref<2x128x256xf32, #tpu.memory_space<vmem>>, vector<1x128x32xf32>,
    %234 = vector.extract_strided_slice %8 {offsets = [128, 64], sizes = [128, 32], strides = [1, 1]} : vector<256x256xbf16> to vector<128x32xbf16>
    %235 = vector.extract_strided_slice %7 {offsets = [128, 64], sizes = [128, 32], strides = [1, 1]} : vector<256x256xbf16> to vector<128x32xbf16>
    %236 = vector.extract_strided_slice %10 {offsets = [128, 64], sizes = [128, 32], strides = [1, 1]} : vector<256x256xbf16> to vector<128x32xbf16>
    %cst_76 = arith.constant dense<0.000000e+00> : vector<128x128xf32>
    %237 = tpu.matmul %234, %235, %cst_76 {dimension_numbers = #tpu.dot_dimension_numbers<[1], [1], [0], [0], [0, 0, 1, 0], [], []>} : vector<128x32xbf16>, vector<128x32xbf16>, vector<128x128xf32> -> vector<128x128xf32>
    %cst_77 = arith.constant 0xFF800000 : f32
    %238 = vector.broadcast %cst_77 : f32 to vector<128x128xf32>
    %239 = arith.select %13, %237, %238 : vector<128x128xi1>, vector<128x128xf32>
    %cst_78 = arith.constant dense<0xFF800000> : vector<128xf32>
    %240 = vector.multi_reduction <maximumf>, %239, %cst_78 [1] : vector<128x128xf32> to vector<128xf32>
    %241 = vector.shape_cast %240 : vector<128xf32> to vector<128x1xf32>
    %242 = vector.broadcast %241 : vector<128x1xf32> to vector<128x128xf32>
    %243 = arith.subf %239, %242 : vector<128x128xf32>
    %244 = arith.truncf %243 : vector<128x128xf32> to vector<128x128xbf16>
    %245 = math.exp %244 : vector<128x128xbf16>
    %246 = arith.extf %245 : vector<128x128xbf16> to vector<128x128xf32>
    %cst_79 = arith.constant dense<0.000000e+00> : vector<128xf32>
    %247 = vector.multi_reduction <add>, %246, %cst_79 [1] : vector<128x128xf32> to vector<128xf32>
    %248 = vector.shape_cast %247 : vector<128xf32> to vector<128x1xf32>
    %249 = tpu.reciprocal %248 {approx = true} : vector<128x1xf32> -> vector<128x1xf32>
    %cst_80 = arith.constant dense<0.000000e+00> : vector<128x32xf32>
    %250 = tpu.matmul %245, %236, %cst_80 {dimension_numbers = #tpu.dot_dimension_numbers<[1], [0], [0], [1], [0, 0, 1, 1], [], []>} : vector<128x128xbf16>, vector<128x32xbf16>, vector<128x32xf32> -> vector<128x32xf32>
    %251 = vector.broadcast %249 : vector<128x1xf32> to vector<128x32xf32>
    %252 = arith.mulf %250, %251 : vector<128x32xf32>
    %c1_81 = arith.constant 1 : index
    %c0_82 = arith.constant 0 : index
    %c64_83 = arith.constant 64 : index
    %253 = vector.load %arg3[%c1_81, %c0_82, %c64_83] : memref<2x128x256xf32, #tpu.memory_space<vmem>>, vector<1x128x32xf32>
    %254 = vector.shape_cast %253 : vector<1x128x32xf32> to vector<128x32xf32>
    %255 = vector.shape_cast %252 : vector<128x32xf32> to vector<1x128x32xf32>
    tpu.vector_store %arg3[%c1_81, %c0_82, %c64_83], %255 {strides = array<i32>} : memref<2x128x256xf32, #tpu.memory_space<vmem>>, vector<1x128x32xf32>,
    %256 = vector.extract_strided_slice %8 {offsets = [128, 96], sizes = [128, 32], strides = [1, 1]} : vector<256x256xbf16> to vector<128x32xbf16>
    %257 = vector.extract_strided_slice %7 {offsets = [128, 96], sizes = [128, 32], strides = [1, 1]} : vector<256x256xbf16> to vector<128x32xbf16>
    %258 = vector.extract_strided_slice %10 {offsets = [128, 96], sizes = [128, 32], strides = [1, 1]} : vector<256x256xbf16> to vector<128x32xbf16>
    %cst_84 = arith.constant dense<0.000000e+00> : vector<128x128xf32>
    %259 = tpu.matmul %256, %257, %cst_84 {dimension_numbers = #tpu.dot_dimension_numbers<[1], [1], [0], [0], [0, 0, 1, 0], [], []>} : vector<128x32xbf16>, vector<128x32xbf16>, vector<128x128xf32> -> vector<128x128xf32>
    %cst_85 = arith.constant 0xFF800000 : f32
    %260 = vector.broadcast %cst_85 : f32 to vector<128x128xf32>
    %261 = arith.select %13, %259, %260 : vector<128x128xi1>, vector<128x128xf32>
    %cst_86 = arith.constant dense<0xFF800000> : vector<128xf32>
    %262 = vector.multi_reduction <maximumf>, %261, %cst_86 [1] : vector<128x128xf32> to vector<128xf32>
    %263 = vector.shape_cast %262 : vector<128xf32> to vector<128x1xf32>
    %264 = vector.broadcast %263 : vector<128x1xf32> to vector<128x128xf32>
    %265 = arith.subf %261, %264 : vector<128x128xf32>
    %266 = arith.truncf %265 : vector<128x128xf32> to vector<128x128xbf16>
    %267 = math.exp %266 : vector<128x128xbf16>
    %268 = arith.extf %267 : vector<128x128xbf16> to vector<128x128xf32>
    %cst_87 = arith.constant dense<0.000000e+00> : vector<128xf32>
    %269 = vector.multi_reduction <add>, %268, %cst_87 [1] : vector<128x128xf32> to vector<128xf32>
    %270 = vector.shape_cast %269 : vector<128xf32> to vector<128x1xf32>
    %271 = tpu.reciprocal %270 {approx = true} : vector<128x1xf32> -> vector<128x1xf32>
    %cst_88 = arith.constant dense<0.000000e+00> : vector<128x32xf32>
    %272 = tpu.matmul %267, %258, %cst_88 {dimension_numbers = #tpu.dot_dimension_numbers<[1], [0], [0], [1], [0, 0, 1, 1], [], []>} : vector<128x128xbf16>, vector<128x32xbf16>, vector<128x32xf32> -> vector<128x32xf32>
    %273 = vector.broadcast %271 : vector<128x1xf32> to vector<128x32xf32>
    %274 = arith.mulf %272, %273 : vector<128x32xf32>
    %c1_89 = arith.constant 1 : index
    %c0_90 = arith.constant 0 : index
    %c96_91 = arith.constant 96 : index
    %275 = vector.load %arg3[%c1_89, %c0_90, %c96_91] : memref<2x128x256xf32, #tpu.memory_space<vmem>>, vector<1x128x32xf32>
    %276 = vector.shape_cast %275 : vector<1x128x32xf32> to vector<128x32xf32>
    %277 = vector.shape_cast %274 : vector<128x32xf32> to vector<1x128x32xf32>
    tpu.vector_store %arg3[%c1_89, %c0_90, %c96_91], %277 {strides = array<i32>} : memref<2x128x256xf32, #tpu.memory_space<vmem>>, vector<1x128x32xf32>,
    %278 = vector.extract_strided_slice %8 {offsets = [128, 128], sizes = [128, 32], strides = [1, 1]} : vector<256x256xbf16> to vector<128x32xbf16>
    %279 = vector.extract_strided_slice %7 {offsets = [128, 128], sizes = [128, 32], strides = [1, 1]} : vector<256x256xbf16> to vector<128x32xbf16>
    %280 = vector.extract_strided_slice %10 {offsets = [128, 128], sizes = [128, 32], strides = [1, 1]} : vector<256x256xbf16> to vector<128x32xbf16>
    %cst_92 = arith.constant dense<0.000000e+00> : vector<128x128xf32>
    %281 = tpu.matmul %278, %279, %cst_92 {dimension_numbers = #tpu.dot_dimension_numbers<[1], [1], [0], [0], [0, 0, 1, 0], [], []>} : vector<128x32xbf16>, vector<128x32xbf16>, vector<128x128xf32> -> vector<128x128xf32>
    %cst_93 = arith.constant 0xFF800000 : f32
    %282 = vector.broadcast %cst_93 : f32 to vector<128x128xf32>
    %283 = arith.select %13, %281, %282 : vector<128x128xi1>, vector<128x128xf32>
    %cst_94 = arith.constant dense<0xFF800000> : vector<128xf32>
    %284 = vector.multi_reduction <maximumf>, %283, %cst_94 [1] : vector<128x128xf32> to vector<128xf32>
    %285 = vector.shape_cast %284 : vector<128xf32> to vector<128x1xf32>
    %286 = vector.broadcast %285 : vector<128x1xf32> to vector<128x128xf32>
    %287 = arith.subf %283, %286 : vector<128x128xf32>
    %288 = arith.truncf %287 : vector<128x128xf32> to vector<128x128xbf16>
    %289 = math.exp %288 : vector<128x128xbf16>
    %290 = arith.extf %289 : vector<128x128xbf16> to vector<128x128xf32>
    %cst_95 = arith.constant dense<0.000000e+00> : vector<128xf32>
    %291 = vector.multi_reduction <add>, %290, %cst_95 [1] : vector<128x128xf32> to vector<128xf32>
    %292 = vector.shape_cast %291 : vector<128xf32> to vector<128x1xf32>
    %293 = tpu.reciprocal %292 {approx = true} : vector<128x1xf32> -> vector<128x1xf32>
    %cst_96 = arith.constant dense<0.000000e+00> : vector<128x32xf32>
    %294 = tpu.matmul %289, %280, %cst_96 {dimension_numbers = #tpu.dot_dimension_numbers<[1], [0], [0], [1], [0, 0, 1, 1], [], []>} : vector<128x128xbf16>, vector<128x32xbf16>, vector<128x32xf32> -> vector<128x32xf32>
    %295 = vector.broadcast %293 : vector<128x1xf32> to vector<128x32xf32>
    %296 = arith.mulf %294, %295 : vector<128x32xf32>
    %c1_97 = arith.constant 1 : index
    %c0_98 = arith.constant 0 : index
    %c128_99 = arith.constant 128 : index
    %297 = vector.load %arg3[%c1_97, %c0_98, %c128_99] : memref<2x128x256xf32, #tpu.memory_space<vmem>>, vector<1x128x32xf32>
    %298 = vector.shape_cast %297 : vector<1x128x32xf32> to vector<128x32xf32>
    %299 = vector.shape_cast %296 : vector<128x32xf32> to vector<1x128x32xf32>
    tpu.vector_store %arg3[%c1_97, %c0_98, %c128_99], %299 {strides = array<i32>} : memref<2x128x256xf32, #tpu.memory_space<vmem>>, vector<1x128x32xf32>,
    %300 = vector.extract_strided_slice %8 {offsets = [128, 160], sizes = [128, 32], strides = [1, 1]} : vector<256x256xbf16> to vector<128x32xbf16>
    %301 = vector.extract_strided_slice %7 {offsets = [128, 160], sizes = [128, 32], strides = [1, 1]} : vector<256x256xbf16> to vector<128x32xbf16>
    %302 = vector.extract_strided_slice %10 {offsets = [128, 160], sizes = [128, 32], strides = [1, 1]} : vector<256x256xbf16> to vector<128x32xbf16>
    %cst_100 = arith.constant dense<0.000000e+00> : vector<128x128xf32>
    %303 = tpu.matmul %300, %301, %cst_100 {dimension_numbers = #tpu.dot_dimension_numbers<[1], [1], [0], [0], [0, 0, 1, 0], [], []>} : vector<128x32xbf16>, vector<128x32xbf16>, vector<128x128xf32> -> vector<128x128xf32>
    %cst_101 = arith.constant 0xFF800000 : f32
    %304 = vector.broadcast %cst_101 : f32 to vector<128x128xf32>
    %305 = arith.select %13, %303, %304 : vector<128x128xi1>, vector<128x128xf32>
    %cst_102 = arith.constant dense<0xFF800000> : vector<128xf32>
    %306 = vector.multi_reduction <maximumf>, %305, %cst_102 [1] : vector<128x128xf32> to vector<128xf32>
    %307 = vector.shape_cast %306 : vector<128xf32> to vector<128x1xf32>
    %308 = vector.broadcast %307 : vector<128x1xf32> to vector<128x128xf32>
    %309 = arith.subf %305, %308 : vector<128x128xf32>
    %310 = arith.truncf %309 : vector<128x128xf32> to vector<128x128xbf16>
    %311 = math.exp %310 : vector<128x128xbf16>
    %312 = arith.extf %311 : vector<128x128xbf16> to vector<128x128xf32>
    %cst_103 = arith.constant dense<0.000000e+00> : vector<128xf32>
    %313 = vector.multi_reduction <add>, %312, %cst_103 [1] : vector<128x128xf32> to vector<128xf32>
    %314 = vector.shape_cast %313 : vector<128xf32> to vector<128x1xf32>
    %315 = tpu.reciprocal %314 {approx = true} : vector<128x1xf32> -> vector<128x1xf32>
    %cst_104 = arith.constant dense<0.000000e+00> : vector<128x32xf32>
    %316 = tpu.matmul %311, %302, %cst_104 {dimension_numbers = #tpu.dot_dimension_numbers<[1], [0], [0], [1], [0, 0, 1, 1], [], []>} : vector<128x128xbf16>, vector<128x32xbf16>, vector<128x32xf32> -> vector<128x32xf32>
    %317 = vector.broadcast %315 : vector<128x1xf32> to vector<128x32xf32>
    %318 = arith.mulf %316, %317 : vector<128x32xf32>
    %c1_105 = arith.constant 1 : index
    %c0_106 = arith.constant 0 : index
    %c160_107 = arith.constant 160 : index
    %319 = vector.load %arg3[%c1_105, %c0_106, %c160_107] : memref<2x128x256xf32, #tpu.memory_space<vmem>>, vector<1x128x32xf32>
    %320 = vector.shape_cast %319 : vector<1x128x32xf32> to vector<128x32xf32>
    %321 = vector.shape_cast %318 : vector<128x32xf32> to vector<1x128x32xf32>
    tpu.vector_store %arg3[%c1_105, %c0_106, %c160_107], %321 {strides = array<i32>} : memref<2x128x256xf32, #tpu.memory_space<vmem>>, vector<1x128x32xf32>,
    %322 = vector.extract_strided_slice %8 {offsets = [128, 192], sizes = [128, 32], strides = [1, 1]} : vector<256x256xbf16> to vector<128x32xbf16>
    %323 = vector.extract_strided_slice %7 {offsets = [128, 192], sizes = [128, 32], strides = [1, 1]} : vector<256x256xbf16> to vector<128x32xbf16>
    %324 = vector.extract_strided_slice %10 {offsets = [128, 192], sizes = [128, 32], strides = [1, 1]} : vector<256x256xbf16> to vector<128x32xbf16>
    %cst_108 = arith.constant dense<0.000000e+00> : vector<128x128xf32>
    %325 = tpu.matmul %322, %323, %cst_108 {dimension_numbers = #tpu.dot_dimension_numbers<[1], [1], [0], [0], [0, 0, 1, 0], [], []>} : vector<128x32xbf16>, vector<128x32xbf16>, vector<128x128xf32> -> vector<128x128xf32>
    %cst_109 = arith.constant 0xFF800000 : f32
    %326 = vector.broadcast %cst_109 : f32 to vector<128x128xf32>
    %327 = arith.select %13, %325, %326 : vector<128x128xi1>, vector<128x128xf32>
    %cst_110 = arith.constant dense<0xFF800000> : vector<128xf32>
    %328 = vector.multi_reduction <maximumf>, %327, %cst_110 [1] : vector<128x128xf32> to vector<128xf32>
    %329 = vector.shape_cast %328 : vector<128xf32> to vector<128x1xf32>
    %330 = vector.broadcast %329 : vector<128x1xf32> to vector<128x128xf32>
    %331 = arith.subf %327, %330 : vector<128x128xf32>
    %332 = arith.truncf %331 : vector<128x128xf32> to vector<128x128xbf16>
    %333 = math.exp %332 : vector<128x128xbf16>
    %334 = arith.extf %333 : vector<128x128xbf16> to vector<128x128xf32>
    %cst_111 = arith.constant dense<0.000000e+00> : vector<128xf32>
    %335 = vector.multi_reduction <add>, %334, %cst_111 [1] : vector<128x128xf32> to vector<128xf32>
    %336 = vector.shape_cast %335 : vector<128xf32> to vector<128x1xf32>
    %337 = tpu.reciprocal %336 {approx = true} : vector<128x1xf32> -> vector<128x1xf32>
    %cst_112 = arith.constant dense<0.000000e+00> : vector<128x32xf32>
    %338 = tpu.matmul %333, %324, %cst_112 {dimension_numbers = #tpu.dot_dimension_numbers<[1], [0], [0], [1], [0, 0, 1, 1], [], []>} : vector<128x128xbf16>, vector<128x32xbf16>, vector<128x32xf32> -> vector<128x32xf32>
    %339 = vector.broadcast %337 : vector<128x1xf32> to vector<128x32xf32>
    %340 = arith.mulf %338, %339 : vector<128x32xf32>
    %c1_113 = arith.constant 1 : index
    %c0_114 = arith.constant 0 : index
    %c192_115 = arith.constant 192 : index
    %341 = vector.load %arg3[%c1_113, %c0_114, %c192_115] : memref<2x128x256xf32, #tpu.memory_space<vmem>>, vector<1x128x32xf32>
    %342 = vector.shape_cast %341 : vector<1x128x32xf32> to vector<128x32xf32>
    %343 = vector.shape_cast %340 : vector<128x32xf32> to vector<1x128x32xf32>
    tpu.vector_store %arg3[%c1_113, %c0_114, %c192_115], %343 {strides = array<i32>} : memref<2x128x256xf32, #tpu.memory_space<vmem>>, vector<1x128x32xf32>,
    %344 = vector.extract_strided_slice %8 {offsets = [128, 224], sizes = [128, 32], strides = [1, 1]} : vector<256x256xbf16> to vector<128x32xbf16>
    %345 = vector.extract_strided_slice %7 {offsets = [128, 224], sizes = [128, 32], strides = [1, 1]} : vector<256x256xbf16> to vector<128x32xbf16>
    %346 = vector.extract_strided_slice %10 {offsets = [128, 224], sizes = [128, 32], strides = [1, 1]} : vector<256x256xbf16> to vector<128x32xbf16>
    %cst_116 = arith.constant dense<0.000000e+00> : vector<128x128xf32>
    %347 = tpu.matmul %344, %345, %cst_116 {dimension_numbers = #tpu.dot_dimension_numbers<[1], [1], [0], [0], [0, 0, 1, 0], [], []>} : vector<128x32xbf16>, vector<128x32xbf16>, vector<128x128xf32> -> vector<128x128xf32>
    %cst_117 = arith.constant 0xFF800000 : f32
    %348 = vector.broadcast %cst_117 : f32 to vector<128x128xf32>
    %349 = arith.select %13, %347, %348 : vector<128x128xi1>, vector<128x128xf32>
    %cst_118 = arith.constant dense<0xFF800000> : vector<128xf32>
    %350 = vector.multi_reduction <maximumf>, %349, %cst_118 [1] : vector<128x128xf32> to vector<128xf32>
    %351 = vector.shape_cast %350 : vector<128xf32> to vector<128x1xf32>
    %352 = vector.broadcast %351 : vector<128x1xf32> to vector<128x128xf32>
    %353 = arith.subf %349, %352 : vector<128x128xf32>
    %354 = arith.truncf %353 : vector<128x128xf32> to vector<128x128xbf16>
    %355 = math.exp %354 : vector<128x128xbf16>
    %356 = arith.extf %355 : vector<128x128xbf16> to vector<128x128xf32>
    %cst_119 = arith.constant dense<0.000000e+00> : vector<128xf32>
    %357 = vector.multi_reduction <add>, %356, %cst_119 [1] : vector<128x128xf32> to vector<128xf32>
    %358 = vector.shape_cast %357 : vector<128xf32> to vector<128x1xf32>
    %359 = tpu.reciprocal %358 {approx = true} : vector<128x1xf32> -> vector<128x1xf32>
    %cst_120 = arith.constant dense<0.000000e+00> : vector<128x32xf32>
    %360 = tpu.matmul %355, %346, %cst_120 {dimension_numbers = #tpu.dot_dimension_numbers<[1], [0], [0], [1], [0, 0, 1, 1], [], []>} : vector<128x128xbf16>, vector<128x32xbf16>, vector<128x32xf32> -> vector<128x32xf32>
    %361 = vector.broadcast %359 : vector<128x1xf32> to vector<128x32xf32>
    %362 = arith.mulf %360, %361 : vector<128x32xf32>
    %c1_121 = arith.constant 1 : index
    %c0_122 = arith.constant 0 : index
    %c224_123 = arith.constant 224 : index
    %363 = vector.load %arg3[%c1_121, %c0_122, %c224_123] : memref<2x128x256xf32, #tpu.memory_space<vmem>>, vector<1x128x32xf32>
    %364 = vector.shape_cast %363 : vector<1x128x32xf32> to vector<128x32xf32>
    %365 = vector.shape_cast %362 : vector<128x32xf32> to vector<1x128x32xf32>
    tpu.vector_store %arg3[%c1_121, %c0_122, %c224_123], %365 {strides = array<i32>} : memref<2x128x256xf32, #tpu.memory_space<vmem>>, vector<1x128x32xf32>,
    return
  }
  func.func @transform_0(%arg0: i32) -> (i32, i32, i32) {
    %c0_i32 = arith.constant 0 : i32
    %c0_i32_0 = arith.constant 0 : i32
    %c0_i32_1 = arith.constant 0 : i32
    return %arg0, %c0_i32, %c0_i32_0 : i32, i32, i32
  }
  func.func @transform_1(%arg0: i32) -> (i32, i32) {
    %c0_i32 = arith.constant 0 : i32
    %c0_i32_0 = arith.constant 0 : i32
    %c0_i32_1 = arith.constant 0 : i32
    return %c0_i32, %c0_i32_0 : i32, i32
  }
  func.func @transform_2(%arg0: i32) -> (i32, i32, i32) {
    %c0_i32 = arith.constant 0 : i32
    %c0_i32_0 = arith.constant 0 : i32
    %c0_i32_1 = arith.constant 0 : i32
    return %arg0, %c0_i32, %c0_i32_0 : i32, i32, i32
  }
}

</mosaic_0001>

<llo_original>
// kernel: tpu_custom_call.1
$region0: #{tpu_custom_call.1}
  #allocation0 [shape = 'u32[]', space=smem, size = 0x4, offset = 0x4, fixed_abs, tag = 'smem constant byte address 0x4 - core index']
  #allocation1 [shape = 'u32[144,128]{1,0:T(1,128)}', space=vmem, size = 0x12000, scoped, tag = 'internal scratch']
  %s0 = inlined_call_operand.hbm [shape: f32[2,128,256], index: 0, kind: input, shape index: {}]
  %s1 = inlined_call_operand.hbm [shape: bf16[256,768], index: 1, kind: input, shape index: {}]
  %s2 = inlined_call_operand.hbm [shape: f32[2,128,256], index: 2, kind: output, shape index: {}]
  %s3 = sld [smem:[#allocation0]]
  $region26: #{tpu_custom_call.1} parent=0
    _
  %s5 = ssub.s32 1, %s3
  %s6 = scalar_select 0, %s5, %s3
  $region1: #{tpu_custom_call.1} parent=0
    #allocation2 [shape = 'u8[262144]{0}', space=vmem, size = 0x40000, scoped, tag = 'input window, operand 0, single buffered']
    #allocation3 [shape = 's32[1]{0}', space=sflag, size = 0x4, scoped, tag = 'scoped memory for tpu_custom_call.1']
    #allocation4 [shape = 's32[1]{0}', space=sflag, size = 0x4, scoped, tag = 'scoped memory for tpu_custom_call.1']
    #allocation5 [shape = 'u8[393216]{0}', space=vmem, size = 0x60000, scoped, tag = 'input window, operand 1, single buffered']
    #allocation6 [shape = 's32[1]{0}', space=sflag, size = 0x4, scoped, tag = 'scoped memory for tpu_custom_call.1']
    #allocation7 [shape = 'u8[262144]{0}', space=vmem, size = 0x40000, scoped, tag = 'output window, operand 0, single buffered']
    %7 = vsyncpa [#allocation3], 0
    %8 = vsyncpa [#allocation6], 0
    %9 = vsyncpa [#allocation4], 0
    // Predicated region
    $region2: #{tpu_custom_call.1} parent=1 // pred_check
      _
    $region3: #{tpu_custom_call.1} parent=1 // pred_check_branch
      %11 = sbr.rel (0) target = $region5
    $region4: #{tpu_custom_call.1} parent=1 // pred_region
      %s13 = ssub.s32 8192, 8192
      %14 = vsyncadd [#allocation3], %s13
      %s15 = sshll.u32 [#allocation2], 4
      %s16 = int_to_ptr.vmem [resolvable:$true] %s15
      %21 = dma.hbm_to_vmem [thread:$0]  %s0, 8192, %s16, [#allocation3], 256, 256, 16
    $region5: #{tpu_custom_call.1} parent=1 // pred_fallthru
      _
    // Predicated region
    $region6: #{tpu_custom_call.1} parent=1 // pred_check
      _
    $region7: #{tpu_custom_call.1} parent=1 // pred_check_branch
      %23 = sbr.rel (0) target = $region9
    $region8: #{tpu_custom_call.1} parent=1 // pred_region
      %s25 = ssub.s32 12288, 12288
      %26 = vsyncadd [#allocation6], %s25
      %s27 = sshll.u32 [#allocation5], 4
      %s28 = int_to_ptr.vmem [resolvable:$true] %s27
      %33 = dma.hbm_to_vmem [thread:$0]  %s1, 12288, %s28, [#allocation6], 384, 384, 24
    $region9: #{tpu_custom_call.1} parent=1 // pred_fallthru
      _
    // Predicated region
    $region10: #{tpu_custom_call.1} parent=1 // pred_check
      _
    $region11: #{tpu_custom_call.1} parent=1 // pred_check_branch
      %35 = sbr.rel (0) target = $region13
    $region12: #{tpu_custom_call.1} parent=1 // pred_region
      %36 = dma.done [#allocation3], 8192
    $region13: #{tpu_custom_call.1} parent=1 // pred_fallthru
      _
    // Predicated region
    $region14: #{tpu_custom_call.1} parent=1 // pred_check
      _
    $region15: #{tpu_custom_call.1} parent=1 // pred_check_branch
      %38 = sbr.rel (0) target = $region17
    $region16: #{tpu_custom_call.1} parent=1 // pred_region
      %39 = dma.done [#allocation6], 12288
    $region17: #{tpu_custom_call.1} parent=1 // pred_fallthru
      _
    %v41 = vld [vmem:[#allocation2] sm:$0xff]
    %v42 = vld [vmem:[#allocation2 + $0x8] sm:$0xff]
    %v43 = vld [vmem:[#allocation2 + $0x10] sm:$0xff]
    %v44 = vld [vmem:[#allocation2 + $0x18] sm:$0xff]
    %v45 = vld [vmem:[#allocation2 + $0x20] sm:$0xff]
    %v46 = vld [vmem:[#allocation2 + $0x28] sm:$0xff]
    %v47 = vld [vmem:[#allocation2 + $0x30] sm:$0xff]
    %v48 = vld [vmem:[#allocation2 + $0x38] sm:$0xff]
    %v49 = vld [vmem:[#allocation2 + $0x40] sm:$0xff]
    %v50 = vld [vmem:[#allocation2 + $0x48] sm:$0xff]
    %v51 = vld [vmem:[#allocation2 + $0x50] sm:$0xff]
    %v52 = vld [vmem:[#allocation2 + $0x58] sm:$0xff]
    %v53 = vld [vmem:[#allocation2 + $0x60] sm:$0xff]
    %v54 = vld [vmem:[#allocation2 + $0x68] sm:$0xff]
    %v55 = vld [vmem:[#allocation2 + $0x70] sm:$0xff]
    %v56 = vld [vmem:[#allocation2 + $0x78] sm:$0xff]
    %v57 = vld [vmem:[#allocation2 + $0x80] sm:$0xff]
    %v58 = vld [vmem:[#allocation2 + $0x88] sm:$0xff]
    %v59 = vld [vmem:[#allocation2 + $0x90] sm:$0xff]
    %v60 = vld [vmem:[#allocation2 + $0x98] sm:$0xff]
    %v61 = vld [vmem:[#allocation2 + $0xa0] sm:$0xff]
    %v62 = vld [vmem:[#allocation2 + $0xa8] sm:$0xff]
    %v63 = vld [vmem:[#allocation2 + $0xb0] sm:$0xff]
    %v64 = vld [vmem:[#allocation2 + $0xb8] sm:$0xff]
    %v65 = vld [vmem:[#allocation2 + $0xc0] sm:$0xff]
    %v66 = vld [vmem:[#allocation2 + $0xc8] sm:$0xff]
    %v67 = vld [vmem:[#allocation2 + $0xd0] sm:$0xff]
    %v68 = vld [vmem:[#allocation2 + $0xd8] sm:$0xff]
    %v69 = vld [vmem:[#allocation2 + $0xe0] sm:$0xff]
    %v70 = vld [vmem:[#allocation2 + $0xe8] sm:$0xff]
    %v71 = vld [vmem:[#allocation2 + $0xf0] sm:$0xff]
    %v72 = vld [vmem:[#allocation2 + $0xf8] sm:$0xff]
    %v73 = vld [vmem:[#allocation2 + $0x100] sm:$0xff]
    %v74 = vld [vmem:[#allocation2 + $0x108] sm:$0xff]
    %v75 = vld [vmem:[#allocation2 + $0x110] sm:$0xff]
    %v76 = vld [vmem:[#allocation2 + $0x118] sm:$0xff]
    %v77 = vld [vmem:[#allocation2 + $0x120] sm:$0xff]
    %v78 = vld [vmem:[#allocation2 + $0x128] sm:$0xff]
    %v79 = vld [vmem:[#allocation2 + $0x130] sm:$0xff]
    %v80 = vld [vmem:[#allocation2 + $0x138] sm:$0xff]
    %v81 = vld [vmem:[#allocation2 + $0x140] sm:$0xff]
    %v82 = vld [vmem:[#allocation2 + $0x148] sm:$0xff]
    %v83 = vld [vmem:[#allocation2 + $0x150] sm:$0xff]
    %v84 = vld [vmem:[#allocation2 + $0x158] sm:$0xff]
    %v85 = vld [vmem:[#allocation2 + $0x160] sm:$0xff]
    %v86 = vld [vmem:[#allocation2 + $0x168] sm:$0xff]
    %v87 = vld [vmem:[#allocation2 + $0x170] sm:$0xff]
    %v88 = vld [vmem:[#allocation2 + $0x178] sm:$0xff]
    %v89 = vld [vmem:[#allocation2 + $0x180] sm:$0xff]
    %v90 = vld [vmem:[#allocation2 + $0x188] sm:$0xff]
    %v91 = vld [vmem:[#allocation2 + $0x190] sm:$0xff]
    %v92 = vld [vmem:[#allocation2 + $0x198] sm:$0xff]
    %v93 = vld [vmem:[#allocation2 + $0x1a0] sm:$0xff]
    %v94 = vld [vmem:[#allocation2 + $0x1a8] sm:$0xff]
    %v95 = vld [vmem:[#allocation2 + $0x1b0] sm:$0xff]
    %v96 = vld [vmem:[#allocation2 + $0x1b8] sm:$0xff]
    %v97 = vld [vmem:[#allocation2 + $0x1c0] sm:$0xff]
    %v98 = vld [vmem:[#allocation2 + $0x1c8] sm:$0xff]
    %v99 = vld [vmem:[#allocation2 + $0x1d0] sm:$0xff]
    %v100 = vld [vmem:[#allocation2 + $0x1d8] sm:$0xff]
    %v101 = vld [vmem:[#allocation2 + $0x1e0] sm:$0xff]
    %v102 = vld [vmem:[#allocation2 + $0x1e8] sm:$0xff]
    %v103 = vld [vmem:[#allocation2 + $0x1f0] sm:$0xff]
    %v104 = vld [vmem:[#allocation2 + $0x1f8] sm:$0xff]
    %v105 = vpack.c.bf16 %v43, %v41
    %v106 = vpack.c.bf16 %v44, %v42
    %v107 = vpack.c.bf16 %v47, %v45
    %v108 = vpack.c.bf16 %v48, %v46
    %v109 = vpack.c.bf16 %v51, %v49
    %v110 = vpack.c.bf16 %v52, %v50
    %v111 = vpack.c.bf16 %v55, %v53
    %v112 = vpack.c.bf16 %v56, %v54
    %v113 = vpack.c.bf16 %v59, %v57
    %v114 = vpack.c.bf16 %v60, %v58
    %v115 = vpack.c.bf16 %v63, %v61
    %v116 = vpack.c.bf16 %v64, %v62
    %v117 = vpack.c.bf16 %v67, %v65
    %v118 = vpack.c.bf16 %v68, %v66
    %v119 = vpack.c.bf16 %v71, %v69
    %v120 = vpack.c.bf16 %v72, %v70
    %v121 = vpack.c.bf16 %v75, %v73
    %v122 = vpack.c.bf16 %v76, %v74
    %v123 = vpack.c.bf16 %v79, %v77
    %v124 = vpack.c.bf16 %v80, %v78
    %v125 = vpack.c.bf16 %v83, %v81
    %v126 = vpack.c.bf16 %v84, %v82
    %v127 = vpack.c.bf16 %v87, %v85
    %v128 = vpack.c.bf16 %v88, %v86
    %v129 = vpack.c.bf16 %v91, %v89
    %v130 = vpack.c.bf16 %v92, %v90
    %v131 = vpack.c.bf16 %v95, %v93
    %v132 = vpack.c.bf16 %v96, %v94
    %v133 = vpack.c.bf16 %v99, %v97
    %v134 = vpack.c.bf16 %v100, %v98
    %v135 = vpack.c.bf16 %v103, %v101
    %v136 = vpack.c.bf16 %v104, %v102
    %v137 = vld [vmem:[#allocation5] sm:$0xff]
    %v138 = vld [vmem:[#allocation5 + $0x8] sm:$0xff]
    %v139 = vld [vmem:[#allocation5 + $0x10] sm:$0xff]
    %v140 = vld [vmem:[#allocation5 + $0x18] sm:$0xff]
    %v141 = vld [vmem:[#allocation5 + $0x20] sm:$0xff]
    %v142 = vld [vmem:[#allocation5 + $0x28] sm:$0xff]
    %v143 = vld [vmem:[#allocation5 + $0x30] sm:$0xff]
    %v144 = vld [vmem:[#allocation5 + $0x38] sm:$0xff]
    %v145 = vld [vmem:[#allocation5 + $0x40] sm:$0xff]
    %v146 = vld [vmem:[#allocation5 + $0x48] sm:$0xff]
    %v147 = vld [vmem:[#allocation5 + $0x50] sm:$0xff]
    %v148 = vld [vmem:[#allocation5 + $0x58] sm:$0xff]
    %v149 = vld [vmem:[#allocation5 + $0x60] sm:$0xff]
    %v150 = vld [vmem:[#allocation5 + $0x68] sm:$0xff]
    %v151 = vld [vmem:[#allocation5 + $0x70] sm:$0xff]
    %v152 = vld [vmem:[#allocation5 + $0x78] sm:$0xff]
    %v153 = vld [vmem:[#allocation5 + $0x80] sm:$0xff]
    %v154 = vld [vmem:[#allocation5 + $0x88] sm:$0xff]
    %v155 = vld [vmem:[#allocation5 + $0x90] sm:$0xff]
    %v156 = vld [vmem:[#allocation5 + $0x98] sm:$0xff]
    %v157 = vld [vmem:[#allocation5 + $0xa0] sm:$0xff]
    %v158 = vld [vmem:[#allocation5 + $0xa8] sm:$0xff]
    %v159 = vld [vmem:[#allocation5 + $0xb0] sm:$0xff]
    %v160 = vld [vmem:[#allocation5 + $0xb8] sm:$0xff]
    %v161 = vld [vmem:[#allocation5 + $0xc0] sm:$0xff]
    %v162 = vld [vmem:[#allocation5 + $0xc8] sm:$0xff]
    %v163 = vld [vmem:[#allocation5 + $0xd0] sm:$0xff]
    %v164 = vld [vmem:[#allocation5 + $0xd8] sm:$0xff]
    %v165 = vld [vmem:[#allocation5 + $0xe0] sm:$0xff]
    %v166 = vld [vmem:[#allocation5 + $0xe8] sm:$0xff]
    %v167 = vld [vmem:[#allocation5 + $0xf0] sm:$0xff]
    %v168 = vld [vmem:[#allocation5 + $0xf8] sm:$0xff]
    %v169 = vld [vmem:[#allocation5 + $0x100] sm:$0xff]
    %v170 = vld [vmem:[#allocation5 + $0x108] sm:$0xff]
    %v171 = vld [vmem:[#allocation5 + $0x110] sm:$0xff]
    %v172 = vld [vmem:[#allocation5 + $0x118] sm:$0xff]
    %v173 = vld [vmem:[#allocation5 + $0x120] sm:$0xff]
    %v174 = vld [vmem:[#allocation5 + $0x128] sm:$0xff]
    %v175 = vld [vmem:[#allocation5 + $0x130] sm:$0xff]
    %v176 = vld [vmem:[#allocation5 + $0x138] sm:$0xff]
    %v177 = vld [vmem:[#allocation5 + $0x140] sm:$0xff]
    %v178 = vld [vmem:[#allocation5 + $0x148] sm:$0xff]
    %v179 = vld [vmem:[#allocation5 + $0x150] sm:$0xff]
    %v180 = vld [vmem:[#allocation5 + $0x158] sm:$0xff]
    %v181 = vld [vmem:[#allocation5 + $0x160] sm:$0xff]
    %v182 = vld [vmem:[#allocation5 + $0x168] sm:$0xff]
    %v183 = vld [vmem:[#allocation5 + $0x170] sm:$0xff]
    %v184 = vld [vmem:[#allocation5 + $0x178] sm:$0xff]
    %v185 = vld [vmem:[#allocation5 + $0x180] sm:$0xff]
    %v186 = vld [vmem:[#allocation5 + $0x188] sm:$0xff]
    %v187 = vld [vmem:[#allocation5 + $0x190] sm:$0xff]
    %v188 = vld [vmem:[#allocation5 + $0x198] sm:$0xff]
    %v189 = vld [vmem:[#allocation5 + $0x1a0] sm:$0xff]
    %v190 = vld [vmem:[#allocation5 + $0x1a8] sm:$0xff]
    %v191 = vld [vmem:[#allocation5 + $0x1b0] sm:$0xff]
    %v192 = vld [vmem:[#allocation5 + $0x1b8] sm:$0xff]
    %v193 = vld [vmem:[#allocation5 + $0x1c0] sm:$0xff]
    %v194 = vld [vmem:[#allocation5 + $0x1c8] sm:$0xff]
    %v195 = vld [vmem:[#allocation5 + $0x1d0] sm:$0xff]
    %v196 = vld [vmem:[#allocation5 + $0x1d8] sm:$0xff]
    %v197 = vld [vmem:[#allocation5 + $0x1e0] sm:$0xff]
    %v198 = vld [vmem:[#allocation5 + $0x1e8] sm:$0xff]
    %v199 = vld [vmem:[#allocation5 + $0x1f0] sm:$0xff]
    %v200 = vld [vmem:[#allocation5 + $0x1f8] sm:$0xff]
    %v201 = vld [vmem:[#allocation5 + $0x200] sm:$0xff]
    %v202 = vld [vmem:[#allocation5 + $0x208] sm:$0xff]
    %v203 = vld [vmem:[#allocation5 + $0x210] sm:$0xff]
    %v204 = vld [vmem:[#allocation5 + $0x218] sm:$0xff]
    %v205 = vld [vmem:[#allocation5 + $0x220] sm:$0xff]
    %v206 = vld [vmem:[#allocation5 + $0x228] sm:$0xff]
    %v207 = vld [vmem:[#allocation5 + $0x230] sm:$0xff]
    %v208 = vld [vmem:[#allocation5 + $0x238] sm:$0xff]
    %v209 = vld [vmem:[#allocation5 + $0x240] sm:$0xff]
    %v210 = vld [vmem:[#allocation5 + $0x248] sm:$0xff]
    %v211 = vld [vmem:[#allocation5 + $0x250] sm:$0xff]
    %v212 = vld [vmem:[#allocation5 + $0x258] sm:$0xff]
    %v213 = vld [vmem:[#allocation5 + $0x260] sm:$0xff]
    %v214 = vld [vmem:[#allocation5 + $0x268] sm:$0xff]
    %v215 = vld [vmem:[#allocation5 + $0x270] sm:$0xff]
    %v216 = vld [vmem:[#allocation5 + $0x278] sm:$0xff]
    %v217 = vld [vmem:[#allocation5 + $0x280] sm:$0xff]
    %v218 = vld [vmem:[#allocation5 + $0x288] sm:$0xff]
    %v219 = vld [vmem:[#allocation5 + $0x290] sm:$0xff]
    %v220 = vld [vmem:[#allocation5 + $0x298] sm:$0xff]
    %v221 = vld [vmem:[#allocation5 + $0x2a0] sm:$0xff]
    %v222 = vld [vmem:[#allocation5 + $0x2a8] sm:$0xff]
    %v223 = vld [vmem:[#allocation5 + $0x2b0] sm:$0xff]
    %v224 = vld [vmem:[#allocation5 + $0x2b8] sm:$0xff]
    %v225 = vld [vmem:[#allocation5 + $0x2c0] sm:$0xff]
    %v226 = vld [vmem:[#allocation5 + $0x2c8] sm:$0xff]
    %v227 = vld [vmem:[#allocation5 + $0x2d0] sm:$0xff]
    %v228 = vld [vmem:[#allocation5 + $0x2d8] sm:$0xff]
    %v229 = vld [vmem:[#allocation5 + $0x2e0] sm:$0xff]
    %v230 = vld [vmem:[#allocation5 + $0x2e8] sm:$0xff]
    %v231 = vld [vmem:[#allocation5 + $0x2f0] sm:$0xff]
    %v232 = vld [vmem:[#allocation5 + $0x2f8] sm:$0xff]
    %v329 = vunpack.c.l.b16 %v137
    %v330 = vunpack.c.h.b16 %v137
    %v331 = vunpack.c.l.b16 %v138
    %v332 = vunpack.c.h.b16 %v138
    %v333 = vunpack.c.l.b16 %v139
    %v334 = vunpack.c.h.b16 %v139
    %v335 = vunpack.c.l.b16 %v140
    %v336 = vunpack.c.h.b16 %v140
    %v337 = vunpack.c.l.b16 %v141
    %v338 = vunpack.c.h.b16 %v141
    %v339 = vunpack.c.l.b16 %v142
    %v340 = vunpack.c.h.b16 %v142
    %v341 = vunpack.c.l.b16 %v143
    %v342 = vunpack.c.h.b16 %v143
    %v343 = vunpack.c.l.b16 %v144
    %v344 = vunpack.c.h.b16 %v144
    %v345 = vunpack.c.l.b16 %v145
    %v346 = vunpack.c.h.b16 %v145
    %v347 = vunpack.c.l.b16 %v146
    %v348 = vunpack.c.h.b16 %v146
    %v349 = vunpack.c.l.b16 %v147
    %v350 = vunpack.c.h.b16 %v147
    %v351 = vunpack.c.l.b16 %v148
    %v352 = vunpack.c.h.b16 %v148
    %v353 = vunpack.c.l.b16 %v149
    %v354 = vunpack.c.h.b16 %v149
    %v355 = vunpack.c.l.b16 %v150
    %v356 = vunpack.c.h.b16 %v150
    %v357 = vunpack.c.l.b16 %v151
    %v358 = vunpack.c.h.b16 %v151
    %v359 = vunpack.c.l.b16 %v152
    %v360 = vunpack.c.h.b16 %v152
    %v361 = vunpack.c.l.b16 %v153
    %v362 = vunpack.c.h.b16 %v153
    %v363 = vunpack.c.l.b16 %v154
    %v364 = vunpack.c.h.b16 %v154
    %v365 = vunpack.c.l.b16 %v155
    %v366 = vunpack.c.h.b16 %v155
    %v367 = vunpack.c.l.b16 %v156
    %v368 = vunpack.c.h.b16 %v156
    %v369 = vunpack.c.l.b16 %v157
    %v370 = vunpack.c.h.b16 %v157
    %v371 = vunpack.c.l.b16 %v158
    %v372 = vunpack.c.h.b16 %v158
    %v373 = vunpack.c.l.b16 %v159
    %v374 = vunpack.c.h.b16 %v159
    %v375 = vunpack.c.l.b16 %v160
    %v376 = vunpack.c.h.b16 %v160
    %v377 = vunpack.c.l.b16 %v161
    %v378 = vunpack.c.h.b16 %v161
    %v379 = vunpack.c.l.b16 %v162
    %v380 = vunpack.c.h.b16 %v162
    %v381 = vunpack.c.l.b16 %v163
    %v382 = vunpack.c.h.b16 %v163
    %v383 = vunpack.c.l.b16 %v164
    %v384 = vunpack.c.h.b16 %v164
    %v385 = vunpack.c.l.b16 %v165
    %v386 = vunpack.c.h.b16 %v165
    %v387 = vunpack.c.l.b16 %v166
    %v388 = vunpack.c.h.b16 %v166
    %v389 = vunpack.c.l.b16 %v167
    %v390 = vunpack.c.h.b16 %v167
    %v391 = vunpack.c.l.b16 %v168
    %v392 = vunpack.c.h.b16 %v168
    %v393 = vunpack.c.l.b16 %v169
    %v394 = vunpack.c.h.b16 %v169
    %v395 = vunpack.c.l.b16 %v170
    %v396 = vunpack.c.h.b16 %v170
    %v397 = vunpack.c.l.b16 %v171
    %v398 = vunpack.c.h.b16 %v171
    %v399 = vunpack.c.l.b16 %v172
    %v400 = vunpack.c.h.b16 %v172
    %v401 = vunpack.c.l.b16 %v173
    %v402 = vunpack.c.h.b16 %v173
    %v403 = vunpack.c.l.b16 %v174
    %v404 = vunpack.c.h.b16 %v174
    %v405 = vunpack.c.l.b16 %v175
    %v406 = vunpack.c.h.b16 %v175
    %v407 = vunpack.c.l.b16 %v176
    %v408 = vunpack.c.h.b16 %v176
    %v409 = vunpack.c.l.b16 %v177
    %v410 = vunpack.c.h.b16 %v177
    %v411 = vunpack.c.l.b16 %v178
    %v412 = vunpack.c.h.b16 %v178
    %v413 = vunpack.c.l.b16 %v179
    %v414 = vunpack.c.h.b16 %v179
    %v415 = vunpack.c.l.b16 %v180
    %v416 = vunpack.c.h.b16 %v180
    %v417 = vunpack.c.l.b16 %v181
    %v418 = vunpack.c.h.b16 %v181
    %v419 = vunpack.c.l.b16 %v182
    %v420 = vunpack.c.h.b16 %v182
    %v421 = vunpack.c.l.b16 %v183
    %v422 = vunpack.c.h.b16 %v183
    %v423 = vunpack.c.l.b16 %v184
    %v424 = vunpack.c.h.b16 %v184
    %v425 = vunpack.c.l.b16 %v185
    %v426 = vunpack.c.h.b16 %v185
    %v427 = vunpack.c.l.b16 %v186
    %v428 = vunpack.c.h.b16 %v186
    %v429 = vunpack.c.l.b16 %v187
    %v430 = vunpack.c.h.b16 %v187
    %v431 = vunpack.c.l.b16 %v188
    %v432 = vunpack.c.h.b16 %v188
    %v433 = vunpack.c.l.b16 %v189
    %v434 = vunpack.c.h.b16 %v189
    %v435 = vunpack.c.l.b16 %v190
    %v436 = vunpack.c.h.b16 %v190
    %v437 = vunpack.c.l.b16 %v191
    %v438 = vunpack.c.h.b16 %v191
    %v439 = vunpack.c.l.b16 %v192
    %v440 = vunpack.c.h.b16 %v192
    %v441 = vunpack.c.l.b16 %v193
    %v442 = vunpack.c.h.b16 %v193
    %v443 = vunpack.c.l.b16 %v194
    %v444 = vunpack.c.h.b16 %v194
    %v445 = vunpack.c.l.b16 %v195
    %v446 = vunpack.c.h.b16 %v195
    %v447 = vunpack.c.l.b16 %v196
    %v448 = vunpack.c.h.b16 %v196
    %v449 = vunpack.c.l.b16 %v197
    %v450 = vunpack.c.h.b16 %v197
    %v451 = vunpack.c.l.b16 %v198
    %v452 = vunpack.c.h.b16 %v198
    %v453 = vunpack.c.l.b16 %v199
    %v454 = vunpack.c.h.b16 %v199
    %v455 = vunpack.c.l.b16 %v200
    %v456 = vunpack.c.h.b16 %v200
    %v457 = vunpack.c.l.b16 %v201
    %v458 = vunpack.c.h.b16 %v201
    %v459 = vunpack.c.l.b16 %v202
    %v460 = vunpack.c.h.b16 %v202
    %v461 = vunpack.c.l.b16 %v203
    %v462 = vunpack.c.h.b16 %v203
    %v463 = vunpack.c.l.b16 %v204
    %v464 = vunpack.c.h.b16 %v204
    %v465 = vunpack.c.l.b16 %v205
    %v466 = vunpack.c.h.b16 %v205
    %v467 = vunpack.c.l.b16 %v206
    %v468 = vunpack.c.h.b16 %v206
    %v469 = vunpack.c.l.b16 %v207
    %v470 = vunpack.c.h.b16 %v207
    %v471 = vunpack.c.l.b16 %v208
    %v472 = vunpack.c.h.b16 %v208
    %v473 = vunpack.c.l.b16 %v209
    %v474 = vunpack.c.h.b16 %v209
    %v475 = vunpack.c.l.b16 %v210
    %v476 = vunpack.c.h.b16 %v210
    %v477 = vunpack.c.l.b16 %v211
    %v478 = vunpack.c.h.b16 %v211
    %v479 = vunpack.c.l.b16 %v212
    %v480 = vunpack.c.h.b16 %v212
    %v481 = vunpack.c.l.b16 %v213
    %v482 = vunpack.c.h.b16 %v213
    %v483 = vunpack.c.l.b16 %v214
    %v484 = vunpack.c.h.b16 %v214
    %v485 = vunpack.c.l.b16 %v215
    %v486 = vunpack.c.h.b16 %v215
    %v487 = vunpack.c.l.b16 %v216
    %v488 = vunpack.c.h.b16 %v216
    %v489 = vunpack.c.l.b16 %v217
    %v490 = vunpack.c.h.b16 %v217
    %v491 = vunpack.c.l.b16 %v218
    %v492 = vunpack.c.h.b16 %v218
    %v493 = vunpack.c.l.b16 %v219
    %v494 = vunpack.c.h.b16 %v219
    %v495 = vunpack.c.l.b16 %v220
    %v496 = vunpack.c.h.b16 %v220
    %v497 = vunpack.c.l.b16 %v221
    %v498 = vunpack.c.h.b16 %v221
    %v499 = vunpack.c.l.b16 %v222
    %v500 = vunpack.c.h.b16 %v222
    %v501 = vunpack.c.l.b16 %v223
    %v502 = vunpack.c.h.b16 %v223
    %v503 = vunpack.c.l.b16 %v224
    %v504 = vunpack.c.h.b16 %v224
    %v505 = vunpack.c.l.b16 %v225
    %v506 = vunpack.c.h.b16 %v225
    %v507 = vunpack.c.l.b16 %v226
    %v508 = vunpack.c.h.b16 %v226
    %v509 = vunpack.c.l.b16 %v227
    %v510 = vunpack.c.h.b16 %v227
    %v511 = vunpack.c.l.b16 %v228
    %v512 = vunpack.c.h.b16 %v228
    %v513 = vunpack.c.l.b16 %v229
    %v514 = vunpack.c.h.b16 %v229
    %v515 = vunpack.c.l.b16 %v230
    %v516 = vunpack.c.h.b16 %v230
    %v517 = vunpack.c.l.b16 %v231
    %v518 = vunpack.c.h.b16 %v231
    %v519 = vunpack.c.l.b16 %v232
    %v520 = vunpack.c.h.b16 %v232
    %v521 = vpack.c.b16 %v335, %v329
    %v522 = vpack.c.b16 %v336, %v330
    %v523 = vpack.c.b16 %v337, %v331
    %v524 = vpack.c.b16 %v338, %v332
    %v525 = vpack.c.b16 %v339, %v333
    %v526 = vpack.c.b16 %v340, %v334
    %v527 = vpack.c.b16 %v347, %v341
    %v528 = vpack.c.b16 %v348, %v342
    %v529 = vpack.c.b16 %v349, %v343
    %v530 = vpack.c.b16 %v350, %v344
    %v531 = vpack.c.b16 %v351, %v345
    %v532 = vpack.c.b16 %v352, %v346
    %v533 = vpack.c.b16 %v359, %v353
    %v534 = vpack.c.b16 %v360, %v354
    %v535 = vpack.c.b16 %v361, %v355
    %v536 = vpack.c.b16 %v362, %v356
    %v537 = vpack.c.b16 %v363, %v357
    %v538 = vpack.c.b16 %v364, %v358
    %v539 = vpack.c.b16 %v371, %v365
    %v540 = vpack.c.b16 %v372, %v366
    %v541 = vpack.c.b16 %v373, %v367
    %v542 = vpack.c.b16 %v374, %v368
    %v543 = vpack.c.b16 %v375, %v369
    %v544 = vpack.c.b16 %v376, %v370
    %v545 = vpack.c.b16 %v383, %v377
    %v546 = vpack.c.b16 %v384, %v378
    %v547 = vpack.c.b16 %v385, %v379
    %v548 = vpack.c.b16 %v386, %v380
    %v549 = vpack.c.b16 %v387, %v381
    %v550 = vpack.c.b16 %v388, %v382
    %v551 = vpack.c.b16 %v395, %v389
    %v552 = vpack.c.b16 %v396, %v390
    %v553 = vpack.c.b16 %v397, %v391
    %v554 = vpack.c.b16 %v398, %v392
    %v555 = vpack.c.b16 %v399, %v393
    %v556 = vpack.c.b16 %v400, %v394
    %v557 = vpack.c.b16 %v407, %v401
    %v558 = vpack.c.b16 %v408, %v402
    %v559 = vpack.c.b16 %v409, %v403
    %v560 = vpack.c.b16 %v410, %v404
    %v561 = vpack.c.b16 %v411, %v405
    %v562 = vpack.c.b16 %v412, %v406
    %v563 = vpack.c.b16 %v419, %v413
    %v564 = vpack.c.b16 %v420, %v414
    %v565 = vpack.c.b16 %v421, %v415
    %v566 = vpack.c.b16 %v422, %v416
    %v567 = vpack.c.b16 %v423, %v417
    %v568 = vpack.c.b16 %v424, %v418
    %v569 = vpack.c.b16 %v431, %v425
    %v570 = vpack.c.b16 %v432, %v426
    %v571 = vpack.c.b16 %v433, %v427
    %v572 = vpack.c.b16 %v434, %v428
    %v573 = vpack.c.b16 %v435, %v429
    %v574 = vpack.c.b16 %v436, %v430
    %v575 = vpack.c.b16 %v443, %v437
    %v576 = vpack.c.b16 %v444, %v438
    %v577 = vpack.c.b16 %v445, %v439
    %v578 = vpack.c.b16 %v446, %v440
    %v579 = vpack.c.b16 %v447, %v441
    %v580 = vpack.c.b16 %v448, %v442
    %v581 = vpack.c.b16 %v455, %v449
    %v582 = vpack.c.b16 %v456, %v450
    %v583 = vpack.c.b16 %v457, %v451
    %v584 = vpack.c.b16 %v458, %v452
    %v585 = vpack.c.b16 %v459, %v453
    %v586 = vpack.c.b16 %v460, %v454
    %v587 = vpack.c.b16 %v467, %v461
    %v588 = vpack.c.b16 %v468, %v462
    %v589 = vpack.c.b16 %v469, %v463
    %v590 = vpack.c.b16 %v470, %v464
    %v591 = vpack.c.b16 %v471, %v465
    %v592 = vpack.c.b16 %v472, %v466
    %v593 = vpack.c.b16 %v479, %v473
    %v594 = vpack.c.b16 %v480, %v474
    %v595 = vpack.c.b16 %v481, %v475
    %v596 = vpack.c.b16 %v482, %v476
    %v597 = vpack.c.b16 %v483, %v477
    %v598 = vpack.c.b16 %v484, %v478
    %v599 = vpack.c.b16 %v491, %v485
    %v600 = vpack.c.b16 %v492, %v486
    %v601 = vpack.c.b16 %v493, %v487
    %v602 = vpack.c.b16 %v494, %v488
    %v603 = vpack.c.b16 %v495, %v489
    %v604 = vpack.c.b16 %v496, %v490
    %v605 = vpack.c.b16 %v503, %v497
    %v606 = vpack.c.b16 %v504, %v498
    %v607 = vpack.c.b16 %v505, %v499
    %v608 = vpack.c.b16 %v506, %v500
    %v609 = vpack.c.b16 %v507, %v501
    %v610 = vpack.c.b16 %v508, %v502
    %v611 = vpack.c.b16 %v515, %v509
    %v612 = vpack.c.b16 %v516, %v510
    %v613 = vpack.c.b16 %v517, %v511
    %v614 = vpack.c.b16 %v518, %v512
    %v615 = vpack.c.b16 %v519, %v513
    %v616 = vpack.c.b16 %v520, %v514
    %713 = vmatprep.subr.bf16.mxu0 %v564
    %714 = vmatpush1.bf16.msra.mxu0 %v563
    %715 = vmatprep.subr.bf16.mxu0 %v558
    %716 = vmatpush1.bf16.msra.mxu0 %v557
    %717 = vmatprep.subr.bf16.mxu0 %v552
    %718 = vmatpush1.bf16.msra.mxu0 %v551
    %719 = vmatprep.subr.bf16.mxu0 %v546
    %720 = vmatpush1.bf16.msra.mxu0 %v545
    %721 = vmatprep.subr.bf16.mxu0 %v540
    %722 = vmatpush1.bf16.msra.mxu0 %v539
    %723 = vmatprep.subr.bf16.mxu0 %v534
    %724 = vmatpush1.bf16.msra.mxu0 %v533
    %725 = vmatprep.subr.bf16.mxu0 %v528
    %726 = vmatpush1.bf16.msra.mxu0 %v527
    %727 = vmatprep.subr.bf16.mxu0 %v522
    %728 = vmatpush1.bf16.msra.mxu0 %v521
    %729 = vmatprep.subr.bf16.mxu0 %v612
    %730 = vmatpush2.bf16.msra.mxu0 %v611
    %731 = vmatprep.subr.bf16.mxu0 %v606
    %732 = vmatpush2.bf16.msra.mxu0 %v605
    %733 = vmatprep.subr.bf16.mxu0 %v600
    %734 = vmatpush2.bf16.msra.mxu0 %v599
    %735 = vmatprep.subr.bf16.mxu0 %v594
    %736 = vmatpush2.bf16.msra.mxu0 %v593
    %737 = vmatprep.subr.bf16.mxu0 %v588
    %738 = vmatpush2.bf16.msra.mxu0 %v587
    %739 = vmatprep.subr.bf16.mxu0 %v582
    %740 = vmatpush2.bf16.msra.mxu0 %v581
    %741 = vmatprep.subr.bf16.mxu0 %v576
    %742 = vmatpush2.bf16.msra.mxu0 %v575
    %743 = vmatprep.subr.bf16.mxu0 %v570
    %744 = vmatpush2.bf16.msra.mxu0 %v569
    %745 = vmatprep.mubr.bf16.mxu0 %v106
    %746 = vmatmul.mubr.bf16.gmra.mxu0 %v105
    %v747 = vpop.f32.mrf.mxu0
    %v748 = vadd.f32 0.0, %v747
    %v749 = vpop.f32.mrf.mxu0
    %v750 = vadd.f32 0.0, %v749
    %v751 = vpop.f32.mrf.mxu0
    %v752 = vadd.f32 0.0, %v751
    %v753 = vpop.f32.mrf.mxu0
    %v754 = vadd.f32 0.0, %v753
    %755 = vmatprep.mubr.bf16.mxu0 %v108
    %756 = vmatmul.mubr.bf16.gmra.mxu0 %v107
    %v757 = vpop.f32.mrf.mxu0
    %v758 = vadd.f32 0.0, %v757
    %v759 = vpop.f32.mrf.mxu0
    %v760 = vadd.f32 0.0, %v759
    %v761 = vpop.f32.mrf.mxu0
    %v762 = vadd.f32 0.0, %v761
    %v763 = vpop.f32.mrf.mxu0
    %v764 = vadd.f32 0.0, %v763
    %765 = vmatprep.mubr.bf16.mxu0 %v110
    %766 = vmatmul.mubr.bf16.gmra.mxu0 %v109
    %v767 = vpop.f32.mrf.mxu0
    %v768 = vadd.f32 0.0, %v767
    %v769 = vpop.f32.mrf.mxu0
    %v770 = vadd.f32 0.0, %v769
    %v771 = vpop.f32.mrf.mxu0
    %v772 = vadd.f32 0.0, %v771
    %v773 = vpop.f32.mrf.mxu0
    %v774 = vadd.f32 0.0, %v773
    %775 = vmatprep.mubr.bf16.mxu0 %v112
    %776 = vmatmul.mubr.bf16.gmra.mxu0 %v111
    %v777 = vpop.f32.mrf.mxu0
    %v778 = vadd.f32 0.0, %v777
    %v779 = vpop.f32.mrf.mxu0
    %v780 = vadd.f32 0.0, %v779
    %v781 = vpop.f32.mrf.mxu0
    %v782 = vadd.f32 0.0, %v781
    %v783 = vpop.f32.mrf.mxu0
    %v784 = vadd.f32 0.0, %v783
    %785 = vmatprep.mubr.bf16.mxu0 %v114
    %786 = vmatmul.mubr.bf16.gmra.mxu0 %v113
    %v787 = vpop.f32.mrf.mxu0
    %v788 = vadd.f32 0.0, %v787
    %v789 = vpop.f32.mrf.mxu0
    %v790 = vadd.f32 0.0, %v789
    %v791 = vpop.f32.mrf.mxu0
    %v792 = vadd.f32 0.0, %v791
    %v793 = vpop.f32.mrf.mxu0
    %v794 = vadd.f32 0.0, %v793
    %795 = vmatprep.mubr.bf16.mxu0 %v116
    %796 = vmatmul.mubr.bf16.gmra.mxu0 %v115
    %v797 = vpop.f32.mrf.mxu0
    %v798 = vadd.f32 0.0, %v797
    %v799 = vpop.f32.mrf.mxu0
    %v800 = vadd.f32 0.0, %v799
    %v801 = vpop.f32.mrf.mxu0
    %v802 = vadd.f32 0.0, %v801
    %v803 = vpop.f32.mrf.mxu0
    %v804 = vadd.f32 0.0, %v803
    %805 = vmatprep.mubr.bf16.mxu0 %v118
    %806 = vmatmul.mubr.bf16.gmra.mxu0 %v117
    %v807 = vpop.f32.mrf.mxu0
    %v808 = vadd.f32 0.0, %v807
    %v809 = vpop.f32.mrf.mxu0
    %v810 = vadd.f32 0.0, %v809
    %v811 = vpop.f32.mrf.mxu0
    %v812 = vadd.f32 0.0, %v811
    %v813 = vpop.f32.mrf.mxu0
    %v814 = vadd.f32 0.0, %v813
    %815 = vmatprep.mubr.bf16.mxu0 %v120
    %816 = vmatmul.mubr.bf16.gmra.mxu0 %v119
    %v817 = vpop.f32.mrf.mxu0
    %v818 = vadd.f32 0.0, %v817
    %v819 = vpop.f32.mrf.mxu0
    %v820 = vadd.f32 0.0, %v819
    %v821 = vpop.f32.mrf.mxu0
    %v822 = vadd.f32 0.0, %v821
    %v823 = vpop.f32.mrf.mxu0
    %v824 = vadd.f32 0.0, %v823
    %825 = vmatprep.mubr.bf16.mxu0 %v122
    %826 = vmatmul.mubr.bf16.gmra.mxu0 %v121
    %v827 = vpop.f32.mrf.mxu0
    %v828 = vadd.f32 0.0, %v827
    %v829 = vpop.f32.mrf.mxu0
    %v830 = vadd.f32 0.0, %v829
    %v831 = vpop.f32.mrf.mxu0
    %v832 = vadd.f32 0.0, %v831
    %v833 = vpop.f32.mrf.mxu0
    %v834 = vadd.f32 0.0, %v833
    %835 = vmatprep.mubr.bf16.mxu0 %v124
    %836 = vmatmul.mubr.bf16.gmra.mxu0 %v123
    %v837 = vpop.f32.mrf.mxu0
    %v838 = vadd.f32 0.0, %v837
    %v839 = vpop.f32.mrf.mxu0
    %v840 = vadd.f32 0.0, %v839
    %v841 = vpop.f32.mrf.mxu0
    %v842 = vadd.f32 0.0, %v841
    %v843 = vpop.f32.mrf.mxu0
    %v844 = vadd.f32 0.0, %v843
    %845 = vmatprep.mubr.bf16.mxu0 %v126
    %846 = vmatmul.mubr.bf16.gmra.mxu0 %v125
    %v847 = vpop.f32.mrf.mxu0
    %v848 = vadd.f32 0.0, %v847
    %v849 = vpop.f32.mrf.mxu0
    %v850 = vadd.f32 0.0, %v849
    %v851 = vpop.f32.mrf.mxu0
    %v852 = vadd.f32 0.0, %v851
    %v853 = vpop.f32.mrf.mxu0
    %v854 = vadd.f32 0.0, %v853
    %855 = vmatprep.mubr.bf16.mxu0 %v128
    %856 = vmatmul.mubr.bf16.gmra.mxu0 %v127
    %v857 = vpop.f32.mrf.mxu0
    %v858 = vadd.f32 0.0, %v857
    %v859 = vpop.f32.mrf.mxu0
    %v860 = vadd.f32 0.0, %v859
    %v861 = vpop.f32.mrf.mxu0
    %v862 = vadd.f32 0.0, %v861
    %v863 = vpop.f32.mrf.mxu0
    %v864 = vadd.f32 0.0, %v863
    %865 = vmatprep.mubr.bf16.mxu0 %v130
    %866 = vmatmul.mubr.bf16.gmra.mxu0 %v129
    %v867 = vpop.f32.mrf.mxu0
    %v868 = vadd.f32 0.0, %v867
    %v869 = vpop.f32.mrf.mxu0
    %v870 = vadd.f32 0.0, %v869
    %v871 = vpop.f32.mrf.mxu0
    %v872 = vadd.f32 0.0, %v871
    %v873 = vpop.f32.mrf.mxu0
    %v874 = vadd.f32 0.0, %v873
    %875 = vmatprep.mubr.bf16.mxu0 %v132
    %876 = vmatmul.mubr.bf16.gmra.mxu0 %v131
    %v877 = vpop.f32.mrf.mxu0
    %v878 = vadd.f32 0.0, %v877
    %v879 = vpop.f32.mrf.mxu0
    %v880 = vadd.f32 0.0, %v879
    %v881 = vpop.f32.mrf.mxu0
    %v882 = vadd.f32 0.0, %v881
    %v883 = vpop.f32.mrf.mxu0
    %v884 = vadd.f32 0.0, %v883
    %885 = vmatprep.mubr.bf16.mxu0 %v134
    %886 = vmatmul.mubr.bf16.gmra.mxu0 %v133
    %v887 = vpop.f32.mrf.mxu0
    %v888 = vadd.f32 0.0, %v887
    %v889 = vpop.f32.mrf.mxu0
    %v890 = vadd.f32 0.0, %v889
    %v891 = vpop.f32.mrf.mxu0
    %v892 = vadd.f32 0.0, %v891
    %v893 = vpop.f32.mrf.mxu0
    %v894 = vadd.f32 0.0, %v893
    %895 = vmatprep.mubr.bf16.mxu0 %v136
    %896 = vmatmul.mubr.bf16.gmra.mxu0 %v135
    %v897 = vpop.f32.mrf.mxu0
    %v898 = vadd.f32 0.0, %v897
    %v899 = vpop.f32.mrf.mxu0
    %v900 = vadd.f32 0.0, %v899
    %v901 = vpop.f32.mrf.mxu0
    %v902 = vadd.f32 0.0, %v901
    %v903 = vpop.f32.mrf.mxu0
    %v904 = vadd.f32 0.0, %v903
    %905 = vdwg.mxu0
    %906 = vmatprep.subr.bf16.mxu0 %v566
    %907 = vmatpush1.bf16.msra.mxu0 %v565
    %908 = vmatprep.subr.bf16.mxu0 %v560
    %909 = vmatpush1.bf16.msra.mxu0 %v559
    %910 = vmatprep.subr.bf16.mxu0 %v554
    %911 = vmatpush1.bf16.msra.mxu0 %v553
    %912 = vmatprep.subr.bf16.mxu0 %v548
    %913 = vmatpush1.bf16.msra.mxu0 %v547
    %914 = vmatprep.subr.bf16.mxu0 %v542
    %915 = vmatpush1.bf16.msra.mxu0 %v541
    %916 = vmatprep.subr.bf16.mxu0 %v536
    %917 = vmatpush1.bf16.msra.mxu0 %v535
    %918 = vmatprep.subr.bf16.mxu0 %v530
    %919 = vmatpush1.bf16.msra.mxu0 %v529
    %920 = vmatprep.subr.bf16.mxu0 %v524
    %921 = vmatpush1.bf16.msra.mxu0 %v523
    %922 = vmatprep.subr.bf16.mxu0 %v614
    %923 = vmatpush2.bf16.msra.mxu0 %v613
    %924 = vmatprep.subr.bf16.mxu0 %v608
    %925 = vmatpush2.bf16.msra.mxu0 %v607
    %926 = vmatprep.subr.bf16.mxu0 %v602
    %927 = vmatpush2.bf16.msra.mxu0 %v601
    %928 = vmatprep.subr.bf16.mxu0 %v596
    %929 = vmatpush2.bf16.msra.mxu0 %v595
    %930 = vmatprep.subr.bf16.mxu0 %v590
    %931 = vmatpush2.bf16.msra.mxu0 %v589
    %932 = vmatprep.subr.bf16.mxu0 %v584
    %933 = vmatpush2.bf16.msra.mxu0 %v583
    %934 = vmatprep.subr.bf16.mxu0 %v578
    %935 = vmatpush2.bf16.msra.mxu0 %v577
    %936 = vmatprep.subr.bf16.mxu0 %v572
    %937 = vmatpush2.bf16.msra.mxu0 %v571
    %938 = vmatprep.mubr.bf16.mxu0 %v106
    %939 = vmatmul.mubr.bf16.gmra.mxu0 %v105
    %v940 = vpop.f32.mrf.mxu0
    %v941 = vadd.f32 0.0, %v940
    %v942 = vpop.f32.mrf.mxu0
    %v943 = vadd.f32 0.0, %v942
    %v944 = vpop.f32.mrf.mxu0
    %v945 = vadd.f32 0.0, %v944
    %v946 = vpop.f32.mrf.mxu0
    %v947 = vadd.f32 0.0, %v946
    %948 = vmatprep.mubr.bf16.mxu0 %v108
    %949 = vmatmul.mubr.bf16.gmra.mxu0 %v107
    %v950 = vpop.f32.mrf.mxu0
    %v951 = vadd.f32 0.0, %v950
    %v952 = vpop.f32.mrf.mxu0
    %v953 = vadd.f32 0.0, %v952
    %v954 = vpop.f32.mrf.mxu0
    %v955 = vadd.f32 0.0, %v954
    %v956 = vpop.f32.mrf.mxu0
    %v957 = vadd.f32 0.0, %v956
    %958 = vmatprep.mubr.bf16.mxu0 %v110
    %959 = vmatmul.mubr.bf16.gmra.mxu0 %v109
    %v960 = vpop.f32.mrf.mxu0
    %v961 = vadd.f32 0.0, %v960
    %v962 = vpop.f32.mrf.mxu0
    %v963 = vadd.f32 0.0, %v962
    %v964 = vpop.f32.mrf.mxu0
    %v965 = vadd.f32 0.0, %v964
    %v966 = vpop.f32.mrf.mxu0
    %v967 = vadd.f32 0.0, %v966
    %968 = vmatprep.mubr.bf16.mxu0 %v112
    %969 = vmatmul.mubr.bf16.gmra.mxu0 %v111
    %v970 = vpop.f32.mrf.mxu0
    %v971 = vadd.f32 0.0, %v970
    %v972 = vpop.f32.mrf.mxu0
    %v973 = vadd.f32 0.0, %v972
    %v974 = vpop.f32.mrf.mxu0
    %v975 = vadd.f32 0.0, %v974
    %v976 = vpop.f32.mrf.mxu0
    %v977 = vadd.f32 0.0, %v976
    %978 = vmatprep.mubr.bf16.mxu0 %v114
    %979 = vmatmul.mubr.bf16.gmra.mxu0 %v113
    %v980 = vpop.f32.mrf.mxu0
    %v981 = vadd.f32 0.0, %v980
    %v982 = vpop.f32.mrf.mxu0
    %v983 = vadd.f32 0.0, %v982
    %v984 = vpop.f32.mrf.mxu0
    %v985 = vadd.f32 0.0, %v984
    %v986 = vpop.f32.mrf.mxu0
    %v987 = vadd.f32 0.0, %v986
    %988 = vmatprep.mubr.bf16.mxu0 %v116
    %989 = vmatmul.mubr.bf16.gmra.mxu0 %v115
    %v990 = vpop.f32.mrf.mxu0
    %v991 = vadd.f32 0.0, %v990
    %v992 = vpop.f32.mrf.mxu0
    %v993 = vadd.f32 0.0, %v992
    %v994 = vpop.f32.mrf.mxu0
    %v995 = vadd.f32 0.0, %v994
    %v996 = vpop.f32.mrf.mxu0
    %v997 = vadd.f32 0.0, %v996
    %998 = vmatprep.mubr.bf16.mxu0 %v118
    %999 = vmatmul.mubr.bf16.gmra.mxu0 %v117
    %v1000 = vpop.f32.mrf.mxu0
    %v1001 = vadd.f32 0.0, %v1000
    %v1002 = vpop.f32.mrf.mxu0
    %v1003 = vadd.f32 0.0, %v1002
    %v1004 = vpop.f32.mrf.mxu0
    %v1005 = vadd.f32 0.0, %v1004
    %v1006 = vpop.f32.mrf.mxu0
    %v1007 = vadd.f32 0.0, %v1006
    %1008 = vmatprep.mubr.bf16.mxu0 %v120
    %1009 = vmatmul.mubr.bf16.gmra.mxu0 %v119
    %v1010 = vpop.f32.mrf.mxu0
    %v1011 = vadd.f32 0.0, %v1010
    %v1012 = vpop.f32.mrf.mxu0
    %v1013 = vadd.f32 0.0, %v1012
    %v1014 = vpop.f32.mrf.mxu0
    %v1015 = vadd.f32 0.0, %v1014
    %v1016 = vpop.f32.mrf.mxu0
    %v1017 = vadd.f32 0.0, %v1016
    %1018 = vmatprep.mubr.bf16.mxu0 %v122
    %1019 = vmatmul.mubr.bf16.gmra.mxu0 %v121
    %v1020 = vpop.f32.mrf.mxu0
    %v1021 = vadd.f32 0.0, %v1020
    %v1022 = vpop.f32.mrf.mxu0
    %v1023 = vadd.f32 0.0, %v1022
    %v1024 = vpop.f32.mrf.mxu0
    %v1025 = vadd.f32 0.0, %v1024
    %v1026 = vpop.f32.mrf.mxu0
    %v1027 = vadd.f32 0.0, %v1026
    %1028 = vmatprep.mubr.bf16.mxu0 %v124
    %1029 = vmatmul.mubr.bf16.gmra.mxu0 %v123
    %v1030 = vpop.f32.mrf.mxu0
    %v1031 = vadd.f32 0.0, %v1030
    %v1032 = vpop.f32.mrf.mxu0
    %v1033 = vadd.f32 0.0, %v1032
    %v1034 = vpop.f32.mrf.mxu0
    %v1035 = vadd.f32 0.0, %v1034
    %v1036 = vpop.f32.mrf.mxu0
    %v1037 = vadd.f32 0.0, %v1036
    %1038 = vmatprep.mubr.bf16.mxu0 %v126
    %1039 = vmatmul.mubr.bf16.gmra.mxu0 %v125
    %v1040 = vpop.f32.mrf.mxu0
    %v1041 = vadd.f32 0.0, %v1040
    %v1042 = vpop.f32.mrf.mxu0
    %v1043 = vadd.f32 0.0, %v1042
    %v1044 = vpop.f32.mrf.mxu0
    %v1045 = vadd.f32 0.0, %v1044
    %v1046 = vpop.f32.mrf.mxu0
    %v1047 = vadd.f32 0.0, %v1046
    %1048 = vmatprep.mubr.bf16.mxu0 %v128
    %1049 = vmatmul.mubr.bf16.gmra.mxu0 %v127
    %v1050 = vpop.f32.mrf.mxu0
    %v1051 = vadd.f32 0.0, %v1050
    %v1052 = vpop.f32.mrf.mxu0
    %v1053 = vadd.f32 0.0, %v1052
    %v1054 = vpop.f32.mrf.mxu0
    %v1055 = vadd.f32 0.0, %v1054
    %v1056 = vpop.f32.mrf.mxu0
    %v1057 = vadd.f32 0.0, %v1056
    %1058 = vmatprep.mubr.bf16.mxu0 %v130
    %1059 = vmatmul.mubr.bf16.gmra.mxu0 %v129
    %v1060 = vpop.f32.mrf.mxu0
    %v1061 = vadd.f32 0.0, %v1060
    %v1062 = vpop.f32.mrf.mxu0
    %v1063 = vadd.f32 0.0, %v1062
    %v1064 = vpop.f32.mrf.mxu0
    %v1065 = vadd.f32 0.0, %v1064
    %v1066 = vpop.f32.mrf.mxu0
    %v1067 = vadd.f32 0.0, %v1066
    %1068 = vmatprep.mubr.bf16.mxu0 %v132
    %1069 = vmatmul.mubr.bf16.gmra.mxu0 %v131
    %v1070 = vpop.f32.mrf.mxu0
    %v1071 = vadd.f32 0.0, %v1070
    %v1072 = vpop.f32.mrf.mxu0
    %v1073 = vadd.f32 0.0, %v1072
    %v1074 = vpop.f32.mrf.mxu0
    %v1075 = vadd.f32 0.0, %v1074
    %v1076 = vpop.f32.mrf.mxu0
    %v1077 = vadd.f32 0.0, %v1076
    %1078 = vmatprep.mubr.bf16.mxu0 %v134
    %1079 = vmatmul.mubr.bf16.gmra.mxu0 %v133
    %v1080 = vpop.f32.mrf.mxu0
    %v1081 = vadd.f32 0.0, %v1080
    %v1082 = vpop.f32.mrf.mxu0
    %v1083 = vadd.f32 0.0, %v1082
    %v1084 = vpop.f32.mrf.mxu0
    %v1085 = vadd.f32 0.0, %v1084
    %v1086 = vpop.f32.mrf.mxu0
    %v1087 = vadd.f32 0.0, %v1086
    %1088 = vmatprep.mubr.bf16.mxu0 %v136
    %1089 = vmatmul.mubr.bf16.gmra.mxu0 %v135
    %v1090 = vpop.f32.mrf.mxu0
    %v1091 = vadd.f32 0.0, %v1090
    %v1092 = vpop.f32.mrf.mxu0
    %v1093 = vadd.f32 0.0, %v1092
    %v1094 = vpop.f32.mrf.mxu0
    %v1095 = vadd.f32 0.0, %v1094
    %v1096 = vpop.f32.mrf.mxu0
    %v1097 = vadd.f32 0.0, %v1096
    %1098 = vdwg.mxu0
    %1099 = vmatprep.subr.bf16.mxu0 %v568
    %1100 = vmatpush1.bf16.msra.mxu0 %v567
    %1101 = vmatprep.subr.bf16.mxu0 %v562
    %1102 = vmatpush1.bf16.msra.mxu0 %v561
    %1103 = vmatprep.subr.bf16.mxu0 %v556
    %1104 = vmatpush1.bf16.msra.mxu0 %v555
    %1105 = vmatprep.subr.bf16.mxu0 %v550
    %1106 = vmatpush1.bf16.msra.mxu0 %v549
    %1107 = vmatprep.subr.bf16.mxu0 %v544
    %1108 = vmatpush1.bf16.msra.mxu0 %v543
    %1109 = vmatprep.subr.bf16.mxu0 %v538
    %1110 = vmatpush1.bf16.msra.mxu0 %v537
    %1111 = vmatprep.subr.bf16.mxu0 %v532
    %1112 = vmatpush1.bf16.msra.mxu0 %v531
    %1113 = vmatprep.subr.bf16.mxu0 %v526
    %1114 = vmatpush1.bf16.msra.mxu0 %v525
    %1115 = vmatprep.subr.bf16.mxu0 %v616
    %1116 = vmatpush2.bf16.msra.mxu0 %v615
    %1117 = vmatprep.subr.bf16.mxu0 %v610
    %1118 = vmatpush2.bf16.msra.mxu0 %v609
    %1119 = vmatprep.subr.bf16.mxu0 %v604
    %1120 = vmatpush2.bf16.msra.mxu0 %v603
    %1121 = vmatprep.subr.bf16.mxu0 %v598
    %1122 = vmatpush2.bf16.msra.mxu0 %v597
    %1123 = vmatprep.subr.bf16.mxu0 %v592
    %1124 = vmatpush2.bf16.msra.mxu0 %v591
    %1125 = vmatprep.subr.bf16.mxu0 %v586
    %1126 = vmatpush2.bf16.msra.mxu0 %v585
    %1127 = vmatprep.subr.bf16.mxu0 %v580
    %1128 = vmatpush2.bf16.msra.mxu0 %v579
    %1129 = vmatprep.subr.bf16.mxu0 %v574
    %1130 = vmatpush2.bf16.msra.mxu0 %v573
    %1131 = vmatprep.mubr.bf16.mxu0 %v106
    %1132 = vmatmul.mubr.bf16.gmra.mxu0 %v105
    %v1133 = vpop.f32.mrf.mxu0
    %v1134 = vadd.f32 0.0, %v1133
    %v1135 = vpop.f32.mrf.mxu0
    %v1136 = vadd.f32 0.0, %v1135
    %v1137 = vpop.f32.mrf.mxu0
    %v1138 = vadd.f32 0.0, %v1137
    %v1139 = vpop.f32.mrf.mxu0
    %v1140 = vadd.f32 0.0, %v1139
    %1141 = vmatprep.mubr.bf16.mxu0 %v108
    %1142 = vmatmul.mubr.bf16.gmra.mxu0 %v107
    %v1143 = vpop.f32.mrf.mxu0
    %v1144 = vadd.f32 0.0, %v1143
    %v1145 = vpop.f32.mrf.mxu0
    %v1146 = vadd.f32 0.0, %v1145
    %v1147 = vpop.f32.mrf.mxu0
    %v1148 = vadd.f32 0.0, %v1147
    %v1149 = vpop.f32.mrf.mxu0
    %v1150 = vadd.f32 0.0, %v1149
    %1151 = vmatprep.mubr.bf16.mxu0 %v110
    %1152 = vmatmul.mubr.bf16.gmra.mxu0 %v109
    %v1153 = vpop.f32.mrf.mxu0
    %v1154 = vadd.f32 0.0, %v1153
    %v1155 = vpop.f32.mrf.mxu0
    %v1156 = vadd.f32 0.0, %v1155
    %v1157 = vpop.f32.mrf.mxu0
    %v1158 = vadd.f32 0.0, %v1157
    %v1159 = vpop.f32.mrf.mxu0
    %v1160 = vadd.f32 0.0, %v1159
    %1161 = vmatprep.mubr.bf16.mxu0 %v112
    %1162 = vmatmul.mubr.bf16.gmra.mxu0 %v111
    %v1163 = vpop.f32.mrf.mxu0
    %v1164 = vadd.f32 0.0, %v1163
    %v1165 = vpop.f32.mrf.mxu0
    %v1166 = vadd.f32 0.0, %v1165
    %v1167 = vpop.f32.mrf.mxu0
    %v1168 = vadd.f32 0.0, %v1167
    %v1169 = vpop.f32.mrf.mxu0
    %v1170 = vadd.f32 0.0, %v1169
    %1171 = vmatprep.mubr.bf16.mxu0 %v114
    %1172 = vmatmul.mubr.bf16.gmra.mxu0 %v113
    %v1173 = vpop.f32.mrf.mxu0
    %v1174 = vadd.f32 0.0, %v1173
    %v1175 = vpop.f32.mrf.mxu0
    %v1176 = vadd.f32 0.0, %v1175
    %v1177 = vpop.f32.mrf.mxu0
    %v1178 = vadd.f32 0.0, %v1177
    %v1179 = vpop.f32.mrf.mxu0
    %v1180 = vadd.f32 0.0, %v1179
    %1181 = vmatprep.mubr.bf16.mxu0 %v116
    %1182 = vmatmul.mubr.bf16.gmra.mxu0 %v115
    %v1183 = vpop.f32.mrf.mxu0
    %v1184 = vadd.f32 0.0, %v1183
    %v1185 = vpop.f32.mrf.mxu0
    %v1186 = vadd.f32 0.0, %v1185
    %v1187 = vpop.f32.mrf.mxu0
    %v1188 = vadd.f32 0.0, %v1187
    %v1189 = vpop.f32.mrf.mxu0
    %v1190 = vadd.f32 0.0, %v1189
    %1191 = vmatprep.mubr.bf16.mxu0 %v118
    %1192 = vmatmul.mubr.bf16.gmra.mxu0 %v117
    %v1193 = vpop.f32.mrf.mxu0
    %v1194 = vadd.f32 0.0, %v1193
    %v1195 = vpop.f32.mrf.mxu0
    %v1196 = vadd.f32 0.0, %v1195
    %v1197 = vpop.f32.mrf.mxu0
    %v1198 = vadd.f32 0.0, %v1197
    %v1199 = vpop.f32.mrf.mxu0
    %v1200 = vadd.f32 0.0, %v1199
    %1201 = vmatprep.mubr.bf16.mxu0 %v120
    %1202 = vmatmul.mubr.bf16.gmra.mxu0 %v119
    %v1203 = vpop.f32.mrf.mxu0
    %v1204 = vadd.f32 0.0, %v1203
    %v1205 = vpop.f32.mrf.mxu0
    %v1206 = vadd.f32 0.0, %v1205
    %v1207 = vpop.f32.mrf.mxu0
    %v1208 = vadd.f32 0.0, %v1207
    %v1209 = vpop.f32.mrf.mxu0
    %v1210 = vadd.f32 0.0, %v1209
    %1211 = vmatprep.mubr.bf16.mxu0 %v122
    %1212 = vmatmul.mubr.bf16.gmra.mxu0 %v121
    %v1213 = vpop.f32.mrf.mxu0
    %v1214 = vadd.f32 0.0, %v1213
    %v1215 = vpop.f32.mrf.mxu0
    %v1216 = vadd.f32 0.0, %v1215
    %v1217 = vpop.f32.mrf.mxu0
    %v1218 = vadd.f32 0.0, %v1217
    %v1219 = vpop.f32.mrf.mxu0
    %v1220 = vadd.f32 0.0, %v1219
    %1221 = vmatprep.mubr.bf16.mxu0 %v124
    %1222 = vmatmul.mubr.bf16.gmra.mxu0 %v123
    %v1223 = vpop.f32.mrf.mxu0
    %v1224 = vadd.f32 0.0, %v1223
    %v1225 = vpop.f32.mrf.mxu0
    %v1226 = vadd.f32 0.0, %v1225
    %v1227 = vpop.f32.mrf.mxu0
    %v1228 = vadd.f32 0.0, %v1227
    %v1229 = vpop.f32.mrf.mxu0
    %v1230 = vadd.f32 0.0, %v1229
    %1231 = vmatprep.mubr.bf16.mxu0 %v126
    %1232 = vmatmul.mubr.bf16.gmra.mxu0 %v125
    %v1233 = vpop.f32.mrf.mxu0
    %v1234 = vadd.f32 0.0, %v1233
    %v1235 = vpop.f32.mrf.mxu0
    %v1236 = vadd.f32 0.0, %v1235
    %v1237 = vpop.f32.mrf.mxu0
    %v1238 = vadd.f32 0.0, %v1237
    %v1239 = vpop.f32.mrf.mxu0
    %v1240 = vadd.f32 0.0, %v1239
    %1241 = vmatprep.mubr.bf16.mxu0 %v128
    %1242 = vmatmul.mubr.bf16.gmra.mxu0 %v127
    %v1243 = vpop.f32.mrf.mxu0
    %v1244 = vadd.f32 0.0, %v1243
    %v1245 = vpop.f32.mrf.mxu0
    %v1246 = vadd.f32 0.0, %v1245
    %v1247 = vpop.f32.mrf.mxu0
    %v1248 = vadd.f32 0.0, %v1247
    %v1249 = vpop.f32.mrf.mxu0
    %v1250 = vadd.f32 0.0, %v1249
    %1251 = vmatprep.mubr.bf16.mxu0 %v130
    %1252 = vmatmul.mubr.bf16.gmra.mxu0 %v129
    %v1253 = vpop.f32.mrf.mxu0
    %v1254 = vadd.f32 0.0, %v1253
    %v1255 = vpop.f32.mrf.mxu0
    %v1256 = vadd.f32 0.0, %v1255
    %v1257 = vpop.f32.mrf.mxu0
    %v1258 = vadd.f32 0.0, %v1257
    %v1259 = vpop.f32.mrf.mxu0
    %v1260 = vadd.f32 0.0, %v1259
    %1261 = vmatprep.mubr.bf16.mxu0 %v132
    %1262 = vmatmul.mubr.bf16.gmra.mxu0 %v131
    %v1263 = vpop.f32.mrf.mxu0
    %v1264 = vadd.f32 0.0, %v1263
    %v1265 = vpop.f32.mrf.mxu0
    %v1266 = vadd.f32 0.0, %v1265
    %v1267 = vpop.f32.mrf.mxu0
    %v1268 = vadd.f32 0.0, %v1267
    %v1269 = vpop.f32.mrf.mxu0
    %v1270 = vadd.f32 0.0, %v1269
    %1271 = vmatprep.mubr.bf16.mxu0 %v134
    %1272 = vmatmul.mubr.bf16.gmra.mxu0 %v133
    %v1273 = vpop.f32.mrf.mxu0
    %v1274 = vadd.f32 0.0, %v1273
    %v1275 = vpop.f32.mrf.mxu0
    %v1276 = vadd.f32 0.0, %v1275
    %v1277 = vpop.f32.mrf.mxu0
    %v1278 = vadd.f32 0.0, %v1277
    %v1279 = vpop.f32.mrf.mxu0
    %v1280 = vadd.f32 0.0, %v1279
    %1281 = vmatprep.mubr.bf16.mxu0 %v136
    %1282 = vmatmul.mubr.bf16.gmra.mxu0 %v135
    %v1283 = vpop.f32.mrf.mxu0
    %v1284 = vadd.f32 0.0, %v1283
    %v1285 = vpop.f32.mrf.mxu0
    %v1286 = vadd.f32 0.0, %v1285
    %v1287 = vpop.f32.mrf.mxu0
    %v1288 = vadd.f32 0.0, %v1287
    %v1289 = vpop.f32.mrf.mxu0
    %v1290 = vadd.f32 0.0, %v1289
    %1291 = vdwg.mxu0
    %v1292 = vpack.c.bf16 %v752, %v748
    %v1293 = vpack.c.bf16 %v754, %v750
    %v1294 = vpack.c.bf16 %v945, %v941
    %v1295 = vpack.c.bf16 %v947, %v943
    %v1296 = vpack.c.bf16 %v762, %v758
    %v1297 = vpack.c.bf16 %v764, %v760
    %v1298 = vpack.c.bf16 %v955, %v951
    %v1299 = vpack.c.bf16 %v957, %v953
    %v1300 = vpack.c.bf16 %v772, %v768
    %v1301 = vpack.c.bf16 %v774, %v770
    %v1302 = vpack.c.bf16 %v965, %v961
    %v1303 = vpack.c.bf16 %v967, %v963
    %v1304 = vpack.c.bf16 %v782, %v778
    %v1305 = vpack.c.bf16 %v784, %v780
    %v1306 = vpack.c.bf16 %v975, %v971
    %v1307 = vpack.c.bf16 %v977, %v973
    %v1308 = vpack.c.bf16 %v792, %v788
    %v1309 = vpack.c.bf16 %v794, %v790
    %v1310 = vpack.c.bf16 %v985, %v981
    %v1311 = vpack.c.bf16 %v987, %v983
    %v1312 = vpack.c.bf16 %v802, %v798
    %v1313 = vpack.c.bf16 %v804, %v800
    %v1314 = vpack.c.bf16 %v995, %v991
    %v1315 = vpack.c.bf16 %v997, %v993
    %v1316 = vpack.c.bf16 %v812, %v808
    %v1317 = vpack.c.bf16 %v814, %v810
    %v1318 = vpack.c.bf16 %v1005, %v1001
    %v1319 = vpack.c.bf16 %v1007, %v1003
    %v1320 = vpack.c.bf16 %v822, %v818
    %v1321 = vpack.c.bf16 %v824, %v820
    %v1322 = vpack.c.bf16 %v1015, %v1011
    %v1323 = vpack.c.bf16 %v1017, %v1013
    %v1324 = vpack.c.bf16 %v832, %v828
    %v1325 = vpack.c.bf16 %v834, %v830
    %v1326 = vpack.c.bf16 %v1025, %v1021
    %v1327 = vpack.c.bf16 %v1027, %v1023
    %v1328 = vpack.c.bf16 %v842, %v838
    %v1329 = vpack.c.bf16 %v844, %v840
    %v1330 = vpack.c.bf16 %v1035, %v1031
    %v1331 = vpack.c.bf16 %v1037, %v1033
    %v1332 = vpack.c.bf16 %v852, %v848
    %v1333 = vpack.c.bf16 %v854, %v850
    %v1334 = vpack.c.bf16 %v1045, %v1041
    %v1335 = vpack.c.bf16 %v1047, %v1043
    %v1336 = vpack.c.bf16 %v862, %v858
    %v1337 = vpack.c.bf16 %v864, %v860
    %v1338 = vpack.c.bf16 %v1055, %v1051
    %v1339 = vpack.c.bf16 %v1057, %v1053
    %v1340 = vpack.c.bf16 %v872, %v868
    %v1341 = vpack.c.bf16 %v874, %v870
    %v1342 = vpack.c.bf16 %v1065, %v1061
    %v1343 = vpack.c.bf16 %v1067, %v1063
    %v1344 = vpack.c.bf16 %v882, %v878
    %v1345 = vpack.c.bf16 %v884, %v880
    %v1346 = vpack.c.bf16 %v1075, %v1071
    %v1347 = vpack.c.bf16 %v1077, %v1073
    %v1348 = vpack.c.bf16 %v892, %v888
    %v1349 = vpack.c.bf16 %v894, %v890
    %v1350 = vpack.c.bf16 %v1085, %v1081
    %v1351 = vpack.c.bf16 %v1087, %v1083
    %v1352 = vpack.c.bf16 %v902, %v898
    %v1353 = vpack.c.bf16 %v904, %v900
    %v1354 = vpack.c.bf16 %v1095, %v1091
    %v1355 = vpack.c.bf16 %v1097, %v1093
    %v1356 = vpack.c.bf16 %v1138, %v1134
    %v1357 = vpack.c.bf16 %v1140, %v1136
    %v1358 = vpack.c.bf16 %v1148, %v1144
    %v1359 = vpack.c.bf16 %v1150, %v1146
    %v1360 = vpack.c.bf16 %v1158, %v1154
    %v1361 = vpack.c.bf16 %v1160, %v1156
    %v1362 = vpack.c.bf16 %v1168, %v1164
    %v1363 = vpack.c.bf16 %v1170, %v1166
    %v1364 = vpack.c.bf16 %v1178, %v1174
    %v1365 = vpack.c.bf16 %v1180, %v1176
    %v1366 = vpack.c.bf16 %v1188, %v1184
    %v1367 = vpack.c.bf16 %v1190, %v1186
    %v1368 = vpack.c.bf16 %v1198, %v1194
    %v1369 = vpack.c.bf16 %v1200, %v1196
    %v1370 = vpack.c.bf16 %v1208, %v1204
    %v1371 = vpack.c.bf16 %v1210, %v1206
    %v1372 = vpack.c.bf16 %v1218, %v1214
    %v1373 = vpack.c.bf16 %v1220, %v1216
    %v1374 = vpack.c.bf16 %v1228, %v1224
    %v1375 = vpack.c.bf16 %v1230, %v1226
    %v1376 = vpack.c.bf16 %v1238, %v1234
    %v1377 = vpack.c.bf16 %v1240, %v1236
    %v1378 = vpack.c.bf16 %v1248, %v1244
    %v1379 = vpack.c.bf16 %v1250, %v1246
    %v1380 = vpack.c.bf16 %v1258, %v1254
    %v1381 = vpack.c.bf16 %v1260, %v1256
    %v1382 = vpack.c.bf16 %v1268, %v1264
    %v1383 = vpack.c.bf16 %v1270, %v1266
    %v1384 = vpack.c.bf16 %v1278, %v1274
    %v1385 = vpack.c.bf16 %v1280, %v1276
    %v1386 = vpack.c.bf16 %v1288, %v1284
    %v1387 = vpack.c.bf16 %v1290, %v1286
    %v1388 = vlaneseq
    %v1389 = vshrl.u32 %v1388, 7
    %v1390 = vadd.s32 %v1389, 8
    %v1391 = vadd.s32 %v1389, 16
    %v1392 = vadd.s32 %v1389, 24
    %v1393 = vadd.s32 %v1389, 32
    %v1394 = vadd.s32 %v1389, 40
    %v1395 = vadd.s32 %v1389, 48
    %v1396 = vadd.s32 %v1389, 56
    %v1397 = vadd.s32 %v1389, 64
    %v1398 = vadd.s32 %v1389, 72
    %v1399 = vadd.s32 %v1389, 80
    %v1400 = vadd.s32 %v1389, 88
    %v1401 = vadd.s32 %v1389, 96
    %v1402 = vadd.s32 %v1389, 104
    %v1403 = vadd.s32 %v1389, 112
    %v1404 = vadd.s32 %v1389, 120
    %v1405 = vlaneseq
    %v1406 = vand.u32 %v1405, 127
    %vm1407 = vcmp.le.s32.totalorder %v1406, %v1389
    %vm1408 = vcmp.le.s32.totalorder %v1406, %v1390
    %vm1409 = vcmp.le.s32.totalorder %v1406, %v1391
    %vm1410 = vcmp.le.s32.totalorder %v1406, %v1392
    %vm1411 = vcmp.le.s32.totalorder %v1406, %v1393
    %vm1412 = vcmp.le.s32.totalorder %v1406, %v1394
    %vm1413 = vcmp.le.s32.totalorder %v1406, %v1395
    %vm1414 = vcmp.le.s32.totalorder %v1406, %v1396
    %vm1415 = vcmp.le.s32.totalorder %v1406, %v1397
    %vm1416 = vcmp.le.s32.totalorder %v1406, %v1398
    %vm1417 = vcmp.le.s32.totalorder %v1406, %v1399
    %vm1418 = vcmp.le.s32.totalorder %v1406, %v1400
    %vm1419 = vcmp.le.s32.totalorder %v1406, %v1401
    %vm1420 = vcmp.le.s32.totalorder %v1406, %v1402
    %vm1421 = vcmp.le.s32.totalorder %v1406, %v1403
    %vm1422 = vcmp.le.s32.totalorder %v1406, %v1404
    %vm1423 = vcmask 261120
    %v1425 = vsel %vm1423, %v1294, 0
    %v1428 = vsel %vm1423, %v1298, 0
    %v1431 = vsel %vm1423, %v1302, 0
    %v1434 = vsel %vm1423, %v1306, 0
    %v1437 = vsel %vm1423, %v1310, 0
    %v1440 = vsel %vm1423, %v1314, 0
    %v1443 = vsel %vm1423, %v1318, 0
    %v1446 = vsel %vm1423, %v1322, 0
    %v1449 = vsel %vm1423, %v1292, 0
    %v1452 = vsel %vm1423, %v1296, 0
    %v1455 = vsel %vm1423, %v1300, 0
    %v1458 = vsel %vm1423, %v1304, 0
    %v1461 = vsel %vm1423, %v1308, 0
    %v1464 = vsel %vm1423, %v1312, 0
    %v1467 = vsel %vm1423, %v1316, 0
    %v1470 = vsel %vm1423, %v1320, 0
    %1472 = vmatprep.subr.bf16.mxu0 0
    %1473 = vmatpush1.bf16.xpose.msra.mxu0 %v1470
    %1474 = vmatprep.subr.bf16.mxu0 0
    %1475 = vmatpush1.bf16.xpose.msra.mxu0 %v1467
    %1476 = vmatprep.subr.bf16.mxu0 0
    %1477 = vmatpush1.bf16.xpose.msra.mxu0 %v1464
    %1478 = vmatprep.subr.bf16.mxu0 0
    %1479 = vmatpush1.bf16.xpose.msra.mxu0 %v1461
    %1480 = vmatprep.subr.bf16.mxu0 0
    %1481 = vmatpush1.bf16.xpose.msra.mxu0 %v1458
    %1482 = vmatprep.subr.bf16.mxu0 0
    %1483 = vmatpush1.bf16.xpose.msra.mxu0 %v1455
    %1484 = vmatprep.subr.bf16.mxu0 0
    %1485 = vmatpush1.bf16.xpose.msra.mxu0 %v1452
    %1486 = vmatprep.subr.bf16.mxu0 0
    %1487 = vmatpush1.bf16.xpose.msra.mxu0 %v1449
    %1488 = vmatprep.subr.bf16.mxu0 0
    %1489 = vmatpush2.bf16.xpose.msra.mxu0 0
    %1490 = vmatprep.subr.bf16.mxu0 0
    %1491 = vmatpush2.bf16.xpose.msra.mxu0 0
    %1492 = vmatprep.subr.bf16.mxu0 0
    %1493 = vmatpush2.bf16.xpose.msra.mxu0 0
    %1494 = vmatprep.subr.bf16.mxu0 0
    %1495 = vmatpush2.bf16.xpose.msra.mxu0 0
    %1496 = vmatprep.subr.bf16.mxu0 0
    %1497 = vmatpush2.bf16.xpose.msra.mxu0 0
    %1498 = vmatprep.subr.bf16.mxu0 0
    %1499 = vmatpush2.bf16.xpose.msra.mxu0 0
    %1500 = vmatprep.subr.bf16.mxu0 0
    %1501 = vmatpush2.bf16.xpose.msra.mxu0 0
    %1502 = vmatprep.subr.bf16.mxu0 0
    %1503 = vmatpush2.bf16.xpose.msra.mxu0 0
    %1504 = vmatprep.mubr.bf16.mxu0 0
    %1505 = vmatmul.mubr.bf16.gmra.mxu0 %v1425
    %v1506 = vpop.f32.mrf.mxu0
    %v1507 = vadd.f32 0.0, %v1506
    %v1508 = vpop.f32.mrf.mxu0
    %v1509 = vpop.f32.mrf.mxu0
    %v1510 = vadd.f32 0.0, %v1509
    %v1511 = vpop.f32.mrf.mxu0
    %1512 = vmatprep.mubr.bf16.mxu0 0
    %1513 = vmatmul.mubr.bf16.gmra.mxu0 %v1428
    %v1514 = vpop.f32.mrf.mxu0
    %v1515 = vadd.f32 0.0, %v1514
    %v1516 = vpop.f32.mrf.mxu0
    %v1517 = vpop.f32.mrf.mxu0
    %v1518 = vadd.f32 0.0, %v1517
    %v1519 = vpop.f32.mrf.mxu0
    %1520 = vmatprep.mubr.bf16.mxu0 0
    %1521 = vmatmul.mubr.bf16.gmra.mxu0 %v1431
    %v1522 = vpop.f32.mrf.mxu0
    %v1523 = vadd.f32 0.0, %v1522
    %v1524 = vpop.f32.mrf.mxu0
    %v1525 = vpop.f32.mrf.mxu0
    %v1526 = vadd.f32 0.0, %v1525
    %v1527 = vpop.f32.mrf.mxu0
    %1528 = vmatprep.mubr.bf16.mxu0 0
    %1529 = vmatmul.mubr.bf16.gmra.mxu0 %v1434
    %v1530 = vpop.f32.mrf.mxu0
    %v1531 = vadd.f32 0.0, %v1530
    %v1532 = vpop.f32.mrf.mxu0
    %v1533 = vpop.f32.mrf.mxu0
    %v1534 = vadd.f32 0.0, %v1533
    %v1535 = vpop.f32.mrf.mxu0
    %1536 = vmatprep.mubr.bf16.mxu0 0
    %1537 = vmatmul.mubr.bf16.gmra.mxu0 %v1437
    %v1538 = vpop.f32.mrf.mxu0
    %v1539 = vadd.f32 0.0, %v1538
    %v1540 = vpop.f32.mrf.mxu0
    %v1541 = vpop.f32.mrf.mxu0
    %v1542 = vadd.f32 0.0, %v1541
    %v1543 = vpop.f32.mrf.mxu0
    %1544 = vmatprep.mubr.bf16.mxu0 0
    %1545 = vmatmul.mubr.bf16.gmra.mxu0 %v1440
    %v1546 = vpop.f32.mrf.mxu0
    %v1547 = vadd.f32 0.0, %v1546
    %v1548 = vpop.f32.mrf.mxu0
    %v1549 = vpop.f32.mrf.mxu0
    %v1550 = vadd.f32 0.0, %v1549
    %v1551 = vpop.f32.mrf.mxu0
    %1552 = vmatprep.mubr.bf16.mxu0 0
    %1553 = vmatmul.mubr.bf16.gmra.mxu0 %v1443
    %v1554 = vpop.f32.mrf.mxu0
    %v1555 = vadd.f32 0.0, %v1554
    %v1556 = vpop.f32.mrf.mxu0
    %v1557 = vpop.f32.mrf.mxu0
    %v1558 = vadd.f32 0.0, %v1557
    %v1559 = vpop.f32.mrf.mxu0
    %1560 = vmatprep.mubr.bf16.mxu0 0
    %1561 = vmatmul.mubr.bf16.gmra.mxu0 %v1446
    %v1562 = vpop.f32.mrf.mxu0
    %v1563 = vadd.f32 0.0, %v1562
    %v1564 = vpop.f32.mrf.mxu0
    %v1565 = vpop.f32.mrf.mxu0
    %v1566 = vadd.f32 0.0, %v1565
    %v1567 = vpop.f32.mrf.mxu0
    %1568 = vdwg.mxu0
    %v1569 = vsel %vm1407, %v1507, -inf
    %v1570 = vsel %vm1408, %v1510, -inf
    %v1571 = vsel %vm1409, %v1515, -inf
    %v1572 = vsel %vm1410, %v1518, -inf
    %v1573 = vsel %vm1411, %v1523, -inf
    %v1574 = vsel %vm1412, %v1526, -inf
    %v1575 = vsel %vm1413, %v1531, -inf
    %v1576 = vsel %vm1414, %v1534, -inf
    %v1577 = vsel %vm1415, %v1539, -inf
    %v1578 = vsel %vm1416, %v1542, -inf
    %v1579 = vsel %vm1417, %v1547, -inf
    %v1580 = vsel %vm1418, %v1550, -inf
    %v1581 = vsel %vm1419, %v1555, -inf
    %v1582 = vsel %vm1420, %v1558, -inf
    %v1583 = vsel %vm1421, %v1563, -inf
    %v1584 = vsel %vm1422, %v1566, -inf
    %1585 = vmax.xlane.f32.xlu0 %v1569
    %v1586 = vpop.xlane.xlu0 %1585
    %1587 = vmax.xlane.f32.xlu0 %v1570
    %v1588 = vpop.xlane.xlu0 %1587
    %1589 = vmax.xlane.f32.xlu0 %v1571
    %v1590 = vpop.xlane.xlu0 %1589
    %1591 = vmax.xlane.f32.xlu0 %v1572
    %v1592 = vpop.xlane.xlu0 %1591
    %1593 = vmax.xlane.f32.xlu0 %v1573
    %v1594 = vpop.xlane.xlu0 %1593
    %1595 = vmax.xlane.f32.xlu0 %v1574
    %v1596 = vpop.xlane.xlu0 %1595
    %1597 = vmax.xlane.f32.xlu0 %v1575
    %v1598 = vpop.xlane.xlu0 %1597
    %1599 = vmax.xlane.f32.xlu0 %v1576
    %v1600 = vpop.xlane.xlu0 %1599
    %1601 = vmax.xlane.f32.xlu0 %v1577
    %v1602 = vpop.xlane.xlu0 %1601
    %1603 = vmax.xlane.f32.xlu0 %v1578
    %v1604 = vpop.xlane.xlu0 %1603
    %1605 = vmax.xlane.f32.xlu0 %v1579
    %v1606 = vpop.xlane.xlu0 %1605
    %1607 = vmax.xlane.f32.xlu0 %v1580
    %v1608 = vpop.xlane.xlu0 %1607
    %1609 = vmax.xlane.f32.xlu0 %v1581
    %v1610 = vpop.xlane.xlu0 %1609
    %1611 = vmax.xlane.f32.xlu0 %v1582
    %v1612 = vpop.xlane.xlu0 %1611
    %1613 = vmax.xlane.f32.xlu0 %v1583
    %v1614 = vpop.xlane.xlu0 %1613
    %1615 = vmax.xlane.f32.xlu0 %v1584
    %v1616 = vpop.xlane.xlu0 %1615
    %v1617 = vsub.f32 %v1569, %v1586
    %v1618 = vsub.f32 %v1570, %v1588
    %v1619 = vsub.f32 %v1571, %v1590
    %v1620 = vsub.f32 %v1572, %v1592
    %v1621 = vsub.f32 %v1573, %v1594
    %v1622 = vsub.f32 %v1574, %v1596
    %v1623 = vsub.f32 %v1575, %v1598
    %v1624 = vsub.f32 %v1576, %v1600
    %v1625 = vsub.f32 %v1577, %v1602
    %v1626 = vsub.f32 %v1578, %v1604
    %v1627 = vsub.f32 %v1579, %v1606
    %v1628 = vsub.f32 %v1580, %v1608
    %v1629 = vsub.f32 %v1581, %v1610
    %v1630 = vsub.f32 %v1582, %v1612
    %v1631 = vsub.f32 %v1583, %v1614
    %v1632 = vsub.f32 %v1584, %v1616
    %v1633 = vpack.c.bf16 %v1618, %v1617
    %v1634 = vpack.c.bf16 %v1620, %v1619
    %v1635 = vpack.c.bf16 %v1622, %v1621
    %v1636 = vpack.c.bf16 %v1624, %v1623
    %v1637 = vpack.c.bf16 %v1626, %v1625
    %v1638 = vpack.c.bf16 %v1628, %v1627
    %v1639 = vpack.c.bf16 %v1630, %v1629
    %v1640 = vpack.c.bf16 %v1632, %v1631
    %v1642 = vmul.bf16 %v1633, 1069105081
    %v1643 = vpow.bf16.pop %v1642
    %v1645 = vmul.bf16 %v1634, 1069105081
    %v1646 = vpow.bf16.pop %v1645
    %v1648 = vmul.bf16 %v1635, 1069105081
    %v1649 = vpow.bf16.pop %v1648
    %v1651 = vmul.bf16 %v1636, 1069105081
    %v1652 = vpow.bf16.pop %v1651
    %v1654 = vmul.bf16 %v1637, 1069105081
    %v1655 = vpow.bf16.pop %v1654
    %v1657 = vmul.bf16 %v1638, 1069105081
    %v1658 = vpow.bf16.pop %v1657
    %v1660 = vmul.bf16 %v1639, 1069105081
    %v1661 = vpow.bf16.pop %v1660
    %v1663 = vmul.bf16 %v1640, 1069105081
    %v1664 = vpow.bf16.pop %v1663
    %v1665 = vunpack.c.l.bf16 %v1643
    %v1666 = vunpack.c.h.bf16 %v1643
    %v1667 = vunpack.c.l.bf16 %v1646
    %v1668 = vunpack.c.h.bf16 %v1646
    %v1669 = vunpack.c.l.bf16 %v1649
    %v1670 = vunpack.c.h.bf16 %v1649
    %v1671 = vunpack.c.l.bf16 %v1652
    %v1672 = vunpack.c.h.bf16 %v1652
    %v1673 = vunpack.c.l.bf16 %v1655
    %v1674 = vunpack.c.h.bf16 %v1655
    %v1675 = vunpack.c.l.bf16 %v1658
    %v1676 = vunpack.c.h.bf16 %v1658
    %v1677 = vunpack.c.l.bf16 %v1661
    %v1678 = vunpack.c.h.bf16 %v1661
    %v1679 = vunpack.c.l.bf16 %v1664
    %v1680 = vunpack.c.h.bf16 %v1664
    %1681 = vadd.xlane.f32.xlu0 %v1665
    %v1682 = vpop.xlane.xlu0 %1681
    %1683 = vadd.xlane.f32.xlu0 %v1666
    %v1684 = vpop.xlane.xlu0 %1683
    %1685 = vadd.xlane.f32.xlu0 %v1667
    %v1686 = vpop.xlane.xlu0 %1685
    %1687 = vadd.xlane.f32.xlu0 %v1668
    %v1688 = vpop.xlane.xlu0 %1687
    %1689 = vadd.xlane.f32.xlu0 %v1669
    %v1690 = vpop.xlane.xlu0 %1689
    %1691 = vadd.xlane.f32.xlu0 %v1670
    %v1692 = vpop.xlane.xlu0 %1691
    %1693 = vadd.xlane.f32.xlu0 %v1671
    %v1694 = vpop.xlane.xlu0 %1693
    %1695 = vadd.xlane.f32.xlu0 %v1672
    %v1696 = vpop.xlane.xlu0 %1695
    %1697 = vadd.xlane.f32.xlu0 %v1673
    %v1698 = vpop.xlane.xlu0 %1697
    %1699 = vadd.xlane.f32.xlu0 %v1674
    %v1700 = vpop.xlane.xlu0 %1699
    %1701 = vadd.xlane.f32.xlu0 %v1675
    %v1702 = vpop.xlane.xlu0 %1701
    %1703 = vadd.xlane.f32.xlu0 %v1676
    %v1704 = vpop.xlane.xlu0 %1703
    %1705 = vadd.xlane.f32.xlu0 %v1677
    %v1706 = vpop.xlane.xlu0 %1705
    %1707 = vadd.xlane.f32.xlu0 %v1678
    %v1708 = vpop.xlane.xlu0 %1707
    %1709 = vadd.xlane.f32.xlu0 %v1679
    %v1710 = vpop.xlane.xlu0 %1709
    %1711 = vadd.xlane.f32.xlu0 %v1680
    %v1712 = vpop.xlane.xlu0 %1711
    %v1713 = vrcp.pop %v1682
    %v1714 = vrcp.pop %v1684
    %v1715 = vrcp.pop %v1686
    %v1716 = vrcp.pop %v1688
    %v1717 = vrcp.pop %v1690
    %v1718 = vrcp.pop %v1692
    %v1719 = vrcp.pop %v1694
    %v1720 = vrcp.pop %v1696
    %v1721 = vrcp.pop %v1698
    %v1722 = vrcp.pop %v1700
    %v1723 = vrcp.pop %v1702
    %v1724 = vrcp.pop %v1704
    %v1725 = vrcp.pop %v1706
    %v1726 = vrcp.pop %v1708
    %v1727 = vrcp.pop %v1710
    %v1728 = vrcp.pop %v1712
    %1729 = vmatprep.subr.bf16.mxu0 0
    %1730 = vmatpush1.bf16.msra.mxu0 %v1370
    %1731 = vmatprep.subr.bf16.mxu0 0
    %1732 = vmatpush1.bf16.msra.mxu0 %v1368
    %1733 = vmatprep.subr.bf16.mxu0 0
    %1734 = vmatpush1.bf16.msra.mxu0 %v1366
    %1735 = vmatprep.subr.bf16.mxu0 0
    %1736 = vmatpush1.bf16.msra.mxu0 %v1364
    %1737 = vmatprep.subr.bf16.mxu0 0
    %1738 = vmatpush1.bf16.msra.mxu0 %v1362
    %1739 = vmatprep.subr.bf16.mxu0 0
    %1740 = vmatpush1.bf16.msra.mxu0 %v1360
    %1741 = vmatprep.subr.bf16.mxu0 0
    %1742 = vmatpush1.bf16.msra.mxu0 %v1358
    %1743 = vmatprep.subr.bf16.mxu0 0
    %1744 = vmatpush1.bf16.msra.mxu0 %v1356
    %1745 = vmatprep.subr.bf16.mxu0 0
    %1746 = vmatpush2.bf16.msra.mxu0 0
    %1747 = vmatprep.subr.bf16.mxu0 0
    %1748 = vmatpush2.bf16.msra.mxu0 0
    %1749 = vmatprep.subr.bf16.mxu0 0
    %1750 = vmatpush2.bf16.msra.mxu0 0
    %1751 = vmatprep.subr.bf16.mxu0 0
    %1752 = vmatpush2.bf16.msra.mxu0 0
    %1753 = vmatprep.subr.bf16.mxu0 0
    %1754 = vmatpush2.bf16.msra.mxu0 0
    %1755 = vmatprep.subr.bf16.mxu0 0
    %1756 = vmatpush2.bf16.msra.mxu0 0
    %1757 = vmatprep.subr.bf16.mxu0 0
    %1758 = vmatpush2.bf16.msra.mxu0 0
    %1759 = vmatprep.subr.bf16.mxu0 0
    %1760 = vmatpush2.bf16.msra.mxu0 0
    %1761 = vmatprep.mubr.bf16.mxu0 0
    %1762 = vmatmul.mubr.bf16.gmra.mxu0 %v1643
    %v1763 = vpop.f32.mrf.mxu0
    %v1764 = vadd.f32 0.0, %v1763
    %v1765 = vpop.f32.mrf.mxu0
    %v1766 = vpop.f32.mrf.mxu0
    %v1767 = vadd.f32 0.0, %v1766
    %v1768 = vpop.f32.mrf.mxu0
    %1769 = vmatprep.mubr.bf16.mxu0 0
    %1770 = vmatmul.mubr.bf16.gmra.mxu0 %v1646
    %v1771 = vpop.f32.mrf.mxu0
    %v1772 = vadd.f32 0.0, %v1771
    %v1773 = vpop.f32.mrf.mxu0
    %v1774 = vpop.f32.mrf.mxu0
    %v1775 = vadd.f32 0.0, %v1774
    %v1776 = vpop.f32.mrf.mxu0
    %1777 = vmatprep.mubr.bf16.mxu0 0
    %1778 = vmatmul.mubr.bf16.gmra.mxu0 %v1649
    %v1779 = vpop.f32.mrf.mxu0
    %v1780 = vadd.f32 0.0, %v1779
    %v1781 = vpop.f32.mrf.mxu0
    %v1782 = vpop.f32.mrf.mxu0
    %v1783 = vadd.f32 0.0, %v1782
    %v1784 = vpop.f32.mrf.mxu0
    %1785 = vmatprep.mubr.bf16.mxu0 0
    %1786 = vmatmul.mubr.bf16.gmra.mxu0 %v1652
    %v1787 = vpop.f32.mrf.mxu0
    %v1788 = vadd.f32 0.0, %v1787
    %v1789 = vpop.f32.mrf.mxu0
    %v1790 = vpop.f32.mrf.mxu0
    %v1791 = vadd.f32 0.0, %v1790
    %v1792 = vpop.f32.mrf.mxu0
    %1793 = vmatprep.mubr.bf16.mxu0 0
    %1794 = vmatmul.mubr.bf16.gmra.mxu0 %v1655
    %v1795 = vpop.f32.mrf.mxu0
    %v1796 = vadd.f32 0.0, %v1795
    %v1797 = vpop.f32.mrf.mxu0
    %v1798 = vpop.f32.mrf.mxu0
    %v1799 = vadd.f32 0.0, %v1798
    %v1800 = vpop.f32.mrf.mxu0
    %1801 = vmatprep.mubr.bf16.mxu0 0
    %1802 = vmatmul.mubr.bf16.gmra.mxu0 %v1658
    %v1803 = vpop.f32.mrf.mxu0
    %v1804 = vadd.f32 0.0, %v1803
    %v1805 = vpop.f32.mrf.mxu0
    %v1806 = vpop.f32.mrf.mxu0
    %v1807 = vadd.f32 0.0, %v1806
    %v1808 = vpop.f32.mrf.mxu0
    %1809 = vmatprep.mubr.bf16.mxu0 0
    %1810 = vmatmul.mubr.bf16.gmra.mxu0 %v1661
    %v1811 = vpop.f32.mrf.mxu0
    %v1812 = vadd.f32 0.0, %v1811
    %v1813 = vpop.f32.mrf.mxu0
    %v1814 = vpop.f32.mrf.mxu0
    %v1815 = vadd.f32 0.0, %v1814
    %v1816 = vpop.f32.mrf.mxu0
    %1817 = vmatprep.mubr.bf16.mxu0 0
    %1818 = vmatmul.mubr.bf16.gmra.mxu0 %v1664
    %v1819 = vpop.f32.mrf.mxu0
    %v1820 = vadd.f32 0.0, %v1819
    %v1821 = vpop.f32.mrf.mxu0
    %v1822 = vpop.f32.mrf.mxu0
    %v1823 = vadd.f32 0.0, %v1822
    %v1824 = vpop.f32.mrf.mxu0
    %1825 = vdwg.mxu0
    %v1826 = vmul.f32 %v1764, %v1713
    %v1827 = vmul.f32 %v1767, %v1714
    %v1828 = vmul.f32 %v1772, %v1715
    %v1829 = vmul.f32 %v1775, %v1716
    %v1830 = vmul.f32 %v1780, %v1717
    %v1831 = vmul.f32 %v1783, %v1718
    %v1832 = vmul.f32 %v1788, %v1719
    %v1833 = vmul.f32 %v1791, %v1720
    %v1834 = vmul.f32 %v1796, %v1721
    %v1835 = vmul.f32 %v1799, %v1722
    %v1836 = vmul.f32 %v1804, %v1723
    %v1837 = vmul.f32 %v1807, %v1724
    %v1838 = vmul.f32 %v1812, %v1725
    %v1839 = vmul.f32 %v1815, %v1726
    %v1840 = vmul.f32 %v1820, %v1727
    %v1841 = vmul.f32 %v1823, %v1728
    %1842 = vst.msk [vmem:[#allocation7] sm:$0xff] %vm1423, %v1826
    %1843 = vst.msk [vmem:[#allocation7 + $0x10] sm:$0xff] %vm1423, %v1827
    %1844 = vst.msk [vmem:[#allocation7 + $0x20] sm:$0xff] %vm1423, %v1828
    %1845 = vst.msk [vmem:[#allocation7 + $0x30] sm:$0xff] %vm1423, %v1829
    %1846 = vst.msk [vmem:[#allocation7 + $0x40] sm:$0xff] %vm1423, %v1830
    %1847 = vst.msk [vmem:[#allocation7 + $0x50] sm:$0xff] %vm1423, %v1831
    %1848 = vst.msk [vmem:[#allocation7 + $0x60] sm:$0xff] %vm1423, %v1832
    %1849 = vst.msk [vmem:[#allocation7 + $0x70] sm:$0xff] %vm1423, %v1833
    %1850 = vst.msk [vmem:[#allocation7 + $0x80] sm:$0xff] %vm1423, %v1834
    %1851 = vst.msk [vmem:[#allocation7 + $0x90] sm:$0xff] %vm1423, %v1835
    %1852 = vst.msk [vmem:[#allocation7 + $0xa0] sm:$0xff] %vm1423, %v1836
    %1853 = vst.msk [vmem:[#allocation7 + $0xb0] sm:$0xff] %vm1423, %v1837
    %1854 = vst.msk [vmem:[#allocation7 + $0xc0] sm:$0xff] %vm1423, %v1838
    %1855 = vst.msk [vmem:[#allocation7 + $0xd0] sm:$0xff] %vm1423, %v1839
    %1856 = vst.msk [vmem:[#allocation7 + $0xe0] sm:$0xff] %vm1423, %v1840
    %1857 = vst.msk [vmem:[#allocation7 + $0xf0] sm:$0xff] %vm1423, %v1841
    %1866 = vrot.lane.b32.xlu0 %v1294, 96
    %v1867 = vpop.permute.xlu0 %1866
    %1868 = vrot.lane.b32.xlu0 %v1298, 96
    %v1869 = vpop.permute.xlu0 %1868
    %1870 = vrot.lane.b32.xlu0 %v1302, 96
    %v1871 = vpop.permute.xlu0 %1870
    %1872 = vrot.lane.b32.xlu0 %v1306, 96
    %v1873 = vpop.permute.xlu0 %1872
    %1874 = vrot.lane.b32.xlu0 %v1310, 96
    %v1875 = vpop.permute.xlu0 %1874
    %1876 = vrot.lane.b32.xlu0 %v1314, 96
    %v1877 = vpop.permute.xlu0 %1876
    %1878 = vrot.lane.b32.xlu0 %v1318, 96
    %v1879 = vpop.permute.xlu0 %1878
    %1880 = vrot.lane.b32.xlu0 %v1322, 96
    %v1881 = vpop.permute.xlu0 %1880
    %1890 = vrot.lane.b32.xlu0 %v1292, 96
    %v1891 = vpop.permute.xlu0 %1890
    %1892 = vrot.lane.b32.xlu0 %v1296, 96
    %v1893 = vpop.permute.xlu0 %1892
    %1894 = vrot.lane.b32.xlu0 %v1300, 96
    %v1895 = vpop.permute.xlu0 %1894
    %1896 = vrot.lane.b32.xlu0 %v1304, 96
    %v1897 = vpop.permute.xlu0 %1896
    %1898 = vrot.lane.b32.xlu0 %v1308, 96
    %v1899 = vpop.permute.xlu0 %1898
    %1900 = vrot.lane.b32.xlu0 %v1312, 96
    %v1901 = vpop.permute.xlu0 %1900
    %1902 = vrot.lane.b32.xlu0 %v1316, 96
    %v1903 = vpop.permute.xlu0 %1902
    %1904 = vrot.lane.b32.xlu0 %v1320, 96
    %v1905 = vpop.permute.xlu0 %1904
    %v1907 = vsel %vm1423, %v1867, 0
    %v1910 = vsel %vm1423, %v1869, 0
    %v1913 = vsel %vm1423, %v1871, 0
    %v1916 = vsel %vm1423, %v1873, 0
    %v1919 = vsel %vm1423, %v1875, 0
    %v1922 = vsel %vm1423, %v1877, 0
    %v1925 = vsel %vm1423, %v1879, 0
    %v1928 = vsel %vm1423, %v1881, 0
    %v1931 = vsel %vm1423, %v1891, 0
    %v1934 = vsel %vm1423, %v1893, 0
    %v1937 = vsel %vm1423, %v1895, 0
    %v1940 = vsel %vm1423, %v1897, 0
    %v1943 = vsel %vm1423, %v1899, 0
    %v1946 = vsel %vm1423, %v1901, 0
    %v1949 = vsel %vm1423, %v1903, 0
    %v1952 = vsel %vm1423, %v1905, 0
    %1954 = vmatprep.subr.bf16.mxu0 0
    %1955 = vmatpush1.bf16.xpose.msra.mxu0 %v1952
    %1956 = vmatprep.subr.bf16.mxu0 0
    %1957 = vmatpush1.bf16.xpose.msra.mxu0 %v1949
    %1958 = vmatprep.subr.bf16.mxu0 0
    %1959 = vmatpush1.bf16.xpose.msra.mxu0 %v1946
    %1960 = vmatprep.subr.bf16.mxu0 0
    %1961 = vmatpush1.bf16.xpose.msra.mxu0 %v1943
    %1962 = vmatprep.subr.bf16.mxu0 0
    %1963 = vmatpush1.bf16.xpose.msra.mxu0 %v1940
    %1964 = vmatprep.subr.bf16.mxu0 0
    %1965 = vmatpush1.bf16.xpose.msra.mxu0 %v1937
    %1966 = vmatprep.subr.bf16.mxu0 0
    %1967 = vmatpush1.bf16.xpose.msra.mxu0 %v1934
    %1968 = vmatprep.subr.bf16.mxu0 0
    %1969 = vmatpush1.bf16.xpose.msra.mxu0 %v1931
    %1970 = vmatprep.subr.bf16.mxu0 0
    %1971 = vmatpush2.bf16.xpose.msra.mxu0 0
    %1972 = vmatprep.subr.bf16.mxu0 0
    %1973 = vmatpush2.bf16.xpose.msra.mxu0 0
    %1974 = vmatprep.subr.bf16.mxu0 0
    %1975 = vmatpush2.bf16.xpose.msra.mxu0 0
    %1976 = vmatprep.subr.bf16.mxu0 0
    %1977 = vmatpush2.bf16.xpose.msra.mxu0 0
    %1978 = vmatprep.subr.bf16.mxu0 0
    %1979 = vmatpush2.bf16.xpose.msra.mxu0 0
    %1980 = vmatprep.subr.bf16.mxu0 0
    %1981 = vmatpush2.bf16.xpose.msra.mxu0 0
    %1982 = vmatprep.subr.bf16.mxu0 0
    %1983 = vmatpush2.bf16.xpose.msra.mxu0 0
    %1984 = vmatprep.subr.bf16.mxu0 0
    %1985 = vmatpush2.bf16.xpose.msra.mxu0 0
    %1986 = vmatprep.mubr.bf16.mxu0 0
    %1987 = vmatmul.mubr.bf16.gmra.mxu0 %v1907
    %v1988 = vpop.f32.mrf.mxu0
    %v1989 = vadd.f32 0.0, %v1988
    %v1990 = vpop.f32.mrf.mxu0
    %v1991 = vpop.f32.mrf.mxu0
    %v1992 = vadd.f32 0.0, %v1991
    %v1993 = vpop.f32.mrf.mxu0
    %1994 = vmatprep.mubr.bf16.mxu0 0
    %1995 = vmatmul.mubr.bf16.gmra.mxu0 %v1910
    %v1996 = vpop.f32.mrf.mxu0
    %v1997 = vadd.f32 0.0, %v1996
    %v1998 = vpop.f32.mrf.mxu0
    %v1999 = vpop.f32.mrf.mxu0
    %v2000 = vadd.f32 0.0, %v1999
    %v2001 = vpop.f32.mrf.mxu0
    %2002 = vmatprep.mubr.bf16.mxu0 0
    %2003 = vmatmul.mubr.bf16.gmra.mxu0 %v1913
    %v2004 = vpop.f32.mrf.mxu0
    %v2005 = vadd.f32 0.0, %v2004
    %v2006 = vpop.f32.mrf.mxu0
    %v2007 = vpop.f32.mrf.mxu0
    %v2008 = vadd.f32 0.0, %v2007
    %v2009 = vpop.f32.mrf.mxu0
    %2010 = vmatprep.mubr.bf16.mxu0 0
    %2011 = vmatmul.mubr.bf16.gmra.mxu0 %v1916
    %v2012 = vpop.f32.mrf.mxu0
    %v2013 = vadd.f32 0.0, %v2012
    %v2014 = vpop.f32.mrf.mxu0
    %v2015 = vpop.f32.mrf.mxu0
    %v2016 = vadd.f32 0.0, %v2015
    %v2017 = vpop.f32.mrf.mxu0
    %2018 = vmatprep.mubr.bf16.mxu0 0
    %2019 = vmatmul.mubr.bf16.gmra.mxu0 %v1919
    %v2020 = vpop.f32.mrf.mxu0
    %v2021 = vadd.f32 0.0, %v2020
    %v2022 = vpop.f32.mrf.mxu0
    %v2023 = vpop.f32.mrf.mxu0
    %v2024 = vadd.f32 0.0, %v2023
    %v2025 = vpop.f32.mrf.mxu0
    %2026 = vmatprep.mubr.bf16.mxu0 0
    %2027 = vmatmul.mubr.bf16.gmra.mxu0 %v1922
    %v2028 = vpop.f32.mrf.mxu0
    %v2029 = vadd.f32 0.0, %v2028
    %v2030 = vpop.f32.mrf.mxu0
    %v2031 = vpop.f32.mrf.mxu0
    %v2032 = vadd.f32 0.0, %v2031
    %v2033 = vpop.f32.mrf.mxu0
    %2034 = vmatprep.mubr.bf16.mxu0 0
    %2035 = vmatmul.mubr.bf16.gmra.mxu0 %v1925
    %v2036 = vpop.f32.mrf.mxu0
    %v2037 = vadd.f32 0.0, %v2036
    %v2038 = vpop.f32.mrf.mxu0
    %v2039 = vpop.f32.mrf.mxu0
    %v2040 = vadd.f32 0.0, %v2039
    %v2041 = vpop.f32.mrf.mxu0
    %2042 = vmatprep.mubr.bf16.mxu0 0
    %2043 = vmatmul.mubr.bf16.gmra.mxu0 %v1928
    %v2044 = vpop.f32.mrf.mxu0
    %v2045 = vadd.f32 0.0, %v2044
    %v2046 = vpop.f32.mrf.mxu0
    %v2047 = vpop.f32.mrf.mxu0
    %v2048 = vadd.f32 0.0, %v2047
    %v2049 = vpop.f32.mrf.mxu0
    %2050 = vdwg.mxu0
    %v2051 = vsel %vm1407, %v1989, -inf
    %v2052 = vsel %vm1408, %v1992, -inf
    %v2053 = vsel %vm1409, %v1997, -inf
    %v2054 = vsel %vm1410, %v2000, -inf
    %v2055 = vsel %vm1411, %v2005, -inf
    %v2056 = vsel %vm1412, %v2008, -inf
    %v2057 = vsel %vm1413, %v2013, -inf
    %v2058 = vsel %vm1414, %v2016, -inf
    %v2059 = vsel %vm1415, %v2021, -inf
    %v2060 = vsel %vm1416, %v2024, -inf
    %v2061 = vsel %vm1417, %v2029, -inf
    %v2062 = vsel %vm1418, %v2032, -inf
    %v2063 = vsel %vm1419, %v2037, -inf
    %v2064 = vsel %vm1420, %v2040, -inf
    %v2065 = vsel %vm1421, %v2045, -inf
    %v2066 = vsel %vm1422, %v2048, -inf
    %2067 = vmax.xlane.f32.xlu0 %v2051
    %v2068 = vpop.xlane.xlu0 %2067
    %2069 = vmax.xlane.f32.xlu0 %v2052
    %v2070 = vpop.xlane.xlu0 %2069
    %2071 = vmax.xlane.f32.xlu0 %v2053
    %v2072 = vpop.xlane.xlu0 %2071
    %2073 = vmax.xlane.f32.xlu0 %v2054
    %v2074 = vpop.xlane.xlu0 %2073
    %2075 = vmax.xlane.f32.xlu0 %v2055
    %v2076 = vpop.xlane.xlu0 %2075
    %2077 = vmax.xlane.f32.xlu0 %v2056
    %v2078 = vpop.xlane.xlu0 %2077
    %2079 = vmax.xlane.f32.xlu0 %v2057
    %v2080 = vpop.xlane.xlu0 %2079
    %2081 = vmax.xlane.f32.xlu0 %v2058
    %v2082 = vpop.xlane.xlu0 %2081
    %2083 = vmax.xlane.f32.xlu0 %v2059
    %v2084 = vpop.xlane.xlu0 %2083
    %2085 = vmax.xlane.f32.xlu0 %v2060
    %v2086 = vpop.xlane.xlu0 %2085
    %2087 = vmax.xlane.f32.xlu0 %v2061
    %v2088 = vpop.xlane.xlu0 %2087
    %2089 = vmax.xlane.f32.xlu0 %v2062
    %v2090 = vpop.xlane.xlu0 %2089
    %2091 = vmax.xlane.f32.xlu0 %v2063
    %v2092 = vpop.xlane.xlu0 %2091
    %2093 = vmax.xlane.f32.xlu0 %v2064
    %v2094 = vpop.xlane.xlu0 %2093
    %2095 = vmax.xlane.f32.xlu0 %v2065
    %v2096 = vpop.xlane.xlu0 %2095
    %2097 = vmax.xlane.f32.xlu0 %v2066
    %v2098 = vpop.xlane.xlu0 %2097
    %v2099 = vsub.f32 %v2051, %v2068
    %v2100 = vsub.f32 %v2052, %v2070
    %v2101 = vsub.f32 %v2053, %v2072
    %v2102 = vsub.f32 %v2054, %v2074
    %v2103 = vsub.f32 %v2055, %v2076
    %v2104 = vsub.f32 %v2056, %v2078
    %v2105 = vsub.f32 %v2057, %v2080
    %v2106 = vsub.f32 %v2058, %v2082
    %v2107 = vsub.f32 %v2059, %v2084
    %v2108 = vsub.f32 %v2060, %v2086
    %v2109 = vsub.f32 %v2061, %v2088
    %v2110 = vsub.f32 %v2062, %v2090
    %v2111 = vsub.f32 %v2063, %v2092
    %v2112 = vsub.f32 %v2064, %v2094
    %v2113 = vsub.f32 %v2065, %v2096
    %v2114 = vsub.f32 %v2066, %v2098
    %v2115 = vpack.c.bf16 %v2100, %v2099
    %v2116 = vpack.c.bf16 %v2102, %v2101
    %v2117 = vpack.c.bf16 %v2104, %v2103
    %v2118 = vpack.c.bf16 %v2106, %v2105
    %v2119 = vpack.c.bf16 %v2108, %v2107
    %v2120 = vpack.c.bf16 %v2110, %v2109
    %v2121 = vpack.c.bf16 %v2112, %v2111
    %v2122 = vpack.c.bf16 %v2114, %v2113
    %v2124 = vmul.bf16 %v2115, 1069105081
    %v2125 = vpow.bf16.pop %v2124
    %v2127 = vmul.bf16 %v2116, 1069105081
    %v2128 = vpow.bf16.pop %v2127
    %v2130 = vmul.bf16 %v2117, 1069105081
    %v2131 = vpow.bf16.pop %v2130
    %v2133 = vmul.bf16 %v2118, 1069105081
    %v2134 = vpow.bf16.pop %v2133
    %v2136 = vmul.bf16 %v2119, 1069105081
    %v2137 = vpow.bf16.pop %v2136
    %v2139 = vmul.bf16 %v2120, 1069105081
    %v2140 = vpow.bf16.pop %v2139
    %v2142 = vmul.bf16 %v2121, 1069105081
    %v2143 = vpow.bf16.pop %v2142
    %v2145 = vmul.bf16 %v2122, 1069105081
    %v2146 = vpow.bf16.pop %v2145
    %v2147 = vunpack.c.l.bf16 %v2125
    %v2148 = vunpack.c.h.bf16 %v2125
    %v2149 = vunpack.c.l.bf16 %v2128
    %v2150 = vunpack.c.h.bf16 %v2128
    %v2151 = vunpack.c.l.bf16 %v2131
    %v2152 = vunpack.c.h.bf16 %v2131
    %v2153 = vunpack.c.l.bf16 %v2134
    %v2154 = vunpack.c.h.bf16 %v2134
    %v2155 = vunpack.c.l.bf16 %v2137
    %v2156 = vunpack.c.h.bf16 %v2137
    %v2157 = vunpack.c.l.bf16 %v2140
    %v2158 = vunpack.c.h.bf16 %v2140
    %v2159 = vunpack.c.l.bf16 %v2143
    %v2160 = vunpack.c.h.bf16 %v2143
    %v2161 = vunpack.c.l.bf16 %v2146
    %v2162 = vunpack.c.h.bf16 %v2146
    %2163 = vadd.xlane.f32.xlu0 %v2147
    %v2164 = vpop.xlane.xlu0 %2163
    %2165 = vadd.xlane.f32.xlu0 %v2148
    %v2166 = vpop.xlane.xlu0 %2165
    %2167 = vadd.xlane.f32.xlu0 %v2149
    %v2168 = vpop.xlane.xlu0 %2167
    %2169 = vadd.xlane.f32.xlu0 %v2150
    %v2170 = vpop.xlane.xlu0 %2169
    %2171 = vadd.xlane.f32.xlu0 %v2151
    %v2172 = vpop.xlane.xlu0 %2171
    %2173 = vadd.xlane.f32.xlu0 %v2152
    %v2174 = vpop.xlane.xlu0 %2173
    %2175 = vadd.xlane.f32.xlu0 %v2153
    %v2176 = vpop.xlane.xlu0 %2175
    %2177 = vadd.xlane.f32.xlu0 %v2154
    %v2178 = vpop.xlane.xlu0 %2177
    %2179 = vadd.xlane.f32.xlu0 %v2155
    %v2180 = vpop.xlane.xlu0 %2179
    %2181 = vadd.xlane.f32.xlu0 %v2156
    %v2182 = vpop.xlane.xlu0 %2181
    %2183 = vadd.xlane.f32.xlu0 %v2157
    %v2184 = vpop.xlane.xlu0 %2183
    %2185 = vadd.xlane.f32.xlu0 %v2158
    %v2186 = vpop.xlane.xlu0 %2185
    %2187 = vadd.xlane.f32.xlu0 %v2159
    %v2188 = vpop.xlane.xlu0 %2187
    %2189 = vadd.xlane.f32.xlu0 %v2160
    %v2190 = vpop.xlane.xlu0 %2189
    %2191 = vadd.xlane.f32.xlu0 %v2161
    %v2192 = vpop.xlane.xlu0 %2191
    %2193 = vadd.xlane.f32.xlu0 %v2162
    %v2194 = vpop.xlane.xlu0 %2193
    %v2195 = vrcp.pop %v2164
    %v2196 = vrcp.pop %v2166
    %v2197 = vrcp.pop %v2168
    %v2198 = vrcp.pop %v2170
    %v2199 = vrcp.pop %v2172
    %v2200 = vrcp.pop %v2174
    %v2201 = vrcp.pop %v2176
    %v2202 = vrcp.pop %v2178
    %v2203 = vrcp.pop %v2180
    %v2204 = vrcp.pop %v2182
    %v2205 = vrcp.pop %v2184
    %v2206 = vrcp.pop %v2186
    %v2207 = vrcp.pop %v2188
    %v2208 = vrcp.pop %v2190
    %v2209 = vrcp.pop %v2192
    %v2210 = vrcp.pop %v2194
    %2219 = vrot.lane.b32.xlu0 %v1356, 96
    %v2220 = vpop.permute.xlu0 %2219
    %2221 = vrot.lane.b32.xlu0 %v1358, 96
    %v2222 = vpop.permute.xlu0 %2221
    %2223 = vrot.lane.b32.xlu0 %v1360, 96
    %v2224 = vpop.permute.xlu0 %2223
    %2225 = vrot.lane.b32.xlu0 %v1362, 96
    %v2226 = vpop.permute.xlu0 %2225
    %2227 = vrot.lane.b32.xlu0 %v1364, 96
    %v2228 = vpop.permute.xlu0 %2227
    %2229 = vrot.lane.b32.xlu0 %v1366, 96
    %v2230 = vpop.permute.xlu0 %2229
    %2231 = vrot.lane.b32.xlu0 %v1368, 96
    %v2232 = vpop.permute.xlu0 %2231
    %2233 = vrot.lane.b32.xlu0 %v1370, 96
    %v2234 = vpop.permute.xlu0 %2233
    %2243 = vmatprep.subr.bf16.mxu0 0
    %2244 = vmatpush1.bf16.msra.mxu0 %v2234
    %2245 = vmatprep.subr.bf16.mxu0 0
    %2246 = vmatpush1.bf16.msra.mxu0 %v2232
    %2247 = vmatprep.subr.bf16.mxu0 0
    %2248 = vmatpush1.bf16.msra.mxu0 %v2230
    %2249 = vmatprep.subr.bf16.mxu0 0
    %2250 = vmatpush1.bf16.msra.mxu0 %v2228
    %2251 = vmatprep.subr.bf16.mxu0 0
    %2252 = vmatpush1.bf16.msra.mxu0 %v2226
    %2253 = vmatprep.subr.bf16.mxu0 0
    %2254 = vmatpush1.bf16.msra.mxu0 %v2224
    %2255 = vmatprep.subr.bf16.mxu0 0
    %2256 = vmatpush1.bf16.msra.mxu0 %v2222
    %2257 = vmatprep.subr.bf16.mxu0 0
    %2258 = vmatpush1.bf16.msra.mxu0 %v2220
    %2259 = vmatprep.subr.bf16.mxu0 0
    %2260 = vmatpush2.bf16.msra.mxu0 0
    %2261 = vmatprep.subr.bf16.mxu0 0
    %2262 = vmatpush2.bf16.msra.mxu0 0
    %2263 = vmatprep.subr.bf16.mxu0 0
    %2264 = vmatpush2.bf16.msra.mxu0 0
    %2265 = vmatprep.subr.bf16.mxu0 0
    %2266 = vmatpush2.bf16.msra.mxu0 0
    %2267 = vmatprep.subr.bf16.mxu0 0
    %2268 = vmatpush2.bf16.msra.mxu0 0
    %2269 = vmatprep.subr.bf16.mxu0 0
    %2270 = vmatpush2.bf16.msra.mxu0 0
    %2271 = vmatprep.subr.bf16.mxu0 0
    %2272 = vmatpush2.bf16.msra.mxu0 0
    %2273 = vmatprep.subr.bf16.mxu0 0
    %2274 = vmatpush2.bf16.msra.mxu0 0
    %2275 = vmatprep.mubr.bf16.mxu0 0
    %2276 = vmatmul.mubr.bf16.gmra.mxu0 %v2125
    %v2277 = vpop.f32.mrf.mxu0
    %v2278 = vadd.f32 0.0, %v2277
    %v2279 = vpop.f32.mrf.mxu0
    %v2280 = vpop.f32.mrf.mxu0
    %v2281 = vadd.f32 0.0, %v2280
    %v2282 = vpop.f32.mrf.mxu0
    %2283 = vmatprep.mubr.bf16.mxu0 0
    %2284 = vmatmul.mubr.bf16.gmra.mxu0 %v2128
    %v2285 = vpop.f32.mrf.mxu0
    %v2286 = vadd.f32 0.0, %v2285
    %v2287 = vpop.f32.mrf.mxu0
    %v2288 = vpop.f32.mrf.mxu0
    %v2289 = vadd.f32 0.0, %v2288
    %v2290 = vpop.f32.mrf.mxu0
    %2291 = vmatprep.mubr.bf16.mxu0 0
    %2292 = vmatmul.mubr.bf16.gmra.mxu0 %v2131
    %v2293 = vpop.f32.mrf.mxu0
    %v2294 = vadd.f32 0.0, %v2293
    %v2295 = vpop.f32.mrf.mxu0
    %v2296 = vpop.f32.mrf.mxu0
    %v2297 = vadd.f32 0.0, %v2296
    %v2298 = vpop.f32.mrf.mxu0
    %2299 = vmatprep.mubr.bf16.mxu0 0
    %2300 = vmatmul.mubr.bf16.gmra.mxu0 %v2134
    %v2301 = vpop.f32.mrf.mxu0
    %v2302 = vadd.f32 0.0, %v2301
    %v2303 = vpop.f32.mrf.mxu0
    %v2304 = vpop.f32.mrf.mxu0
    %v2305 = vadd.f32 0.0, %v2304
    %v2306 = vpop.f32.mrf.mxu0
    %2307 = vmatprep.mubr.bf16.mxu0 0
    %2308 = vmatmul.mubr.bf16.gmra.mxu0 %v2137
    %v2309 = vpop.f32.mrf.mxu0
    %v2310 = vadd.f32 0.0, %v2309
    %v2311 = vpop.f32.mrf.mxu0
    %v2312 = vpop.f32.mrf.mxu0
    %v2313 = vadd.f32 0.0, %v2312
    %v2314 = vpop.f32.mrf.mxu0
    %2315 = vmatprep.mubr.bf16.mxu0 0
    %2316 = vmatmul.mubr.bf16.gmra.mxu0 %v2140
    %v2317 = vpop.f32.mrf.mxu0
    %v2318 = vadd.f32 0.0, %v2317
    %v2319 = vpop.f32.mrf.mxu0
    %v2320 = vpop.f32.mrf.mxu0
    %v2321 = vadd.f32 0.0, %v2320
    %v2322 = vpop.f32.mrf.mxu0
    %2323 = vmatprep.mubr.bf16.mxu0 0
    %2324 = vmatmul.mubr.bf16.gmra.mxu0 %v2143
    %v2325 = vpop.f32.mrf.mxu0
    %v2326 = vadd.f32 0.0, %v2325
    %v2327 = vpop.f32.mrf.mxu0
    %v2328 = vpop.f32.mrf.mxu0
    %v2329 = vadd.f32 0.0, %v2328
    %v2330 = vpop.f32.mrf.mxu0
    %2331 = vmatprep.mubr.bf16.mxu0 0
    %2332 = vmatmul.mubr.bf16.gmra.mxu0 %v2146
    %v2333 = vpop.f32.mrf.mxu0
    %v2334 = vadd.f32 0.0, %v2333
    %v2335 = vpop.f32.mrf.mxu0
    %v2336 = vpop.f32.mrf.mxu0
    %v2337 = vadd.f32 0.0, %v2336
    %v2338 = vpop.f32.mrf.mxu0
    %2339 = vdwg.mxu0
    %v2340 = vmul.f32 %v2278, %v2195
    %v2341 = vmul.f32 %v2281, %v2196
    %v2342 = vmul.f32 %v2286, %v2197
    %v2343 = vmul.f32 %v2289, %v2198
    %v2344 = vmul.f32 %v2294, %v2199
    %v2345 = vmul.f32 %v2297, %v2200
    %v2346 = vmul.f32 %v2302, %v2201
    %v2347 = vmul.f32 %v2305, %v2202
    %v2348 = vmul.f32 %v2310, %v2203
    %v2349 = vmul.f32 %v2313, %v2204
    %v2350 = vmul.f32 %v2318, %v2205
    %v2351 = vmul.f32 %v2321, %v2206
    %v2352 = vmul.f32 %v2326, %v2207
    %v2353 = vmul.f32 %v2329, %v2208
    %v2354 = vmul.f32 %v2334, %v2209
    %v2355 = vmul.f32 %v2337, %v2210
    %2372 = vrot.lane.b32.xlu0 %v2340, 32
    %v2373 = vpop.permute.xlu0 %2372
    %2374 = vrot.lane.b32.xlu0 %v2341, 32
    %v2375 = vpop.permute.xlu0 %2374
    %2376 = vrot.lane.b32.xlu0 %v2342, 32
    %v2377 = vpop.permute.xlu0 %2376
    %2378 = vrot.lane.b32.xlu0 %v2343, 32
    %v2379 = vpop.permute.xlu0 %2378
    %2380 = vrot.lane.b32.xlu0 %v2344, 32
    %v2381 = vpop.permute.xlu0 %2380
    %2382 = vrot.lane.b32.xlu0 %v2345, 32
    %v2383 = vpop.permute.xlu0 %2382
    %2384 = vrot.lane.b32.xlu0 %v2346, 32
    %v2385 = vpop.permute.xlu0 %2384
    %2386 = vrot.lane.b32.xlu0 %v2347, 32
    %v2387 = vpop.permute.xlu0 %2386
    %2388 = vrot.lane.b32.xlu0 %v2348, 32
    %v2389 = vpop.permute.xlu0 %2388
    %2390 = vrot.lane.b32.xlu0 %v2349, 32
    %v2391 = vpop.permute.xlu0 %2390
    %2392 = vrot.lane.b32.xlu0 %v2350, 32
    %v2393 = vpop.permute.xlu0 %2392
    %2394 = vrot.lane.b32.xlu0 %v2351, 32
    %v2395 = vpop.permute.xlu0 %2394
    %2396 = vrot.lane.b32.xlu0 %v2352, 32
    %v2397 = vpop.permute.xlu0 %2396
    %2398 = vrot.lane.b32.xlu0 %v2353, 32
    %v2399 = vpop.permute.xlu0 %2398
    %2400 = vrot.lane.b32.xlu0 %v2354, 32
    %v2401 = vpop.permute.xlu0 %2400
    %2402 = vrot.lane.b32.xlu0 %v2355, 32
    %v2403 = vpop.permute.xlu0 %2402
    %vm2420 = vcmask 523520
    %2421 = vst.msk [vmem:[#allocation7] sm:$0xff] %vm2420, %v2373
    %2422 = vst.msk [vmem:[#allocation7 + $0x10] sm:$0xff] %vm2420, %v2375
    %2423 = vst.msk [vmem:[#allocation7 + $0x20] sm:$0xff] %vm2420, %v2377
    %2424 = vst.msk [vmem:[#allocation7 + $0x30] sm:$0xff] %vm2420, %v2379
    %2425 = vst.msk [vmem:[#allocation7 + $0x40] sm:$0xff] %vm2420, %v2381
    %2426 = vst.msk [vmem:[#allocation7 + $0x50] sm:$0xff] %vm2420, %v2383
    %2427 = vst.msk [vmem:[#allocation7 + $0x60] sm:$0xff] %vm2420, %v2385
    %2428 = vst.msk [vmem:[#allocation7 + $0x70] sm:$0xff] %vm2420, %v2387
    %2429 = vst.msk [vmem:[#allocation7 + $0x80] sm:$0xff] %vm2420, %v2389
    %2430 = vst.msk [vmem:[#allocation7 + $0x90] sm:$0xff] %vm2420, %v2391
    %2431 = vst.msk [vmem:[#allocation7 + $0xa0] sm:$0xff] %vm2420, %v2393
    %2432 = vst.msk [vmem:[#allocation7 + $0xb0] sm:$0xff] %vm2420, %v2395
    %2433 = vst.msk [vmem:[#allocation7 + $0xc0] sm:$0xff] %vm2420, %v2397
    %2434 = vst.msk [vmem:[#allocation7 + $0xd0] sm:$0xff] %vm2420, %v2399
    %2435 = vst.msk [vmem:[#allocation7 + $0xe0] sm:$0xff] %vm2420, %v2401
    %2436 = vst.msk [vmem:[#allocation7 + $0xf0] sm:$0xff] %vm2420, %v2403
    %2437 = vrot.lane.b32.xlu0 %v1294, 64
    %v2438 = vpop.permute.xlu0 %2437
    %2439 = vrot.lane.b32.xlu0 %v1298, 64
    %v2440 = vpop.permute.xlu0 %2439
    %2441 = vrot.lane.b32.xlu0 %v1302, 64
    %v2442 = vpop.permute.xlu0 %2441
    %2443 = vrot.lane.b32.xlu0 %v1306, 64
    %v2444 = vpop.permute.xlu0 %2443
    %2445 = vrot.lane.b32.xlu0 %v1310, 64
    %v2446 = vpop.permute.xlu0 %2445
    %2447 = vrot.lane.b32.xlu0 %v1314, 64
    %v2448 = vpop.permute.xlu0 %2447
    %2449 = vrot.lane.b32.xlu0 %v1318, 64
    %v2450 = vpop.permute.xlu0 %2449
    %2451 = vrot.lane.b32.xlu0 %v1322, 64
    %v2452 = vpop.permute.xlu0 %2451
    %2453 = vrot.lane.b32.xlu0 %v1292, 64
    %v2454 = vpop.permute.xlu0 %2453
    %2455 = vrot.lane.b32.xlu0 %v1296, 64
    %v2456 = vpop.permute.xlu0 %2455
    %2457 = vrot.lane.b32.xlu0 %v1300, 64
    %v2458 = vpop.permute.xlu0 %2457
    %2459 = vrot.lane.b32.xlu0 %v1304, 64
    %v2460 = vpop.permute.xlu0 %2459
    %2461 = vrot.lane.b32.xlu0 %v1308, 64
    %v2462 = vpop.permute.xlu0 %2461
    %2463 = vrot.lane.b32.xlu0 %v1312, 64
    %v2464 = vpop.permute.xlu0 %2463
    %2465 = vrot.lane.b32.xlu0 %v1316, 64
    %v2466 = vpop.permute.xlu0 %2465
    %2467 = vrot.lane.b32.xlu0 %v1320, 64
    %v2468 = vpop.permute.xlu0 %2467
    %v2470 = vsel %vm1423, %v2438, 0
    %v2473 = vsel %vm1423, %v2440, 0
    %v2476 = vsel %vm1423, %v2442, 0
    %v2479 = vsel %vm1423, %v2444, 0
    %v2482 = vsel %vm1423, %v2446, 0
    %v2485 = vsel %vm1423, %v2448, 0
    %v2488 = vsel %vm1423, %v2450, 0
    %v2491 = vsel %vm1423, %v2452, 0
    %v2494 = vsel %vm1423, %v2454, 0
    %v2497 = vsel %vm1423, %v2456, 0
    %v2500 = vsel %vm1423, %v2458, 0
    %v2503 = vsel %vm1423, %v2460, 0
    %v2506 = vsel %vm1423, %v2462, 0
    %v2509 = vsel %vm1423, %v2464, 0
    %v2512 = vsel %vm1423, %v2466, 0
    %v2515 = vsel %vm1423, %v2468, 0
    %2517 = vmatprep.subr.bf16.mxu0 0
    %2518 = vmatpush1.bf16.xpose.msra.mxu0 %v2515
    %2519 = vmatprep.subr.bf16.mxu0 0
    %2520 = vmatpush1.bf16.xpose.msra.mxu0 %v2512
    %2521 = vmatprep.subr.bf16.mxu0 0
    %2522 = vmatpush1.bf16.xpose.msra.mxu0 %v2509
    %2523 = vmatprep.subr.bf16.mxu0 0
    %2524 = vmatpush1.bf16.xpose.msra.mxu0 %v2506
    %2525 = vmatprep.subr.bf16.mxu0 0
    %2526 = vmatpush1.bf16.xpose.msra.mxu0 %v2503
    %2527 = vmatprep.subr.bf16.mxu0 0
    %2528 = vmatpush1.bf16.xpose.msra.mxu0 %v2500
    %2529 = vmatprep.subr.bf16.mxu0 0
    %2530 = vmatpush1.bf16.xpose.msra.mxu0 %v2497
    %2531 = vmatprep.subr.bf16.mxu0 0
    %2532 = vmatpush1.bf16.xpose.msra.mxu0 %v2494
    %2533 = vmatprep.subr.bf16.mxu0 0
    %2534 = vmatpush2.bf16.xpose.msra.mxu0 0
    %2535 = vmatprep.subr.bf16.mxu0 0
    %2536 = vmatpush2.bf16.xpose.msra.mxu0 0
    %2537 = vmatprep.subr.bf16.mxu0 0
    %2538 = vmatpush2.bf16.xpose.msra.mxu0 0
    %2539 = vmatprep.subr.bf16.mxu0 0
    %2540 = vmatpush2.bf16.xpose.msra.mxu0 0
    %2541 = vmatprep.subr.bf16.mxu0 0
    %2542 = vmatpush2.bf16.xpose.msra.mxu0 0
    %2543 = vmatprep.subr.bf16.mxu0 0
    %2544 = vmatpush2.bf16.xpose.msra.mxu0 0
    %2545 = vmatprep.subr.bf16.mxu0 0
    %2546 = vmatpush2.bf16.xpose.msra.mxu0 0
    %2547 = vmatprep.subr.bf16.mxu0 0
    %2548 = vmatpush2.bf16.xpose.msra.mxu0 0
    %2549 = vmatprep.mubr.bf16.mxu0 0
    %2550 = vmatmul.mubr.bf16.gmra.mxu0 %v2470
    %v2551 = vpop.f32.mrf.mxu0
    %v2552 = vadd.f32 0.0, %v2551
    %v2553 = vpop.f32.mrf.mxu0
    %v2554 = vpop.f32.mrf.mxu0
    %v2555 = vadd.f32 0.0, %v2554
    %v2556 = vpop.f32.mrf.mxu0
    %2557 = vmatprep.mubr.bf16.mxu0 0
    %2558 = vmatmul.mubr.bf16.gmra.mxu0 %v2473
    %v2559 = vpop.f32.mrf.mxu0
    %v2560 = vadd.f32 0.0, %v2559
    %v2561 = vpop.f32.mrf.mxu0
    %v2562 = vpop.f32.mrf.mxu0
    %v2563 = vadd.f32 0.0, %v2562
    %v2564 = vpop.f32.mrf.mxu0
    %2565 = vmatprep.mubr.bf16.mxu0 0
    %2566 = vmatmul.mubr.bf16.gmra.mxu0 %v2476
    %v2567 = vpop.f32.mrf.mxu0
    %v2568 = vadd.f32 0.0, %v2567
    %v2569 = vpop.f32.mrf.mxu0
    %v2570 = vpop.f32.mrf.mxu0
    %v2571 = vadd.f32 0.0, %v2570
    %v2572 = vpop.f32.mrf.mxu0
    %2573 = vmatprep.mubr.bf16.mxu0 0
    %2574 = vmatmul.mubr.bf16.gmra.mxu0 %v2479
    %v2575 = vpop.f32.mrf.mxu0
    %v2576 = vadd.f32 0.0, %v2575
    %v2577 = vpop.f32.mrf.mxu0
    %v2578 = vpop.f32.mrf.mxu0
    %v2579 = vadd.f32 0.0, %v2578
    %v2580 = vpop.f32.mrf.mxu0
    %2581 = vmatprep.mubr.bf16.mxu0 0
    %2582 = vmatmul.mubr.bf16.gmra.mxu0 %v2482
    %v2583 = vpop.f32.mrf.mxu0
    %v2584 = vadd.f32 0.0, %v2583
    %v2585 = vpop.f32.mrf.mxu0
    %v2586 = vpop.f32.mrf.mxu0
    %v2587 = vadd.f32 0.0, %v2586
    %v2588 = vpop.f32.mrf.mxu0
    %2589 = vmatprep.mubr.bf16.mxu0 0
    %2590 = vmatmul.mubr.bf16.gmra.mxu0 %v2485
    %v2591 = vpop.f32.mrf.mxu0
    %v2592 = vadd.f32 0.0, %v2591
    %v2593 = vpop.f32.mrf.mxu0
    %v2594 = vpop.f32.mrf.mxu0
    %v2595 = vadd.f32 0.0, %v2594
    %v2596 = vpop.f32.mrf.mxu0
    %2597 = vmatprep.mubr.bf16.mxu0 0
    %2598 = vmatmul.mubr.bf16.gmra.mxu0 %v2488
    %v2599 = vpop.f32.mrf.mxu0
    %v2600 = vadd.f32 0.0, %v2599
    %v2601 = vpop.f32.mrf.mxu0
    %v2602 = vpop.f32.mrf.mxu0
    %v2603 = vadd.f32 0.0, %v2602
    %v2604 = vpop.f32.mrf.mxu0
    %2605 = vmatprep.mubr.bf16.mxu0 0
    %2606 = vmatmul.mubr.bf16.gmra.mxu0 %v2491
    %v2607 = vpop.f32.mrf.mxu0
    %v2608 = vadd.f32 0.0, %v2607
    %v2609 = vpop.f32.mrf.mxu0
    %v2610 = vpop.f32.mrf.mxu0
    %v2611 = vadd.f32 0.0, %v2610
    %v2612 = vpop.f32.mrf.mxu0
    %2613 = vdwg.mxu0
    %v2614 = vsel %vm1407, %v2552, -inf
    %v2615 = vsel %vm1408, %v2555, -inf
    %v2616 = vsel %vm1409, %v2560, -inf
    %v2617 = vsel %vm1410, %v2563, -inf
    %v2618 = vsel %vm1411, %v2568, -inf
    %v2619 = vsel %vm1412, %v2571, -inf
    %v2620 = vsel %vm1413, %v2576, -inf
    %v2621 = vsel %vm1414, %v2579, -inf
    %v2622 = vsel %vm1415, %v2584, -inf
    %v2623 = vsel %vm1416, %v2587, -inf
    %v2624 = vsel %vm1417, %v2592, -inf
    %v2625 = vsel %vm1418, %v2595, -inf
    %v2626 = vsel %vm1419, %v2600, -inf
    %v2627 = vsel %vm1420, %v2603, -inf
    %v2628 = vsel %vm1421, %v2608, -inf
    %v2629 = vsel %vm1422, %v2611, -inf
    %2630 = vmax.xlane.f32.xlu0 %v2614
    %v2631 = vpop.xlane.xlu0 %2630
    %2632 = vmax.xlane.f32.xlu0 %v2615
    %v2633 = vpop.xlane.xlu0 %2632
    %2634 = vmax.xlane.f32.xlu0 %v2616
    %v2635 = vpop.xlane.xlu0 %2634
    %2636 = vmax.xlane.f32.xlu0 %v2617
    %v2637 = vpop.xlane.xlu0 %2636
    %2638 = vmax.xlane.f32.xlu0 %v2618
    %v2639 = vpop.xlane.xlu0 %2638
    %2640 = vmax.xlane.f32.xlu0 %v2619
    %v2641 = vpop.xlane.xlu0 %2640
    %2642 = vmax.xlane.f32.xlu0 %v2620
    %v2643 = vpop.xlane.xlu0 %2642
    %2644 = vmax.xlane.f32.xlu0 %v2621
    %v2645 = vpop.xlane.xlu0 %2644
    %2646 = vmax.xlane.f32.xlu0 %v2622
    %v2647 = vpop.xlane.xlu0 %2646
    %2648 = vmax.xlane.f32.xlu0 %v2623
    %v2649 = vpop.xlane.xlu0 %2648
    %2650 = vmax.xlane.f32.xlu0 %v2624
    %v2651 = vpop.xlane.xlu0 %2650
    %2652 = vmax.xlane.f32.xlu0 %v2625
    %v2653 = vpop.xlane.xlu0 %2652
    %2654 = vmax.xlane.f32.xlu0 %v2626
    %v2655 = vpop.xlane.xlu0 %2654
    %2656 = vmax.xlane.f32.xlu0 %v2627
    %v2657 = vpop.xlane.xlu0 %2656
    %2658 = vmax.xlane.f32.xlu0 %v2628
    %v2659 = vpop.xlane.xlu0 %2658
    %2660 = vmax.xlane.f32.xlu0 %v2629
    %v2661 = vpop.xlane.xlu0 %2660
    %v2662 = vsub.f32 %v2614, %v2631
    %v2663 = vsub.f32 %v2615, %v2633
    %v2664 = vsub.f32 %v2616, %v2635
    %v2665 = vsub.f32 %v2617, %v2637
    %v2666 = vsub.f32 %v2618, %v2639
    %v2667 = vsub.f32 %v2619, %v2641
    %v2668 = vsub.f32 %v2620, %v2643
    %v2669 = vsub.f32 %v2621, %v2645
    %v2670 = vsub.f32 %v2622, %v2647
    %v2671 = vsub.f32 %v2623, %v2649
    %v2672 = vsub.f32 %v2624, %v2651
    %v2673 = vsub.f32 %v2625, %v2653
    %v2674 = vsub.f32 %v2626, %v2655
    %v2675 = vsub.f32 %v2627, %v2657
    %v2676 = vsub.f32 %v2628, %v2659
    %v2677 = vsub.f32 %v2629, %v2661
    %v2678 = vpack.c.bf16 %v2663, %v2662
    %v2679 = vpack.c.bf16 %v2665, %v2664
    %v2680 = vpack.c.bf16 %v2667, %v2666
    %v2681 = vpack.c.bf16 %v2669, %v2668
    %v2682 = vpack.c.bf16 %v2671, %v2670
    %v2683 = vpack.c.bf16 %v2673, %v2672
    %v2684 = vpack.c.bf16 %v2675, %v2674
    %v2685 = vpack.c.bf16 %v2677, %v2676
    %v2687 = vmul.bf16 %v2678, 1069105081
    %v2688 = vpow.bf16.pop %v2687
    %v2690 = vmul.bf16 %v2679, 1069105081
    %v2691 = vpow.bf16.pop %v2690
    %v2693 = vmul.bf16 %v2680, 1069105081
    %v2694 = vpow.bf16.pop %v2693
    %v2696 = vmul.bf16 %v2681, 1069105081
    %v2697 = vpow.bf16.pop %v2696
    %v2699 = vmul.bf16 %v2682, 1069105081
    %v2700 = vpow.bf16.pop %v2699
    %v2702 = vmul.bf16 %v2683, 1069105081
    %v2703 = vpow.bf16.pop %v2702
    %v2705 = vmul.bf16 %v2684, 1069105081
    %v2706 = vpow.bf16.pop %v2705
    %v2708 = vmul.bf16 %v2685, 1069105081
    %v2709 = vpow.bf16.pop %v2708
    %v2710 = vunpack.c.l.bf16 %v2688
    %v2711 = vunpack.c.h.bf16 %v2688
    %v2712 = vunpack.c.l.bf16 %v2691
    %v2713 = vunpack.c.h.bf16 %v2691
    %v2714 = vunpack.c.l.bf16 %v2694
    %v2715 = vunpack.c.h.bf16 %v2694
    %v2716 = vunpack.c.l.bf16 %v2697
    %v2717 = vunpack.c.h.bf16 %v2697
    %v2718 = vunpack.c.l.bf16 %v2700
    %v2719 = vunpack.c.h.bf16 %v2700
    %v2720 = vunpack.c.l.bf16 %v2703
    %v2721 = vunpack.c.h.bf16 %v2703
    %v2722 = vunpack.c.l.bf16 %v2706
    %v2723 = vunpack.c.h.bf16 %v2706
    %v2724 = vunpack.c.l.bf16 %v2709
    %v2725 = vunpack.c.h.bf16 %v2709
    %2726 = vadd.xlane.f32.xlu0 %v2710
    %v2727 = vpop.xlane.xlu0 %2726
    %2728 = vadd.xlane.f32.xlu0 %v2711
    %v2729 = vpop.xlane.xlu0 %2728
    %2730 = vadd.xlane.f32.xlu0 %v2712
    %v2731 = vpop.xlane.xlu0 %2730
    %2732 = vadd.xlane.f32.xlu0 %v2713
    %v2733 = vpop.xlane.xlu0 %2732
    %2734 = vadd.xlane.f32.xlu0 %v2714
    %v2735 = vpop.xlane.xlu0 %2734
    %2736 = vadd.xlane.f32.xlu0 %v2715
    %v2737 = vpop.xlane.xlu0 %2736
    %2738 = vadd.xlane.f32.xlu0 %v2716
    %v2739 = vpop.xlane.xlu0 %2738
    %2740 = vadd.xlane.f32.xlu0 %v2717
    %v2741 = vpop.xlane.xlu0 %2740
    %2742 = vadd.xlane.f32.xlu0 %v2718
    %v2743 = vpop.xlane.xlu0 %2742
    %2744 = vadd.xlane.f32.xlu0 %v2719
    %v2745 = vpop.xlane.xlu0 %2744
    %2746 = vadd.xlane.f32.xlu0 %v2720
    %v2747 = vpop.xlane.xlu0 %2746
    %2748 = vadd.xlane.f32.xlu0 %v2721
    %v2749 = vpop.xlane.xlu0 %2748
    %2750 = vadd.xlane.f32.xlu0 %v2722
    %v2751 = vpop.xlane.xlu0 %2750
    %2752 = vadd.xlane.f32.xlu0 %v2723
    %v2753 = vpop.xlane.xlu0 %2752
    %2754 = vadd.xlane.f32.xlu0 %v2724
    %v2755 = vpop.xlane.xlu0 %2754
    %2756 = vadd.xlane.f32.xlu0 %v2725
    %v2757 = vpop.xlane.xlu0 %2756
    %v2758 = vrcp.pop %v2727
    %v2759 = vrcp.pop %v2729
    %v2760 = vrcp.pop %v2731
    %v2761 = vrcp.pop %v2733
    %v2762 = vrcp.pop %v2735
    %v2763 = vrcp.pop %v2737
    %v2764 = vrcp.pop %v2739
    %v2765 = vrcp.pop %v2741
    %v2766 = vrcp.pop %v2743
    %v2767 = vrcp.pop %v2745
    %v2768 = vrcp.pop %v2747
    %v2769 = vrcp.pop %v2749
    %v2770 = vrcp.pop %v2751
    %v2771 = vrcp.pop %v2753
    %v2772 = vrcp.pop %v2755
    %v2773 = vrcp.pop %v2757
    %2774 = vrot.lane.b32.xlu0 %v1356, 64
    %v2775 = vpop.permute.xlu0 %2774
    %2776 = vrot.lane.b32.xlu0 %v1358, 64
    %v2777 = vpop.permute.xlu0 %2776
    %2778 = vrot.lane.b32.xlu0 %v1360, 64
    %v2779 = vpop.permute.xlu0 %2778
    %2780 = vrot.lane.b32.xlu0 %v1362, 64
    %v2781 = vpop.permute.xlu0 %2780
    %2782 = vrot.lane.b32.xlu0 %v1364, 64
    %v2783 = vpop.permute.xlu0 %2782
    %2784 = vrot.lane.b32.xlu0 %v1366, 64
    %v2785 = vpop.permute.xlu0 %2784
    %2786 = vrot.lane.b32.xlu0 %v1368, 64
    %v2787 = vpop.permute.xlu0 %2786
    %2788 = vrot.lane.b32.xlu0 %v1370, 64
    %v2789 = vpop.permute.xlu0 %2788
    %2798 = vmatprep.subr.bf16.mxu0 0
    %2799 = vmatpush1.bf16.msra.mxu0 %v2789
    %2800 = vmatprep.subr.bf16.mxu0 0
    %2801 = vmatpush1.bf16.msra.mxu0 %v2787
    %2802 = vmatprep.subr.bf16.mxu0 0
    %2803 = vmatpush1.bf16.msra.mxu0 %v2785
    %2804 = vmatprep.subr.bf16.mxu0 0
    %2805 = vmatpush1.bf16.msra.mxu0 %v2783
    %2806 = vmatprep.subr.bf16.mxu0 0
    %2807 = vmatpush1.bf16.msra.mxu0 %v2781
    %2808 = vmatprep.subr.bf16.mxu0 0
    %2809 = vmatpush1.bf16.msra.mxu0 %v2779
    %2810 = vmatprep.subr.bf16.mxu0 0
    %2811 = vmatpush1.bf16.msra.mxu0 %v2777
    %2812 = vmatprep.subr.bf16.mxu0 0
    %2813 = vmatpush1.bf16.msra.mxu0 %v2775
    %2814 = vmatprep.subr.bf16.mxu0 0
    %2815 = vmatpush2.bf16.msra.mxu0 0
    %2816 = vmatprep.subr.bf16.mxu0 0
    %2817 = vmatpush2.bf16.msra.mxu0 0
    %2818 = vmatprep.subr.bf16.mxu0 0
    %2819 = vmatpush2.bf16.msra.mxu0 0
    %2820 = vmatprep.subr.bf16.mxu0 0
    %2821 = vmatpush2.bf16.msra.mxu0 0
    %2822 = vmatprep.subr.bf16.mxu0 0
    %2823 = vmatpush2.bf16.msra.mxu0 0
    %2824 = vmatprep.subr.bf16.mxu0 0
    %2825 = vmatpush2.bf16.msra.mxu0 0
    %2826 = vmatprep.subr.bf16.mxu0 0
    %2827 = vmatpush2.bf16.msra.mxu0 0
    %2828 = vmatprep.subr.bf16.mxu0 0
    %2829 = vmatpush2.bf16.msra.mxu0 0
    %2830 = vmatprep.mubr.bf16.mxu0 0
    %2831 = vmatmul.mubr.bf16.gmra.mxu0 %v2688
    %v2832 = vpop.f32.mrf.mxu0
    %v2833 = vadd.f32 0.0, %v2832
    %v2834 = vpop.f32.mrf.mxu0
    %v2835 = vpop.f32.mrf.mxu0
    %v2836 = vadd.f32 0.0, %v2835
    %v2837 = vpop.f32.mrf.mxu0
    %2838 = vmatprep.mubr.bf16.mxu0 0
    %2839 = vmatmul.mubr.bf16.gmra.mxu0 %v2691
    %v2840 = vpop.f32.mrf.mxu0
    %v2841 = vadd.f32 0.0, %v2840
    %v2842 = vpop.f32.mrf.mxu0
    %v2843 = vpop.f32.mrf.mxu0
    %v2844 = vadd.f32 0.0, %v2843
    %v2845 = vpop.f32.mrf.mxu0
    %2846 = vmatprep.mubr.bf16.mxu0 0
    %2847 = vmatmul.mubr.bf16.gmra.mxu0 %v2694
    %v2848 = vpop.f32.mrf.mxu0
    %v2849 = vadd.f32 0.0, %v2848
    %v2850 = vpop.f32.mrf.mxu0
    %v2851 = vpop.f32.mrf.mxu0
    %v2852 = vadd.f32 0.0, %v2851
    %v2853 = vpop.f32.mrf.mxu0
    %2854 = vmatprep.mubr.bf16.mxu0 0
    %2855 = vmatmul.mubr.bf16.gmra.mxu0 %v2697
    %v2856 = vpop.f32.mrf.mxu0
    %v2857 = vadd.f32 0.0, %v2856
    %v2858 = vpop.f32.mrf.mxu0
    %v2859 = vpop.f32.mrf.mxu0
    %v2860 = vadd.f32 0.0, %v2859
    %v2861 = vpop.f32.mrf.mxu0
    %2862 = vmatprep.mubr.bf16.mxu0 0
    %2863 = vmatmul.mubr.bf16.gmra.mxu0 %v2700
    %v2864 = vpop.f32.mrf.mxu0
    %v2865 = vadd.f32 0.0, %v2864
    %v2866 = vpop.f32.mrf.mxu0
    %v2867 = vpop.f32.mrf.mxu0
    %v2868 = vadd.f32 0.0, %v2867
    %v2869 = vpop.f32.mrf.mxu0
    %2870 = vmatprep.mubr.bf16.mxu0 0
    %2871 = vmatmul.mubr.bf16.gmra.mxu0 %v2703
    %v2872 = vpop.f32.mrf.mxu0
    %v2873 = vadd.f32 0.0, %v2872
    %v2874 = vpop.f32.mrf.mxu0
    %v2875 = vpop.f32.mrf.mxu0
    %v2876 = vadd.f32 0.0, %v2875
    %v2877 = vpop.f32.mrf.mxu0
    %2878 = vmatprep.mubr.bf16.mxu0 0
    %2879 = vmatmul.mubr.bf16.gmra.mxu0 %v2706
    %v2880 = vpop.f32.mrf.mxu0
    %v2881 = vadd.f32 0.0, %v2880
    %v2882 = vpop.f32.mrf.mxu0
    %v2883 = vpop.f32.mrf.mxu0
    %v2884 = vadd.f32 0.0, %v2883
    %v2885 = vpop.f32.mrf.mxu0
    %2886 = vmatprep.mubr.bf16.mxu0 0
    %2887 = vmatmul.mubr.bf16.gmra.mxu0 %v2709
    %v2888 = vpop.f32.mrf.mxu0
    %v2889 = vadd.f32 0.0, %v2888
    %v2890 = vpop.f32.mrf.mxu0
    %v2891 = vpop.f32.mrf.mxu0
    %v2892 = vadd.f32 0.0, %v2891
    %v2893 = vpop.f32.mrf.mxu0
    %2894 = vdwg.mxu0
    %v2895 = vmul.f32 %v2833, %v2758
    %v2896 = vmul.f32 %v2836, %v2759
    %v2897 = vmul.f32 %v2841, %v2760
    %v2898 = vmul.f32 %v2844, %v2761
    %v2899 = vmul.f32 %v2849, %v2762
    %v2900 = vmul.f32 %v2852, %v2763
    %v2901 = vmul.f32 %v2857, %v2764
    %v2902 = vmul.f32 %v2860, %v2765
    %v2903 = vmul.f32 %v2865, %v2766
    %v2904 = vmul.f32 %v2868, %v2767
    %v2905 = vmul.f32 %v2873, %v2768
    %v2906 = vmul.f32 %v2876, %v2769
    %v2907 = vmul.f32 %v2881, %v2770
    %v2908 = vmul.f32 %v2884, %v2771
    %v2909 = vmul.f32 %v2889, %v2772
    %v2910 = vmul.f32 %v2892, %v2773
    %2927 = vrot.lane.b32.xlu0 %v2895, 64
    %v2928 = vpop.permute.xlu0 %2927
    %2929 = vrot.lane.b32.xlu0 %v2896, 64
    %v2930 = vpop.permute.xlu0 %2929
    %2931 = vrot.lane.b32.xlu0 %v2897, 64
    %v2932 = vpop.permute.xlu0 %2931
    %2933 = vrot.lane.b32.xlu0 %v2898, 64
    %v2934 = vpop.permute.xlu0 %2933
    %2935 = vrot.lane.b32.xlu0 %v2899, 64
    %v2936 = vpop.permute.xlu0 %2935
    %2937 = vrot.lane.b32.xlu0 %v2900, 64
    %v2938 = vpop.permute.xlu0 %2937
    %2939 = vrot.lane.b32.xlu0 %v2901, 64
    %v2940 = vpop.permute.xlu0 %2939
    %2941 = vrot.lane.b32.xlu0 %v2902, 64
    %v2942 = vpop.permute.xlu0 %2941
    %2943 = vrot.lane.b32.xlu0 %v2903, 64
    %v2944 = vpop.permute.xlu0 %2943
    %2945 = vrot.lane.b32.xlu0 %v2904, 64
    %v2946 = vpop.permute.xlu0 %2945
    %2947 = vrot.lane.b32.xlu0 %v2905, 64
    %v2948 = vpop.permute.xlu0 %2947
    %2949 = vrot.lane.b32.xlu0 %v2906, 64
    %v2950 = vpop.permute.xlu0 %2949
    %2951 = vrot.lane.b32.xlu0 %v2907, 64
    %v2952 = vpop.permute.xlu0 %2951
    %2953 = vrot.lane.b32.xlu0 %v2908, 64
    %v2954 = vpop.permute.xlu0 %2953
    %2955 = vrot.lane.b32.xlu0 %v2909, 64
    %v2956 = vpop.permute.xlu0 %2955
    %2957 = vrot.lane.b32.xlu0 %v2910, 64
    %v2958 = vpop.permute.xlu0 %2957
    %vm2975 = vcmask 785920
    %2976 = vst.msk [vmem:[#allocation7] sm:$0xff] %vm2975, %v2928
    %2977 = vst.msk [vmem:[#allocation7 + $0x10] sm:$0xff] %vm2975, %v2930
    %2978 = vst.msk [vmem:[#allocation7 + $0x20] sm:$0xff] %vm2975, %v2932
    %2979 = vst.msk [vmem:[#allocation7 + $0x30] sm:$0xff] %vm2975, %v2934
    %2980 = vst.msk [vmem:[#allocation7 + $0x40] sm:$0xff] %vm2975, %v2936
    %2981 = vst.msk [vmem:[#allocation7 + $0x50] sm:$0xff] %vm2975, %v2938
    %2982 = vst.msk [vmem:[#allocation7 + $0x60] sm:$0xff] %vm2975, %v2940
    %2983 = vst.msk [vmem:[#allocation7 + $0x70] sm:$0xff] %vm2975, %v2942
    %2984 = vst.msk [vmem:[#allocation7 + $0x80] sm:$0xff] %vm2975, %v2944
    %2985 = vst.msk [vmem:[#allocation7 + $0x90] sm:$0xff] %vm2975, %v2946
    %2986 = vst.msk [vmem:[#allocation7 + $0xa0] sm:$0xff] %vm2975, %v2948
    %2987 = vst.msk [vmem:[#allocation7 + $0xb0] sm:$0xff] %vm2975, %v2950
    %2988 = vst.msk [vmem:[#allocation7 + $0xc0] sm:$0xff] %vm2975, %v2952
    %2989 = vst.msk [vmem:[#allocation7 + $0xd0] sm:$0xff] %vm2975, %v2954
    %2990 = vst.msk [vmem:[#allocation7 + $0xe0] sm:$0xff] %vm2975, %v2956
    %2991 = vst.msk [vmem:[#allocation7 + $0xf0] sm:$0xff] %vm2975, %v2958
    %2992 = vrot.lane.b32.xlu0 %v1294, 32
    %v2993 = vpop.permute.xlu0 %2992
    %2994 = vrot.lane.b32.xlu0 %v1298, 32
    %v2995 = vpop.permute.xlu0 %2994
    %2996 = vrot.lane.b32.xlu0 %v1302, 32
    %v2997 = vpop.permute.xlu0 %2996
    %2998 = vrot.lane.b32.xlu0 %v1306, 32
    %v2999 = vpop.permute.xlu0 %2998
    %3000 = vrot.lane.b32.xlu0 %v1310, 32
    %v3001 = vpop.permute.xlu0 %3000
    %3002 = vrot.lane.b32.xlu0 %v1314, 32
    %v3003 = vpop.permute.xlu0 %3002
    %3004 = vrot.lane.b32.xlu0 %v1318, 32
    %v3005 = vpop.permute.xlu0 %3004
    %3006 = vrot.lane.b32.xlu0 %v1322, 32
    %v3007 = vpop.permute.xlu0 %3006
    %3008 = vrot.lane.b32.xlu0 %v1292, 32
    %v3009 = vpop.permute.xlu0 %3008
    %3010 = vrot.lane.b32.xlu0 %v1296, 32
    %v3011 = vpop.permute.xlu0 %3010
    %3012 = vrot.lane.b32.xlu0 %v1300, 32
    %v3013 = vpop.permute.xlu0 %3012
    %3014 = vrot.lane.b32.xlu0 %v1304, 32
    %v3015 = vpop.permute.xlu0 %3014
    %3016 = vrot.lane.b32.xlu0 %v1308, 32
    %v3017 = vpop.permute.xlu0 %3016
    %3018 = vrot.lane.b32.xlu0 %v1312, 32
    %v3019 = vpop.permute.xlu0 %3018
    %3020 = vrot.lane.b32.xlu0 %v1316, 32
    %v3021 = vpop.permute.xlu0 %3020
    %3022 = vrot.lane.b32.xlu0 %v1320, 32
    %v3023 = vpop.permute.xlu0 %3022
    %v3025 = vsel %vm1423, %v2993, 0
    %v3028 = vsel %vm1423, %v2995, 0
    %v3031 = vsel %vm1423, %v2997, 0
    %v3034 = vsel %vm1423, %v2999, 0
    %v3037 = vsel %vm1423, %v3001, 0
    %v3040 = vsel %vm1423, %v3003, 0
    %v3043 = vsel %vm1423, %v3005, 0
    %v3046 = vsel %vm1423, %v3007, 0
    %v3049 = vsel %vm1423, %v3009, 0
    %v3052 = vsel %vm1423, %v3011, 0
    %v3055 = vsel %vm1423, %v3013, 0
    %v3058 = vsel %vm1423, %v3015, 0
    %v3061 = vsel %vm1423, %v3017, 0
    %v3064 = vsel %vm1423, %v3019, 0
    %v3067 = vsel %vm1423, %v3021, 0
    %v3070 = vsel %vm1423, %v3023, 0
    %3072 = vmatprep.subr.bf16.mxu0 0
    %3073 = vmatpush1.bf16.xpose.msra.mxu0 %v3070
    %3074 = vmatprep.subr.bf16.mxu0 0
    %3075 = vmatpush1.bf16.xpose.msra.mxu0 %v3067
    %3076 = vmatprep.subr.bf16.mxu0 0
    %3077 = vmatpush1.bf16.xpose.msra.mxu0 %v3064
    %3078 = vmatprep.subr.bf16.mxu0 0
    %3079 = vmatpush1.bf16.xpose.msra.mxu0 %v3061
    %3080 = vmatprep.subr.bf16.mxu0 0
    %3081 = vmatpush1.bf16.xpose.msra.mxu0 %v3058
    %3082 = vmatprep.subr.bf16.mxu0 0
    %3083 = vmatpush1.bf16.xpose.msra.mxu0 %v3055
    %3084 = vmatprep.subr.bf16.mxu0 0
    %3085 = vmatpush1.bf16.xpose.msra.mxu0 %v3052
    %3086 = vmatprep.subr.bf16.mxu0 0
    %3087 = vmatpush1.bf16.xpose.msra.mxu0 %v3049
    %3088 = vmatprep.subr.bf16.mxu0 0
    %3089 = vmatpush2.bf16.xpose.msra.mxu0 0
    %3090 = vmatprep.subr.bf16.mxu0 0
    %3091 = vmatpush2.bf16.xpose.msra.mxu0 0
    %3092 = vmatprep.subr.bf16.mxu0 0
    %3093 = vmatpush2.bf16.xpose.msra.mxu0 0
    %3094 = vmatprep.subr.bf16.mxu0 0
    %3095 = vmatpush2.bf16.xpose.msra.mxu0 0
    %3096 = vmatprep.subr.bf16.mxu0 0
    %3097 = vmatpush2.bf16.xpose.msra.mxu0 0
    %3098 = vmatprep.subr.bf16.mxu0 0
    %3099 = vmatpush2.bf16.xpose.msra.mxu0 0
    %3100 = vmatprep.subr.bf16.mxu0 0
    %3101 = vmatpush2.bf16.xpose.msra.mxu0 0
    %3102 = vmatprep.subr.bf16.mxu0 0
    %3103 = vmatpush2.bf16.xpose.msra.mxu0 0
    %3104 = vmatprep.mubr.bf16.mxu0 0
    %3105 = vmatmul.mubr.bf16.gmra.mxu0 %v3025
    %v3106 = vpop.f32.mrf.mxu0
    %v3107 = vadd.f32 0.0, %v3106
    %v3108 = vpop.f32.mrf.mxu0
    %v3109 = vpop.f32.mrf.mxu0
    %v3110 = vadd.f32 0.0, %v3109
    %v3111 = vpop.f32.mrf.mxu0
    %3112 = vmatprep.mubr.bf16.mxu0 0
    %3113 = vmatmul.mubr.bf16.gmra.mxu0 %v3028
    %v3114 = vpop.f32.mrf.mxu0
    %v3115 = vadd.f32 0.0, %v3114
    %v3116 = vpop.f32.mrf.mxu0
    %v3117 = vpop.f32.mrf.mxu0
    %v3118 = vadd.f32 0.0, %v3117
    %v3119 = vpop.f32.mrf.mxu0
    %3120 = vmatprep.mubr.bf16.mxu0 0
    %3121 = vmatmul.mubr.bf16.gmra.mxu0 %v3031
    %v3122 = vpop.f32.mrf.mxu0
    %v3123 = vadd.f32 0.0, %v3122
    %v3124 = vpop.f32.mrf.mxu0
    %v3125 = vpop.f32.mrf.mxu0
    %v3126 = vadd.f32 0.0, %v3125
    %v3127 = vpop.f32.mrf.mxu0
    %3128 = vmatprep.mubr.bf16.mxu0 0
    %3129 = vmatmul.mubr.bf16.gmra.mxu0 %v3034
    %v3130 = vpop.f32.mrf.mxu0
    %v3131 = vadd.f32 0.0, %v3130
    %v3132 = vpop.f32.mrf.mxu0
    %v3133 = vpop.f32.mrf.mxu0
    %v3134 = vadd.f32 0.0, %v3133
    %v3135 = vpop.f32.mrf.mxu0
    %3136 = vmatprep.mubr.bf16.mxu0 0
    %3137 = vmatmul.mubr.bf16.gmra.mxu0 %v3037
    %v3138 = vpop.f32.mrf.mxu0
    %v3139 = vadd.f32 0.0, %v3138
    %v3140 = vpop.f32.mrf.mxu0
    %v3141 = vpop.f32.mrf.mxu0
    %v3142 = vadd.f32 0.0, %v3141
    %v3143 = vpop.f32.mrf.mxu0
    %3144 = vmatprep.mubr.bf16.mxu0 0
    %3145 = vmatmul.mubr.bf16.gmra.mxu0 %v3040
    %v3146 = vpop.f32.mrf.mxu0
    %v3147 = vadd.f32 0.0, %v3146
    %v3148 = vpop.f32.mrf.mxu0
    %v3149 = vpop.f32.mrf.mxu0
    %v3150 = vadd.f32 0.0, %v3149
    %v3151 = vpop.f32.mrf.mxu0
    %3152 = vmatprep.mubr.bf16.mxu0 0
    %3153 = vmatmul.mubr.bf16.gmra.mxu0 %v3043
    %v3154 = vpop.f32.mrf.mxu0
    %v3155 = vadd.f32 0.0, %v3154
    %v3156 = vpop.f32.mrf.mxu0
    %v3157 = vpop.f32.mrf.mxu0
    %v3158 = vadd.f32 0.0, %v3157
    %v3159 = vpop.f32.mrf.mxu0
    %3160 = vmatprep.mubr.bf16.mxu0 0
    %3161 = vmatmul.mubr.bf16.gmra.mxu0 %v3046
    %v3162 = vpop.f32.mrf.mxu0
    %v3163 = vadd.f32 0.0, %v3162
    %v3164 = vpop.f32.mrf.mxu0
    %v3165 = vpop.f32.mrf.mxu0
    %v3166 = vadd.f32 0.0, %v3165
    %v3167 = vpop.f32.mrf.mxu0
    %3168 = vdwg.mxu0
    %v3169 = vsel %vm1407, %v3107, -inf
    %v3170 = vsel %vm1408, %v3110, -inf
    %v3171 = vsel %vm1409, %v3115, -inf
    %v3172 = vsel %vm1410, %v3118, -inf
    %v3173 = vsel %vm1411, %v3123, -inf
    %v3174 = vsel %vm1412, %v3126, -inf
    %v3175 = vsel %vm1413, %v3131, -inf
    %v3176 = vsel %vm1414, %v3134, -inf
    %v3177 = vsel %vm1415, %v3139, -inf
    %v3178 = vsel %vm1416, %v3142, -inf
    %v3179 = vsel %vm1417, %v3147, -inf
    %v3180 = vsel %vm1418, %v3150, -inf
    %v3181 = vsel %vm1419, %v3155, -inf
    %v3182 = vsel %vm1420, %v3158, -inf
    %v3183 = vsel %vm1421, %v3163, -inf
    %v3184 = vsel %vm1422, %v3166, -inf
    %3185 = vmax.xlane.f32.xlu0 %v3169
    %v3186 = vpop.xlane.xlu0 %3185
    %3187 = vmax.xlane.f32.xlu0 %v3170
    %v3188 = vpop.xlane.xlu0 %3187
    %3189 = vmax.xlane.f32.xlu0 %v3171
    %v3190 = vpop.xlane.xlu0 %3189
    %3191 = vmax.xlane.f32.xlu0 %v3172
    %v3192 = vpop.xlane.xlu0 %3191
    %3193 = vmax.xlane.f32.xlu0 %v3173
    %v3194 = vpop.xlane.xlu0 %3193
    %3195 = vmax.xlane.f32.xlu0 %v3174
    %v3196 = vpop.xlane.xlu0 %3195
    %3197 = vmax.xlane.f32.xlu0 %v3175
    %v3198 = vpop.xlane.xlu0 %3197
    %3199 = vmax.xlane.f32.xlu0 %v3176
    %v3200 = vpop.xlane.xlu0 %3199
    %3201 = vmax.xlane.f32.xlu0 %v3177
    %v3202 = vpop.xlane.xlu0 %3201
    %3203 = vmax.xlane.f32.xlu0 %v3178
    %v3204 = vpop.xlane.xlu0 %3203
    %3205 = vmax.xlane.f32.xlu0 %v3179
    %v3206 = vpop.xlane.xlu0 %3205
    %3207 = vmax.xlane.f32.xlu0 %v3180
    %v3208 = vpop.xlane.xlu0 %3207
    %3209 = vmax.xlane.f32.xlu0 %v3181
    %v3210 = vpop.xlane.xlu0 %3209
    %3211 = vmax.xlane.f32.xlu0 %v3182
    %v3212 = vpop.xlane.xlu0 %3211
    %3213 = vmax.xlane.f32.xlu0 %v3183
    %v3214 = vpop.xlane.xlu0 %3213
    %3215 = vmax.xlane.f32.xlu0 %v3184
    %v3216 = vpop.xlane.xlu0 %3215
    %v3217 = vsub.f32 %v3169, %v3186
    %v3218 = vsub.f32 %v3170, %v3188
    %v3219 = vsub.f32 %v3171, %v3190
    %v3220 = vsub.f32 %v3172, %v3192
    %v3221 = vsub.f32 %v3173, %v3194
    %v3222 = vsub.f32 %v3174, %v3196
    %v3223 = vsub.f32 %v3175, %v3198
    %v3224 = vsub.f32 %v3176, %v3200
    %v3225 = vsub.f32 %v3177, %v3202
    %v3226 = vsub.f32 %v3178, %v3204
    %v3227 = vsub.f32 %v3179, %v3206
    %v3228 = vsub.f32 %v3180, %v3208
    %v3229 = vsub.f32 %v3181, %v3210
    %v3230 = vsub.f32 %v3182, %v3212
    %v3231 = vsub.f32 %v3183, %v3214
    %v3232 = vsub.f32 %v3184, %v3216
    %v3233 = vpack.c.bf16 %v3218, %v3217
    %v3234 = vpack.c.bf16 %v3220, %v3219
    %v3235 = vpack.c.bf16 %v3222, %v3221
    %v3236 = vpack.c.bf16 %v3224, %v3223
    %v3237 = vpack.c.bf16 %v3226, %v3225
    %v3238 = vpack.c.bf16 %v3228, %v3227
    %v3239 = vpack.c.bf16 %v3230, %v3229
    %v3240 = vpack.c.bf16 %v3232, %v3231
    %v3242 = vmul.bf16 %v3233, 1069105081
    %v3243 = vpow.bf16.pop %v3242
    %v3245 = vmul.bf16 %v3234, 1069105081
    %v3246 = vpow.bf16.pop %v3245
    %v3248 = vmul.bf16 %v3235, 1069105081
    %v3249 = vpow.bf16.pop %v3248
    %v3251 = vmul.bf16 %v3236, 1069105081
    %v3252 = vpow.bf16.pop %v3251
    %v3254 = vmul.bf16 %v3237, 1069105081
    %v3255 = vpow.bf16.pop %v3254
    %v3257 = vmul.bf16 %v3238, 1069105081
    %v3258 = vpow.bf16.pop %v3257
    %v3260 = vmul.bf16 %v3239, 1069105081
    %v3261 = vpow.bf16.pop %v3260
    %v3263 = vmul.bf16 %v3240, 1069105081
    %v3264 = vpow.bf16.pop %v3263
    %v3265 = vunpack.c.l.bf16 %v3243
    %v3266 = vunpack.c.h.bf16 %v3243
    %v3267 = vunpack.c.l.bf16 %v3246
    %v3268 = vunpack.c.h.bf16 %v3246
    %v3269 = vunpack.c.l.bf16 %v3249
    %v3270 = vunpack.c.h.bf16 %v3249
    %v3271 = vunpack.c.l.bf16 %v3252
    %v3272 = vunpack.c.h.bf16 %v3252
    %v3273 = vunpack.c.l.bf16 %v3255
    %v3274 = vunpack.c.h.bf16 %v3255
    %v3275 = vunpack.c.l.bf16 %v3258
    %v3276 = vunpack.c.h.bf16 %v3258
    %v3277 = vunpack.c.l.bf16 %v3261
    %v3278 = vunpack.c.h.bf16 %v3261
    %v3279 = vunpack.c.l.bf16 %v3264
    %v3280 = vunpack.c.h.bf16 %v3264
    %3281 = vadd.xlane.f32.xlu0 %v3265
    %v3282 = vpop.xlane.xlu0 %3281
    %3283 = vadd.xlane.f32.xlu0 %v3266
    %v3284 = vpop.xlane.xlu0 %3283
    %3285 = vadd.xlane.f32.xlu0 %v3267
    %v3286 = vpop.xlane.xlu0 %3285
    %3287 = vadd.xlane.f32.xlu0 %v3268
    %v3288 = vpop.xlane.xlu0 %3287
    %3289 = vadd.xlane.f32.xlu0 %v3269
    %v3290 = vpop.xlane.xlu0 %3289
    %3291 = vadd.xlane.f32.xlu0 %v3270
    %v3292 = vpop.xlane.xlu0 %3291
    %3293 = vadd.xlane.f32.xlu0 %v3271
    %v3294 = vpop.xlane.xlu0 %3293
    %3295 = vadd.xlane.f32.xlu0 %v3272
    %v3296 = vpop.xlane.xlu0 %3295
    %3297 = vadd.xlane.f32.xlu0 %v3273
    %v3298 = vpop.xlane.xlu0 %3297
    %3299 = vadd.xlane.f32.xlu0 %v3274
    %v3300 = vpop.xlane.xlu0 %3299
    %3301 = vadd.xlane.f32.xlu0 %v3275
    %v3302 = vpop.xlane.xlu0 %3301
    %3303 = vadd.xlane.f32.xlu0 %v3276
    %v3304 = vpop.xlane.xlu0 %3303
    %3305 = vadd.xlane.f32.xlu0 %v3277
    %v3306 = vpop.xlane.xlu0 %3305
    %3307 = vadd.xlane.f32.xlu0 %v3278
    %v3308 = vpop.xlane.xlu0 %3307
    %3309 = vadd.xlane.f32.xlu0 %v3279
    %v3310 = vpop.xlane.xlu0 %3309
    %3311 = vadd.xlane.f32.xlu0 %v3280
    %v3312 = vpop.xlane.xlu0 %3311
    %v3313 = vrcp.pop %v3282
    %v3314 = vrcp.pop %v3284
    %v3315 = vrcp.pop %v3286
    %v3316 = vrcp.pop %v3288
    %v3317 = vrcp.pop %v3290
    %v3318 = vrcp.pop %v3292
    %v3319 = vrcp.pop %v3294
    %v3320 = vrcp.pop %v3296
    %v3321 = vrcp.pop %v3298
    %v3322 = vrcp.pop %v3300
    %v3323 = vrcp.pop %v3302
    %v3324 = vrcp.pop %v3304
    %v3325 = vrcp.pop %v3306
    %v3326 = vrcp.pop %v3308
    %v3327 = vrcp.pop %v3310
    %v3328 = vrcp.pop %v3312
    %3329 = vrot.lane.b32.xlu0 %v1356, 32
    %v3330 = vpop.permute.xlu0 %3329
    %3331 = vrot.lane.b32.xlu0 %v1358, 32
    %v3332 = vpop.permute.xlu0 %3331
    %3333 = vrot.lane.b32.xlu0 %v1360, 32
    %v3334 = vpop.permute.xlu0 %3333
    %3335 = vrot.lane.b32.xlu0 %v1362, 32
    %v3336 = vpop.permute.xlu0 %3335
    %3337 = vrot.lane.b32.xlu0 %v1364, 32
    %v3338 = vpop.permute.xlu0 %3337
    %3339 = vrot.lane.b32.xlu0 %v1366, 32
    %v3340 = vpop.permute.xlu0 %3339
    %3341 = vrot.lane.b32.xlu0 %v1368, 32
    %v3342 = vpop.permute.xlu0 %3341
    %3343 = vrot.lane.b32.xlu0 %v1370, 32
    %v3344 = vpop.permute.xlu0 %3343
    %3353 = vmatprep.subr.bf16.mxu0 0
    %3354 = vmatpush1.bf16.msra.mxu0 %v3344
    %3355 = vmatprep.subr.bf16.mxu0 0
    %3356 = vmatpush1.bf16.msra.mxu0 %v3342
    %3357 = vmatprep.subr.bf16.mxu0 0
    %3358 = vmatpush1.bf16.msra.mxu0 %v3340
    %3359 = vmatprep.subr.bf16.mxu0 0
    %3360 = vmatpush1.bf16.msra.mxu0 %v3338
    %3361 = vmatprep.subr.bf16.mxu0 0
    %3362 = vmatpush1.bf16.msra.mxu0 %v3336
    %3363 = vmatprep.subr.bf16.mxu0 0
    %3364 = vmatpush1.bf16.msra.mxu0 %v3334
    %3365 = vmatprep.subr.bf16.mxu0 0
    %3366 = vmatpush1.bf16.msra.mxu0 %v3332
    %3367 = vmatprep.subr.bf16.mxu0 0
    %3368 = vmatpush1.bf16.msra.mxu0 %v3330
    %3369 = vmatprep.subr.bf16.mxu0 0
    %3370 = vmatpush2.bf16.msra.mxu0 0
    %3371 = vmatprep.subr.bf16.mxu0 0
    %3372 = vmatpush2.bf16.msra.mxu0 0
    %3373 = vmatprep.subr.bf16.mxu0 0
    %3374 = vmatpush2.bf16.msra.mxu0 0
    %3375 = vmatprep.subr.bf16.mxu0 0
    %3376 = vmatpush2.bf16.msra.mxu0 0
    %3377 = vmatprep.subr.bf16.mxu0 0
    %3378 = vmatpush2.bf16.msra.mxu0 0
    %3379 = vmatprep.subr.bf16.mxu0 0
    %3380 = vmatpush2.bf16.msra.mxu0 0
    %3381 = vmatprep.subr.bf16.mxu0 0
    %3382 = vmatpush2.bf16.msra.mxu0 0
    %3383 = vmatprep.subr.bf16.mxu0 0
    %3384 = vmatpush2.bf16.msra.mxu0 0
    %3385 = vmatprep.mubr.bf16.mxu0 0
    %3386 = vmatmul.mubr.bf16.gmra.mxu0 %v3243
    %v3387 = vpop.f32.mrf.mxu0
    %v3388 = vadd.f32 0.0, %v3387
    %v3389 = vpop.f32.mrf.mxu0
    %v3390 = vpop.f32.mrf.mxu0
    %v3391 = vadd.f32 0.0, %v3390
    %v3392 = vpop.f32.mrf.mxu0
    %3393 = vmatprep.mubr.bf16.mxu0 0
    %3394 = vmatmul.mubr.bf16.gmra.mxu0 %v3246
    %v3395 = vpop.f32.mrf.mxu0
    %v3396 = vadd.f32 0.0, %v3395
    %v3397 = vpop.f32.mrf.mxu0
    %v3398 = vpop.f32.mrf.mxu0
    %v3399 = vadd.f32 0.0, %v3398
    %v3400 = vpop.f32.mrf.mxu0
    %3401 = vmatprep.mubr.bf16.mxu0 0
    %3402 = vmatmul.mubr.bf16.gmra.mxu0 %v3249
    %v3403 = vpop.f32.mrf.mxu0
    %v3404 = vadd.f32 0.0, %v3403
    %v3405 = vpop.f32.mrf.mxu0
    %v3406 = vpop.f32.mrf.mxu0
    %v3407 = vadd.f32 0.0, %v3406
    %v3408 = vpop.f32.mrf.mxu0
    %3409 = vmatprep.mubr.bf16.mxu0 0
    %3410 = vmatmul.mubr.bf16.gmra.mxu0 %v3252
    %v3411 = vpop.f32.mrf.mxu0
    %v3412 = vadd.f32 0.0, %v3411
    %v3413 = vpop.f32.mrf.mxu0
    %v3414 = vpop.f32.mrf.mxu0
    %v3415 = vadd.f32 0.0, %v3414
    %v3416 = vpop.f32.mrf.mxu0
    %3417 = vmatprep.mubr.bf16.mxu0 0
    %3418 = vmatmul.mubr.bf16.gmra.mxu0 %v3255
    %v3419 = vpop.f32.mrf.mxu0
    %v3420 = vadd.f32 0.0, %v3419
    %v3421 = vpop.f32.mrf.mxu0
    %v3422 = vpop.f32.mrf.mxu0
    %v3423 = vadd.f32 0.0, %v3422
    %v3424 = vpop.f32.mrf.mxu0
    %3425 = vmatprep.mubr.bf16.mxu0 0
    %3426 = vmatmul.mubr.bf16.gmra.mxu0 %v3258
    %v3427 = vpop.f32.mrf.mxu0
    %v3428 = vadd.f32 0.0, %v3427
    %v3429 = vpop.f32.mrf.mxu0
    %v3430 = vpop.f32.mrf.mxu0
    %v3431 = vadd.f32 0.0, %v3430
    %v3432 = vpop.f32.mrf.mxu0
    %3433 = vmatprep.mubr.bf16.mxu0 0
    %3434 = vmatmul.mubr.bf16.gmra.mxu0 %v3261
    %v3435 = vpop.f32.mrf.mxu0
    %v3436 = vadd.f32 0.0, %v3435
    %v3437 = vpop.f32.mrf.mxu0
    %v3438 = vpop.f32.mrf.mxu0
    %v3439 = vadd.f32 0.0, %v3438
    %v3440 = vpop.f32.mrf.mxu0
    %3441 = vmatprep.mubr.bf16.mxu0 0
    %3442 = vmatmul.mubr.bf16.gmra.mxu0 %v3264
    %v3443 = vpop.f32.mrf.mxu0
    %v3444 = vadd.f32 0.0, %v3443
    %v3445 = vpop.f32.mrf.mxu0
    %v3446 = vpop.f32.mrf.mxu0
    %v3447 = vadd.f32 0.0, %v3446
    %v3448 = vpop.f32.mrf.mxu0
    %3449 = vdwg.mxu0
    %v3450 = vmul.f32 %v3388, %v3313
    %v3451 = vmul.f32 %v3391, %v3314
    %v3452 = vmul.f32 %v3396, %v3315
    %v3453 = vmul.f32 %v3399, %v3316
    %v3454 = vmul.f32 %v3404, %v3317
    %v3455 = vmul.f32 %v3407, %v3318
    %v3456 = vmul.f32 %v3412, %v3319
    %v3457 = vmul.f32 %v3415, %v3320
    %v3458 = vmul.f32 %v3420, %v3321
    %v3459 = vmul.f32 %v3423, %v3322
    %v3460 = vmul.f32 %v3428, %v3323
    %v3461 = vmul.f32 %v3431, %v3324
    %v3462 = vmul.f32 %v3436, %v3325
    %v3463 = vmul.f32 %v3439, %v3326
    %v3464 = vmul.f32 %v3444, %v3327
    %v3465 = vmul.f32 %v3447, %v3328
    %3482 = vrot.lane.b32.xlu0 %v3450, 96
    %v3483 = vpop.permute.xlu0 %3482
    %3484 = vrot.lane.b32.xlu0 %v3451, 96
    %v3485 = vpop.permute.xlu0 %3484
    %3486 = vrot.lane.b32.xlu0 %v3452, 96
    %v3487 = vpop.permute.xlu0 %3486
    %3488 = vrot.lane.b32.xlu0 %v3453, 96
    %v3489 = vpop.permute.xlu0 %3488
    %3490 = vrot.lane.b32.xlu0 %v3454, 96
    %v3491 = vpop.permute.xlu0 %3490
    %3492 = vrot.lane.b32.xlu0 %v3455, 96
    %v3493 = vpop.permute.xlu0 %3492
    %3494 = vrot.lane.b32.xlu0 %v3456, 96
    %v3495 = vpop.permute.xlu0 %3494
    %3496 = vrot.lane.b32.xlu0 %v3457, 96
    %v3497 = vpop.permute.xlu0 %3496
    %3498 = vrot.lane.b32.xlu0 %v3458, 96
    %v3499 = vpop.permute.xlu0 %3498
    %3500 = vrot.lane.b32.xlu0 %v3459, 96
    %v3501 = vpop.permute.xlu0 %3500
    %3502 = vrot.lane.b32.xlu0 %v3460, 96
    %v3503 = vpop.permute.xlu0 %3502
    %3504 = vrot.lane.b32.xlu0 %v3461, 96
    %v3505 = vpop.permute.xlu0 %3504
    %3506 = vrot.lane.b32.xlu0 %v3462, 96
    %v3507 = vpop.permute.xlu0 %3506
    %3508 = vrot.lane.b32.xlu0 %v3463, 96
    %v3509 = vpop.permute.xlu0 %3508
    %3510 = vrot.lane.b32.xlu0 %v3464, 96
    %v3511 = vpop.permute.xlu0 %3510
    %3512 = vrot.lane.b32.xlu0 %v3465, 96
    %v3513 = vpop.permute.xlu0 %3512
    %vm3530 = vcmask 1048320
    %3531 = vst.msk [vmem:[#allocation7] sm:$0xff] %vm3530, %v3483
    %3532 = vst.msk [vmem:[#allocation7 + $0x10] sm:$0xff] %vm3530, %v3485
    %3533 = vst.msk [vmem:[#allocation7 + $0x20] sm:$0xff] %vm3530, %v3487
    %3534 = vst.msk [vmem:[#allocation7 + $0x30] sm:$0xff] %vm3530, %v3489
    %3535 = vst.msk [vmem:[#allocation7 + $0x40] sm:$0xff] %vm3530, %v3491
    %3536 = vst.msk [vmem:[#allocation7 + $0x50] sm:$0xff] %vm3530, %v3493
    %3537 = vst.msk [vmem:[#allocation7 + $0x60] sm:$0xff] %vm3530, %v3495
    %3538 = vst.msk [vmem:[#allocation7 + $0x70] sm:$0xff] %vm3530, %v3497
    %3539 = vst.msk [vmem:[#allocation7 + $0x80] sm:$0xff] %vm3530, %v3499
    %3540 = vst.msk [vmem:[#allocation7 + $0x90] sm:$0xff] %vm3530, %v3501
    %3541 = vst.msk [vmem:[#allocation7 + $0xa0] sm:$0xff] %vm3530, %v3503
    %3542 = vst.msk [vmem:[#allocation7 + $0xb0] sm:$0xff] %vm3530, %v3505
    %3543 = vst.msk [vmem:[#allocation7 + $0xc0] sm:$0xff] %vm3530, %v3507
    %3544 = vst.msk [vmem:[#allocation7 + $0xd0] sm:$0xff] %vm3530, %v3509
    %3545 = vst.msk [vmem:[#allocation7 + $0xe0] sm:$0xff] %vm3530, %v3511
    %3546 = vst.msk [vmem:[#allocation7 + $0xf0] sm:$0xff] %vm3530, %v3513
    %v3548 = vsel %vm1423, %v1295, 0
    %v3551 = vsel %vm1423, %v1299, 0
    %v3554 = vsel %vm1423, %v1303, 0
    %v3557 = vsel %vm1423, %v1307, 0
    %v3560 = vsel %vm1423, %v1311, 0
    %v3563 = vsel %vm1423, %v1315, 0
    %v3566 = vsel %vm1423, %v1319, 0
    %v3569 = vsel %vm1423, %v1323, 0
    %v3572 = vsel %vm1423, %v1293, 0
    %v3575 = vsel %vm1423, %v1297, 0
    %v3578 = vsel %vm1423, %v1301, 0
    %v3581 = vsel %vm1423, %v1305, 0
    %v3584 = vsel %vm1423, %v1309, 0
    %v3587 = vsel %vm1423, %v1313, 0
    %v3590 = vsel %vm1423, %v1317, 0
    %v3593 = vsel %vm1423, %v1321, 0
    %3595 = vmatprep.subr.bf16.mxu0 0
    %3596 = vmatpush1.bf16.xpose.msra.mxu0 %v3593
    %3597 = vmatprep.subr.bf16.mxu0 0
    %3598 = vmatpush1.bf16.xpose.msra.mxu0 %v3590
    %3599 = vmatprep.subr.bf16.mxu0 0
    %3600 = vmatpush1.bf16.xpose.msra.mxu0 %v3587
    %3601 = vmatprep.subr.bf16.mxu0 0
    %3602 = vmatpush1.bf16.xpose.msra.mxu0 %v3584
    %3603 = vmatprep.subr.bf16.mxu0 0
    %3604 = vmatpush1.bf16.xpose.msra.mxu0 %v3581
    %3605 = vmatprep.subr.bf16.mxu0 0
    %3606 = vmatpush1.bf16.xpose.msra.mxu0 %v3578
    %3607 = vmatprep.subr.bf16.mxu0 0
    %3608 = vmatpush1.bf16.xpose.msra.mxu0 %v3575
    %3609 = vmatprep.subr.bf16.mxu0 0
    %3610 = vmatpush1.bf16.xpose.msra.mxu0 %v3572
    %3611 = vmatprep.subr.bf16.mxu0 0
    %3612 = vmatpush2.bf16.xpose.msra.mxu0 0
    %3613 = vmatprep.subr.bf16.mxu0 0
    %3614 = vmatpush2.bf16.xpose.msra.mxu0 0
    %3615 = vmatprep.subr.bf16.mxu0 0
    %3616 = vmatpush2.bf16.xpose.msra.mxu0 0
    %3617 = vmatprep.subr.bf16.mxu0 0
    %3618 = vmatpush2.bf16.xpose.msra.mxu0 0
    %3619 = vmatprep.subr.bf16.mxu0 0
    %3620 = vmatpush2.bf16.xpose.msra.mxu0 0
    %3621 = vmatprep.subr.bf16.mxu0 0
    %3622 = vmatpush2.bf16.xpose.msra.mxu0 0
    %3623 = vmatprep.subr.bf16.mxu0 0
    %3624 = vmatpush2.bf16.xpose.msra.mxu0 0
    %3625 = vmatprep.subr.bf16.mxu0 0
    %3626 = vmatpush2.bf16.xpose.msra.mxu0 0
    %3627 = vmatprep.mubr.bf16.mxu0 0
    %3628 = vmatmul.mubr.bf16.gmra.mxu0 %v3548
    %v3629 = vpop.f32.mrf.mxu0
    %v3630 = vadd.f32 0.0, %v3629
    %v3631 = vpop.f32.mrf.mxu0
    %v3632 = vpop.f32.mrf.mxu0
    %v3633 = vadd.f32 0.0, %v3632
    %v3634 = vpop.f32.mrf.mxu0
    %3635 = vmatprep.mubr.bf16.mxu0 0
    %3636 = vmatmul.mubr.bf16.gmra.mxu0 %v3551
    %v3637 = vpop.f32.mrf.mxu0
    %v3638 = vadd.f32 0.0, %v3637
    %v3639 = vpop.f32.mrf.mxu0
    %v3640 = vpop.f32.mrf.mxu0
    %v3641 = vadd.f32 0.0, %v3640
    %v3642 = vpop.f32.mrf.mxu0
    %3643 = vmatprep.mubr.bf16.mxu0 0
    %3644 = vmatmul.mubr.bf16.gmra.mxu0 %v3554
    %v3645 = vpop.f32.mrf.mxu0
    %v3646 = vadd.f32 0.0, %v3645
    %v3647 = vpop.f32.mrf.mxu0
    %v3648 = vpop.f32.mrf.mxu0
    %v3649 = vadd.f32 0.0, %v3648
    %v3650 = vpop.f32.mrf.mxu0
    %3651 = vmatprep.mubr.bf16.mxu0 0
    %3652 = vmatmul.mubr.bf16.gmra.mxu0 %v3557
    %v3653 = vpop.f32.mrf.mxu0
    %v3654 = vadd.f32 0.0, %v3653
    %v3655 = vpop.f32.mrf.mxu0
    %v3656 = vpop.f32.mrf.mxu0
    %v3657 = vadd.f32 0.0, %v3656
    %v3658 = vpop.f32.mrf.mxu0
    %3659 = vmatprep.mubr.bf16.mxu0 0
    %3660 = vmatmul.mubr.bf16.gmra.mxu0 %v3560
    %v3661 = vpop.f32.mrf.mxu0
    %v3662 = vadd.f32 0.0, %v3661
    %v3663 = vpop.f32.mrf.mxu0
    %v3664 = vpop.f32.mrf.mxu0
    %v3665 = vadd.f32 0.0, %v3664
    %v3666 = vpop.f32.mrf.mxu0
    %3667 = vmatprep.mubr.bf16.mxu0 0
    %3668 = vmatmul.mubr.bf16.gmra.mxu0 %v3563
    %v3669 = vpop.f32.mrf.mxu0
    %v3670 = vadd.f32 0.0, %v3669
    %v3671 = vpop.f32.mrf.mxu0
    %v3672 = vpop.f32.mrf.mxu0
    %v3673 = vadd.f32 0.0, %v3672
    %v3674 = vpop.f32.mrf.mxu0
    %3675 = vmatprep.mubr.bf16.mxu0 0
    %3676 = vmatmul.mubr.bf16.gmra.mxu0 %v3566
    %v3677 = vpop.f32.mrf.mxu0
    %v3678 = vadd.f32 0.0, %v3677
    %v3679 = vpop.f32.mrf.mxu0
    %v3680 = vpop.f32.mrf.mxu0
    %v3681 = vadd.f32 0.0, %v3680
    %v3682 = vpop.f32.mrf.mxu0
    %3683 = vmatprep.mubr.bf16.mxu0 0
    %3684 = vmatmul.mubr.bf16.gmra.mxu0 %v3569
    %v3685 = vpop.f32.mrf.mxu0
    %v3686 = vadd.f32 0.0, %v3685
    %v3687 = vpop.f32.mrf.mxu0
    %v3688 = vpop.f32.mrf.mxu0
    %v3689 = vadd.f32 0.0, %v3688
    %v3690 = vpop.f32.mrf.mxu0
    %3691 = vdwg.mxu0
    %v3692 = vsel %vm1407, %v3630, -inf
    %v3693 = vsel %vm1408, %v3633, -inf
    %v3694 = vsel %vm1409, %v3638, -inf
    %v3695 = vsel %vm1410, %v3641, -inf
    %v3696 = vsel %vm1411, %v3646, -inf
    %v3697 = vsel %vm1412, %v3649, -inf
    %v3698 = vsel %vm1413, %v3654, -inf
    %v3699 = vsel %vm1414, %v3657, -inf
    %v3700 = vsel %vm1415, %v3662, -inf
    %v3701 = vsel %vm1416, %v3665, -inf
    %v3702 = vsel %vm1417, %v3670, -inf
    %v3703 = vsel %vm1418, %v3673, -inf
    %v3704 = vsel %vm1419, %v3678, -inf
    %v3705 = vsel %vm1420, %v3681, -inf
    %v3706 = vsel %vm1421, %v3686, -inf
    %v3707 = vsel %vm1422, %v3689, -inf
    %3708 = vmax.xlane.f32.xlu0 %v3692
    %v3709 = vpop.xlane.xlu0 %3708
    %3710 = vmax.xlane.f32.xlu0 %v3693
    %v3711 = vpop.xlane.xlu0 %3710
    %3712 = vmax.xlane.f32.xlu0 %v3694
    %v3713 = vpop.xlane.xlu0 %3712
    %3714 = vmax.xlane.f32.xlu0 %v3695
    %v3715 = vpop.xlane.xlu0 %3714
    %3716 = vmax.xlane.f32.xlu0 %v3696
    %v3717 = vpop.xlane.xlu0 %3716
    %3718 = vmax.xlane.f32.xlu0 %v3697
    %v3719 = vpop.xlane.xlu0 %3718
    %3720 = vmax.xlane.f32.xlu0 %v3698
    %v3721 = vpop.xlane.xlu0 %3720
    %3722 = vmax.xlane.f32.xlu0 %v3699
    %v3723 = vpop.xlane.xlu0 %3722
    %3724 = vmax.xlane.f32.xlu0 %v3700
    %v3725 = vpop.xlane.xlu0 %3724
    %3726 = vmax.xlane.f32.xlu0 %v3701
    %v3727 = vpop.xlane.xlu0 %3726
    %3728 = vmax.xlane.f32.xlu0 %v3702
    %v3729 = vpop.xlane.xlu0 %3728
    %3730 = vmax.xlane.f32.xlu0 %v3703
    %v3731 = vpop.xlane.xlu0 %3730
    %3732 = vmax.xlane.f32.xlu0 %v3704
    %v3733 = vpop.xlane.xlu0 %3732
    %3734 = vmax.xlane.f32.xlu0 %v3705
    %v3735 = vpop.xlane.xlu0 %3734
    %3736 = vmax.xlane.f32.xlu0 %v3706
    %v3737 = vpop.xlane.xlu0 %3736
    %3738 = vmax.xlane.f32.xlu0 %v3707
    %v3739 = vpop.xlane.xlu0 %3738
    %v3740 = vsub.f32 %v3692, %v3709
    %v3741 = vsub.f32 %v3693, %v3711
    %v3742 = vsub.f32 %v3694, %v3713
    %v3743 = vsub.f32 %v3695, %v3715
    %v3744 = vsub.f32 %v3696, %v3717
    %v3745 = vsub.f32 %v3697, %v3719
    %v3746 = vsub.f32 %v3698, %v3721
    %v3747 = vsub.f32 %v3699, %v3723
    %v3748 = vsub.f32 %v3700, %v3725
    %v3749 = vsub.f32 %v3701, %v3727
    %v3750 = vsub.f32 %v3702, %v3729
    %v3751 = vsub.f32 %v3703, %v3731
    %v3752 = vsub.f32 %v3704, %v3733
    %v3753 = vsub.f32 %v3705, %v3735
    %v3754 = vsub.f32 %v3706, %v3737
    %v3755 = vsub.f32 %v3707, %v3739
    %v3756 = vpack.c.bf16 %v3741, %v3740
    %v3757 = vpack.c.bf16 %v3743, %v3742
    %v3758 = vpack.c.bf16 %v3745, %v3744
    %v3759 = vpack.c.bf16 %v3747, %v3746
    %v3760 = vpack.c.bf16 %v3749, %v3748
    %v3761 = vpack.c.bf16 %v3751, %v3750
    %v3762 = vpack.c.bf16 %v3753, %v3752
    %v3763 = vpack.c.bf16 %v3755, %v3754
    %v3765 = vmul.bf16 %v3756, 1069105081
    %v3766 = vpow.bf16.pop %v3765
    %v3768 = vmul.bf16 %v3757, 1069105081
    %v3769 = vpow.bf16.pop %v3768
    %v3771 = vmul.bf16 %v3758, 1069105081
    %v3772 = vpow.bf16.pop %v3771
    %v3774 = vmul.bf16 %v3759, 1069105081
    %v3775 = vpow.bf16.pop %v3774
    %v3777 = vmul.bf16 %v3760, 1069105081
    %v3778 = vpow.bf16.pop %v3777
    %v3780 = vmul.bf16 %v3761, 1069105081
    %v3781 = vpow.bf16.pop %v3780
    %v3783 = vmul.bf16 %v3762, 1069105081
    %v3784 = vpow.bf16.pop %v3783
    %v3786 = vmul.bf16 %v3763, 1069105081
    %v3787 = vpow.bf16.pop %v3786
    %v3788 = vunpack.c.l.bf16 %v3766
    %v3789 = vunpack.c.h.bf16 %v3766
    %v3790 = vunpack.c.l.bf16 %v3769
    %v3791 = vunpack.c.h.bf16 %v3769
    %v3792 = vunpack.c.l.bf16 %v3772
    %v3793 = vunpack.c.h.bf16 %v3772
    %v3794 = vunpack.c.l.bf16 %v3775
    %v3795 = vunpack.c.h.bf16 %v3775
    %v3796 = vunpack.c.l.bf16 %v3778
    %v3797 = vunpack.c.h.bf16 %v3778
    %v3798 = vunpack.c.l.bf16 %v3781
    %v3799 = vunpack.c.h.bf16 %v3781
    %v3800 = vunpack.c.l.bf16 %v3784
    %v3801 = vunpack.c.h.bf16 %v3784
    %v3802 = vunpack.c.l.bf16 %v3787
    %v3803 = vunpack.c.h.bf16 %v3787
    %3804 = vadd.xlane.f32.xlu0 %v3788
    %v3805 = vpop.xlane.xlu0 %3804
    %3806 = vadd.xlane.f32.xlu0 %v3789
    %v3807 = vpop.xlane.xlu0 %3806
    %3808 = vadd.xlane.f32.xlu0 %v3790
    %v3809 = vpop.xlane.xlu0 %3808
    %3810 = vadd.xlane.f32.xlu0 %v3791
    %v3811 = vpop.xlane.xlu0 %3810
    %3812 = vadd.xlane.f32.xlu0 %v3792
    %v3813 = vpop.xlane.xlu0 %3812
    %3814 = vadd.xlane.f32.xlu0 %v3793
    %v3815 = vpop.xlane.xlu0 %3814
    %3816 = vadd.xlane.f32.xlu0 %v3794
    %v3817 = vpop.xlane.xlu0 %3816
    %3818 = vadd.xlane.f32.xlu0 %v3795
    %v3819 = vpop.xlane.xlu0 %3818
    %3820 = vadd.xlane.f32.xlu0 %v3796
    %v3821 = vpop.xlane.xlu0 %3820
    %3822 = vadd.xlane.f32.xlu0 %v3797
    %v3823 = vpop.xlane.xlu0 %3822
    %3824 = vadd.xlane.f32.xlu0 %v3798
    %v3825 = vpop.xlane.xlu0 %3824
    %3826 = vadd.xlane.f32.xlu0 %v3799
    %v3827 = vpop.xlane.xlu0 %3826
    %3828 = vadd.xlane.f32.xlu0 %v3800
    %v3829 = vpop.xlane.xlu0 %3828
    %3830 = vadd.xlane.f32.xlu0 %v3801
    %v3831 = vpop.xlane.xlu0 %3830
    %3832 = vadd.xlane.f32.xlu0 %v3802
    %v3833 = vpop.xlane.xlu0 %3832
    %3834 = vadd.xlane.f32.xlu0 %v3803
    %v3835 = vpop.xlane.xlu0 %3834
    %v3836 = vrcp.pop %v3805
    %v3837 = vrcp.pop %v3807
    %v3838 = vrcp.pop %v3809
    %v3839 = vrcp.pop %v3811
    %v3840 = vrcp.pop %v3813
    %v3841 = vrcp.pop %v3815
    %v3842 = vrcp.pop %v3817
    %v3843 = vrcp.pop %v3819
    %v3844 = vrcp.pop %v3821
    %v3845 = vrcp.pop %v3823
    %v3846 = vrcp.pop %v3825
    %v3847 = vrcp.pop %v3827
    %v3848 = vrcp.pop %v3829
    %v3849 = vrcp.pop %v3831
    %v3850 = vrcp.pop %v3833
    %v3851 = vrcp.pop %v3835
    %3852 = vmatprep.subr.bf16.mxu0 0
    %3853 = vmatpush1.bf16.msra.mxu0 %v1371
    %3854 = vmatprep.subr.bf16.mxu0 0
    %3855 = vmatpush1.bf16.msra.mxu0 %v1369
    %3856 = vmatprep.subr.bf16.mxu0 0
    %3857 = vmatpush1.bf16.msra.mxu0 %v1367
    %3858 = vmatprep.subr.bf16.mxu0 0
    %3859 = vmatpush1.bf16.msra.mxu0 %v1365
    %3860 = vmatprep.subr.bf16.mxu0 0
    %3861 = vmatpush1.bf16.msra.mxu0 %v1363
    %3862 = vmatprep.subr.bf16.mxu0 0
    %3863 = vmatpush1.bf16.msra.mxu0 %v1361
    %3864 = vmatprep.subr.bf16.mxu0 0
    %3865 = vmatpush1.bf16.msra.mxu0 %v1359
    %3866 = vmatprep.subr.bf16.mxu0 0
    %3867 = vmatpush1.bf16.msra.mxu0 %v1357
    %3868 = vmatprep.subr.bf16.mxu0 0
    %3869 = vmatpush2.bf16.msra.mxu0 0
    %3870 = vmatprep.subr.bf16.mxu0 0
    %3871 = vmatpush2.bf16.msra.mxu0 0
    %3872 = vmatprep.subr.bf16.mxu0 0
    %3873 = vmatpush2.bf16.msra.mxu0 0
    %3874 = vmatprep.subr.bf16.mxu0 0
    %3875 = vmatpush2.bf16.msra.mxu0 0
    %3876 = vmatprep.subr.bf16.mxu0 0
    %3877 = vmatpush2.bf16.msra.mxu0 0
    %3878 = vmatprep.subr.bf16.mxu0 0
    %3879 = vmatpush2.bf16.msra.mxu0 0
    %3880 = vmatprep.subr.bf16.mxu0 0
    %3881 = vmatpush2.bf16.msra.mxu0 0
    %3882 = vmatprep.subr.bf16.mxu0 0
    %3883 = vmatpush2.bf16.msra.mxu0 0
    %3884 = vmatprep.mubr.bf16.mxu0 0
    %3885 = vmatmul.mubr.bf16.gmra.mxu0 %v3766
    %v3886 = vpop.f32.mrf.mxu0
    %v3887 = vadd.f32 0.0, %v3886
    %v3888 = vpop.f32.mrf.mxu0
    %v3889 = vpop.f32.mrf.mxu0
    %v3890 = vadd.f32 0.0, %v3889
    %v3891 = vpop.f32.mrf.mxu0
    %3892 = vmatprep.mubr.bf16.mxu0 0
    %3893 = vmatmul.mubr.bf16.gmra.mxu0 %v3769
    %v3894 = vpop.f32.mrf.mxu0
    %v3895 = vadd.f32 0.0, %v3894
    %v3896 = vpop.f32.mrf.mxu0
    %v3897 = vpop.f32.mrf.mxu0
    %v3898 = vadd.f32 0.0, %v3897
    %v3899 = vpop.f32.mrf.mxu0
    %3900 = vmatprep.mubr.bf16.mxu0 0
    %3901 = vmatmul.mubr.bf16.gmra.mxu0 %v3772
    %v3902 = vpop.f32.mrf.mxu0
    %v3903 = vadd.f32 0.0, %v3902
    %v3904 = vpop.f32.mrf.mxu0
    %v3905 = vpop.f32.mrf.mxu0
    %v3906 = vadd.f32 0.0, %v3905
    %v3907 = vpop.f32.mrf.mxu0
    %3908 = vmatprep.mubr.bf16.mxu0 0
    %3909 = vmatmul.mubr.bf16.gmra.mxu0 %v3775
    %v3910 = vpop.f32.mrf.mxu0
    %v3911 = vadd.f32 0.0, %v3910
    %v3912 = vpop.f32.mrf.mxu0
    %v3913 = vpop.f32.mrf.mxu0
    %v3914 = vadd.f32 0.0, %v3913
    %v3915 = vpop.f32.mrf.mxu0
    %3916 = vmatprep.mubr.bf16.mxu0 0
    %3917 = vmatmul.mubr.bf16.gmra.mxu0 %v3778
    %v3918 = vpop.f32.mrf.mxu0
    %v3919 = vadd.f32 0.0, %v3918
    %v3920 = vpop.f32.mrf.mxu0
    %v3921 = vpop.f32.mrf.mxu0
    %v3922 = vadd.f32 0.0, %v3921
    %v3923 = vpop.f32.mrf.mxu0
    %3924 = vmatprep.mubr.bf16.mxu0 0
    %3925 = vmatmul.mubr.bf16.gmra.mxu0 %v3781
    %v3926 = vpop.f32.mrf.mxu0
    %v3927 = vadd.f32 0.0, %v3926
    %v3928 = vpop.f32.mrf.mxu0
    %v3929 = vpop.f32.mrf.mxu0
    %v3930 = vadd.f32 0.0, %v3929
    %v3931 = vpop.f32.mrf.mxu0
    %3932 = vmatprep.mubr.bf16.mxu0 0
    %3933 = vmatmul.mubr.bf16.gmra.mxu0 %v3784
    %v3934 = vpop.f32.mrf.mxu0
    %v3935 = vadd.f32 0.0, %v3934
    %v3936 = vpop.f32.mrf.mxu0
    %v3937 = vpop.f32.mrf.mxu0
    %v3938 = vadd.f32 0.0, %v3937
    %v3939 = vpop.f32.mrf.mxu0
    %3940 = vmatprep.mubr.bf16.mxu0 0
    %3941 = vmatmul.mubr.bf16.gmra.mxu0 %v3787
    %v3942 = vpop.f32.mrf.mxu0
    %v3943 = vadd.f32 0.0, %v3942
    %v3944 = vpop.f32.mrf.mxu0
    %v3945 = vpop.f32.mrf.mxu0
    %v3946 = vadd.f32 0.0, %v3945
    %v3947 = vpop.f32.mrf.mxu0
    %3948 = vdwg.mxu0
    %v3949 = vmul.f32 %v3887, %v3836
    %v3950 = vmul.f32 %v3890, %v3837
    %v3951 = vmul.f32 %v3895, %v3838
    %v3952 = vmul.f32 %v3898, %v3839
    %v3953 = vmul.f32 %v3903, %v3840
    %v3954 = vmul.f32 %v3906, %v3841
    %v3955 = vmul.f32 %v3911, %v3842
    %v3956 = vmul.f32 %v3914, %v3843
    %v3957 = vmul.f32 %v3919, %v3844
    %v3958 = vmul.f32 %v3922, %v3845
    %v3959 = vmul.f32 %v3927, %v3846
    %v3960 = vmul.f32 %v3930, %v3847
    %v3961 = vmul.f32 %v3935, %v3848
    %v3962 = vmul.f32 %v3938, %v3849
    %v3963 = vmul.f32 %v3943, %v3850
    %v3964 = vmul.f32 %v3946, %v3851
    %3965 = vst.msk [vmem:[#allocation7 + $0x8] sm:$0xff] %vm1423, %v3949
    %3966 = vst.msk [vmem:[#allocation7 + $0x18] sm:$0xff] %vm1423, %v3950
    %3967 = vst.msk [vmem:[#allocation7 + $0x28] sm:$0xff] %vm1423, %v3951
    %3968 = vst.msk [vmem:[#allocation7 + $0x38] sm:$0xff] %vm1423, %v3952
    %3969 = vst.msk [vmem:[#allocation7 + $0x48] sm:$0xff] %vm1423, %v3953
    %3970 = vst.msk [vmem:[#allocation7 + $0x58] sm:$0xff] %vm1423, %v3954
    %3971 = vst.msk [vmem:[#allocation7 + $0x68] sm:$0xff] %vm1423, %v3955
    %3972 = vst.msk [vmem:[#allocation7 + $0x78] sm:$0xff] %vm1423, %v3956
    %3973 = vst.msk [vmem:[#allocation7 + $0x88] sm:$0xff] %vm1423, %v3957
    %3974 = vst.msk [vmem:[#allocation7 + $0x98] sm:$0xff] %vm1423, %v3958
    %3975 = vst.msk [vmem:[#allocation7 + $0xa8] sm:$0xff] %vm1423, %v3959
    %3976 = vst.msk [vmem:[#allocation7 + $0xb8] sm:$0xff] %vm1423, %v3960
    %3977 = vst.msk [vmem:[#allocation7 + $0xc8] sm:$0xff] %vm1423, %v3961
    %3978 = vst.msk [vmem:[#allocation7 + $0xd8] sm:$0xff] %vm1423, %v3962
    %3979 = vst.msk [vmem:[#allocation7 + $0xe8] sm:$0xff] %vm1423, %v3963
    %3980 = vst.msk [vmem:[#allocation7 + $0xf8] sm:$0xff] %vm1423, %v3964
    %3989 = vrot.lane.b32.xlu0 %v1295, 96
    %v3990 = vpop.permute.xlu0 %3989
    %3991 = vrot.lane.b32.xlu0 %v1299, 96
    %v3992 = vpop.permute.xlu0 %3991
    %3993 = vrot.lane.b32.xlu0 %v1303, 96
    %v3994 = vpop.permute.xlu0 %3993
    %3995 = vrot.lane.b32.xlu0 %v1307, 96
    %v3996 = vpop.permute.xlu0 %3995
    %3997 = vrot.lane.b32.xlu0 %v1311, 96
    %v3998 = vpop.permute.xlu0 %3997
    %3999 = vrot.lane.b32.xlu0 %v1315, 96
    %v4000 = vpop.permute.xlu0 %3999
    %4001 = vrot.lane.b32.xlu0 %v1319, 96
    %v4002 = vpop.permute.xlu0 %4001
    %4003 = vrot.lane.b32.xlu0 %v1323, 96
    %v4004 = vpop.permute.xlu0 %4003
    %4013 = vrot.lane.b32.xlu0 %v1293, 96
    %v4014 = vpop.permute.xlu0 %4013
    %4015 = vrot.lane.b32.xlu0 %v1297, 96
    %v4016 = vpop.permute.xlu0 %4015
    %4017 = vrot.lane.b32.xlu0 %v1301, 96
    %v4018 = vpop.permute.xlu0 %4017
    %4019 = vrot.lane.b32.xlu0 %v1305, 96
    %v4020 = vpop.permute.xlu0 %4019
    %4021 = vrot.lane.b32.xlu0 %v1309, 96
    %v4022 = vpop.permute.xlu0 %4021
    %4023 = vrot.lane.b32.xlu0 %v1313, 96
    %v4024 = vpop.permute.xlu0 %4023
    %4025 = vrot.lane.b32.xlu0 %v1317, 96
    %v4026 = vpop.permute.xlu0 %4025
    %4027 = vrot.lane.b32.xlu0 %v1321, 96
    %v4028 = vpop.permute.xlu0 %4027
    %v4030 = vsel %vm1423, %v3990, 0
    %v4033 = vsel %vm1423, %v3992, 0
    %v4036 = vsel %vm1423, %v3994, 0
    %v4039 = vsel %vm1423, %v3996, 0
    %v4042 = vsel %vm1423, %v3998, 0
    %v4045 = vsel %vm1423, %v4000, 0
    %v4048 = vsel %vm1423, %v4002, 0
    %v4051 = vsel %vm1423, %v4004, 0
    %v4054 = vsel %vm1423, %v4014, 0
    %v4057 = vsel %vm1423, %v4016, 0
    %v4060 = vsel %vm1423, %v4018, 0
    %v4063 = vsel %vm1423, %v4020, 0
    %v4066 = vsel %vm1423, %v4022, 0
    %v4069 = vsel %vm1423, %v4024, 0
    %v4072 = vsel %vm1423, %v4026, 0
    %v4075 = vsel %vm1423, %v4028, 0
    %4077 = vmatprep.subr.bf16.mxu0 0
    %4078 = vmatpush1.bf16.xpose.msra.mxu0 %v4075
    %4079 = vmatprep.subr.bf16.mxu0 0
    %4080 = vmatpush1.bf16.xpose.msra.mxu0 %v4072
    %4081 = vmatprep.subr.bf16.mxu0 0
    %4082 = vmatpush1.bf16.xpose.msra.mxu0 %v4069
    %4083 = vmatprep.subr.bf16.mxu0 0
    %4084 = vmatpush1.bf16.xpose.msra.mxu0 %v4066
    %4085 = vmatprep.subr.bf16.mxu0 0
    %4086 = vmatpush1.bf16.xpose.msra.mxu0 %v4063
    %4087 = vmatprep.subr.bf16.mxu0 0
    %4088 = vmatpush1.bf16.xpose.msra.mxu0 %v4060
    %4089 = vmatprep.subr.bf16.mxu0 0
    %4090 = vmatpush1.bf16.xpose.msra.mxu0 %v4057
    %4091 = vmatprep.subr.bf16.mxu0 0
    %4092 = vmatpush1.bf16.xpose.msra.mxu0 %v4054
    %4093 = vmatprep.subr.bf16.mxu0 0
    %4094 = vmatpush2.bf16.xpose.msra.mxu0 0
    %4095 = vmatprep.subr.bf16.mxu0 0
    %4096 = vmatpush2.bf16.xpose.msra.mxu0 0
    %4097 = vmatprep.subr.bf16.mxu0 0
    %4098 = vmatpush2.bf16.xpose.msra.mxu0 0
    %4099 = vmatprep.subr.bf16.mxu0 0
    %4100 = vmatpush2.bf16.xpose.msra.mxu0 0
    %4101 = vmatprep.subr.bf16.mxu0 0
    %4102 = vmatpush2.bf16.xpose.msra.mxu0 0
    %4103 = vmatprep.subr.bf16.mxu0 0
    %4104 = vmatpush2.bf16.xpose.msra.mxu0 0
    %4105 = vmatprep.subr.bf16.mxu0 0
    %4106 = vmatpush2.bf16.xpose.msra.mxu0 0
    %4107 = vmatprep.subr.bf16.mxu0 0
    %4108 = vmatpush2.bf16.xpose.msra.mxu0 0
    %4109 = vmatprep.mubr.bf16.mxu0 0
    %4110 = vmatmul.mubr.bf16.gmra.mxu0 %v4030
    %v4111 = vpop.f32.mrf.mxu0
    %v4112 = vadd.f32 0.0, %v4111
    %v4113 = vpop.f32.mrf.mxu0
    %v4114 = vpop.f32.mrf.mxu0
    %v4115 = vadd.f32 0.0, %v4114
    %v4116 = vpop.f32.mrf.mxu0
    %4117 = vmatprep.mubr.bf16.mxu0 0
    %4118 = vmatmul.mubr.bf16.gmra.mxu0 %v4033
    %v4119 = vpop.f32.mrf.mxu0
    %v4120 = vadd.f32 0.0, %v4119
    %v4121 = vpop.f32.mrf.mxu0
    %v4122 = vpop.f32.mrf.mxu0
    %v4123 = vadd.f32 0.0, %v4122
    %v4124 = vpop.f32.mrf.mxu0
    %4125 = vmatprep.mubr.bf16.mxu0 0
    %4126 = vmatmul.mubr.bf16.gmra.mxu0 %v4036
    %v4127 = vpop.f32.mrf.mxu0
    %v4128 = vadd.f32 0.0, %v4127
    %v4129 = vpop.f32.mrf.mxu0
    %v4130 = vpop.f32.mrf.mxu0
    %v4131 = vadd.f32 0.0, %v4130
    %v4132 = vpop.f32.mrf.mxu0
    %4133 = vmatprep.mubr.bf16.mxu0 0
    %4134 = vmatmul.mubr.bf16.gmra.mxu0 %v4039
    %v4135 = vpop.f32.mrf.mxu0
    %v4136 = vadd.f32 0.0, %v4135
    %v4137 = vpop.f32.mrf.mxu0
    %v4138 = vpop.f32.mrf.mxu0
    %v4139 = vadd.f32 0.0, %v4138
    %v4140 = vpop.f32.mrf.mxu0
    %4141 = vmatprep.mubr.bf16.mxu0 0
    %4142 = vmatmul.mubr.bf16.gmra.mxu0 %v4042
    %v4143 = vpop.f32.mrf.mxu0
    %v4144 = vadd.f32 0.0, %v4143
    %v4145 = vpop.f32.mrf.mxu0
    %v4146 = vpop.f32.mrf.mxu0
    %v4147 = vadd.f32 0.0, %v4146
    %v4148 = vpop.f32.mrf.mxu0
    %4149 = vmatprep.mubr.bf16.mxu0 0
    %4150 = vmatmul.mubr.bf16.gmra.mxu0 %v4045
    %v4151 = vpop.f32.mrf.mxu0
    %v4152 = vadd.f32 0.0, %v4151
    %v4153 = vpop.f32.mrf.mxu0
    %v4154 = vpop.f32.mrf.mxu0
    %v4155 = vadd.f32 0.0, %v4154
    %v4156 = vpop.f32.mrf.mxu0
    %4157 = vmatprep.mubr.bf16.mxu0 0
    %4158 = vmatmul.mubr.bf16.gmra.mxu0 %v4048
    %v4159 = vpop.f32.mrf.mxu0
    %v4160 = vadd.f32 0.0, %v4159
    %v4161 = vpop.f32.mrf.mxu0
    %v4162 = vpop.f32.mrf.mxu0
    %v4163 = vadd.f32 0.0, %v4162
    %v4164 = vpop.f32.mrf.mxu0
    %4165 = vmatprep.mubr.bf16.mxu0 0
    %4166 = vmatmul.mubr.bf16.gmra.mxu0 %v4051
    %v4167 = vpop.f32.mrf.mxu0
    %v4168 = vadd.f32 0.0, %v4167
    %v4169 = vpop.f32.mrf.mxu0
    %v4170 = vpop.f32.mrf.mxu0
    %v4171 = vadd.f32 0.0, %v4170
    %v4172 = vpop.f32.mrf.mxu0
    %4173 = vdwg.mxu0
    %v4174 = vsel %vm1407, %v4112, -inf
    %v4175 = vsel %vm1408, %v4115, -inf
    %v4176 = vsel %vm1409, %v4120, -inf
    %v4177 = vsel %vm1410, %v4123, -inf
    %v4178 = vsel %vm1411, %v4128, -inf
    %v4179 = vsel %vm1412, %v4131, -inf
    %v4180 = vsel %vm1413, %v4136, -inf
    %v4181 = vsel %vm1414, %v4139, -inf
    %v4182 = vsel %vm1415, %v4144, -inf
    %v4183 = vsel %vm1416, %v4147, -inf
    %v4184 = vsel %vm1417, %v4152, -inf
    %v4185 = vsel %vm1418, %v4155, -inf
    %v4186 = vsel %vm1419, %v4160, -inf
    %v4187 = vsel %vm1420, %v4163, -inf
    %v4188 = vsel %vm1421, %v4168, -inf
    %v4189 = vsel %vm1422, %v4171, -inf
    %4190 = vmax.xlane.f32.xlu0 %v4174
    %v4191 = vpop.xlane.xlu0 %4190
    %4192 = vmax.xlane.f32.xlu0 %v4175
    %v4193 = vpop.xlane.xlu0 %4192
    %4194 = vmax.xlane.f32.xlu0 %v4176
    %v4195 = vpop.xlane.xlu0 %4194
    %4196 = vmax.xlane.f32.xlu0 %v4177
    %v4197 = vpop.xlane.xlu0 %4196
    %4198 = vmax.xlane.f32.xlu0 %v4178
    %v4199 = vpop.xlane.xlu0 %4198
    %4200 = vmax.xlane.f32.xlu0 %v4179
    %v4201 = vpop.xlane.xlu0 %4200
    %4202 = vmax.xlane.f32.xlu0 %v4180
    %v4203 = vpop.xlane.xlu0 %4202
    %4204 = vmax.xlane.f32.xlu0 %v4181
    %v4205 = vpop.xlane.xlu0 %4204
    %4206 = vmax.xlane.f32.xlu0 %v4182
    %v4207 = vpop.xlane.xlu0 %4206
    %4208 = vmax.xlane.f32.xlu0 %v4183
    %v4209 = vpop.xlane.xlu0 %4208
    %4210 = vmax.xlane.f32.xlu0 %v4184
    %v4211 = vpop.xlane.xlu0 %4210
    %4212 = vmax.xlane.f32.xlu0 %v4185
    %v4213 = vpop.xlane.xlu0 %4212
    %4214 = vmax.xlane.f32.xlu0 %v4186
    %v4215 = vpop.xlane.xlu0 %4214
    %4216 = vmax.xlane.f32.xlu0 %v4187
    %v4217 = vpop.xlane.xlu0 %4216
    %4218 = vmax.xlane.f32.xlu0 %v4188
    %v4219 = vpop.xlane.xlu0 %4218
    %4220 = vmax.xlane.f32.xlu0 %v4189
    %v4221 = vpop.xlane.xlu0 %4220
    %v4222 = vsub.f32 %v4174, %v4191
    %v4223 = vsub.f32 %v4175, %v4193
    %v4224 = vsub.f32 %v4176, %v4195
    %v4225 = vsub.f32 %v4177, %v4197
    %v4226 = vsub.f32 %v4178, %v4199
    %v4227 = vsub.f32 %v4179, %v4201
    %v4228 = vsub.f32 %v4180, %v4203
    %v4229 = vsub.f32 %v4181, %v4205
    %v4230 = vsub.f32 %v4182, %v4207
    %v4231 = vsub.f32 %v4183, %v4209
    %v4232 = vsub.f32 %v4184, %v4211
    %v4233 = vsub.f32 %v4185, %v4213
    %v4234 = vsub.f32 %v4186, %v4215
    %v4235 = vsub.f32 %v4187, %v4217
    %v4236 = vsub.f32 %v4188, %v4219
    %v4237 = vsub.f32 %v4189, %v4221
    %v4238 = vpack.c.bf16 %v4223, %v4222
    %v4239 = vpack.c.bf16 %v4225, %v4224
    %v4240 = vpack.c.bf16 %v4227, %v4226
    %v4241 = vpack.c.bf16 %v4229, %v4228
    %v4242 = vpack.c.bf16 %v4231, %v4230
    %v4243 = vpack.c.bf16 %v4233, %v4232
    %v4244 = vpack.c.bf16 %v4235, %v4234
    %v4245 = vpack.c.bf16 %v4237, %v4236
    %v4247 = vmul.bf16 %v4238, 1069105081
    %v4248 = vpow.bf16.pop %v4247
    %v4250 = vmul.bf16 %v4239, 1069105081
    %v4251 = vpow.bf16.pop %v4250
    %v4253 = vmul.bf16 %v4240, 1069105081
    %v4254 = vpow.bf16.pop %v4253
    %v4256 = vmul.bf16 %v4241, 1069105081
    %v4257 = vpow.bf16.pop %v4256
    %v4259 = vmul.bf16 %v4242, 1069105081
    %v4260 = vpow.bf16.pop %v4259
    %v4262 = vmul.bf16 %v4243, 1069105081
    %v4263 = vpow.bf16.pop %v4262
    %v4265 = vmul.bf16 %v4244, 1069105081
    %v4266 = vpow.bf16.pop %v4265
    %v4268 = vmul.bf16 %v4245, 1069105081
    %v4269 = vpow.bf16.pop %v4268
    %v4270 = vunpack.c.l.bf16 %v4248
    %v4271 = vunpack.c.h.bf16 %v4248
    %v4272 = vunpack.c.l.bf16 %v4251
    %v4273 = vunpack.c.h.bf16 %v4251
    %v4274 = vunpack.c.l.bf16 %v4254
    %v4275 = vunpack.c.h.bf16 %v4254
    %v4276 = vunpack.c.l.bf16 %v4257
    %v4277 = vunpack.c.h.bf16 %v4257
    %v4278 = vunpack.c.l.bf16 %v4260
    %v4279 = vunpack.c.h.bf16 %v4260
    %v4280 = vunpack.c.l.bf16 %v4263
    %v4281 = vunpack.c.h.bf16 %v4263
    %v4282 = vunpack.c.l.bf16 %v4266
    %v4283 = vunpack.c.h.bf16 %v4266
    %v4284 = vunpack.c.l.bf16 %v4269
    %v4285 = vunpack.c.h.bf16 %v4269
    %4286 = vadd.xlane.f32.xlu0 %v4270
    %v4287 = vpop.xlane.xlu0 %4286
    %4288 = vadd.xlane.f32.xlu0 %v4271
    %v4289 = vpop.xlane.xlu0 %4288
    %4290 = vadd.xlane.f32.xlu0 %v4272
    %v4291 = vpop.xlane.xlu0 %4290
    %4292 = vadd.xlane.f32.xlu0 %v4273
    %v4293 = vpop.xlane.xlu0 %4292
    %4294 = vadd.xlane.f32.xlu0 %v4274
    %v4295 = vpop.xlane.xlu0 %4294
    %4296 = vadd.xlane.f32.xlu0 %v4275
    %v4297 = vpop.xlane.xlu0 %4296
    %4298 = vadd.xlane.f32.xlu0 %v4276
    %v4299 = vpop.xlane.xlu0 %4298
    %4300 = vadd.xlane.f32.xlu0 %v4277
    %v4301 = vpop.xlane.xlu0 %4300
    %4302 = vadd.xlane.f32.xlu0 %v4278
    %v4303 = vpop.xlane.xlu0 %4302
    %4304 = vadd.xlane.f32.xlu0 %v4279
    %v4305 = vpop.xlane.xlu0 %4304
    %4306 = vadd.xlane.f32.xlu0 %v4280
    %v4307 = vpop.xlane.xlu0 %4306
    %4308 = vadd.xlane.f32.xlu0 %v4281
    %v4309 = vpop.xlane.xlu0 %4308
    %4310 = vadd.xlane.f32.xlu0 %v4282
    %v4311 = vpop.xlane.xlu0 %4310
    %4312 = vadd.xlane.f32.xlu0 %v4283
    %v4313 = vpop.xlane.xlu0 %4312
    %4314 = vadd.xlane.f32.xlu0 %v4284
    %v4315 = vpop.xlane.xlu0 %4314
    %4316 = vadd.xlane.f32.xlu0 %v4285
    %v4317 = vpop.xlane.xlu0 %4316
    %v4318 = vrcp.pop %v4287
    %v4319 = vrcp.pop %v4289
    %v4320 = vrcp.pop %v4291
    %v4321 = vrcp.pop %v4293
    %v4322 = vrcp.pop %v4295
    %v4323 = vrcp.pop %v4297
    %v4324 = vrcp.pop %v4299
    %v4325 = vrcp.pop %v4301
    %v4326 = vrcp.pop %v4303
    %v4327 = vrcp.pop %v4305
    %v4328 = vrcp.pop %v4307
    %v4329 = vrcp.pop %v4309
    %v4330 = vrcp.pop %v4311
    %v4331 = vrcp.pop %v4313
    %v4332 = vrcp.pop %v4315
    %v4333 = vrcp.pop %v4317
    %4342 = vrot.lane.b32.xlu0 %v1357, 96
    %v4343 = vpop.permute.xlu0 %4342
    %4344 = vrot.lane.b32.xlu0 %v1359, 96
    %v4345 = vpop.permute.xlu0 %4344
    %4346 = vrot.lane.b32.xlu0 %v1361, 96
    %v4347 = vpop.permute.xlu0 %4346
    %4348 = vrot.lane.b32.xlu0 %v1363, 96
    %v4349 = vpop.permute.xlu0 %4348
    %4350 = vrot.lane.b32.xlu0 %v1365, 96
    %v4351 = vpop.permute.xlu0 %4350
    %4352 = vrot.lane.b32.xlu0 %v1367, 96
    %v4353 = vpop.permute.xlu0 %4352
    %4354 = vrot.lane.b32.xlu0 %v1369, 96
    %v4355 = vpop.permute.xlu0 %4354
    %4356 = vrot.lane.b32.xlu0 %v1371, 96
    %v4357 = vpop.permute.xlu0 %4356
    %4366 = vmatprep.subr.bf16.mxu0 0
    %4367 = vmatpush1.bf16.msra.mxu0 %v4357
    %4368 = vmatprep.subr.bf16.mxu0 0
    %4369 = vmatpush1.bf16.msra.mxu0 %v4355
    %4370 = vmatprep.subr.bf16.mxu0 0
    %4371 = vmatpush1.bf16.msra.mxu0 %v4353
    %4372 = vmatprep.subr.bf16.mxu0 0
    %4373 = vmatpush1.bf16.msra.mxu0 %v4351
    %4374 = vmatprep.subr.bf16.mxu0 0
    %4375 = vmatpush1.bf16.msra.mxu0 %v4349
    %4376 = vmatprep.subr.bf16.mxu0 0
    %4377 = vmatpush1.bf16.msra.mxu0 %v4347
    %4378 = vmatprep.subr.bf16.mxu0 0
    %4379 = vmatpush1.bf16.msra.mxu0 %v4345
    %4380 = vmatprep.subr.bf16.mxu0 0
    %4381 = vmatpush1.bf16.msra.mxu0 %v4343
    %4382 = vmatprep.subr.bf16.mxu0 0
    %4383 = vmatpush2.bf16.msra.mxu0 0
    %4384 = vmatprep.subr.bf16.mxu0 0
    %4385 = vmatpush2.bf16.msra.mxu0 0
    %4386 = vmatprep.subr.bf16.mxu0 0
    %4387 = vmatpush2.bf16.msra.mxu0 0
    %4388 = vmatprep.subr.bf16.mxu0 0
    %4389 = vmatpush2.bf16.msra.mxu0 0
    %4390 = vmatprep.subr.bf16.mxu0 0
    %4391 = vmatpush2.bf16.msra.mxu0 0
    %4392 = vmatprep.subr.bf16.mxu0 0
    %4393 = vmatpush2.bf16.msra.mxu0 0
    %4394 = vmatprep.subr.bf16.mxu0 0
    %4395 = vmatpush2.bf16.msra.mxu0 0
    %4396 = vmatprep.subr.bf16.mxu0 0
    %4397 = vmatpush2.bf16.msra.mxu0 0
    %4398 = vmatprep.mubr.bf16.mxu0 0
    %4399 = vmatmul.mubr.bf16.gmra.mxu0 %v4248
    %v4400 = vpop.f32.mrf.mxu0
    %v4401 = vadd.f32 0.0, %v4400
    %v4402 = vpop.f32.mrf.mxu0
    %v4403 = vpop.f32.mrf.mxu0
    %v4404 = vadd.f32 0.0, %v4403
    %v4405 = vpop.f32.mrf.mxu0
    %4406 = vmatprep.mubr.bf16.mxu0 0
    %4407 = vmatmul.mubr.bf16.gmra.mxu0 %v4251
    %v4408 = vpop.f32.mrf.mxu0
    %v4409 = vadd.f32 0.0, %v4408
    %v4410 = vpop.f32.mrf.mxu0
    %v4411 = vpop.f32.mrf.mxu0
    %v4412 = vadd.f32 0.0, %v4411
    %v4413 = vpop.f32.mrf.mxu0
    %4414 = vmatprep.mubr.bf16.mxu0 0
    %4415 = vmatmul.mubr.bf16.gmra.mxu0 %v4254
    %v4416 = vpop.f32.mrf.mxu0
    %v4417 = vadd.f32 0.0, %v4416
    %v4418 = vpop.f32.mrf.mxu0
    %v4419 = vpop.f32.mrf.mxu0
    %v4420 = vadd.f32 0.0, %v4419
    %v4421 = vpop.f32.mrf.mxu0
    %4422 = vmatprep.mubr.bf16.mxu0 0
    %4423 = vmatmul.mubr.bf16.gmra.mxu0 %v4257
    %v4424 = vpop.f32.mrf.mxu0
    %v4425 = vadd.f32 0.0, %v4424
    %v4426 = vpop.f32.mrf.mxu0
    %v4427 = vpop.f32.mrf.mxu0
    %v4428 = vadd.f32 0.0, %v4427
    %v4429 = vpop.f32.mrf.mxu0
    %4430 = vmatprep.mubr.bf16.mxu0 0
    %4431 = vmatmul.mubr.bf16.gmra.mxu0 %v4260
    %v4432 = vpop.f32.mrf.mxu0
    %v4433 = vadd.f32 0.0, %v4432
    %v4434 = vpop.f32.mrf.mxu0
    %v4435 = vpop.f32.mrf.mxu0
    %v4436 = vadd.f32 0.0, %v4435
    %v4437 = vpop.f32.mrf.mxu0
    %4438 = vmatprep.mubr.bf16.mxu0 0
    %4439 = vmatmul.mubr.bf16.gmra.mxu0 %v4263
    %v4440 = vpop.f32.mrf.mxu0
    %v4441 = vadd.f32 0.0, %v4440
    %v4442 = vpop.f32.mrf.mxu0
    %v4443 = vpop.f32.mrf.mxu0
    %v4444 = vadd.f32 0.0, %v4443
    %v4445 = vpop.f32.mrf.mxu0
    %4446 = vmatprep.mubr.bf16.mxu0 0
    %4447 = vmatmul.mubr.bf16.gmra.mxu0 %v4266
    %v4448 = vpop.f32.mrf.mxu0
    %v4449 = vadd.f32 0.0, %v4448
    %v4450 = vpop.f32.mrf.mxu0
    %v4451 = vpop.f32.mrf.mxu0
    %v4452 = vadd.f32 0.0, %v4451
    %v4453 = vpop.f32.mrf.mxu0
    %4454 = vmatprep.mubr.bf16.mxu0 0
    %4455 = vmatmul.mubr.bf16.gmra.mxu0 %v4269
    %v4456 = vpop.f32.mrf.mxu0
    %v4457 = vadd.f32 0.0, %v4456
    %v4458 = vpop.f32.mrf.mxu0
    %v4459 = vpop.f32.mrf.mxu0
    %v4460 = vadd.f32 0.0, %v4459
    %v4461 = vpop.f32.mrf.mxu0
    %4462 = vdwg.mxu0
    %v4463 = vmul.f32 %v4401, %v4318
    %v4464 = vmul.f32 %v4404, %v4319
    %v4465 = vmul.f32 %v4409, %v4320
    %v4466 = vmul.f32 %v4412, %v4321
    %v4467 = vmul.f32 %v4417, %v4322
    %v4468 = vmul.f32 %v4420, %v4323
    %v4469 = vmul.f32 %v4425, %v4324
    %v4470 = vmul.f32 %v4428, %v4325
    %v4471 = vmul.f32 %v4433, %v4326
    %v4472 = vmul.f32 %v4436, %v4327
    %v4473 = vmul.f32 %v4441, %v4328
    %v4474 = vmul.f32 %v4444, %v4329
    %v4475 = vmul.f32 %v4449, %v4330
    %v4476 = vmul.f32 %v4452, %v4331
    %v4477 = vmul.f32 %v4457, %v4332
    %v4478 = vmul.f32 %v4460, %v4333
    %4495 = vrot.lane.b32.xlu0 %v4463, 32
    %v4496 = vpop.permute.xlu0 %4495
    %4497 = vrot.lane.b32.xlu0 %v4464, 32
    %v4498 = vpop.permute.xlu0 %4497
    %4499 = vrot.lane.b32.xlu0 %v4465, 32
    %v4500 = vpop.permute.xlu0 %4499
    %4501 = vrot.lane.b32.xlu0 %v4466, 32
    %v4502 = vpop.permute.xlu0 %4501
    %4503 = vrot.lane.b32.xlu0 %v4467, 32
    %v4504 = vpop.permute.xlu0 %4503
    %4505 = vrot.lane.b32.xlu0 %v4468, 32
    %v4506 = vpop.permute.xlu0 %4505
    %4507 = vrot.lane.b32.xlu0 %v4469, 32
    %v4508 = vpop.permute.xlu0 %4507
    %4509 = vrot.lane.b32.xlu0 %v4470, 32
    %v4510 = vpop.permute.xlu0 %4509
    %4511 = vrot.lane.b32.xlu0 %v4471, 32
    %v4512 = vpop.permute.xlu0 %4511
    %4513 = vrot.lane.b32.xlu0 %v4472, 32
    %v4514 = vpop.permute.xlu0 %4513
    %4515 = vrot.lane.b32.xlu0 %v4473, 32
    %v4516 = vpop.permute.xlu0 %4515
    %4517 = vrot.lane.b32.xlu0 %v4474, 32
    %v4518 = vpop.permute.xlu0 %4517
    %4519 = vrot.lane.b32.xlu0 %v4475, 32
    %v4520 = vpop.permute.xlu0 %4519
    %4521 = vrot.lane.b32.xlu0 %v4476, 32
    %v4522 = vpop.permute.xlu0 %4521
    %4523 = vrot.lane.b32.xlu0 %v4477, 32
    %v4524 = vpop.permute.xlu0 %4523
    %4525 = vrot.lane.b32.xlu0 %v4478, 32
    %v4526 = vpop.permute.xlu0 %4525
    %4543 = vst.msk [vmem:[#allocation7 + $0x8] sm:$0xff] %vm2420, %v4496
    %4544 = vst.msk [vmem:[#allocation7 + $0x18] sm:$0xff] %vm2420, %v4498
    %4545 = vst.msk [vmem:[#allocation7 + $0x28] sm:$0xff] %vm2420, %v4500
    %4546 = vst.msk [vmem:[#allocation7 + $0x38] sm:$0xff] %vm2420, %v4502
    %4547 = vst.msk [vmem:[#allocation7 + $0x48] sm:$0xff] %vm2420, %v4504
    %4548 = vst.msk [vmem:[#allocation7 + $0x58] sm:$0xff] %vm2420, %v4506
    %4549 = vst.msk [vmem:[#allocation7 + $0x68] sm:$0xff] %vm2420, %v4508
    %4550 = vst.msk [vmem:[#allocation7 + $0x78] sm:$0xff] %vm2420, %v4510
    %4551 = vst.msk [vmem:[#allocation7 + $0x88] sm:$0xff] %vm2420, %v4512
    %4552 = vst.msk [vmem:[#allocation7 + $0x98] sm:$0xff] %vm2420, %v4514
    %4553 = vst.msk [vmem:[#allocation7 + $0xa8] sm:$0xff] %vm2420, %v4516
    %4554 = vst.msk [vmem:[#allocation7 + $0xb8] sm:$0xff] %vm2420, %v4518
    %4555 = vst.msk [vmem:[#allocation7 + $0xc8] sm:$0xff] %vm2420, %v4520
    %4556 = vst.msk [vmem:[#allocation7 + $0xd8] sm:$0xff] %vm2420, %v4522
    %4557 = vst.msk [vmem:[#allocation7 + $0xe8] sm:$0xff] %vm2420, %v4524
    %4558 = vst.msk [vmem:[#allocation7 + $0xf8] sm:$0xff] %vm2420, %v4526
    %4559 = vrot.lane.b32.xlu0 %v1295, 64
    %v4560 = vpop.permute.xlu0 %4559
    %4561 = vrot.lane.b32.xlu0 %v1299, 64
    %v4562 = vpop.permute.xlu0 %4561
    %4563 = vrot.lane.b32.xlu0 %v1303, 64
    %v4564 = vpop.permute.xlu0 %4563
    %4565 = vrot.lane.b32.xlu0 %v1307, 64
    %v4566 = vpop.permute.xlu0 %4565
    %4567 = vrot.lane.b32.xlu0 %v1311, 64
    %v4568 = vpop.permute.xlu0 %4567
    %4569 = vrot.lane.b32.xlu0 %v1315, 64
    %v4570 = vpop.permute.xlu0 %4569
    %4571 = vrot.lane.b32.xlu0 %v1319, 64
    %v4572 = vpop.permute.xlu0 %4571
    %4573 = vrot.lane.b32.xlu0 %v1323, 64
    %v4574 = vpop.permute.xlu0 %4573
    %4575 = vrot.lane.b32.xlu0 %v1293, 64
    %v4576 = vpop.permute.xlu0 %4575
    %4577 = vrot.lane.b32.xlu0 %v1297, 64
    %v4578 = vpop.permute.xlu0 %4577
    %4579 = vrot.lane.b32.xlu0 %v1301, 64
    %v4580 = vpop.permute.xlu0 %4579
    %4581 = vrot.lane.b32.xlu0 %v1305, 64
    %v4582 = vpop.permute.xlu0 %4581
    %4583 = vrot.lane.b32.xlu0 %v1309, 64
    %v4584 = vpop.permute.xlu0 %4583
    %4585 = vrot.lane.b32.xlu0 %v1313, 64
    %v4586 = vpop.permute.xlu0 %4585
    %4587 = vrot.lane.b32.xlu0 %v1317, 64
    %v4588 = vpop.permute.xlu0 %4587
    %4589 = vrot.lane.b32.xlu0 %v1321, 64
    %v4590 = vpop.permute.xlu0 %4589
    %v4592 = vsel %vm1423, %v4560, 0
    %v4595 = vsel %vm1423, %v4562, 0
    %v4598 = vsel %vm1423, %v4564, 0
    %v4601 = vsel %vm1423, %v4566, 0
    %v4604 = vsel %vm1423, %v4568, 0
    %v4607 = vsel %vm1423, %v4570, 0
    %v4610 = vsel %vm1423, %v4572, 0
    %v4613 = vsel %vm1423, %v4574, 0
    %v4616 = vsel %vm1423, %v4576, 0
    %v4619 = vsel %vm1423, %v4578, 0
    %v4622 = vsel %vm1423, %v4580, 0
    %v4625 = vsel %vm1423, %v4582, 0
    %v4628 = vsel %vm1423, %v4584, 0
    %v4631 = vsel %vm1423, %v4586, 0
    %v4634 = vsel %vm1423, %v4588, 0
    %v4637 = vsel %vm1423, %v4590, 0
    %4639 = vmatprep.subr.bf16.mxu0 0
    %4640 = vmatpush1.bf16.xpose.msra.mxu0 %v4637
    %4641 = vmatprep.subr.bf16.mxu0 0
    %4642 = vmatpush1.bf16.xpose.msra.mxu0 %v4634
    %4643 = vmatprep.subr.bf16.mxu0 0
    %4644 = vmatpush1.bf16.xpose.msra.mxu0 %v4631
    %4645 = vmatprep.subr.bf16.mxu0 0
    %4646 = vmatpush1.bf16.xpose.msra.mxu0 %v4628
    %4647 = vmatprep.subr.bf16.mxu0 0
    %4648 = vmatpush1.bf16.xpose.msra.mxu0 %v4625
    %4649 = vmatprep.subr.bf16.mxu0 0
    %4650 = vmatpush1.bf16.xpose.msra.mxu0 %v4622
    %4651 = vmatprep.subr.bf16.mxu0 0
    %4652 = vmatpush1.bf16.xpose.msra.mxu0 %v4619
    %4653 = vmatprep.subr.bf16.mxu0 0
    %4654 = vmatpush1.bf16.xpose.msra.mxu0 %v4616
    %4655 = vmatprep.subr.bf16.mxu0 0
    %4656 = vmatpush2.bf16.xpose.msra.mxu0 0
    %4657 = vmatprep.subr.bf16.mxu0 0
    %4658 = vmatpush2.bf16.xpose.msra.mxu0 0
    %4659 = vmatprep.subr.bf16.mxu0 0
    %4660 = vmatpush2.bf16.xpose.msra.mxu0 0
    %4661 = vmatprep.subr.bf16.mxu0 0
    %4662 = vmatpush2.bf16.xpose.msra.mxu0 0
    %4663 = vmatprep.subr.bf16.mxu0 0
    %4664 = vmatpush2.bf16.xpose.msra.mxu0 0
    %4665 = vmatprep.subr.bf16.mxu0 0
    %4666 = vmatpush2.bf16.xpose.msra.mxu0 0
    %4667 = vmatprep.subr.bf16.mxu0 0
    %4668 = vmatpush2.bf16.xpose.msra.mxu0 0
    %4669 = vmatprep.subr.bf16.mxu0 0
    %4670 = vmatpush2.bf16.xpose.msra.mxu0 0
    %4671 = vmatprep.mubr.bf16.mxu0 0
    %4672 = vmatmul.mubr.bf16.gmra.mxu0 %v4592
    %v4673 = vpop.f32.mrf.mxu0
    %v4674 = vadd.f32 0.0, %v4673
    %v4675 = vpop.f32.mrf.mxu0
    %v4676 = vpop.f32.mrf.mxu0
    %v4677 = vadd.f32 0.0, %v4676
    %v4678 = vpop.f32.mrf.mxu0
    %4679 = vmatprep.mubr.bf16.mxu0 0
    %4680 = vmatmul.mubr.bf16.gmra.mxu0 %v4595
    %v4681 = vpop.f32.mrf.mxu0
    %v4682 = vadd.f32 0.0, %v4681
    %v4683 = vpop.f32.mrf.mxu0
    %v4684 = vpop.f32.mrf.mxu0
    %v4685 = vadd.f32 0.0, %v4684
    %v4686 = vpop.f32.mrf.mxu0
    %4687 = vmatprep.mubr.bf16.mxu0 0
    %4688 = vmatmul.mubr.bf16.gmra.mxu0 %v4598
    %v4689 = vpop.f32.mrf.mxu0
    %v4690 = vadd.f32 0.0, %v4689
    %v4691 = vpop.f32.mrf.mxu0
    %v4692 = vpop.f32.mrf.mxu0
    %v4693 = vadd.f32 0.0, %v4692
    %v4694 = vpop.f32.mrf.mxu0
    %4695 = vmatprep.mubr.bf16.mxu0 0
    %4696 = vmatmul.mubr.bf16.gmra.mxu0 %v4601
    %v4697 = vpop.f32.mrf.mxu0
    %v4698 = vadd.f32 0.0, %v4697
    %v4699 = vpop.f32.mrf.mxu0
    %v4700 = vpop.f32.mrf.mxu0
    %v4701 = vadd.f32 0.0, %v4700
    %v4702 = vpop.f32.mrf.mxu0
    %4703 = vmatprep.mubr.bf16.mxu0 0
    %4704 = vmatmul.mubr.bf16.gmra.mxu0 %v4604
    %v4705 = vpop.f32.mrf.mxu0
    %v4706 = vadd.f32 0.0, %v4705
    %v4707 = vpop.f32.mrf.mxu0
    %v4708 = vpop.f32.mrf.mxu0
    %v4709 = vadd.f32 0.0, %v4708
    %v4710 = vpop.f32.mrf.mxu0
    %4711 = vmatprep.mubr.bf16.mxu0 0
    %4712 = vmatmul.mubr.bf16.gmra.mxu0 %v4607
    %v4713 = vpop.f32.mrf.mxu0
    %v4714 = vadd.f32 0.0, %v4713
    %v4715 = vpop.f32.mrf.mxu0
    %v4716 = vpop.f32.mrf.mxu0
    %v4717 = vadd.f32 0.0, %v4716
    %v4718 = vpop.f32.mrf.mxu0
    %4719 = vmatprep.mubr.bf16.mxu0 0
    %4720 = vmatmul.mubr.bf16.gmra.mxu0 %v4610
    %v4721 = vpop.f32.mrf.mxu0
    %v4722 = vadd.f32 0.0, %v4721
    %v4723 = vpop.f32.mrf.mxu0
    %v4724 = vpop.f32.mrf.mxu0
    %v4725 = vadd.f32 0.0, %v4724
    %v4726 = vpop.f32.mrf.mxu0
    %4727 = vmatprep.mubr.bf16.mxu0 0
    %4728 = vmatmul.mubr.bf16.gmra.mxu0 %v4613
    %v4729 = vpop.f32.mrf.mxu0
    %v4730 = vadd.f32 0.0, %v4729
    %v4731 = vpop.f32.mrf.mxu0
    %v4732 = vpop.f32.mrf.mxu0
    %v4733 = vadd.f32 0.0, %v4732
    %v4734 = vpop.f32.mrf.mxu0
    %4735 = vdwg.mxu0
    %v4736 = vsel %vm1407, %v4674, -inf
    %v4737 = vsel %vm1408, %v4677, -inf
    %v4738 = vsel %vm1409, %v4682, -inf
    %v4739 = vsel %vm1410, %v4685, -inf
    %v4740 = vsel %vm1411, %v4690, -inf
    %v4741 = vsel %vm1412, %v4693, -inf
    %v4742 = vsel %vm1413, %v4698, -inf
    %v4743 = vsel %vm1414, %v4701, -inf
    %v4744 = vsel %vm1415, %v4706, -inf
    %v4745 = vsel %vm1416, %v4709, -inf
    %v4746 = vsel %vm1417, %v4714, -inf
    %v4747 = vsel %vm1418, %v4717, -inf
    %v4748 = vsel %vm1419, %v4722, -inf
    %v4749 = vsel %vm1420, %v4725, -inf
    %v4750 = vsel %vm1421, %v4730, -inf
    %v4751 = vsel %vm1422, %v4733, -inf
    %4752 = vmax.xlane.f32.xlu0 %v4736
    %v4753 = vpop.xlane.xlu0 %4752
    %4754 = vmax.xlane.f32.xlu0 %v4737
    %v4755 = vpop.xlane.xlu0 %4754
    %4756 = vmax.xlane.f32.xlu0 %v4738
    %v4757 = vpop.xlane.xlu0 %4756
    %4758 = vmax.xlane.f32.xlu0 %v4739
    %v4759 = vpop.xlane.xlu0 %4758
    %4760 = vmax.xlane.f32.xlu0 %v4740
    %v4761 = vpop.xlane.xlu0 %4760
    %4762 = vmax.xlane.f32.xlu0 %v4741
    %v4763 = vpop.xlane.xlu0 %4762
    %4764 = vmax.xlane.f32.xlu0 %v4742
    %v4765 = vpop.xlane.xlu0 %4764
    %4766 = vmax.xlane.f32.xlu0 %v4743
    %v4767 = vpop.xlane.xlu0 %4766
    %4768 = vmax.xlane.f32.xlu0 %v4744
    %v4769 = vpop.xlane.xlu0 %4768
    %4770 = vmax.xlane.f32.xlu0 %v4745
    %v4771 = vpop.xlane.xlu0 %4770
    %4772 = vmax.xlane.f32.xlu0 %v4746
    %v4773 = vpop.xlane.xlu0 %4772
    %4774 = vmax.xlane.f32.xlu0 %v4747
    %v4775 = vpop.xlane.xlu0 %4774
    %4776 = vmax.xlane.f32.xlu0 %v4748
    %v4777 = vpop.xlane.xlu0 %4776
    %4778 = vmax.xlane.f32.xlu0 %v4749
    %v4779 = vpop.xlane.xlu0 %4778
    %4780 = vmax.xlane.f32.xlu0 %v4750
    %v4781 = vpop.xlane.xlu0 %4780
    %4782 = vmax.xlane.f32.xlu0 %v4751
    %v4783 = vpop.xlane.xlu0 %4782
    %v4784 = vsub.f32 %v4736, %v4753
    %v4785 = vsub.f32 %v4737, %v4755
    %v4786 = vsub.f32 %v4738, %v4757
    %v4787 = vsub.f32 %v4739, %v4759
    %v4788 = vsub.f32 %v4740, %v4761
    %v4789 = vsub.f32 %v4741, %v4763
    %v4790 = vsub.f32 %v4742, %v4765
    %v4791 = vsub.f32 %v4743, %v4767
    %v4792 = vsub.f32 %v4744, %v4769
    %v4793 = vsub.f32 %v4745, %v4771
    %v4794 = vsub.f32 %v4746, %v4773
    %v4795 = vsub.f32 %v4747, %v4775
    %v4796 = vsub.f32 %v4748, %v4777
    %v4797 = vsub.f32 %v4749, %v4779
    %v4798 = vsub.f32 %v4750, %v4781
    %v4799 = vsub.f32 %v4751, %v4783
    %v4800 = vpack.c.bf16 %v4785, %v4784
    %v4801 = vpack.c.bf16 %v4787, %v4786
    %v4802 = vpack.c.bf16 %v4789, %v4788
    %v4803 = vpack.c.bf16 %v4791, %v4790
    %v4804 = vpack.c.bf16 %v4793, %v4792
    %v4805 = vpack.c.bf16 %v4795, %v4794
    %v4806 = vpack.c.bf16 %v4797, %v4796
    %v4807 = vpack.c.bf16 %v4799, %v4798
    %v4809 = vmul.bf16 %v4800, 1069105081
    %v4810 = vpow.bf16.pop %v4809
    %v4812 = vmul.bf16 %v4801, 1069105081
    %v4813 = vpow.bf16.pop %v4812
    %v4815 = vmul.bf16 %v4802, 1069105081
    %v4816 = vpow.bf16.pop %v4815
    %v4818 = vmul.bf16 %v4803, 1069105081
    %v4819 = vpow.bf16.pop %v4818
    %v4821 = vmul.bf16 %v4804, 1069105081
    %v4822 = vpow.bf16.pop %v4821
    %v4824 = vmul.bf16 %v4805, 1069105081
    %v4825 = vpow.bf16.pop %v4824
    %v4827 = vmul.bf16 %v4806, 1069105081
    %v4828 = vpow.bf16.pop %v4827
    %v4830 = vmul.bf16 %v4807, 1069105081
    %v4831 = vpow.bf16.pop %v4830
    %v4832 = vunpack.c.l.bf16 %v4810
    %v4833 = vunpack.c.h.bf16 %v4810
    %v4834 = vunpack.c.l.bf16 %v4813
    %v4835 = vunpack.c.h.bf16 %v4813
    %v4836 = vunpack.c.l.bf16 %v4816
    %v4837 = vunpack.c.h.bf16 %v4816
    %v4838 = vunpack.c.l.bf16 %v4819
    %v4839 = vunpack.c.h.bf16 %v4819
    %v4840 = vunpack.c.l.bf16 %v4822
    %v4841 = vunpack.c.h.bf16 %v4822
    %v4842 = vunpack.c.l.bf16 %v4825
    %v4843 = vunpack.c.h.bf16 %v4825
    %v4844 = vunpack.c.l.bf16 %v4828
    %v4845 = vunpack.c.h.bf16 %v4828
    %v4846 = vunpack.c.l.bf16 %v4831
    %v4847 = vunpack.c.h.bf16 %v4831
    %4848 = vadd.xlane.f32.xlu0 %v4832
    %v4849 = vpop.xlane.xlu0 %4848
    %4850 = vadd.xlane.f32.xlu0 %v4833
    %v4851 = vpop.xlane.xlu0 %4850
    %4852 = vadd.xlane.f32.xlu0 %v4834
    %v4853 = vpop.xlane.xlu0 %4852
    %4854 = vadd.xlane.f32.xlu0 %v4835
    %v4855 = vpop.xlane.xlu0 %4854
    %4856 = vadd.xlane.f32.xlu0 %v4836
    %v4857 = vpop.xlane.xlu0 %4856
    %4858 = vadd.xlane.f32.xlu0 %v4837
    %v4859 = vpop.xlane.xlu0 %4858
    %4860 = vadd.xlane.f32.xlu0 %v4838
    %v4861 = vpop.xlane.xlu0 %4860
    %4862 = vadd.xlane.f32.xlu0 %v4839
    %v4863 = vpop.xlane.xlu0 %4862
    %4864 = vadd.xlane.f32.xlu0 %v4840
    %v4865 = vpop.xlane.xlu0 %4864
    %4866 = vadd.xlane.f32.xlu0 %v4841
    %v4867 = vpop.xlane.xlu0 %4866
    %4868 = vadd.xlane.f32.xlu0 %v4842
    %v4869 = vpop.xlane.xlu0 %4868
    %4870 = vadd.xlane.f32.xlu0 %v4843
    %v4871 = vpop.xlane.xlu0 %4870
    %4872 = vadd.xlane.f32.xlu0 %v4844
    %v4873 = vpop.xlane.xlu0 %4872
    %4874 = vadd.xlane.f32.xlu0 %v4845
    %v4875 = vpop.xlane.xlu0 %4874
    %4876 = vadd.xlane.f32.xlu0 %v4846
    %v4877 = vpop.xlane.xlu0 %4876
    %4878 = vadd.xlane.f32.xlu0 %v4847
    %v4879 = vpop.xlane.xlu0 %4878
    %v4880 = vrcp.pop %v4849
    %v4881 = vrcp.pop %v4851
    %v4882 = vrcp.pop %v4853
    %v4883 = vrcp.pop %v4855
    %v4884 = vrcp.pop %v4857
    %v4885 = vrcp.pop %v4859
    %v4886 = vrcp.pop %v4861
    %v4887 = vrcp.pop %v4863
    %v4888 = vrcp.pop %v4865
    %v4889 = vrcp.pop %v4867
    %v4890 = vrcp.pop %v4869
    %v4891 = vrcp.pop %v4871
    %v4892 = vrcp.pop %v4873
    %v4893 = vrcp.pop %v4875
    %v4894 = vrcp.pop %v4877
    %v4895 = vrcp.pop %v4879
    %4896 = vrot.lane.b32.xlu0 %v1357, 64
    %v4897 = vpop.permute.xlu0 %4896
    %4898 = vrot.lane.b32.xlu0 %v1359, 64
    %v4899 = vpop.permute.xlu0 %4898
    %4900 = vrot.lane.b32.xlu0 %v1361, 64
    %v4901 = vpop.permute.xlu0 %4900
    %4902 = vrot.lane.b32.xlu0 %v1363, 64
    %v4903 = vpop.permute.xlu0 %4902
    %4904 = vrot.lane.b32.xlu0 %v1365, 64
    %v4905 = vpop.permute.xlu0 %4904
    %4906 = vrot.lane.b32.xlu0 %v1367, 64
    %v4907 = vpop.permute.xlu0 %4906
    %4908 = vrot.lane.b32.xlu0 %v1369, 64
    %v4909 = vpop.permute.xlu0 %4908
    %4910 = vrot.lane.b32.xlu0 %v1371, 64
    %v4911 = vpop.permute.xlu0 %4910
    %4920 = vmatprep.subr.bf16.mxu0 0
    %4921 = vmatpush1.bf16.msra.mxu0 %v4911
    %4922 = vmatprep.subr.bf16.mxu0 0
    %4923 = vmatpush1.bf16.msra.mxu0 %v4909
    %4924 = vmatprep.subr.bf16.mxu0 0
    %4925 = vmatpush1.bf16.msra.mxu0 %v4907
    %4926 = vmatprep.subr.bf16.mxu0 0
    %4927 = vmatpush1.bf16.msra.mxu0 %v4905
    %4928 = vmatprep.subr.bf16.mxu0 0
    %4929 = vmatpush1.bf16.msra.mxu0 %v4903
    %4930 = vmatprep.subr.bf16.mxu0 0
    %4931 = vmatpush1.bf16.msra.mxu0 %v4901
    %4932 = vmatprep.subr.bf16.mxu0 0
    %4933 = vmatpush1.bf16.msra.mxu0 %v4899
    %4934 = vmatprep.subr.bf16.mxu0 0
    %4935 = vmatpush1.bf16.msra.mxu0 %v4897
    %4936 = vmatprep.subr.bf16.mxu0 0
    %4937 = vmatpush2.bf16.msra.mxu0 0
    %4938 = vmatprep.subr.bf16.mxu0 0
    %4939 = vmatpush2.bf16.msra.mxu0 0
    %4940 = vmatprep.subr.bf16.mxu0 0
    %4941 = vmatpush2.bf16.msra.mxu0 0
    %4942 = vmatprep.subr.bf16.mxu0 0
    %4943 = vmatpush2.bf16.msra.mxu0 0
    %4944 = vmatprep.subr.bf16.mxu0 0
    %4945 = vmatpush2.bf16.msra.mxu0 0
    %4946 = vmatprep.subr.bf16.mxu0 0
    %4947 = vmatpush2.bf16.msra.mxu0 0
    %4948 = vmatprep.subr.bf16.mxu0 0
    %4949 = vmatpush2.bf16.msra.mxu0 0
    %4950 = vmatprep.subr.bf16.mxu0 0
    %4951 = vmatpush2.bf16.msra.mxu0 0
    %4952 = vmatprep.mubr.bf16.mxu0 0
    %4953 = vmatmul.mubr.bf16.gmra.mxu0 %v4810
    %v4954 = vpop.f32.mrf.mxu0
    %v4955 = vadd.f32 0.0, %v4954
    %v4956 = vpop.f32.mrf.mxu0
    %v4957 = vpop.f32.mrf.mxu0
    %v4958 = vadd.f32 0.0, %v4957
    %v4959 = vpop.f32.mrf.mxu0
    %4960 = vmatprep.mubr.bf16.mxu0 0
    %4961 = vmatmul.mubr.bf16.gmra.mxu0 %v4813
    %v4962 = vpop.f32.mrf.mxu0
    %v4963 = vadd.f32 0.0, %v4962
    %v4964 = vpop.f32.mrf.mxu0
    %v4965 = vpop.f32.mrf.mxu0
    %v4966 = vadd.f32 0.0, %v4965
    %v4967 = vpop.f32.mrf.mxu0
    %4968 = vmatprep.mubr.bf16.mxu0 0
    %4969 = vmatmul.mubr.bf16.gmra.mxu0 %v4816
    %v4970 = vpop.f32.mrf.mxu0
    %v4971 = vadd.f32 0.0, %v4970
    %v4972 = vpop.f32.mrf.mxu0
    %v4973 = vpop.f32.mrf.mxu0
    %v4974 = vadd.f32 0.0, %v4973
    %v4975 = vpop.f32.mrf.mxu0
    %4976 = vmatprep.mubr.bf16.mxu0 0
    %4977 = vmatmul.mubr.bf16.gmra.mxu0 %v4819
    %v4978 = vpop.f32.mrf.mxu0
    %v4979 = vadd.f32 0.0, %v4978
    %v4980 = vpop.f32.mrf.mxu0
    %v4981 = vpop.f32.mrf.mxu0
    %v4982 = vadd.f32 0.0, %v4981
    %v4983 = vpop.f32.mrf.mxu0
    %4984 = vmatprep.mubr.bf16.mxu0 0
    %4985 = vmatmul.mubr.bf16.gmra.mxu0 %v4822
    %v4986 = vpop.f32.mrf.mxu0
    %v4987 = vadd.f32 0.0, %v4986
    %v4988 = vpop.f32.mrf.mxu0
    %v4989 = vpop.f32.mrf.mxu0
    %v4990 = vadd.f32 0.0, %v4989
    %v4991 = vpop.f32.mrf.mxu0
    %4992 = vmatprep.mubr.bf16.mxu0 0
    %4993 = vmatmul.mubr.bf16.gmra.mxu0 %v4825
    %v4994 = vpop.f32.mrf.mxu0
    %v4995 = vadd.f32 0.0, %v4994
    %v4996 = vpop.f32.mrf.mxu0
    %v4997 = vpop.f32.mrf.mxu0
    %v4998 = vadd.f32 0.0, %v4997
    %v4999 = vpop.f32.mrf.mxu0
    %5000 = vmatprep.mubr.bf16.mxu0 0
    %5001 = vmatmul.mubr.bf16.gmra.mxu0 %v4828
    %v5002 = vpop.f32.mrf.mxu0
    %v5003 = vadd.f32 0.0, %v5002
    %v5004 = vpop.f32.mrf.mxu0
    %v5005 = vpop.f32.mrf.mxu0
    %v5006 = vadd.f32 0.0, %v5005
    %v5007 = vpop.f32.mrf.mxu0
    %5008 = vmatprep.mubr.bf16.mxu0 0
    %5009 = vmatmul.mubr.bf16.gmra.mxu0 %v4831
    %v5010 = vpop.f32.mrf.mxu0
    %v5011 = vadd.f32 0.0, %v5010
    %v5012 = vpop.f32.mrf.mxu0
    %v5013 = vpop.f32.mrf.mxu0
    %v5014 = vadd.f32 0.0, %v5013
    %v5015 = vpop.f32.mrf.mxu0
    %5016 = vdwg.mxu0
    %v5017 = vmul.f32 %v4955, %v4880
    %v5018 = vmul.f32 %v4958, %v4881
    %v5019 = vmul.f32 %v4963, %v4882
    %v5020 = vmul.f32 %v4966, %v4883
    %v5021 = vmul.f32 %v4971, %v4884
    %v5022 = vmul.f32 %v4974, %v4885
    %v5023 = vmul.f32 %v4979, %v4886
    %v5024 = vmul.f32 %v4982, %v4887
    %v5025 = vmul.f32 %v4987, %v4888
    %v5026 = vmul.f32 %v4990, %v4889
    %v5027 = vmul.f32 %v4995, %v4890
    %v5028 = vmul.f32 %v4998, %v4891
    %v5029 = vmul.f32 %v5003, %v4892
    %v5030 = vmul.f32 %v5006, %v4893
    %v5031 = vmul.f32 %v5011, %v4894
    %v5032 = vmul.f32 %v5014, %v4895
    %5049 = vrot.lane.b32.xlu0 %v5017, 64
    %v5050 = vpop.permute.xlu0 %5049
    %5051 = vrot.lane.b32.xlu0 %v5018, 64
    %v5052 = vpop.permute.xlu0 %5051
    %5053 = vrot.lane.b32.xlu0 %v5019, 64
    %v5054 = vpop.permute.xlu0 %5053
    %5055 = vrot.lane.b32.xlu0 %v5020, 64
    %v5056 = vpop.permute.xlu0 %5055
    %5057 = vrot.lane.b32.xlu0 %v5021, 64
    %v5058 = vpop.permute.xlu0 %5057
    %5059 = vrot.lane.b32.xlu0 %v5022, 64
    %v5060 = vpop.permute.xlu0 %5059
    %5061 = vrot.lane.b32.xlu0 %v5023, 64
    %v5062 = vpop.permute.xlu0 %5061
    %5063 = vrot.lane.b32.xlu0 %v5024, 64
    %v5064 = vpop.permute.xlu0 %5063
    %5065 = vrot.lane.b32.xlu0 %v5025, 64
    %v5066 = vpop.permute.xlu0 %5065
    %5067 = vrot.lane.b32.xlu0 %v5026, 64
    %v5068 = vpop.permute.xlu0 %5067
    %5069 = vrot.lane.b32.xlu0 %v5027, 64
    %v5070 = vpop.permute.xlu0 %5069
    %5071 = vrot.lane.b32.xlu0 %v5028, 64
    %v5072 = vpop.permute.xlu0 %5071
    %5073 = vrot.lane.b32.xlu0 %v5029, 64
    %v5074 = vpop.permute.xlu0 %5073
    %5075 = vrot.lane.b32.xlu0 %v5030, 64
    %v5076 = vpop.permute.xlu0 %5075
    %5077 = vrot.lane.b32.xlu0 %v5031, 64
    %v5078 = vpop.permute.xlu0 %5077
    %5079 = vrot.lane.b32.xlu0 %v5032, 64
    %v5080 = vpop.permute.xlu0 %5079
    %5097 = vst.msk [vmem:[#allocation7 + $0x8] sm:$0xff] %vm2975, %v5050
    %5098 = vst.msk [vmem:[#allocation7 + $0x18] sm:$0xff] %vm2975, %v5052
    %5099 = vst.msk [vmem:[#allocation7 + $0x28] sm:$0xff] %vm2975, %v5054
    %5100 = vst.msk [vmem:[#allocation7 + $0x38] sm:$0xff] %vm2975, %v5056
    %5101 = vst.msk [vmem:[#allocation7 + $0x48] sm:$0xff] %vm2975, %v5058
    %5102 = vst.msk [vmem:[#allocation7 + $0x58] sm:$0xff] %vm2975, %v5060
    %5103 = vst.msk [vmem:[#allocation7 + $0x68] sm:$0xff] %vm2975, %v5062
    %5104 = vst.msk [vmem:[#allocation7 + $0x78] sm:$0xff] %vm2975, %v5064
    %5105 = vst.msk [vmem:[#allocation7 + $0x88] sm:$0xff] %vm2975, %v5066
    %5106 = vst.msk [vmem:[#allocation7 + $0x98] sm:$0xff] %vm2975, %v5068
    %5107 = vst.msk [vmem:[#allocation7 + $0xa8] sm:$0xff] %vm2975, %v5070
    %5108 = vst.msk [vmem:[#allocation7 + $0xb8] sm:$0xff] %vm2975, %v5072
    %5109 = vst.msk [vmem:[#allocation7 + $0xc8] sm:$0xff] %vm2975, %v5074
    %5110 = vst.msk [vmem:[#allocation7 + $0xd8] sm:$0xff] %vm2975, %v5076
    %5111 = vst.msk [vmem:[#allocation7 + $0xe8] sm:$0xff] %vm2975, %v5078
    %5112 = vst.msk [vmem:[#allocation7 + $0xf8] sm:$0xff] %vm2975, %v5080
    %5113 = vrot.lane.b32.xlu0 %v1295, 32
    %v5114 = vpop.permute.xlu0 %5113
    %5115 = vrot.lane.b32.xlu0 %v1299, 32
    %v5116 = vpop.permute.xlu0 %5115
    %5117 = vrot.lane.b32.xlu0 %v1303, 32
    %v5118 = vpop.permute.xlu0 %5117
    %5119 = vrot.lane.b32.xlu0 %v1307, 32
    %v5120 = vpop.permute.xlu0 %5119
    %5121 = vrot.lane.b32.xlu0 %v1311, 32
    %v5122 = vpop.permute.xlu0 %5121
    %5123 = vrot.lane.b32.xlu0 %v1315, 32
    %v5124 = vpop.permute.xlu0 %5123
    %5125 = vrot.lane.b32.xlu0 %v1319, 32
    %v5126 = vpop.permute.xlu0 %5125
    %5127 = vrot.lane.b32.xlu0 %v1323, 32
    %v5128 = vpop.permute.xlu0 %5127
    %5129 = vrot.lane.b32.xlu0 %v1293, 32
    %v5130 = vpop.permute.xlu0 %5129
    %5131 = vrot.lane.b32.xlu0 %v1297, 32
    %v5132 = vpop.permute.xlu0 %5131
    %5133 = vrot.lane.b32.xlu0 %v1301, 32
    %v5134 = vpop.permute.xlu0 %5133
    %5135 = vrot.lane.b32.xlu0 %v1305, 32
    %v5136 = vpop.permute.xlu0 %5135
    %5137 = vrot.lane.b32.xlu0 %v1309, 32
    %v5138 = vpop.permute.xlu0 %5137
    %5139 = vrot.lane.b32.xlu0 %v1313, 32
    %v5140 = vpop.permute.xlu0 %5139
    %5141 = vrot.lane.b32.xlu0 %v1317, 32
    %v5142 = vpop.permute.xlu0 %5141
    %5143 = vrot.lane.b32.xlu0 %v1321, 32
    %v5144 = vpop.permute.xlu0 %5143
    %v5146 = vsel %vm1423, %v5114, 0
    %v5149 = vsel %vm1423, %v5116, 0
    %v5152 = vsel %vm1423, %v5118, 0
    %v5155 = vsel %vm1423, %v5120, 0
    %v5158 = vsel %vm1423, %v5122, 0
    %v5161 = vsel %vm1423, %v5124, 0
    %v5164 = vsel %vm1423, %v5126, 0
    %v5167 = vsel %vm1423, %v5128, 0
    %v5170 = vsel %vm1423, %v5130, 0
    %v5173 = vsel %vm1423, %v5132, 0
    %v5176 = vsel %vm1423, %v5134, 0
    %v5179 = vsel %vm1423, %v5136, 0
    %v5182 = vsel %vm1423, %v5138, 0
    %v5185 = vsel %vm1423, %v5140, 0
    %v5188 = vsel %vm1423, %v5142, 0
    %v5191 = vsel %vm1423, %v5144, 0
    %5193 = vmatprep.subr.bf16.mxu0 0
    %5194 = vmatpush1.bf16.xpose.msra.mxu0 %v5191
    %5195 = vmatprep.subr.bf16.mxu0 0
    %5196 = vmatpush1.bf16.xpose.msra.mxu0 %v5188
    %5197 = vmatprep.subr.bf16.mxu0 0
    %5198 = vmatpush1.bf16.xpose.msra.mxu0 %v5185
    %5199 = vmatprep.subr.bf16.mxu0 0
    %5200 = vmatpush1.bf16.xpose.msra.mxu0 %v5182
    %5201 = vmatprep.subr.bf16.mxu0 0
    %5202 = vmatpush1.bf16.xpose.msra.mxu0 %v5179
    %5203 = vmatprep.subr.bf16.mxu0 0
    %5204 = vmatpush1.bf16.xpose.msra.mxu0 %v5176
    %5205 = vmatprep.subr.bf16.mxu0 0
    %5206 = vmatpush1.bf16.xpose.msra.mxu0 %v5173
    %5207 = vmatprep.subr.bf16.mxu0 0
    %5208 = vmatpush1.bf16.xpose.msra.mxu0 %v5170
    %5209 = vmatprep.subr.bf16.mxu0 0
    %5210 = vmatpush2.bf16.xpose.msra.mxu0 0
    %5211 = vmatprep.subr.bf16.mxu0 0
    %5212 = vmatpush2.bf16.xpose.msra.mxu0 0
    %5213 = vmatprep.subr.bf16.mxu0 0
    %5214 = vmatpush2.bf16.xpose.msra.mxu0 0
    %5215 = vmatprep.subr.bf16.mxu0 0
    %5216 = vmatpush2.bf16.xpose.msra.mxu0 0
    %5217 = vmatprep.subr.bf16.mxu0 0
    %5218 = vmatpush2.bf16.xpose.msra.mxu0 0
    %5219 = vmatprep.subr.bf16.mxu0 0
    %5220 = vmatpush2.bf16.xpose.msra.mxu0 0
    %5221 = vmatprep.subr.bf16.mxu0 0
    %5222 = vmatpush2.bf16.xpose.msra.mxu0 0
    %5223 = vmatprep.subr.bf16.mxu0 0
    %5224 = vmatpush2.bf16.xpose.msra.mxu0 0
    %5225 = vmatprep.mubr.bf16.mxu0 0
    %5226 = vmatmul.mubr.bf16.gmra.mxu0 %v5146
    %v5227 = vpop.f32.mrf.mxu0
    %v5228 = vadd.f32 0.0, %v5227
    %v5229 = vpop.f32.mrf.mxu0
    %v5230 = vpop.f32.mrf.mxu0
    %v5231 = vadd.f32 0.0, %v5230
    %v5232 = vpop.f32.mrf.mxu0
    %5233 = vmatprep.mubr.bf16.mxu0 0
    %5234 = vmatmul.mubr.bf16.gmra.mxu0 %v5149
    %v5235 = vpop.f32.mrf.mxu0
    %v5236 = vadd.f32 0.0, %v5235
    %v5237 = vpop.f32.mrf.mxu0
    %v5238 = vpop.f32.mrf.mxu0
    %v5239 = vadd.f32 0.0, %v5238
    %v5240 = vpop.f32.mrf.mxu0
    %5241 = vmatprep.mubr.bf16.mxu0 0
    %5242 = vmatmul.mubr.bf16.gmra.mxu0 %v5152
    %v5243 = vpop.f32.mrf.mxu0
    %v5244 = vadd.f32 0.0, %v5243
    %v5245 = vpop.f32.mrf.mxu0
    %v5246 = vpop.f32.mrf.mxu0
    %v5247 = vadd.f32 0.0, %v5246
    %v5248 = vpop.f32.mrf.mxu0
    %5249 = vmatprep.mubr.bf16.mxu0 0
    %5250 = vmatmul.mubr.bf16.gmra.mxu0 %v5155
    %v5251 = vpop.f32.mrf.mxu0
    %v5252 = vadd.f32 0.0, %v5251
    %v5253 = vpop.f32.mrf.mxu0
    %v5254 = vpop.f32.mrf.mxu0
    %v5255 = vadd.f32 0.0, %v5254
    %v5256 = vpop.f32.mrf.mxu0
    %5257 = vmatprep.mubr.bf16.mxu0 0
    %5258 = vmatmul.mubr.bf16.gmra.mxu0 %v5158
    %v5259 = vpop.f32.mrf.mxu0
    %v5260 = vadd.f32 0.0, %v5259
    %v5261 = vpop.f32.mrf.mxu0
    %v5262 = vpop.f32.mrf.mxu0
    %v5263 = vadd.f32 0.0, %v5262
    %v5264 = vpop.f32.mrf.mxu0
    %5265 = vmatprep.mubr.bf16.mxu0 0
    %5266 = vmatmul.mubr.bf16.gmra.mxu0 %v5161
    %v5267 = vpop.f32.mrf.mxu0
    %v5268 = vadd.f32 0.0, %v5267
    %v5269 = vpop.f32.mrf.mxu0
    %v5270 = vpop.f32.mrf.mxu0
    %v5271 = vadd.f32 0.0, %v5270
    %v5272 = vpop.f32.mrf.mxu0
    %5273 = vmatprep.mubr.bf16.mxu0 0
    %5274 = vmatmul.mubr.bf16.gmra.mxu0 %v5164
    %v5275 = vpop.f32.mrf.mxu0
    %v5276 = vadd.f32 0.0, %v5275
    %v5277 = vpop.f32.mrf.mxu0
    %v5278 = vpop.f32.mrf.mxu0
    %v5279 = vadd.f32 0.0, %v5278
    %v5280 = vpop.f32.mrf.mxu0
    %5281 = vmatprep.mubr.bf16.mxu0 0
    %5282 = vmatmul.mubr.bf16.gmra.mxu0 %v5167
    %v5283 = vpop.f32.mrf.mxu0
    %v5284 = vadd.f32 0.0, %v5283
    %v5285 = vpop.f32.mrf.mxu0
    %v5286 = vpop.f32.mrf.mxu0
    %v5287 = vadd.f32 0.0, %v5286
    %v5288 = vpop.f32.mrf.mxu0
    %5289 = vdwg.mxu0
    %v5290 = vsel %vm1407, %v5228, -inf
    %v5291 = vsel %vm1408, %v5231, -inf
    %v5292 = vsel %vm1409, %v5236, -inf
    %v5293 = vsel %vm1410, %v5239, -inf
    %v5294 = vsel %vm1411, %v5244, -inf
    %v5295 = vsel %vm1412, %v5247, -inf
    %v5296 = vsel %vm1413, %v5252, -inf
    %v5297 = vsel %vm1414, %v5255, -inf
    %v5298 = vsel %vm1415, %v5260, -inf
    %v5299 = vsel %vm1416, %v5263, -inf
    %v5300 = vsel %vm1417, %v5268, -inf
    %v5301 = vsel %vm1418, %v5271, -inf
    %v5302 = vsel %vm1419, %v5276, -inf
    %v5303 = vsel %vm1420, %v5279, -inf
    %v5304 = vsel %vm1421, %v5284, -inf
    %v5305 = vsel %vm1422, %v5287, -inf
    %5306 = vmax.xlane.f32.xlu0 %v5290
    %v5307 = vpop.xlane.xlu0 %5306
    %5308 = vmax.xlane.f32.xlu0 %v5291
    %v5309 = vpop.xlane.xlu0 %5308
    %5310 = vmax.xlane.f32.xlu0 %v5292
    %v5311 = vpop.xlane.xlu0 %5310
    %5312 = vmax.xlane.f32.xlu0 %v5293
    %v5313 = vpop.xlane.xlu0 %5312
    %5314 = vmax.xlane.f32.xlu0 %v5294
    %v5315 = vpop.xlane.xlu0 %5314
    %5316 = vmax.xlane.f32.xlu0 %v5295
    %v5317 = vpop.xlane.xlu0 %5316
    %5318 = vmax.xlane.f32.xlu0 %v5296
    %v5319 = vpop.xlane.xlu0 %5318
    %5320 = vmax.xlane.f32.xlu0 %v5297
    %v5321 = vpop.xlane.xlu0 %5320
    %5322 = vmax.xlane.f32.xlu0 %v5298
    %v5323 = vpop.xlane.xlu0 %5322
    %5324 = vmax.xlane.f32.xlu0 %v5299
    %v5325 = vpop.xlane.xlu0 %5324
    %5326 = vmax.xlane.f32.xlu0 %v5300
    %v5327 = vpop.xlane.xlu0 %5326
    %5328 = vmax.xlane.f32.xlu0 %v5301
    %v5329 = vpop.xlane.xlu0 %5328
    %5330 = vmax.xlane.f32.xlu0 %v5302
    %v5331 = vpop.xlane.xlu0 %5330
    %5332 = vmax.xlane.f32.xlu0 %v5303
    %v5333 = vpop.xlane.xlu0 %5332
    %5334 = vmax.xlane.f32.xlu0 %v5304
    %v5335 = vpop.xlane.xlu0 %5334
    %5336 = vmax.xlane.f32.xlu0 %v5305
    %v5337 = vpop.xlane.xlu0 %5336
    %v5338 = vsub.f32 %v5290, %v5307
    %v5339 = vsub.f32 %v5291, %v5309
    %v5340 = vsub.f32 %v5292, %v5311
    %v5341 = vsub.f32 %v5293, %v5313
    %v5342 = vsub.f32 %v5294, %v5315
    %v5343 = vsub.f32 %v5295, %v5317
    %v5344 = vsub.f32 %v5296, %v5319
    %v5345 = vsub.f32 %v5297, %v5321
    %v5346 = vsub.f32 %v5298, %v5323
    %v5347 = vsub.f32 %v5299, %v5325
    %v5348 = vsub.f32 %v5300, %v5327
    %v5349 = vsub.f32 %v5301, %v5329
    %v5350 = vsub.f32 %v5302, %v5331
    %v5351 = vsub.f32 %v5303, %v5333
    %v5352 = vsub.f32 %v5304, %v5335
    %v5353 = vsub.f32 %v5305, %v5337
    %v5354 = vpack.c.bf16 %v5339, %v5338
    %v5355 = vpack.c.bf16 %v5341, %v5340
    %v5356 = vpack.c.bf16 %v5343, %v5342
    %v5357 = vpack.c.bf16 %v5345, %v5344
    %v5358 = vpack.c.bf16 %v5347, %v5346
    %v5359 = vpack.c.bf16 %v5349, %v5348
    %v5360 = vpack.c.bf16 %v5351, %v5350
    %v5361 = vpack.c.bf16 %v5353, %v5352
    %v5363 = vmul.bf16 %v5354, 1069105081
    %v5364 = vpow.bf16.pop %v5363
    %v5366 = vmul.bf16 %v5355, 1069105081
    %v5367 = vpow.bf16.pop %v5366
    %v5369 = vmul.bf16 %v5356, 1069105081
    %v5370 = vpow.bf16.pop %v5369
    %v5372 = vmul.bf16 %v5357, 1069105081
    %v5373 = vpow.bf16.pop %v5372
    %v5375 = vmul.bf16 %v5358, 1069105081
    %v5376 = vpow.bf16.pop %v5375
    %v5378 = vmul.bf16 %v5359, 1069105081
    %v5379 = vpow.bf16.pop %v5378
    %v5381 = vmul.bf16 %v5360, 1069105081
    %v5382 = vpow.bf16.pop %v5381
    %v5384 = vmul.bf16 %v5361, 1069105081
    %v5385 = vpow.bf16.pop %v5384
    %v5386 = vunpack.c.l.bf16 %v5364
    %v5387 = vunpack.c.h.bf16 %v5364
    %v5388 = vunpack.c.l.bf16 %v5367
    %v5389 = vunpack.c.h.bf16 %v5367
    %v5390 = vunpack.c.l.bf16 %v5370
    %v5391 = vunpack.c.h.bf16 %v5370
    %v5392 = vunpack.c.l.bf16 %v5373
    %v5393 = vunpack.c.h.bf16 %v5373
    %v5394 = vunpack.c.l.bf16 %v5376
    %v5395 = vunpack.c.h.bf16 %v5376
    %v5396 = vunpack.c.l.bf16 %v5379
    %v5397 = vunpack.c.h.bf16 %v5379
    %v5398 = vunpack.c.l.bf16 %v5382
    %v5399 = vunpack.c.h.bf16 %v5382
    %v5400 = vunpack.c.l.bf16 %v5385
    %v5401 = vunpack.c.h.bf16 %v5385
    %5402 = vadd.xlane.f32.xlu0 %v5386
    %v5403 = vpop.xlane.xlu0 %5402
    %5404 = vadd.xlane.f32.xlu0 %v5387
    %v5405 = vpop.xlane.xlu0 %5404
    %5406 = vadd.xlane.f32.xlu0 %v5388
    %v5407 = vpop.xlane.xlu0 %5406
    %5408 = vadd.xlane.f32.xlu0 %v5389
    %v5409 = vpop.xlane.xlu0 %5408
    %5410 = vadd.xlane.f32.xlu0 %v5390
    %v5411 = vpop.xlane.xlu0 %5410
    %5412 = vadd.xlane.f32.xlu0 %v5391
    %v5413 = vpop.xlane.xlu0 %5412
    %5414 = vadd.xlane.f32.xlu0 %v5392
    %v5415 = vpop.xlane.xlu0 %5414
    %5416 = vadd.xlane.f32.xlu0 %v5393
    %v5417 = vpop.xlane.xlu0 %5416
    %5418 = vadd.xlane.f32.xlu0 %v5394
    %v5419 = vpop.xlane.xlu0 %5418
    %5420 = vadd.xlane.f32.xlu0 %v5395
    %v5421 = vpop.xlane.xlu0 %5420
    %5422 = vadd.xlane.f32.xlu0 %v5396
    %v5423 = vpop.xlane.xlu0 %5422
    %5424 = vadd.xlane.f32.xlu0 %v5397
    %v5425 = vpop.xlane.xlu0 %5424
    %5426 = vadd.xlane.f32.xlu0 %v5398
    %v5427 = vpop.xlane.xlu0 %5426
    %5428 = vadd.xlane.f32.xlu0 %v5399
    %v5429 = vpop.xlane.xlu0 %5428
    %5430 = vadd.xlane.f32.xlu0 %v5400
    %v5431 = vpop.xlane.xlu0 %5430
    %5432 = vadd.xlane.f32.xlu0 %v5401
    %v5433 = vpop.xlane.xlu0 %5432
    %v5434 = vrcp.pop %v5403
    %v5435 = vrcp.pop %v5405
    %v5436 = vrcp.pop %v5407
    %v5437 = vrcp.pop %v5409
    %v5438 = vrcp.pop %v5411
    %v5439 = vrcp.pop %v5413
    %v5440 = vrcp.pop %v5415
    %v5441 = vrcp.pop %v5417
    %v5442 = vrcp.pop %v5419
    %v5443 = vrcp.pop %v5421
    %v5444 = vrcp.pop %v5423
    %v5445 = vrcp.pop %v5425
    %v5446 = vrcp.pop %v5427
    %v5447 = vrcp.pop %v5429
    %v5448 = vrcp.pop %v5431
    %v5449 = vrcp.pop %v5433
    %5450 = vrot.lane.b32.xlu0 %v1357, 32
    %v5451 = vpop.permute.xlu0 %5450
    %5452 = vrot.lane.b32.xlu0 %v1359, 32
    %v5453 = vpop.permute.xlu0 %5452
    %5454 = vrot.lane.b32.xlu0 %v1361, 32
    %v5455 = vpop.permute.xlu0 %5454
    %5456 = vrot.lane.b32.xlu0 %v1363, 32
    %v5457 = vpop.permute.xlu0 %5456
    %5458 = vrot.lane.b32.xlu0 %v1365, 32
    %v5459 = vpop.permute.xlu0 %5458
    %5460 = vrot.lane.b32.xlu0 %v1367, 32
    %v5461 = vpop.permute.xlu0 %5460
    %5462 = vrot.lane.b32.xlu0 %v1369, 32
    %v5463 = vpop.permute.xlu0 %5462
    %5464 = vrot.lane.b32.xlu0 %v1371, 32
    %v5465 = vpop.permute.xlu0 %5464
    %5474 = vmatprep.subr.bf16.mxu0 0
    %5475 = vmatpush1.bf16.msra.mxu0 %v5465
    %5476 = vmatprep.subr.bf16.mxu0 0
    %5477 = vmatpush1.bf16.msra.mxu0 %v5463
    %5478 = vmatprep.subr.bf16.mxu0 0
    %5479 = vmatpush1.bf16.msra.mxu0 %v5461
    %5480 = vmatprep.subr.bf16.mxu0 0
    %5481 = vmatpush1.bf16.msra.mxu0 %v5459
    %5482 = vmatprep.subr.bf16.mxu0 0
    %5483 = vmatpush1.bf16.msra.mxu0 %v5457
    %5484 = vmatprep.subr.bf16.mxu0 0
    %5485 = vmatpush1.bf16.msra.mxu0 %v5455
    %5486 = vmatprep.subr.bf16.mxu0 0
    %5487 = vmatpush1.bf16.msra.mxu0 %v5453
    %5488 = vmatprep.subr.bf16.mxu0 0
    %5489 = vmatpush1.bf16.msra.mxu0 %v5451
    %5490 = vmatprep.subr.bf16.mxu0 0
    %5491 = vmatpush2.bf16.msra.mxu0 0
    %5492 = vmatprep.subr.bf16.mxu0 0
    %5493 = vmatpush2.bf16.msra.mxu0 0
    %5494 = vmatprep.subr.bf16.mxu0 0
    %5495 = vmatpush2.bf16.msra.mxu0 0
    %5496 = vmatprep.subr.bf16.mxu0 0
    %5497 = vmatpush2.bf16.msra.mxu0 0
    %5498 = vmatprep.subr.bf16.mxu0 0
    %5499 = vmatpush2.bf16.msra.mxu0 0
    %5500 = vmatprep.subr.bf16.mxu0 0
    %5501 = vmatpush2.bf16.msra.mxu0 0
    %5502 = vmatprep.subr.bf16.mxu0 0
    %5503 = vmatpush2.bf16.msra.mxu0 0
    %5504 = vmatprep.subr.bf16.mxu0 0
    %5505 = vmatpush2.bf16.msra.mxu0 0
    %5506 = vmatprep.mubr.bf16.mxu0 0
    %5507 = vmatmul.mubr.bf16.gmra.mxu0 %v5364
    %v5508 = vpop.f32.mrf.mxu0
    %v5509 = vadd.f32 0.0, %v5508
    %v5510 = vpop.f32.mrf.mxu0
    %v5511 = vpop.f32.mrf.mxu0
    %v5512 = vadd.f32 0.0, %v5511
    %v5513 = vpop.f32.mrf.mxu0
    %5514 = vmatprep.mubr.bf16.mxu0 0
    %5515 = vmatmul.mubr.bf16.gmra.mxu0 %v5367
    %v5516 = vpop.f32.mrf.mxu0
    %v5517 = vadd.f32 0.0, %v5516
    %v5518 = vpop.f32.mrf.mxu0
    %v5519 = vpop.f32.mrf.mxu0
    %v5520 = vadd.f32 0.0, %v5519
    %v5521 = vpop.f32.mrf.mxu0
    %5522 = vmatprep.mubr.bf16.mxu0 0
    %5523 = vmatmul.mubr.bf16.gmra.mxu0 %v5370
    %v5524 = vpop.f32.mrf.mxu0
    %v5525 = vadd.f32 0.0, %v5524
    %v5526 = vpop.f32.mrf.mxu0
    %v5527 = vpop.f32.mrf.mxu0
    %v5528 = vadd.f32 0.0, %v5527
    %v5529 = vpop.f32.mrf.mxu0
    %5530 = vmatprep.mubr.bf16.mxu0 0
    %5531 = vmatmul.mubr.bf16.gmra.mxu0 %v5373
    %v5532 = vpop.f32.mrf.mxu0
    %v5533 = vadd.f32 0.0, %v5532
    %v5534 = vpop.f32.mrf.mxu0
    %v5535 = vpop.f32.mrf.mxu0
    %v5536 = vadd.f32 0.0, %v5535
    %v5537 = vpop.f32.mrf.mxu0
    %5538 = vmatprep.mubr.bf16.mxu0 0
    %5539 = vmatmul.mubr.bf16.gmra.mxu0 %v5376
    %v5540 = vpop.f32.mrf.mxu0
    %v5541 = vadd.f32 0.0, %v5540
    %v5542 = vpop.f32.mrf.mxu0
    %v5543 = vpop.f32.mrf.mxu0
    %v5544 = vadd.f32 0.0, %v5543
    %v5545 = vpop.f32.mrf.mxu0
    %5546 = vmatprep.mubr.bf16.mxu0 0
    %5547 = vmatmul.mubr.bf16.gmra.mxu0 %v5379
    %v5548 = vpop.f32.mrf.mxu0
    %v5549 = vadd.f32 0.0, %v5548
    %v5550 = vpop.f32.mrf.mxu0
    %v5551 = vpop.f32.mrf.mxu0
    %v5552 = vadd.f32 0.0, %v5551
    %v5553 = vpop.f32.mrf.mxu0
    %5554 = vmatprep.mubr.bf16.mxu0 0
    %5555 = vmatmul.mubr.bf16.gmra.mxu0 %v5382
    %v5556 = vpop.f32.mrf.mxu0
    %v5557 = vadd.f32 0.0, %v5556
    %v5558 = vpop.f32.mrf.mxu0
    %v5559 = vpop.f32.mrf.mxu0
    %v5560 = vadd.f32 0.0, %v5559
    %v5561 = vpop.f32.mrf.mxu0
    %5562 = vmatprep.mubr.bf16.mxu0 0
    %5563 = vmatmul.mubr.bf16.gmra.mxu0 %v5385
    %v5564 = vpop.f32.mrf.mxu0
    %v5565 = vadd.f32 0.0, %v5564
    %v5566 = vpop.f32.mrf.mxu0
    %v5567 = vpop.f32.mrf.mxu0
    %v5568 = vadd.f32 0.0, %v5567
    %v5569 = vpop.f32.mrf.mxu0
    %5570 = vdwg.mxu0
    %v5571 = vmul.f32 %v5509, %v5434
    %v5572 = vmul.f32 %v5512, %v5435
    %v5573 = vmul.f32 %v5517, %v5436
    %v5574 = vmul.f32 %v5520, %v5437
    %v5575 = vmul.f32 %v5525, %v5438
    %v5576 = vmul.f32 %v5528, %v5439
    %v5577 = vmul.f32 %v5533, %v5440
    %v5578 = vmul.f32 %v5536, %v5441
    %v5579 = vmul.f32 %v5541, %v5442
    %v5580 = vmul.f32 %v5544, %v5443
    %v5581 = vmul.f32 %v5549, %v5444
    %v5582 = vmul.f32 %v5552, %v5445
    %v5583 = vmul.f32 %v5557, %v5446
    %v5584 = vmul.f32 %v5560, %v5447
    %v5585 = vmul.f32 %v5565, %v5448
    %v5586 = vmul.f32 %v5568, %v5449
    %5603 = vrot.lane.b32.xlu0 %v5571, 96
    %v5604 = vpop.permute.xlu0 %5603
    %5605 = vrot.lane.b32.xlu0 %v5572, 96
    %v5606 = vpop.permute.xlu0 %5605
    %5607 = vrot.lane.b32.xlu0 %v5573, 96
    %v5608 = vpop.permute.xlu0 %5607
    %5609 = vrot.lane.b32.xlu0 %v5574, 96
    %v5610 = vpop.permute.xlu0 %5609
    %5611 = vrot.lane.b32.xlu0 %v5575, 96
    %v5612 = vpop.permute.xlu0 %5611
    %5613 = vrot.lane.b32.xlu0 %v5576, 96
    %v5614 = vpop.permute.xlu0 %5613
    %5615 = vrot.lane.b32.xlu0 %v5577, 96
    %v5616 = vpop.permute.xlu0 %5615
    %5617 = vrot.lane.b32.xlu0 %v5578, 96
    %v5618 = vpop.permute.xlu0 %5617
    %5619 = vrot.lane.b32.xlu0 %v5579, 96
    %v5620 = vpop.permute.xlu0 %5619
    %5621 = vrot.lane.b32.xlu0 %v5580, 96
    %v5622 = vpop.permute.xlu0 %5621
    %5623 = vrot.lane.b32.xlu0 %v5581, 96
    %v5624 = vpop.permute.xlu0 %5623
    %5625 = vrot.lane.b32.xlu0 %v5582, 96
    %v5626 = vpop.permute.xlu0 %5625
    %5627 = vrot.lane.b32.xlu0 %v5583, 96
    %v5628 = vpop.permute.xlu0 %5627
    %5629 = vrot.lane.b32.xlu0 %v5584, 96
    %v5630 = vpop.permute.xlu0 %5629
    %5631 = vrot.lane.b32.xlu0 %v5585, 96
    %v5632 = vpop.permute.xlu0 %5631
    %5633 = vrot.lane.b32.xlu0 %v5586, 96
    %v5634 = vpop.permute.xlu0 %5633
    %5651 = vst.msk [vmem:[#allocation7 + $0x8] sm:$0xff] %vm3530, %v5604
    %5652 = vst.msk [vmem:[#allocation7 + $0x18] sm:$0xff] %vm3530, %v5606
    %5653 = vst.msk [vmem:[#allocation7 + $0x28] sm:$0xff] %vm3530, %v5608
    %5654 = vst.msk [vmem:[#allocation7 + $0x38] sm:$0xff] %vm3530, %v5610
    %5655 = vst.msk [vmem:[#allocation7 + $0x48] sm:$0xff] %vm3530, %v5612
    %5656 = vst.msk [vmem:[#allocation7 + $0x58] sm:$0xff] %vm3530, %v5614
    %5657 = vst.msk [vmem:[#allocation7 + $0x68] sm:$0xff] %vm3530, %v5616
    %5658 = vst.msk [vmem:[#allocation7 + $0x78] sm:$0xff] %vm3530, %v5618
    %5659 = vst.msk [vmem:[#allocation7 + $0x88] sm:$0xff] %vm3530, %v5620
    %5660 = vst.msk [vmem:[#allocation7 + $0x98] sm:$0xff] %vm3530, %v5622
    %5661 = vst.msk [vmem:[#allocation7 + $0xa8] sm:$0xff] %vm3530, %v5624
    %5662 = vst.msk [vmem:[#allocation7 + $0xb8] sm:$0xff] %vm3530, %v5626
    %5663 = vst.msk [vmem:[#allocation7 + $0xc8] sm:$0xff] %vm3530, %v5628
    %5664 = vst.msk [vmem:[#allocation7 + $0xd8] sm:$0xff] %vm3530, %v5630
    %5665 = vst.msk [vmem:[#allocation7 + $0xe8] sm:$0xff] %vm3530, %v5632
    %5666 = vst.msk [vmem:[#allocation7 + $0xf8] sm:$0xff] %vm3530, %v5634
    %v5668 = vsel %vm1423, %v1326, 0
    %v5671 = vsel %vm1423, %v1330, 0
    %v5674 = vsel %vm1423, %v1334, 0
    %v5677 = vsel %vm1423, %v1338, 0
    %v5680 = vsel %vm1423, %v1342, 0
    %v5683 = vsel %vm1423, %v1346, 0
    %v5686 = vsel %vm1423, %v1350, 0
    %v5689 = vsel %vm1423, %v1354, 0
    %v5692 = vsel %vm1423, %v1324, 0
    %v5695 = vsel %vm1423, %v1328, 0
    %v5698 = vsel %vm1423, %v1332, 0
    %v5701 = vsel %vm1423, %v1336, 0
    %v5704 = vsel %vm1423, %v1340, 0
    %v5707 = vsel %vm1423, %v1344, 0
    %v5710 = vsel %vm1423, %v1348, 0
    %v5713 = vsel %vm1423, %v1352, 0
    %5715 = vmatprep.subr.bf16.mxu0 0
    %5716 = vmatpush1.bf16.xpose.msra.mxu0 %v5713
    %5717 = vmatprep.subr.bf16.mxu0 0
    %5718 = vmatpush1.bf16.xpose.msra.mxu0 %v5710
    %5719 = vmatprep.subr.bf16.mxu0 0
    %5720 = vmatpush1.bf16.xpose.msra.mxu0 %v5707
    %5721 = vmatprep.subr.bf16.mxu0 0
    %5722 = vmatpush1.bf16.xpose.msra.mxu0 %v5704
    %5723 = vmatprep.subr.bf16.mxu0 0
    %5724 = vmatpush1.bf16.xpose.msra.mxu0 %v5701
    %5725 = vmatprep.subr.bf16.mxu0 0
    %5726 = vmatpush1.bf16.xpose.msra.mxu0 %v5698
    %5727 = vmatprep.subr.bf16.mxu0 0
    %5728 = vmatpush1.bf16.xpose.msra.mxu0 %v5695
    %5729 = vmatprep.subr.bf16.mxu0 0
    %5730 = vmatpush1.bf16.xpose.msra.mxu0 %v5692
    %5731 = vmatprep.subr.bf16.mxu0 0
    %5732 = vmatpush2.bf16.xpose.msra.mxu0 0
    %5733 = vmatprep.subr.bf16.mxu0 0
    %5734 = vmatpush2.bf16.xpose.msra.mxu0 0
    %5735 = vmatprep.subr.bf16.mxu0 0
    %5736 = vmatpush2.bf16.xpose.msra.mxu0 0
    %5737 = vmatprep.subr.bf16.mxu0 0
    %5738 = vmatpush2.bf16.xpose.msra.mxu0 0
    %5739 = vmatprep.subr.bf16.mxu0 0
    %5740 = vmatpush2.bf16.xpose.msra.mxu0 0
    %5741 = vmatprep.subr.bf16.mxu0 0
    %5742 = vmatpush2.bf16.xpose.msra.mxu0 0
    %5743 = vmatprep.subr.bf16.mxu0 0
    %5744 = vmatpush2.bf16.xpose.msra.mxu0 0
    %5745 = vmatprep.subr.bf16.mxu0 0
    %5746 = vmatpush2.bf16.xpose.msra.mxu0 0
    %5747 = vmatprep.mubr.bf16.mxu0 0
    %5748 = vmatmul.mubr.bf16.gmra.mxu0 %v5668
    %v5749 = vpop.f32.mrf.mxu0
    %v5750 = vadd.f32 0.0, %v5749
    %v5751 = vpop.f32.mrf.mxu0
    %v5752 = vpop.f32.mrf.mxu0
    %v5753 = vadd.f32 0.0, %v5752
    %v5754 = vpop.f32.mrf.mxu0
    %5755 = vmatprep.mubr.bf16.mxu0 0
    %5756 = vmatmul.mubr.bf16.gmra.mxu0 %v5671
    %v5757 = vpop.f32.mrf.mxu0
    %v5758 = vadd.f32 0.0, %v5757
    %v5759 = vpop.f32.mrf.mxu0
    %v5760 = vpop.f32.mrf.mxu0
    %v5761 = vadd.f32 0.0, %v5760
    %v5762 = vpop.f32.mrf.mxu0
    %5763 = vmatprep.mubr.bf16.mxu0 0
    %5764 = vmatmul.mubr.bf16.gmra.mxu0 %v5674
    %v5765 = vpop.f32.mrf.mxu0
    %v5766 = vadd.f32 0.0, %v5765
    %v5767 = vpop.f32.mrf.mxu0
    %v5768 = vpop.f32.mrf.mxu0
    %v5769 = vadd.f32 0.0, %v5768
    %v5770 = vpop.f32.mrf.mxu0
    %5771 = vmatprep.mubr.bf16.mxu0 0
    %5772 = vmatmul.mubr.bf16.gmra.mxu0 %v5677
    %v5773 = vpop.f32.mrf.mxu0
    %v5774 = vadd.f32 0.0, %v5773
    %v5775 = vpop.f32.mrf.mxu0
    %v5776 = vpop.f32.mrf.mxu0
    %v5777 = vadd.f32 0.0, %v5776
    %v5778 = vpop.f32.mrf.mxu0
    %5779 = vmatprep.mubr.bf16.mxu0 0
    %5780 = vmatmul.mubr.bf16.gmra.mxu0 %v5680
    %v5781 = vpop.f32.mrf.mxu0
    %v5782 = vadd.f32 0.0, %v5781
    %v5783 = vpop.f32.mrf.mxu0
    %v5784 = vpop.f32.mrf.mxu0
    %v5785 = vadd.f32 0.0, %v5784
    %v5786 = vpop.f32.mrf.mxu0
    %5787 = vmatprep.mubr.bf16.mxu0 0
    %5788 = vmatmul.mubr.bf16.gmra.mxu0 %v5683
    %v5789 = vpop.f32.mrf.mxu0
    %v5790 = vadd.f32 0.0, %v5789
    %v5791 = vpop.f32.mrf.mxu0
    %v5792 = vpop.f32.mrf.mxu0
    %v5793 = vadd.f32 0.0, %v5792
    %v5794 = vpop.f32.mrf.mxu0
    %5795 = vmatprep.mubr.bf16.mxu0 0
    %5796 = vmatmul.mubr.bf16.gmra.mxu0 %v5686
    %v5797 = vpop.f32.mrf.mxu0
    %v5798 = vadd.f32 0.0, %v5797
    %v5799 = vpop.f32.mrf.mxu0
    %v5800 = vpop.f32.mrf.mxu0
    %v5801 = vadd.f32 0.0, %v5800
    %v5802 = vpop.f32.mrf.mxu0
    %5803 = vmatprep.mubr.bf16.mxu0 0
    %5804 = vmatmul.mubr.bf16.gmra.mxu0 %v5689
    %v5805 = vpop.f32.mrf.mxu0
    %v5806 = vadd.f32 0.0, %v5805
    %v5807 = vpop.f32.mrf.mxu0
    %v5808 = vpop.f32.mrf.mxu0
    %v5809 = vadd.f32 0.0, %v5808
    %v5810 = vpop.f32.mrf.mxu0
    %5811 = vdwg.mxu0
    %v5812 = vsel %vm1407, %v5750, -inf
    %v5813 = vsel %vm1408, %v5753, -inf
    %v5814 = vsel %vm1409, %v5758, -inf
    %v5815 = vsel %vm1410, %v5761, -inf
    %v5816 = vsel %vm1411, %v5766, -inf
    %v5817 = vsel %vm1412, %v5769, -inf
    %v5818 = vsel %vm1413, %v5774, -inf
    %v5819 = vsel %vm1414, %v5777, -inf
    %v5820 = vsel %vm1415, %v5782, -inf
    %v5821 = vsel %vm1416, %v5785, -inf
    %v5822 = vsel %vm1417, %v5790, -inf
    %v5823 = vsel %vm1418, %v5793, -inf
    %v5824 = vsel %vm1419, %v5798, -inf
    %v5825 = vsel %vm1420, %v5801, -inf
    %v5826 = vsel %vm1421, %v5806, -inf
    %v5827 = vsel %vm1422, %v5809, -inf
    %5828 = vmax.xlane.f32.xlu0 %v5812
    %v5829 = vpop.xlane.xlu0 %5828
    %5830 = vmax.xlane.f32.xlu0 %v5813
    %v5831 = vpop.xlane.xlu0 %5830
    %5832 = vmax.xlane.f32.xlu0 %v5814
    %v5833 = vpop.xlane.xlu0 %5832
    %5834 = vmax.xlane.f32.xlu0 %v5815
    %v5835 = vpop.xlane.xlu0 %5834
    %5836 = vmax.xlane.f32.xlu0 %v5816
    %v5837 = vpop.xlane.xlu0 %5836
    %5838 = vmax.xlane.f32.xlu0 %v5817
    %v5839 = vpop.xlane.xlu0 %5838
    %5840 = vmax.xlane.f32.xlu0 %v5818
    %v5841 = vpop.xlane.xlu0 %5840
    %5842 = vmax.xlane.f32.xlu0 %v5819
    %v5843 = vpop.xlane.xlu0 %5842
    %5844 = vmax.xlane.f32.xlu0 %v5820
    %v5845 = vpop.xlane.xlu0 %5844
    %5846 = vmax.xlane.f32.xlu0 %v5821
    %v5847 = vpop.xlane.xlu0 %5846
    %5848 = vmax.xlane.f32.xlu0 %v5822
    %v5849 = vpop.xlane.xlu0 %5848
    %5850 = vmax.xlane.f32.xlu0 %v5823
    %v5851 = vpop.xlane.xlu0 %5850
    %5852 = vmax.xlane.f32.xlu0 %v5824
    %v5853 = vpop.xlane.xlu0 %5852
    %5854 = vmax.xlane.f32.xlu0 %v5825
    %v5855 = vpop.xlane.xlu0 %5854
    %5856 = vmax.xlane.f32.xlu0 %v5826
    %v5857 = vpop.xlane.xlu0 %5856
    %5858 = vmax.xlane.f32.xlu0 %v5827
    %v5859 = vpop.xlane.xlu0 %5858
    %v5860 = vsub.f32 %v5812, %v5829
    %v5861 = vsub.f32 %v5813, %v5831
    %v5862 = vsub.f32 %v5814, %v5833
    %v5863 = vsub.f32 %v5815, %v5835
    %v5864 = vsub.f32 %v5816, %v5837
    %v5865 = vsub.f32 %v5817, %v5839
    %v5866 = vsub.f32 %v5818, %v5841
    %v5867 = vsub.f32 %v5819, %v5843
    %v5868 = vsub.f32 %v5820, %v5845
    %v5869 = vsub.f32 %v5821, %v5847
    %v5870 = vsub.f32 %v5822, %v5849
    %v5871 = vsub.f32 %v5823, %v5851
    %v5872 = vsub.f32 %v5824, %v5853
    %v5873 = vsub.f32 %v5825, %v5855
    %v5874 = vsub.f32 %v5826, %v5857
    %v5875 = vsub.f32 %v5827, %v5859
    %v5876 = vpack.c.bf16 %v5861, %v5860
    %v5877 = vpack.c.bf16 %v5863, %v5862
    %v5878 = vpack.c.bf16 %v5865, %v5864
    %v5879 = vpack.c.bf16 %v5867, %v5866
    %v5880 = vpack.c.bf16 %v5869, %v5868
    %v5881 = vpack.c.bf16 %v5871, %v5870
    %v5882 = vpack.c.bf16 %v5873, %v5872
    %v5883 = vpack.c.bf16 %v5875, %v5874
    %v5885 = vmul.bf16 %v5876, 1069105081
    %v5886 = vpow.bf16.pop %v5885
    %v5888 = vmul.bf16 %v5877, 1069105081
    %v5889 = vpow.bf16.pop %v5888
    %v5891 = vmul.bf16 %v5878, 1069105081
    %v5892 = vpow.bf16.pop %v5891
    %v5894 = vmul.bf16 %v5879, 1069105081
    %v5895 = vpow.bf16.pop %v5894
    %v5897 = vmul.bf16 %v5880, 1069105081
    %v5898 = vpow.bf16.pop %v5897
    %v5900 = vmul.bf16 %v5881, 1069105081
    %v5901 = vpow.bf16.pop %v5900
    %v5903 = vmul.bf16 %v5882, 1069105081
    %v5904 = vpow.bf16.pop %v5903
    %v5906 = vmul.bf16 %v5883, 1069105081
    %v5907 = vpow.bf16.pop %v5906
    %v5908 = vunpack.c.l.bf16 %v5886
    %v5909 = vunpack.c.h.bf16 %v5886
    %v5910 = vunpack.c.l.bf16 %v5889
    %v5911 = vunpack.c.h.bf16 %v5889
    %v5912 = vunpack.c.l.bf16 %v5892
    %v5913 = vunpack.c.h.bf16 %v5892
    %v5914 = vunpack.c.l.bf16 %v5895
    %v5915 = vunpack.c.h.bf16 %v5895
    %v5916 = vunpack.c.l.bf16 %v5898
    %v5917 = vunpack.c.h.bf16 %v5898
    %v5918 = vunpack.c.l.bf16 %v5901
    %v5919 = vunpack.c.h.bf16 %v5901
    %v5920 = vunpack.c.l.bf16 %v5904
    %v5921 = vunpack.c.h.bf16 %v5904
    %v5922 = vunpack.c.l.bf16 %v5907
    %v5923 = vunpack.c.h.bf16 %v5907
    %5924 = vadd.xlane.f32.xlu0 %v5908
    %v5925 = vpop.xlane.xlu0 %5924
    %5926 = vadd.xlane.f32.xlu0 %v5909
    %v5927 = vpop.xlane.xlu0 %5926
    %5928 = vadd.xlane.f32.xlu0 %v5910
    %v5929 = vpop.xlane.xlu0 %5928
    %5930 = vadd.xlane.f32.xlu0 %v5911
    %v5931 = vpop.xlane.xlu0 %5930
    %5932 = vadd.xlane.f32.xlu0 %v5912
    %v5933 = vpop.xlane.xlu0 %5932
    %5934 = vadd.xlane.f32.xlu0 %v5913
    %v5935 = vpop.xlane.xlu0 %5934
    %5936 = vadd.xlane.f32.xlu0 %v5914
    %v5937 = vpop.xlane.xlu0 %5936
    %5938 = vadd.xlane.f32.xlu0 %v5915
    %v5939 = vpop.xlane.xlu0 %5938
    %5940 = vadd.xlane.f32.xlu0 %v5916
    %v5941 = vpop.xlane.xlu0 %5940
    %5942 = vadd.xlane.f32.xlu0 %v5917
    %v5943 = vpop.xlane.xlu0 %5942
    %5944 = vadd.xlane.f32.xlu0 %v5918
    %v5945 = vpop.xlane.xlu0 %5944
    %5946 = vadd.xlane.f32.xlu0 %v5919
    %v5947 = vpop.xlane.xlu0 %5946
    %5948 = vadd.xlane.f32.xlu0 %v5920
    %v5949 = vpop.xlane.xlu0 %5948
    %5950 = vadd.xlane.f32.xlu0 %v5921
    %v5951 = vpop.xlane.xlu0 %5950
    %5952 = vadd.xlane.f32.xlu0 %v5922
    %v5953 = vpop.xlane.xlu0 %5952
    %5954 = vadd.xlane.f32.xlu0 %v5923
    %v5955 = vpop.xlane.xlu0 %5954
    %v5956 = vrcp.pop %v5925
    %v5957 = vrcp.pop %v5927
    %v5958 = vrcp.pop %v5929
    %v5959 = vrcp.pop %v5931
    %v5960 = vrcp.pop %v5933
    %v5961 = vrcp.pop %v5935
    %v5962 = vrcp.pop %v5937
    %v5963 = vrcp.pop %v5939
    %v5964 = vrcp.pop %v5941
    %v5965 = vrcp.pop %v5943
    %v5966 = vrcp.pop %v5945
    %v5967 = vrcp.pop %v5947
    %v5968 = vrcp.pop %v5949
    %v5969 = vrcp.pop %v5951
    %v5970 = vrcp.pop %v5953
    %v5971 = vrcp.pop %v5955
    %5972 = vmatprep.subr.bf16.mxu0 0
    %5973 = vmatpush1.bf16.msra.mxu0 %v1386
    %5974 = vmatprep.subr.bf16.mxu0 0
    %5975 = vmatpush1.bf16.msra.mxu0 %v1384
    %5976 = vmatprep.subr.bf16.mxu0 0
    %5977 = vmatpush1.bf16.msra.mxu0 %v1382
    %5978 = vmatprep.subr.bf16.mxu0 0
    %5979 = vmatpush1.bf16.msra.mxu0 %v1380
    %5980 = vmatprep.subr.bf16.mxu0 0
    %5981 = vmatpush1.bf16.msra.mxu0 %v1378
    %5982 = vmatprep.subr.bf16.mxu0 0
    %5983 = vmatpush1.bf16.msra.mxu0 %v1376
    %5984 = vmatprep.subr.bf16.mxu0 0
    %5985 = vmatpush1.bf16.msra.mxu0 %v1374
    %5986 = vmatprep.subr.bf16.mxu0 0
    %5987 = vmatpush1.bf16.msra.mxu0 %v1372
    %5988 = vmatprep.subr.bf16.mxu0 0
    %5989 = vmatpush2.bf16.msra.mxu0 0
    %5990 = vmatprep.subr.bf16.mxu0 0
    %5991 = vmatpush2.bf16.msra.mxu0 0
    %5992 = vmatprep.subr.bf16.mxu0 0
    %5993 = vmatpush2.bf16.msra.mxu0 0
    %5994 = vmatprep.subr.bf16.mxu0 0
    %5995 = vmatpush2.bf16.msra.mxu0 0
    %5996 = vmatprep.subr.bf16.mxu0 0
    %5997 = vmatpush2.bf16.msra.mxu0 0
    %5998 = vmatprep.subr.bf16.mxu0 0
    %5999 = vmatpush2.bf16.msra.mxu0 0
    %6000 = vmatprep.subr.bf16.mxu0 0
    %6001 = vmatpush2.bf16.msra.mxu0 0
    %6002 = vmatprep.subr.bf16.mxu0 0
    %6003 = vmatpush2.bf16.msra.mxu0 0
    %6004 = vmatprep.mubr.bf16.mxu0 0
    %6005 = vmatmul.mubr.bf16.gmra.mxu0 %v5886
    %v6006 = vpop.f32.mrf.mxu0
    %v6007 = vadd.f32 0.0, %v6006
    %v6008 = vpop.f32.mrf.mxu0
    %v6009 = vpop.f32.mrf.mxu0
    %v6010 = vadd.f32 0.0, %v6009
    %v6011 = vpop.f32.mrf.mxu0
    %6012 = vmatprep.mubr.bf16.mxu0 0
    %6013 = vmatmul.mubr.bf16.gmra.mxu0 %v5889
    %v6014 = vpop.f32.mrf.mxu0
    %v6015 = vadd.f32 0.0, %v6014
    %v6016 = vpop.f32.mrf.mxu0
    %v6017 = vpop.f32.mrf.mxu0
    %v6018 = vadd.f32 0.0, %v6017
    %v6019 = vpop.f32.mrf.mxu0
    %6020 = vmatprep.mubr.bf16.mxu0 0
    %6021 = vmatmul.mubr.bf16.gmra.mxu0 %v5892
    %v6022 = vpop.f32.mrf.mxu0
    %v6023 = vadd.f32 0.0, %v6022
    %v6024 = vpop.f32.mrf.mxu0
    %v6025 = vpop.f32.mrf.mxu0
    %v6026 = vadd.f32 0.0, %v6025
    %v6027 = vpop.f32.mrf.mxu0
    %6028 = vmatprep.mubr.bf16.mxu0 0
    %6029 = vmatmul.mubr.bf16.gmra.mxu0 %v5895
    %v6030 = vpop.f32.mrf.mxu0
    %v6031 = vadd.f32 0.0, %v6030
    %v6032 = vpop.f32.mrf.mxu0
    %v6033 = vpop.f32.mrf.mxu0
    %v6034 = vadd.f32 0.0, %v6033
    %v6035 = vpop.f32.mrf.mxu0
    %6036 = vmatprep.mubr.bf16.mxu0 0
    %6037 = vmatmul.mubr.bf16.gmra.mxu0 %v5898
    %v6038 = vpop.f32.mrf.mxu0
    %v6039 = vadd.f32 0.0, %v6038
    %v6040 = vpop.f32.mrf.mxu0
    %v6041 = vpop.f32.mrf.mxu0
    %v6042 = vadd.f32 0.0, %v6041
    %v6043 = vpop.f32.mrf.mxu0
    %6044 = vmatprep.mubr.bf16.mxu0 0
    %6045 = vmatmul.mubr.bf16.gmra.mxu0 %v5901
    %v6046 = vpop.f32.mrf.mxu0
    %v6047 = vadd.f32 0.0, %v6046
    %v6048 = vpop.f32.mrf.mxu0
    %v6049 = vpop.f32.mrf.mxu0
    %v6050 = vadd.f32 0.0, %v6049
    %v6051 = vpop.f32.mrf.mxu0
    %6052 = vmatprep.mubr.bf16.mxu0 0
    %6053 = vmatmul.mubr.bf16.gmra.mxu0 %v5904
    %v6054 = vpop.f32.mrf.mxu0
    %v6055 = vadd.f32 0.0, %v6054
    %v6056 = vpop.f32.mrf.mxu0
    %v6057 = vpop.f32.mrf.mxu0
    %v6058 = vadd.f32 0.0, %v6057
    %v6059 = vpop.f32.mrf.mxu0
    %6060 = vmatprep.mubr.bf16.mxu0 0
    %6061 = vmatmul.mubr.bf16.gmra.mxu0 %v5907
    %v6062 = vpop.f32.mrf.mxu0
    %v6063 = vadd.f32 0.0, %v6062
    %v6064 = vpop.f32.mrf.mxu0
    %v6065 = vpop.f32.mrf.mxu0
    %v6066 = vadd.f32 0.0, %v6065
    %v6067 = vpop.f32.mrf.mxu0
    %6068 = vdwg.mxu0
    %v6069 = vmul.f32 %v6007, %v5956
    %v6070 = vmul.f32 %v6010, %v5957
    %v6071 = vmul.f32 %v6015, %v5958
    %v6072 = vmul.f32 %v6018, %v5959
    %v6073 = vmul.f32 %v6023, %v5960
    %v6074 = vmul.f32 %v6026, %v5961
    %v6075 = vmul.f32 %v6031, %v5962
    %v6076 = vmul.f32 %v6034, %v5963
    %v6077 = vmul.f32 %v6039, %v5964
    %v6078 = vmul.f32 %v6042, %v5965
    %v6079 = vmul.f32 %v6047, %v5966
    %v6080 = vmul.f32 %v6050, %v5967
    %v6081 = vmul.f32 %v6055, %v5968
    %v6082 = vmul.f32 %v6058, %v5969
    %v6083 = vmul.f32 %v6063, %v5970
    %v6084 = vmul.f32 %v6066, %v5971
    %s6085 = scalar_lea.vmem [#allocation7], 256
    %6086 = vst.msk [vmem:[%s6085] sm:$0xff] %vm1423, %v6069
    %6087 = vst.msk [vmem:[%s6085 + $0x10] sm:$0xff] %vm1423, %v6070
    %6088 = vst.msk [vmem:[%s6085 + $0x20] sm:$0xff] %vm1423, %v6071
    %6089 = vst.msk [vmem:[%s6085 + $0x30] sm:$0xff] %vm1423, %v6072
    %6090 = vst.msk [vmem:[%s6085 + $0x40] sm:$0xff] %vm1423, %v6073
    %6091 = vst.msk [vmem:[%s6085 + $0x50] sm:$0xff] %vm1423, %v6074
    %6092 = vst.msk [vmem:[%s6085 + $0x60] sm:$0xff] %vm1423, %v6075
    %6093 = vst.msk [vmem:[%s6085 + $0x70] sm:$0xff] %vm1423, %v6076
    %6094 = vst.msk [vmem:[%s6085 + $0x80] sm:$0xff] %vm1423, %v6077
    %6095 = vst.msk [vmem:[%s6085 + $0x90] sm:$0xff] %vm1423, %v6078
    %6096 = vst.msk [vmem:[%s6085 + $0xa0] sm:$0xff] %vm1423, %v6079
    %6097 = vst.msk [vmem:[%s6085 + $0xb0] sm:$0xff] %vm1423, %v6080
    %6098 = vst.msk [vmem:[%s6085 + $0xc0] sm:$0xff] %vm1423, %v6081
    %6099 = vst.msk [vmem:[%s6085 + $0xd0] sm:$0xff] %vm1423, %v6082
    %6100 = vst.msk [vmem:[%s6085 + $0xe0] sm:$0xff] %vm1423, %v6083
    %6101 = vst.msk [vmem:[%s6085 + $0xf0] sm:$0xff] %vm1423, %v6084
    %6110 = vrot.lane.b32.xlu0 %v1326, 96
    %v6111 = vpop.permute.xlu0 %6110
    %6112 = vrot.lane.b32.xlu0 %v1330, 96
    %v6113 = vpop.permute.xlu0 %6112
    %6114 = vrot.lane.b32.xlu0 %v1334, 96
    %v6115 = vpop.permute.xlu0 %6114
    %6116 = vrot.lane.b32.xlu0 %v1338, 96
    %v6117 = vpop.permute.xlu0 %6116
    %6118 = vrot.lane.b32.xlu0 %v1342, 96
    %v6119 = vpop.permute.xlu0 %6118
    %6120 = vrot.lane.b32.xlu0 %v1346, 96
    %v6121 = vpop.permute.xlu0 %6120
    %6122 = vrot.lane.b32.xlu0 %v1350, 96
    %v6123 = vpop.permute.xlu0 %6122
    %6124 = vrot.lane.b32.xlu0 %v1354, 96
    %v6125 = vpop.permute.xlu0 %6124
    %6134 = vrot.lane.b32.xlu0 %v1324, 96
    %v6135 = vpop.permute.xlu0 %6134
    %6136 = vrot.lane.b32.xlu0 %v1328, 96
    %v6137 = vpop.permute.xlu0 %6136
    %6138 = vrot.lane.b32.xlu0 %v1332, 96
    %v6139 = vpop.permute.xlu0 %6138
    %6140 = vrot.lane.b32.xlu0 %v1336, 96
    %v6141 = vpop.permute.xlu0 %6140
    %6142 = vrot.lane.b32.xlu0 %v1340, 96
    %v6143 = vpop.permute.xlu0 %6142
    %6144 = vrot.lane.b32.xlu0 %v1344, 96
    %v6145 = vpop.permute.xlu0 %6144
    %6146 = vrot.lane.b32.xlu0 %v1348, 96
    %v6147 = vpop.permute.xlu0 %6146
    %6148 = vrot.lane.b32.xlu0 %v1352, 96
    %v6149 = vpop.permute.xlu0 %6148
    %v6151 = vsel %vm1423, %v6111, 0
    %v6154 = vsel %vm1423, %v6113, 0
    %v6157 = vsel %vm1423, %v6115, 0
    %v6160 = vsel %vm1423, %v6117, 0
    %v6163 = vsel %vm1423, %v6119, 0
    %v6166 = vsel %vm1423, %v6121, 0
    %v6169 = vsel %vm1423, %v6123, 0
    %v6172 = vsel %vm1423, %v6125, 0
    %v6175 = vsel %vm1423, %v6135, 0
    %v6178 = vsel %vm1423, %v6137, 0
    %v6181 = vsel %vm1423, %v6139, 0
    %v6184 = vsel %vm1423, %v6141, 0
    %v6187 = vsel %vm1423, %v6143, 0
    %v6190 = vsel %vm1423, %v6145, 0
    %v6193 = vsel %vm1423, %v6147, 0
    %v6196 = vsel %vm1423, %v6149, 0
    %6198 = vmatprep.subr.bf16.mxu0 0
    %6199 = vmatpush1.bf16.xpose.msra.mxu0 %v6196
    %6200 = vmatprep.subr.bf16.mxu0 0
    %6201 = vmatpush1.bf16.xpose.msra.mxu0 %v6193
    %6202 = vmatprep.subr.bf16.mxu0 0
    %6203 = vmatpush1.bf16.xpose.msra.mxu0 %v6190
    %6204 = vmatprep.subr.bf16.mxu0 0
    %6205 = vmatpush1.bf16.xpose.msra.mxu0 %v6187
    %6206 = vmatprep.subr.bf16.mxu0 0
    %6207 = vmatpush1.bf16.xpose.msra.mxu0 %v6184
    %6208 = vmatprep.subr.bf16.mxu0 0
    %6209 = vmatpush1.bf16.xpose.msra.mxu0 %v6181
    %6210 = vmatprep.subr.bf16.mxu0 0
    %6211 = vmatpush1.bf16.xpose.msra.mxu0 %v6178
    %6212 = vmatprep.subr.bf16.mxu0 0
    %6213 = vmatpush1.bf16.xpose.msra.mxu0 %v6175
    %6214 = vmatprep.subr.bf16.mxu0 0
    %6215 = vmatpush2.bf16.xpose.msra.mxu0 0
    %6216 = vmatprep.subr.bf16.mxu0 0
    %6217 = vmatpush2.bf16.xpose.msra.mxu0 0
    %6218 = vmatprep.subr.bf16.mxu0 0
    %6219 = vmatpush2.bf16.xpose.msra.mxu0 0
    %6220 = vmatprep.subr.bf16.mxu0 0
    %6221 = vmatpush2.bf16.xpose.msra.mxu0 0
    %6222 = vmatprep.subr.bf16.mxu0 0
    %6223 = vmatpush2.bf16.xpose.msra.mxu0 0
    %6224 = vmatprep.subr.bf16.mxu0 0
    %6225 = vmatpush2.bf16.xpose.msra.mxu0 0
    %6226 = vmatprep.subr.bf16.mxu0 0
    %6227 = vmatpush2.bf16.xpose.msra.mxu0 0
    %6228 = vmatprep.subr.bf16.mxu0 0
    %6229 = vmatpush2.bf16.xpose.msra.mxu0 0
    %6230 = vmatprep.mubr.bf16.mxu0 0
    %6231 = vmatmul.mubr.bf16.gmra.mxu0 %v6151
    %v6232 = vpop.f32.mrf.mxu0
    %v6233 = vadd.f32 0.0, %v6232
    %v6234 = vpop.f32.mrf.mxu0
    %v6235 = vpop.f32.mrf.mxu0
    %v6236 = vadd.f32 0.0, %v6235
    %v6237 = vpop.f32.mrf.mxu0
    %6238 = vmatprep.mubr.bf16.mxu0 0
    %6239 = vmatmul.mubr.bf16.gmra.mxu0 %v6154
    %v6240 = vpop.f32.mrf.mxu0
    %v6241 = vadd.f32 0.0, %v6240
    %v6242 = vpop.f32.mrf.mxu0
    %v6243 = vpop.f32.mrf.mxu0
    %v6244 = vadd.f32 0.0, %v6243
    %v6245 = vpop.f32.mrf.mxu0
    %6246 = vmatprep.mubr.bf16.mxu0 0
    %6247 = vmatmul.mubr.bf16.gmra.mxu0 %v6157
    %v6248 = vpop.f32.mrf.mxu0
    %v6249 = vadd.f32 0.0, %v6248
    %v6250 = vpop.f32.mrf.mxu0
    %v6251 = vpop.f32.mrf.mxu0
    %v6252 = vadd.f32 0.0, %v6251
    %v6253 = vpop.f32.mrf.mxu0
    %6254 = vmatprep.mubr.bf16.mxu0 0
    %6255 = vmatmul.mubr.bf16.gmra.mxu0 %v6160
    %v6256 = vpop.f32.mrf.mxu0
    %v6257 = vadd.f32 0.0, %v6256
    %v6258 = vpop.f32.mrf.mxu0
    %v6259 = vpop.f32.mrf.mxu0
    %v6260 = vadd.f32 0.0, %v6259
    %v6261 = vpop.f32.mrf.mxu0
    %6262 = vmatprep.mubr.bf16.mxu0 0
    %6263 = vmatmul.mubr.bf16.gmra.mxu0 %v6163
    %v6264 = vpop.f32.mrf.mxu0
    %v6265 = vadd.f32 0.0, %v6264
    %v6266 = vpop.f32.mrf.mxu0
    %v6267 = vpop.f32.mrf.mxu0
    %v6268 = vadd.f32 0.0, %v6267
    %v6269 = vpop.f32.mrf.mxu0
    %6270 = vmatprep.mubr.bf16.mxu0 0
    %6271 = vmatmul.mubr.bf16.gmra.mxu0 %v6166
    %v6272 = vpop.f32.mrf.mxu0
    %v6273 = vadd.f32 0.0, %v6272
    %v6274 = vpop.f32.mrf.mxu0
    %v6275 = vpop.f32.mrf.mxu0
    %v6276 = vadd.f32 0.0, %v6275
    %v6277 = vpop.f32.mrf.mxu0
    %6278 = vmatprep.mubr.bf16.mxu0 0
    %6279 = vmatmul.mubr.bf16.gmra.mxu0 %v6169
    %v6280 = vpop.f32.mrf.mxu0
    %v6281 = vadd.f32 0.0, %v6280
    %v6282 = vpop.f32.mrf.mxu0
    %v6283 = vpop.f32.mrf.mxu0
    %v6284 = vadd.f32 0.0, %v6283
    %v6285 = vpop.f32.mrf.mxu0
    %6286 = vmatprep.mubr.bf16.mxu0 0
    %6287 = vmatmul.mubr.bf16.gmra.mxu0 %v6172
    %v6288 = vpop.f32.mrf.mxu0
    %v6289 = vadd.f32 0.0, %v6288
    %v6290 = vpop.f32.mrf.mxu0
    %v6291 = vpop.f32.mrf.mxu0
    %v6292 = vadd.f32 0.0, %v6291
    %v6293 = vpop.f32.mrf.mxu0
    %6294 = vdwg.mxu0
    %v6295 = vsel %vm1407, %v6233, -inf
    %v6296 = vsel %vm1408, %v6236, -inf
    %v6297 = vsel %vm1409, %v6241, -inf
    %v6298 = vsel %vm1410, %v6244, -inf
    %v6299 = vsel %vm1411, %v6249, -inf
    %v6300 = vsel %vm1412, %v6252, -inf
    %v6301 = vsel %vm1413, %v6257, -inf
    %v6302 = vsel %vm1414, %v6260, -inf
    %v6303 = vsel %vm1415, %v6265, -inf
    %v6304 = vsel %vm1416, %v6268, -inf
    %v6305 = vsel %vm1417, %v6273, -inf
    %v6306 = vsel %vm1418, %v6276, -inf
    %v6307 = vsel %vm1419, %v6281, -inf
    %v6308 = vsel %vm1420, %v6284, -inf
    %v6309 = vsel %vm1421, %v6289, -inf
    %v6310 = vsel %vm1422, %v6292, -inf
    %6311 = vmax.xlane.f32.xlu0 %v6295
    %v6312 = vpop.xlane.xlu0 %6311
    %6313 = vmax.xlane.f32.xlu0 %v6296
    %v6314 = vpop.xlane.xlu0 %6313
    %6315 = vmax.xlane.f32.xlu0 %v6297
    %v6316 = vpop.xlane.xlu0 %6315
    %6317 = vmax.xlane.f32.xlu0 %v6298
    %v6318 = vpop.xlane.xlu0 %6317
    %6319 = vmax.xlane.f32.xlu0 %v6299
    %v6320 = vpop.xlane.xlu0 %6319
    %6321 = vmax.xlane.f32.xlu0 %v6300
    %v6322 = vpop.xlane.xlu0 %6321
    %6323 = vmax.xlane.f32.xlu0 %v6301
    %v6324 = vpop.xlane.xlu0 %6323
    %6325 = vmax.xlane.f32.xlu0 %v6302
    %v6326 = vpop.xlane.xlu0 %6325
    %6327 = vmax.xlane.f32.xlu0 %v6303
    %v6328 = vpop.xlane.xlu0 %6327
    %6329 = vmax.xlane.f32.xlu0 %v6304
    %v6330 = vpop.xlane.xlu0 %6329
    %6331 = vmax.xlane.f32.xlu0 %v6305
    %v6332 = vpop.xlane.xlu0 %6331
    %6333 = vmax.xlane.f32.xlu0 %v6306
    %v6334 = vpop.xlane.xlu0 %6333
    %6335 = vmax.xlane.f32.xlu0 %v6307
    %v6336 = vpop.xlane.xlu0 %6335
    %6337 = vmax.xlane.f32.xlu0 %v6308
    %v6338 = vpop.xlane.xlu0 %6337
    %6339 = vmax.xlane.f32.xlu0 %v6309
    %v6340 = vpop.xlane.xlu0 %6339
    %6341 = vmax.xlane.f32.xlu0 %v6310
    %v6342 = vpop.xlane.xlu0 %6341
    %v6343 = vsub.f32 %v6295, %v6312
    %v6344 = vsub.f32 %v6296, %v6314
    %v6345 = vsub.f32 %v6297, %v6316
    %v6346 = vsub.f32 %v6298, %v6318
    %v6347 = vsub.f32 %v6299, %v6320
    %v6348 = vsub.f32 %v6300, %v6322
    %v6349 = vsub.f32 %v6301, %v6324
    %v6350 = vsub.f32 %v6302, %v6326
    %v6351 = vsub.f32 %v6303, %v6328
    %v6352 = vsub.f32 %v6304, %v6330
    %v6353 = vsub.f32 %v6305, %v6332
    %v6354 = vsub.f32 %v6306, %v6334
    %v6355 = vsub.f32 %v6307, %v6336
    %v6356 = vsub.f32 %v6308, %v6338
    %v6357 = vsub.f32 %v6309, %v6340
    %v6358 = vsub.f32 %v6310, %v6342
    %v6359 = vpack.c.bf16 %v6344, %v6343
    %v6360 = vpack.c.bf16 %v6346, %v6345
    %v6361 = vpack.c.bf16 %v6348, %v6347
    %v6362 = vpack.c.bf16 %v6350, %v6349
    %v6363 = vpack.c.bf16 %v6352, %v6351
    %v6364 = vpack.c.bf16 %v6354, %v6353
    %v6365 = vpack.c.bf16 %v6356, %v6355
    %v6366 = vpack.c.bf16 %v6358, %v6357
    %v6368 = vmul.bf16 %v6359, 1069105081
    %v6369 = vpow.bf16.pop %v6368
    %v6371 = vmul.bf16 %v6360, 1069105081
    %v6372 = vpow.bf16.pop %v6371
    %v6374 = vmul.bf16 %v6361, 1069105081
    %v6375 = vpow.bf16.pop %v6374
    %v6377 = vmul.bf16 %v6362, 1069105081
    %v6378 = vpow.bf16.pop %v6377
    %v6380 = vmul.bf16 %v6363, 1069105081
    %v6381 = vpow.bf16.pop %v6380
    %v6383 = vmul.bf16 %v6364, 1069105081
    %v6384 = vpow.bf16.pop %v6383
    %v6386 = vmul.bf16 %v6365, 1069105081
    %v6387 = vpow.bf16.pop %v6386
    %v6389 = vmul.bf16 %v6366, 1069105081
    %v6390 = vpow.bf16.pop %v6389
    %v6391 = vunpack.c.l.bf16 %v6369
    %v6392 = vunpack.c.h.bf16 %v6369
    %v6393 = vunpack.c.l.bf16 %v6372
    %v6394 = vunpack.c.h.bf16 %v6372
    %v6395 = vunpack.c.l.bf16 %v6375
    %v6396 = vunpack.c.h.bf16 %v6375
    %v6397 = vunpack.c.l.bf16 %v6378
    %v6398 = vunpack.c.h.bf16 %v6378
    %v6399 = vunpack.c.l.bf16 %v6381
    %v6400 = vunpack.c.h.bf16 %v6381
    %v6401 = vunpack.c.l.bf16 %v6384
    %v6402 = vunpack.c.h.bf16 %v6384
    %v6403 = vunpack.c.l.bf16 %v6387
    %v6404 = vunpack.c.h.bf16 %v6387
    %v6405 = vunpack.c.l.bf16 %v6390
    %v6406 = vunpack.c.h.bf16 %v6390
    %6407 = vadd.xlane.f32.xlu0 %v6391
    %v6408 = vpop.xlane.xlu0 %6407
    %6409 = vadd.xlane.f32.xlu0 %v6392
    %v6410 = vpop.xlane.xlu0 %6409
    %6411 = vadd.xlane.f32.xlu0 %v6393
    %v6412 = vpop.xlane.xlu0 %6411
    %6413 = vadd.xlane.f32.xlu0 %v6394
    %v6414 = vpop.xlane.xlu0 %6413
    %6415 = vadd.xlane.f32.xlu0 %v6395
    %v6416 = vpop.xlane.xlu0 %6415
    %6417 = vadd.xlane.f32.xlu0 %v6396
    %v6418 = vpop.xlane.xlu0 %6417
    %6419 = vadd.xlane.f32.xlu0 %v6397
    %v6420 = vpop.xlane.xlu0 %6419
    %6421 = vadd.xlane.f32.xlu0 %v6398
    %v6422 = vpop.xlane.xlu0 %6421
    %6423 = vadd.xlane.f32.xlu0 %v6399
    %v6424 = vpop.xlane.xlu0 %6423
    %6425 = vadd.xlane.f32.xlu0 %v6400
    %v6426 = vpop.xlane.xlu0 %6425
    %6427 = vadd.xlane.f32.xlu0 %v6401
    %v6428 = vpop.xlane.xlu0 %6427
    %6429 = vadd.xlane.f32.xlu0 %v6402
    %v6430 = vpop.xlane.xlu0 %6429
    %6431 = vadd.xlane.f32.xlu0 %v6403
    %v6432 = vpop.xlane.xlu0 %6431
    %6433 = vadd.xlane.f32.xlu0 %v6404
    %v6434 = vpop.xlane.xlu0 %6433
    %6435 = vadd.xlane.f32.xlu0 %v6405
    %v6436 = vpop.xlane.xlu0 %6435
    %6437 = vadd.xlane.f32.xlu0 %v6406
    %v6438 = vpop.xlane.xlu0 %6437
    %v6439 = vrcp.pop %v6408
    %v6440 = vrcp.pop %v6410
    %v6441 = vrcp.pop %v6412
    %v6442 = vrcp.pop %v6414
    %v6443 = vrcp.pop %v6416
    %v6444 = vrcp.pop %v6418
    %v6445 = vrcp.pop %v6420
    %v6446 = vrcp.pop %v6422
    %v6447 = vrcp.pop %v6424
    %v6448 = vrcp.pop %v6426
    %v6449 = vrcp.pop %v6428
    %v6450 = vrcp.pop %v6430
    %v6451 = vrcp.pop %v6432
    %v6452 = vrcp.pop %v6434
    %v6453 = vrcp.pop %v6436
    %v6454 = vrcp.pop %v6438
    %6463 = vrot.lane.b32.xlu0 %v1372, 96
    %v6464 = vpop.permute.xlu0 %6463
    %6465 = vrot.lane.b32.xlu0 %v1374, 96
    %v6466 = vpop.permute.xlu0 %6465
    %6467 = vrot.lane.b32.xlu0 %v1376, 96
    %v6468 = vpop.permute.xlu0 %6467
    %6469 = vrot.lane.b32.xlu0 %v1378, 96
    %v6470 = vpop.permute.xlu0 %6469
    %6471 = vrot.lane.b32.xlu0 %v1380, 96
    %v6472 = vpop.permute.xlu0 %6471
    %6473 = vrot.lane.b32.xlu0 %v1382, 96
    %v6474 = vpop.permute.xlu0 %6473
    %6475 = vrot.lane.b32.xlu0 %v1384, 96
    %v6476 = vpop.permute.xlu0 %6475
    %6477 = vrot.lane.b32.xlu0 %v1386, 96
    %v6478 = vpop.permute.xlu0 %6477
    %6487 = vmatprep.subr.bf16.mxu0 0
    %6488 = vmatpush1.bf16.msra.mxu0 %v6478
    %6489 = vmatprep.subr.bf16.mxu0 0
    %6490 = vmatpush1.bf16.msra.mxu0 %v6476
    %6491 = vmatprep.subr.bf16.mxu0 0
    %6492 = vmatpush1.bf16.msra.mxu0 %v6474
    %6493 = vmatprep.subr.bf16.mxu0 0
    %6494 = vmatpush1.bf16.msra.mxu0 %v6472
    %6495 = vmatprep.subr.bf16.mxu0 0
    %6496 = vmatpush1.bf16.msra.mxu0 %v6470
    %6497 = vmatprep.subr.bf16.mxu0 0
    %6498 = vmatpush1.bf16.msra.mxu0 %v6468
    %6499 = vmatprep.subr.bf16.mxu0 0
    %6500 = vmatpush1.bf16.msra.mxu0 %v6466
    %6501 = vmatprep.subr.bf16.mxu0 0
    %6502 = vmatpush1.bf16.msra.mxu0 %v6464
    %6503 = vmatprep.subr.bf16.mxu0 0
    %6504 = vmatpush2.bf16.msra.mxu0 0
    %6505 = vmatprep.subr.bf16.mxu0 0
    %6506 = vmatpush2.bf16.msra.mxu0 0
    %6507 = vmatprep.subr.bf16.mxu0 0
    %6508 = vmatpush2.bf16.msra.mxu0 0
    %6509 = vmatprep.subr.bf16.mxu0 0
    %6510 = vmatpush2.bf16.msra.mxu0 0
    %6511 = vmatprep.subr.bf16.mxu0 0
    %6512 = vmatpush2.bf16.msra.mxu0 0
    %6513 = vmatprep.subr.bf16.mxu0 0
    %6514 = vmatpush2.bf16.msra.mxu0 0
    %6515 = vmatprep.subr.bf16.mxu0 0
    %6516 = vmatpush2.bf16.msra.mxu0 0
    %6517 = vmatprep.subr.bf16.mxu0 0
    %6518 = vmatpush2.bf16.msra.mxu0 0
    %6519 = vmatprep.mubr.bf16.mxu0 0
    %6520 = vmatmul.mubr.bf16.gmra.mxu0 %v6369
    %v6521 = vpop.f32.mrf.mxu0
    %v6522 = vadd.f32 0.0, %v6521
    %v6523 = vpop.f32.mrf.mxu0
    %v6524 = vpop.f32.mrf.mxu0
    %v6525 = vadd.f32 0.0, %v6524
    %v6526 = vpop.f32.mrf.mxu0
    %6527 = vmatprep.mubr.bf16.mxu0 0
    %6528 = vmatmul.mubr.bf16.gmra.mxu0 %v6372
    %v6529 = vpop.f32.mrf.mxu0
    %v6530 = vadd.f32 0.0, %v6529
    %v6531 = vpop.f32.mrf.mxu0
    %v6532 = vpop.f32.mrf.mxu0
    %v6533 = vadd.f32 0.0, %v6532
    %v6534 = vpop.f32.mrf.mxu0
    %6535 = vmatprep.mubr.bf16.mxu0 0
    %6536 = vmatmul.mubr.bf16.gmra.mxu0 %v6375
    %v6537 = vpop.f32.mrf.mxu0
    %v6538 = vadd.f32 0.0, %v6537
    %v6539 = vpop.f32.mrf.mxu0
    %v6540 = vpop.f32.mrf.mxu0
    %v6541 = vadd.f32 0.0, %v6540
    %v6542 = vpop.f32.mrf.mxu0
    %6543 = vmatprep.mubr.bf16.mxu0 0
    %6544 = vmatmul.mubr.bf16.gmra.mxu0 %v6378
    %v6545 = vpop.f32.mrf.mxu0
    %v6546 = vadd.f32 0.0, %v6545
    %v6547 = vpop.f32.mrf.mxu0
    %v6548 = vpop.f32.mrf.mxu0
    %v6549 = vadd.f32 0.0, %v6548
    %v6550 = vpop.f32.mrf.mxu0
    %6551 = vmatprep.mubr.bf16.mxu0 0
    %6552 = vmatmul.mubr.bf16.gmra.mxu0 %v6381
    %v6553 = vpop.f32.mrf.mxu0
    %v6554 = vadd.f32 0.0, %v6553
    %v6555 = vpop.f32.mrf.mxu0
    %v6556 = vpop.f32.mrf.mxu0
    %v6557 = vadd.f32 0.0, %v6556
    %v6558 = vpop.f32.mrf.mxu0
    %6559 = vmatprep.mubr.bf16.mxu0 0
    %6560 = vmatmul.mubr.bf16.gmra.mxu0 %v6384
    %v6561 = vpop.f32.mrf.mxu0
    %v6562 = vadd.f32 0.0, %v6561
    %v6563 = vpop.f32.mrf.mxu0
    %v6564 = vpop.f32.mrf.mxu0
    %v6565 = vadd.f32 0.0, %v6564
    %v6566 = vpop.f32.mrf.mxu0
    %6567 = vmatprep.mubr.bf16.mxu0 0
    %6568 = vmatmul.mubr.bf16.gmra.mxu0 %v6387
    %v6569 = vpop.f32.mrf.mxu0
    %v6570 = vadd.f32 0.0, %v6569
    %v6571 = vpop.f32.mrf.mxu0
    %v6572 = vpop.f32.mrf.mxu0
    %v6573 = vadd.f32 0.0, %v6572
    %v6574 = vpop.f32.mrf.mxu0
    %6575 = vmatprep.mubr.bf16.mxu0 0
    %6576 = vmatmul.mubr.bf16.gmra.mxu0 %v6390
    %v6577 = vpop.f32.mrf.mxu0
    %v6578 = vadd.f32 0.0, %v6577
    %v6579 = vpop.f32.mrf.mxu0
    %v6580 = vpop.f32.mrf.mxu0
    %v6581 = vadd.f32 0.0, %v6580
    %v6582 = vpop.f32.mrf.mxu0
    %6583 = vdwg.mxu0
    %v6584 = vmul.f32 %v6522, %v6439
    %v6585 = vmul.f32 %v6525, %v6440
    %v6586 = vmul.f32 %v6530, %v6441
    %v6587 = vmul.f32 %v6533, %v6442
    %v6588 = vmul.f32 %v6538, %v6443
    %v6589 = vmul.f32 %v6541, %v6444
    %v6590 = vmul.f32 %v6546, %v6445
    %v6591 = vmul.f32 %v6549, %v6446
    %v6592 = vmul.f32 %v6554, %v6447
    %v6593 = vmul.f32 %v6557, %v6448
    %v6594 = vmul.f32 %v6562, %v6449
    %v6595 = vmul.f32 %v6565, %v6450
    %v6596 = vmul.f32 %v6570, %v6451
    %v6597 = vmul.f32 %v6573, %v6452
    %v6598 = vmul.f32 %v6578, %v6453
    %v6599 = vmul.f32 %v6581, %v6454
    %6616 = vrot.lane.b32.xlu0 %v6584, 32
    %v6617 = vpop.permute.xlu0 %6616
    %6618 = vrot.lane.b32.xlu0 %v6585, 32
    %v6619 = vpop.permute.xlu0 %6618
    %6620 = vrot.lane.b32.xlu0 %v6586, 32
    %v6621 = vpop.permute.xlu0 %6620
    %6622 = vrot.lane.b32.xlu0 %v6587, 32
    %v6623 = vpop.permute.xlu0 %6622
    %6624 = vrot.lane.b32.xlu0 %v6588, 32
    %v6625 = vpop.permute.xlu0 %6624
    %6626 = vrot.lane.b32.xlu0 %v6589, 32
    %v6627 = vpop.permute.xlu0 %6626
    %6628 = vrot.lane.b32.xlu0 %v6590, 32
    %v6629 = vpop.permute.xlu0 %6628
    %6630 = vrot.lane.b32.xlu0 %v6591, 32
    %v6631 = vpop.permute.xlu0 %6630
    %6632 = vrot.lane.b32.xlu0 %v6592, 32
    %v6633 = vpop.permute.xlu0 %6632
    %6634 = vrot.lane.b32.xlu0 %v6593, 32
    %v6635 = vpop.permute.xlu0 %6634
    %6636 = vrot.lane.b32.xlu0 %v6594, 32
    %v6637 = vpop.permute.xlu0 %6636
    %6638 = vrot.lane.b32.xlu0 %v6595, 32
    %v6639 = vpop.permute.xlu0 %6638
    %6640 = vrot.lane.b32.xlu0 %v6596, 32
    %v6641 = vpop.permute.xlu0 %6640
    %6642 = vrot.lane.b32.xlu0 %v6597, 32
    %v6643 = vpop.permute.xlu0 %6642
    %6644 = vrot.lane.b32.xlu0 %v6598, 32
    %v6645 = vpop.permute.xlu0 %6644
    %6646 = vrot.lane.b32.xlu0 %v6599, 32
    %v6647 = vpop.permute.xlu0 %6646
    %6664 = vst.msk [vmem:[%s6085] sm:$0xff] %vm2420, %v6617
    %6665 = vst.msk [vmem:[%s6085 + $0x10] sm:$0xff] %vm2420, %v6619
    %6666 = vst.msk [vmem:[%s6085 + $0x20] sm:$0xff] %vm2420, %v6621
    %6667 = vst.msk [vmem:[%s6085 + $0x30] sm:$0xff] %vm2420, %v6623
    %6668 = vst.msk [vmem:[%s6085 + $0x40] sm:$0xff] %vm2420, %v6625
    %6669 = vst.msk [vmem:[%s6085 + $0x50] sm:$0xff] %vm2420, %v6627
    %6670 = vst.msk [vmem:[%s6085 + $0x60] sm:$0xff] %vm2420, %v6629
    %6671 = vst.msk [vmem:[%s6085 + $0x70] sm:$0xff] %vm2420, %v6631
    %6672 = vst.msk [vmem:[%s6085 + $0x80] sm:$0xff] %vm2420, %v6633
    %6673 = vst.msk [vmem:[%s6085 + $0x90] sm:$0xff] %vm2420, %v6635
    %6674 = vst.msk [vmem:[%s6085 + $0xa0] sm:$0xff] %vm2420, %v6637
    %6675 = vst.msk [vmem:[%s6085 + $0xb0] sm:$0xff] %vm2420, %v6639
    %6676 = vst.msk [vmem:[%s6085 + $0xc0] sm:$0xff] %vm2420, %v6641
    %6677 = vst.msk [vmem:[%s6085 + $0xd0] sm:$0xff] %vm2420, %v6643
    %6678 = vst.msk [vmem:[%s6085 + $0xe0] sm:$0xff] %vm2420, %v6645
    %6679 = vst.msk [vmem:[%s6085 + $0xf0] sm:$0xff] %vm2420, %v6647
    %6680 = vrot.lane.b32.xlu0 %v1326, 64
    %v6681 = vpop.permute.xlu0 %6680
    %6682 = vrot.lane.b32.xlu0 %v1330, 64
    %v6683 = vpop.permute.xlu0 %6682
    %6684 = vrot.lane.b32.xlu0 %v1334, 64
    %v6685 = vpop.permute.xlu0 %6684
    %6686 = vrot.lane.b32.xlu0 %v1338, 64
    %v6687 = vpop.permute.xlu0 %6686
    %6688 = vrot.lane.b32.xlu0 %v1342, 64
    %v6689 = vpop.permute.xlu0 %6688
    %6690 = vrot.lane.b32.xlu0 %v1346, 64
    %v6691 = vpop.permute.xlu0 %6690
    %6692 = vrot.lane.b32.xlu0 %v1350, 64
    %v6693 = vpop.permute.xlu0 %6692
    %6694 = vrot.lane.b32.xlu0 %v1354, 64
    %v6695 = vpop.permute.xlu0 %6694
    %6696 = vrot.lane.b32.xlu0 %v1324, 64
    %v6697 = vpop.permute.xlu0 %6696
    %6698 = vrot.lane.b32.xlu0 %v1328, 64
    %v6699 = vpop.permute.xlu0 %6698
    %6700 = vrot.lane.b32.xlu0 %v1332, 64
    %v6701 = vpop.permute.xlu0 %6700
    %6702 = vrot.lane.b32.xlu0 %v1336, 64
    %v6703 = vpop.permute.xlu0 %6702
    %6704 = vrot.lane.b32.xlu0 %v1340, 64
    %v6705 = vpop.permute.xlu0 %6704
    %6706 = vrot.lane.b32.xlu0 %v1344, 64
    %v6707 = vpop.permute.xlu0 %6706
    %6708 = vrot.lane.b32.xlu0 %v1348, 64
    %v6709 = vpop.permute.xlu0 %6708
    %6710 = vrot.lane.b32.xlu0 %v1352, 64
    %v6711 = vpop.permute.xlu0 %6710
    %v6713 = vsel %vm1423, %v6681, 0
    %v6716 = vsel %vm1423, %v6683, 0
    %v6719 = vsel %vm1423, %v6685, 0
    %v6722 = vsel %vm1423, %v6687, 0
    %v6725 = vsel %vm1423, %v6689, 0
    %v6728 = vsel %vm1423, %v6691, 0
    %v6731 = vsel %vm1423, %v6693, 0
    %v6734 = vsel %vm1423, %v6695, 0
    %v6737 = vsel %vm1423, %v6697, 0
    %v6740 = vsel %vm1423, %v6699, 0
    %v6743 = vsel %vm1423, %v6701, 0
    %v6746 = vsel %vm1423, %v6703, 0
    %v6749 = vsel %vm1423, %v6705, 0
    %v6752 = vsel %vm1423, %v6707, 0
    %v6755 = vsel %vm1423, %v6709, 0
    %v6758 = vsel %vm1423, %v6711, 0
    %6760 = vmatprep.subr.bf16.mxu0 0
    %6761 = vmatpush1.bf16.xpose.msra.mxu0 %v6758
    %6762 = vmatprep.subr.bf16.mxu0 0
    %6763 = vmatpush1.bf16.xpose.msra.mxu0 %v6755
    %6764 = vmatprep.subr.bf16.mxu0 0
    %6765 = vmatpush1.bf16.xpose.msra.mxu0 %v6752
    %6766 = vmatprep.subr.bf16.mxu0 0
    %6767 = vmatpush1.bf16.xpose.msra.mxu0 %v6749
    %6768 = vmatprep.subr.bf16.mxu0 0
    %6769 = vmatpush1.bf16.xpose.msra.mxu0 %v6746
    %6770 = vmatprep.subr.bf16.mxu0 0
    %6771 = vmatpush1.bf16.xpose.msra.mxu0 %v6743
    %6772 = vmatprep.subr.bf16.mxu0 0
    %6773 = vmatpush1.bf16.xpose.msra.mxu0 %v6740
    %6774 = vmatprep.subr.bf16.mxu0 0
    %6775 = vmatpush1.bf16.xpose.msra.mxu0 %v6737
    %6776 = vmatprep.subr.bf16.mxu0 0
    %6777 = vmatpush2.bf16.xpose.msra.mxu0 0
    %6778 = vmatprep.subr.bf16.mxu0 0
    %6779 = vmatpush2.bf16.xpose.msra.mxu0 0
    %6780 = vmatprep.subr.bf16.mxu0 0
    %6781 = vmatpush2.bf16.xpose.msra.mxu0 0
    %6782 = vmatprep.subr.bf16.mxu0 0
    %6783 = vmatpush2.bf16.xpose.msra.mxu0 0
    %6784 = vmatprep.subr.bf16.mxu0 0
    %6785 = vmatpush2.bf16.xpose.msra.mxu0 0
    %6786 = vmatprep.subr.bf16.mxu0 0
    %6787 = vmatpush2.bf16.xpose.msra.mxu0 0
    %6788 = vmatprep.subr.bf16.mxu0 0
    %6789 = vmatpush2.bf16.xpose.msra.mxu0 0
    %6790 = vmatprep.subr.bf16.mxu0 0
    %6791 = vmatpush2.bf16.xpose.msra.mxu0 0
    %6792 = vmatprep.mubr.bf16.mxu0 0
    %6793 = vmatmul.mubr.bf16.gmra.mxu0 %v6713
    %v6794 = vpop.f32.mrf.mxu0
    %v6795 = vadd.f32 0.0, %v6794
    %v6796 = vpop.f32.mrf.mxu0
    %v6797 = vpop.f32.mrf.mxu0
    %v6798 = vadd.f32 0.0, %v6797
    %v6799 = vpop.f32.mrf.mxu0
    %6800 = vmatprep.mubr.bf16.mxu0 0
    %6801 = vmatmul.mubr.bf16.gmra.mxu0 %v6716
    %v6802 = vpop.f32.mrf.mxu0
    %v6803 = vadd.f32 0.0, %v6802
    %v6804 = vpop.f32.mrf.mxu0
    %v6805 = vpop.f32.mrf.mxu0
    %v6806 = vadd.f32 0.0, %v6805
    %v6807 = vpop.f32.mrf.mxu0
    %6808 = vmatprep.mubr.bf16.mxu0 0
    %6809 = vmatmul.mubr.bf16.gmra.mxu0 %v6719
    %v6810 = vpop.f32.mrf.mxu0
    %v6811 = vadd.f32 0.0, %v6810
    %v6812 = vpop.f32.mrf.mxu0
    %v6813 = vpop.f32.mrf.mxu0
    %v6814 = vadd.f32 0.0, %v6813
    %v6815 = vpop.f32.mrf.mxu0
    %6816 = vmatprep.mubr.bf16.mxu0 0
    %6817 = vmatmul.mubr.bf16.gmra.mxu0 %v6722
    %v6818 = vpop.f32.mrf.mxu0
    %v6819 = vadd.f32 0.0, %v6818
    %v6820 = vpop.f32.mrf.mxu0
    %v6821 = vpop.f32.mrf.mxu0
    %v6822 = vadd.f32 0.0, %v6821
    %v6823 = vpop.f32.mrf.mxu0
    %6824 = vmatprep.mubr.bf16.mxu0 0
    %6825 = vmatmul.mubr.bf16.gmra.mxu0 %v6725
    %v6826 = vpop.f32.mrf.mxu0
    %v6827 = vadd.f32 0.0, %v6826
    %v6828 = vpop.f32.mrf.mxu0
    %v6829 = vpop.f32.mrf.mxu0
    %v6830 = vadd.f32 0.0, %v6829
    %v6831 = vpop.f32.mrf.mxu0
    %6832 = vmatprep.mubr.bf16.mxu0 0
    %6833 = vmatmul.mubr.bf16.gmra.mxu0 %v6728
    %v6834 = vpop.f32.mrf.mxu0
    %v6835 = vadd.f32 0.0, %v6834
    %v6836 = vpop.f32.mrf.mxu0
    %v6837 = vpop.f32.mrf.mxu0
    %v6838 = vadd.f32 0.0, %v6837
    %v6839 = vpop.f32.mrf.mxu0
    %6840 = vmatprep.mubr.bf16.mxu0 0
    %6841 = vmatmul.mubr.bf16.gmra.mxu0 %v6731
    %v6842 = vpop.f32.mrf.mxu0
    %v6843 = vadd.f32 0.0, %v6842
    %v6844 = vpop.f32.mrf.mxu0
    %v6845 = vpop.f32.mrf.mxu0
    %v6846 = vadd.f32 0.0, %v6845
    %v6847 = vpop.f32.mrf.mxu0
    %6848 = vmatprep.mubr.bf16.mxu0 0
    %6849 = vmatmul.mubr.bf16.gmra.mxu0 %v6734
    %v6850 = vpop.f32.mrf.mxu0
    %v6851 = vadd.f32 0.0, %v6850
    %v6852 = vpop.f32.mrf.mxu0
    %v6853 = vpop.f32.mrf.mxu0
    %v6854 = vadd.f32 0.0, %v6853
    %v6855 = vpop.f32.mrf.mxu0
    %6856 = vdwg.mxu0
    %v6857 = vsel %vm1407, %v6795, -inf
    %v6858 = vsel %vm1408, %v6798, -inf
    %v6859 = vsel %vm1409, %v6803, -inf
    %v6860 = vsel %vm1410, %v6806, -inf
    %v6861 = vsel %vm1411, %v6811, -inf
    %v6862 = vsel %vm1412, %v6814, -inf
    %v6863 = vsel %vm1413, %v6819, -inf
    %v6864 = vsel %vm1414, %v6822, -inf
    %v6865 = vsel %vm1415, %v6827, -inf
    %v6866 = vsel %vm1416, %v6830, -inf
    %v6867 = vsel %vm1417, %v6835, -inf
    %v6868 = vsel %vm1418, %v6838, -inf
    %v6869 = vsel %vm1419, %v6843, -inf
    %v6870 = vsel %vm1420, %v6846, -inf
    %v6871 = vsel %vm1421, %v6851, -inf
    %v6872 = vsel %vm1422, %v6854, -inf
    %6873 = vmax.xlane.f32.xlu0 %v6857
    %v6874 = vpop.xlane.xlu0 %6873
    %6875 = vmax.xlane.f32.xlu0 %v6858
    %v6876 = vpop.xlane.xlu0 %6875
    %6877 = vmax.xlane.f32.xlu0 %v6859
    %v6878 = vpop.xlane.xlu0 %6877
    %6879 = vmax.xlane.f32.xlu0 %v6860
    %v6880 = vpop.xlane.xlu0 %6879
    %6881 = vmax.xlane.f32.xlu0 %v6861
    %v6882 = vpop.xlane.xlu0 %6881
    %6883 = vmax.xlane.f32.xlu0 %v6862
    %v6884 = vpop.xlane.xlu0 %6883
    %6885 = vmax.xlane.f32.xlu0 %v6863
    %v6886 = vpop.xlane.xlu0 %6885
    %6887 = vmax.xlane.f32.xlu0 %v6864
    %v6888 = vpop.xlane.xlu0 %6887
    %6889 = vmax.xlane.f32.xlu0 %v6865
    %v6890 = vpop.xlane.xlu0 %6889
    %6891 = vmax.xlane.f32.xlu0 %v6866
    %v6892 = vpop.xlane.xlu0 %6891
    %6893 = vmax.xlane.f32.xlu0 %v6867
    %v6894 = vpop.xlane.xlu0 %6893
    %6895 = vmax.xlane.f32.xlu0 %v6868
    %v6896 = vpop.xlane.xlu0 %6895
    %6897 = vmax.xlane.f32.xlu0 %v6869
    %v6898 = vpop.xlane.xlu0 %6897
    %6899 = vmax.xlane.f32.xlu0 %v6870
    %v6900 = vpop.xlane.xlu0 %6899
    %6901 = vmax.xlane.f32.xlu0 %v6871
    %v6902 = vpop.xlane.xlu0 %6901
    %6903 = vmax.xlane.f32.xlu0 %v6872
    %v6904 = vpop.xlane.xlu0 %6903
    %v6905 = vsub.f32 %v6857, %v6874
    %v6906 = vsub.f32 %v6858, %v6876
    %v6907 = vsub.f32 %v6859, %v6878
    %v6908 = vsub.f32 %v6860, %v6880
    %v6909 = vsub.f32 %v6861, %v6882
    %v6910 = vsub.f32 %v6862, %v6884
    %v6911 = vsub.f32 %v6863, %v6886
    %v6912 = vsub.f32 %v6864, %v6888
    %v6913 = vsub.f32 %v6865, %v6890
    %v6914 = vsub.f32 %v6866, %v6892
    %v6915 = vsub.f32 %v6867, %v6894
    %v6916 = vsub.f32 %v6868, %v6896
    %v6917 = vsub.f32 %v6869, %v6898
    %v6918 = vsub.f32 %v6870, %v6900
    %v6919 = vsub.f32 %v6871, %v6902
    %v6920 = vsub.f32 %v6872, %v6904
    %v6921 = vpack.c.bf16 %v6906, %v6905
    %v6922 = vpack.c.bf16 %v6908, %v6907
    %v6923 = vpack.c.bf16 %v6910, %v6909
    %v6924 = vpack.c.bf16 %v6912, %v6911
    %v6925 = vpack.c.bf16 %v6914, %v6913
    %v6926 = vpack.c.bf16 %v6916, %v6915
    %v6927 = vpack.c.bf16 %v6918, %v6917
    %v6928 = vpack.c.bf16 %v6920, %v6919
    %v6930 = vmul.bf16 %v6921, 1069105081
    %v6931 = vpow.bf16.pop %v6930
    %v6933 = vmul.bf16 %v6922, 1069105081
    %v6934 = vpow.bf16.pop %v6933
    %v6936 = vmul.bf16 %v6923, 1069105081
    %v6937 = vpow.bf16.pop %v6936
    %v6939 = vmul.bf16 %v6924, 1069105081
    %v6940 = vpow.bf16.pop %v6939
    %v6942 = vmul.bf16 %v6925, 1069105081
    %v6943 = vpow.bf16.pop %v6942
    %v6945 = vmul.bf16 %v6926, 1069105081
    %v6946 = vpow.bf16.pop %v6945
    %v6948 = vmul.bf16 %v6927, 1069105081
    %v6949 = vpow.bf16.pop %v6948
    %v6951 = vmul.bf16 %v6928, 1069105081
    %v6952 = vpow.bf16.pop %v6951
    %v6953 = vunpack.c.l.bf16 %v6931
    %v6954 = vunpack.c.h.bf16 %v6931
    %v6955 = vunpack.c.l.bf16 %v6934
    %v6956 = vunpack.c.h.bf16 %v6934
    %v6957 = vunpack.c.l.bf16 %v6937
    %v6958 = vunpack.c.h.bf16 %v6937
    %v6959 = vunpack.c.l.bf16 %v6940
    %v6960 = vunpack.c.h.bf16 %v6940
    %v6961 = vunpack.c.l.bf16 %v6943
    %v6962 = vunpack.c.h.bf16 %v6943
    %v6963 = vunpack.c.l.bf16 %v6946
    %v6964 = vunpack.c.h.bf16 %v6946
    %v6965 = vunpack.c.l.bf16 %v6949
    %v6966 = vunpack.c.h.bf16 %v6949
    %v6967 = vunpack.c.l.bf16 %v6952
    %v6968 = vunpack.c.h.bf16 %v6952
    %6969 = vadd.xlane.f32.xlu0 %v6953
    %v6970 = vpop.xlane.xlu0 %6969
    %6971 = vadd.xlane.f32.xlu0 %v6954
    %v6972 = vpop.xlane.xlu0 %6971
    %6973 = vadd.xlane.f32.xlu0 %v6955
    %v6974 = vpop.xlane.xlu0 %6973
    %6975 = vadd.xlane.f32.xlu0 %v6956
    %v6976 = vpop.xlane.xlu0 %6975
    %6977 = vadd.xlane.f32.xlu0 %v6957
    %v6978 = vpop.xlane.xlu0 %6977
    %6979 = vadd.xlane.f32.xlu0 %v6958
    %v6980 = vpop.xlane.xlu0 %6979
    %6981 = vadd.xlane.f32.xlu0 %v6959
    %v6982 = vpop.xlane.xlu0 %6981
    %6983 = vadd.xlane.f32.xlu0 %v6960
    %v6984 = vpop.xlane.xlu0 %6983
    %6985 = vadd.xlane.f32.xlu0 %v6961
    %v6986 = vpop.xlane.xlu0 %6985
    %6987 = vadd.xlane.f32.xlu0 %v6962
    %v6988 = vpop.xlane.xlu0 %6987
    %6989 = vadd.xlane.f32.xlu0 %v6963
    %v6990 = vpop.xlane.xlu0 %6989
    %6991 = vadd.xlane.f32.xlu0 %v6964
    %v6992 = vpop.xlane.xlu0 %6991
    %6993 = vadd.xlane.f32.xlu0 %v6965
    %v6994 = vpop.xlane.xlu0 %6993
    %6995 = vadd.xlane.f32.xlu0 %v6966
    %v6996 = vpop.xlane.xlu0 %6995
    %6997 = vadd.xlane.f32.xlu0 %v6967
    %v6998 = vpop.xlane.xlu0 %6997
    %6999 = vadd.xlane.f32.xlu0 %v6968
    %v7000 = vpop.xlane.xlu0 %6999
    %v7001 = vrcp.pop %v6970
    %v7002 = vrcp.pop %v6972
    %v7003 = vrcp.pop %v6974
    %v7004 = vrcp.pop %v6976
    %v7005 = vrcp.pop %v6978
    %v7006 = vrcp.pop %v6980
    %v7007 = vrcp.pop %v6982
    %v7008 = vrcp.pop %v6984
    %v7009 = vrcp.pop %v6986
    %v7010 = vrcp.pop %v6988
    %v7011 = vrcp.pop %v6990
    %v7012 = vrcp.pop %v6992
    %v7013 = vrcp.pop %v6994
    %v7014 = vrcp.pop %v6996
    %v7015 = vrcp.pop %v6998
    %v7016 = vrcp.pop %v7000
    %7017 = vrot.lane.b32.xlu0 %v1372, 64
    %v7018 = vpop.permute.xlu0 %7017
    %7019 = vrot.lane.b32.xlu0 %v1374, 64
    %v7020 = vpop.permute.xlu0 %7019
    %7021 = vrot.lane.b32.xlu0 %v1376, 64
    %v7022 = vpop.permute.xlu0 %7021
    %7023 = vrot.lane.b32.xlu0 %v1378, 64
    %v7024 = vpop.permute.xlu0 %7023
    %7025 = vrot.lane.b32.xlu0 %v1380, 64
    %v7026 = vpop.permute.xlu0 %7025
    %7027 = vrot.lane.b32.xlu0 %v1382, 64
    %v7028 = vpop.permute.xlu0 %7027
    %7029 = vrot.lane.b32.xlu0 %v1384, 64
    %v7030 = vpop.permute.xlu0 %7029
    %7031 = vrot.lane.b32.xlu0 %v1386, 64
    %v7032 = vpop.permute.xlu0 %7031
    %7041 = vmatprep.subr.bf16.mxu0 0
    %7042 = vmatpush1.bf16.msra.mxu0 %v7032
    %7043 = vmatprep.subr.bf16.mxu0 0
    %7044 = vmatpush1.bf16.msra.mxu0 %v7030
    %7045 = vmatprep.subr.bf16.mxu0 0
    %7046 = vmatpush1.bf16.msra.mxu0 %v7028
    %7047 = vmatprep.subr.bf16.mxu0 0
    %7048 = vmatpush1.bf16.msra.mxu0 %v7026
    %7049 = vmatprep.subr.bf16.mxu0 0
    %7050 = vmatpush1.bf16.msra.mxu0 %v7024
    %7051 = vmatprep.subr.bf16.mxu0 0
    %7052 = vmatpush1.bf16.msra.mxu0 %v7022
    %7053 = vmatprep.subr.bf16.mxu0 0
    %7054 = vmatpush1.bf16.msra.mxu0 %v7020
    %7055 = vmatprep.subr.bf16.mxu0 0
    %7056 = vmatpush1.bf16.msra.mxu0 %v7018
    %7057 = vmatprep.subr.bf16.mxu0 0
    %7058 = vmatpush2.bf16.msra.mxu0 0
    %7059 = vmatprep.subr.bf16.mxu0 0
    %7060 = vmatpush2.bf16.msra.mxu0 0
    %7061 = vmatprep.subr.bf16.mxu0 0
    %7062 = vmatpush2.bf16.msra.mxu0 0
    %7063 = vmatprep.subr.bf16.mxu0 0
    %7064 = vmatpush2.bf16.msra.mxu0 0
    %7065 = vmatprep.subr.bf16.mxu0 0
    %7066 = vmatpush2.bf16.msra.mxu0 0
    %7067 = vmatprep.subr.bf16.mxu0 0
    %7068 = vmatpush2.bf16.msra.mxu0 0
    %7069 = vmatprep.subr.bf16.mxu0 0
    %7070 = vmatpush2.bf16.msra.mxu0 0
    %7071 = vmatprep.subr.bf16.mxu0 0
    %7072 = vmatpush2.bf16.msra.mxu0 0
    %7073 = vmatprep.mubr.bf16.mxu0 0
    %7074 = vmatmul.mubr.bf16.gmra.mxu0 %v6931
    %v7075 = vpop.f32.mrf.mxu0
    %v7076 = vadd.f32 0.0, %v7075
    %v7077 = vpop.f32.mrf.mxu0
    %v7078 = vpop.f32.mrf.mxu0
    %v7079 = vadd.f32 0.0, %v7078
    %v7080 = vpop.f32.mrf.mxu0
    %7081 = vmatprep.mubr.bf16.mxu0 0
    %7082 = vmatmul.mubr.bf16.gmra.mxu0 %v6934
    %v7083 = vpop.f32.mrf.mxu0
    %v7084 = vadd.f32 0.0, %v7083
    %v7085 = vpop.f32.mrf.mxu0
    %v7086 = vpop.f32.mrf.mxu0
    %v7087 = vadd.f32 0.0, %v7086
    %v7088 = vpop.f32.mrf.mxu0
    %7089 = vmatprep.mubr.bf16.mxu0 0
    %7090 = vmatmul.mubr.bf16.gmra.mxu0 %v6937
    %v7091 = vpop.f32.mrf.mxu0
    %v7092 = vadd.f32 0.0, %v7091
    %v7093 = vpop.f32.mrf.mxu0
    %v7094 = vpop.f32.mrf.mxu0
    %v7095 = vadd.f32 0.0, %v7094
    %v7096 = vpop.f32.mrf.mxu0
    %7097 = vmatprep.mubr.bf16.mxu0 0
    %7098 = vmatmul.mubr.bf16.gmra.mxu0 %v6940
    %v7099 = vpop.f32.mrf.mxu0
    %v7100 = vadd.f32 0.0, %v7099
    %v7101 = vpop.f32.mrf.mxu0
    %v7102 = vpop.f32.mrf.mxu0
    %v7103 = vadd.f32 0.0, %v7102
    %v7104 = vpop.f32.mrf.mxu0
    %7105 = vmatprep.mubr.bf16.mxu0 0
    %7106 = vmatmul.mubr.bf16.gmra.mxu0 %v6943
    %v7107 = vpop.f32.mrf.mxu0
    %v7108 = vadd.f32 0.0, %v7107
    %v7109 = vpop.f32.mrf.mxu0
    %v7110 = vpop.f32.mrf.mxu0
    %v7111 = vadd.f32 0.0, %v7110
    %v7112 = vpop.f32.mrf.mxu0
    %7113 = vmatprep.mubr.bf16.mxu0 0
    %7114 = vmatmul.mubr.bf16.gmra.mxu0 %v6946
    %v7115 = vpop.f32.mrf.mxu0
    %v7116 = vadd.f32 0.0, %v7115
    %v7117 = vpop.f32.mrf.mxu0
    %v7118 = vpop.f32.mrf.mxu0
    %v7119 = vadd.f32 0.0, %v7118
    %v7120 = vpop.f32.mrf.mxu0
    %7121 = vmatprep.mubr.bf16.mxu0 0
    %7122 = vmatmul.mubr.bf16.gmra.mxu0 %v6949
    %v7123 = vpop.f32.mrf.mxu0
    %v7124 = vadd.f32 0.0, %v7123
    %v7125 = vpop.f32.mrf.mxu0
    %v7126 = vpop.f32.mrf.mxu0
    %v7127 = vadd.f32 0.0, %v7126
    %v7128 = vpop.f32.mrf.mxu0
    %7129 = vmatprep.mubr.bf16.mxu0 0
    %7130 = vmatmul.mubr.bf16.gmra.mxu0 %v6952
    %v7131 = vpop.f32.mrf.mxu0
    %v7132 = vadd.f32 0.0, %v7131
    %v7133 = vpop.f32.mrf.mxu0
    %v7134 = vpop.f32.mrf.mxu0
    %v7135 = vadd.f32 0.0, %v7134
    %v7136 = vpop.f32.mrf.mxu0
    %7137 = vdwg.mxu0
    %v7138 = vmul.f32 %v7076, %v7001
    %v7139 = vmul.f32 %v7079, %v7002
    %v7140 = vmul.f32 %v7084, %v7003
    %v7141 = vmul.f32 %v7087, %v7004
    %v7142 = vmul.f32 %v7092, %v7005
    %v7143 = vmul.f32 %v7095, %v7006
    %v7144 = vmul.f32 %v7100, %v7007
    %v7145 = vmul.f32 %v7103, %v7008
    %v7146 = vmul.f32 %v7108, %v7009
    %v7147 = vmul.f32 %v7111, %v7010
    %v7148 = vmul.f32 %v7116, %v7011
    %v7149 = vmul.f32 %v7119, %v7012
    %v7150 = vmul.f32 %v7124, %v7013
    %v7151 = vmul.f32 %v7127, %v7014
    %v7152 = vmul.f32 %v7132, %v7015
    %v7153 = vmul.f32 %v7135, %v7016
    %7170 = vrot.lane.b32.xlu0 %v7138, 64
    %v7171 = vpop.permute.xlu0 %7170
    %7172 = vrot.lane.b32.xlu0 %v7139, 64
    %v7173 = vpop.permute.xlu0 %7172
    %7174 = vrot.lane.b32.xlu0 %v7140, 64
    %v7175 = vpop.permute.xlu0 %7174
    %7176 = vrot.lane.b32.xlu0 %v7141, 64
    %v7177 = vpop.permute.xlu0 %7176
    %7178 = vrot.lane.b32.xlu0 %v7142, 64
    %v7179 = vpop.permute.xlu0 %7178
    %7180 = vrot.lane.b32.xlu0 %v7143, 64
    %v7181 = vpop.permute.xlu0 %7180
    %7182 = vrot.lane.b32.xlu0 %v7144, 64
    %v7183 = vpop.permute.xlu0 %7182
    %7184 = vrot.lane.b32.xlu0 %v7145, 64
    %v7185 = vpop.permute.xlu0 %7184
    %7186 = vrot.lane.b32.xlu0 %v7146, 64
    %v7187 = vpop.permute.xlu0 %7186
    %7188 = vrot.lane.b32.xlu0 %v7147, 64
    %v7189 = vpop.permute.xlu0 %7188
    %7190 = vrot.lane.b32.xlu0 %v7148, 64
    %v7191 = vpop.permute.xlu0 %7190
    %7192 = vrot.lane.b32.xlu0 %v7149, 64
    %v7193 = vpop.permute.xlu0 %7192
    %7194 = vrot.lane.b32.xlu0 %v7150, 64
    %v7195 = vpop.permute.xlu0 %7194
    %7196 = vrot.lane.b32.xlu0 %v7151, 64
    %v7197 = vpop.permute.xlu0 %7196
    %7198 = vrot.lane.b32.xlu0 %v7152, 64
    %v7199 = vpop.permute.xlu0 %7198
    %7200 = vrot.lane.b32.xlu0 %v7153, 64
    %v7201 = vpop.permute.xlu0 %7200
    %7218 = vst.msk [vmem:[%s6085] sm:$0xff] %vm2975, %v7171
    %7219 = vst.msk [vmem:[%s6085 + $0x10] sm:$0xff] %vm2975, %v7173
    %7220 = vst.msk [vmem:[%s6085 + $0x20] sm:$0xff] %vm2975, %v7175
    %7221 = vst.msk [vmem:[%s6085 + $0x30] sm:$0xff] %vm2975, %v7177
    %7222 = vst.msk [vmem:[%s6085 + $0x40] sm:$0xff] %vm2975, %v7179
    %7223 = vst.msk [vmem:[%s6085 + $0x50] sm:$0xff] %vm2975, %v7181
    %7224 = vst.msk [vmem:[%s6085 + $0x60] sm:$0xff] %vm2975, %v7183
    %7225 = vst.msk [vmem:[%s6085 + $0x70] sm:$0xff] %vm2975, %v7185
    %7226 = vst.msk [vmem:[%s6085 + $0x80] sm:$0xff] %vm2975, %v7187
    %7227 = vst.msk [vmem:[%s6085 + $0x90] sm:$0xff] %vm2975, %v7189
    %7228 = vst.msk [vmem:[%s6085 + $0xa0] sm:$0xff] %vm2975, %v7191
    %7229 = vst.msk [vmem:[%s6085 + $0xb0] sm:$0xff] %vm2975, %v7193
    %7230 = vst.msk [vmem:[%s6085 + $0xc0] sm:$0xff] %vm2975, %v7195
    %7231 = vst.msk [vmem:[%s6085 + $0xd0] sm:$0xff] %vm2975, %v7197
    %7232 = vst.msk [vmem:[%s6085 + $0xe0] sm:$0xff] %vm2975, %v7199
    %7233 = vst.msk [vmem:[%s6085 + $0xf0] sm:$0xff] %vm2975, %v7201
    %7234 = vrot.lane.b32.xlu0 %v1326, 32
    %v7235 = vpop.permute.xlu0 %7234
    %7236 = vrot.lane.b32.xlu0 %v1330, 32
    %v7237 = vpop.permute.xlu0 %7236
    %7238 = vrot.lane.b32.xlu0 %v1334, 32
    %v7239 = vpop.permute.xlu0 %7238
    %7240 = vrot.lane.b32.xlu0 %v1338, 32
    %v7241 = vpop.permute.xlu0 %7240
    %7242 = vrot.lane.b32.xlu0 %v1342, 32
    %v7243 = vpop.permute.xlu0 %7242
    %7244 = vrot.lane.b32.xlu0 %v1346, 32
    %v7245 = vpop.permute.xlu0 %7244
    %7246 = vrot.lane.b32.xlu0 %v1350, 32
    %v7247 = vpop.permute.xlu0 %7246
    %7248 = vrot.lane.b32.xlu0 %v1354, 32
    %v7249 = vpop.permute.xlu0 %7248
    %7250 = vrot.lane.b32.xlu0 %v1324, 32
    %v7251 = vpop.permute.xlu0 %7250
    %7252 = vrot.lane.b32.xlu0 %v1328, 32
    %v7253 = vpop.permute.xlu0 %7252
    %7254 = vrot.lane.b32.xlu0 %v1332, 32
    %v7255 = vpop.permute.xlu0 %7254
    %7256 = vrot.lane.b32.xlu0 %v1336, 32
    %v7257 = vpop.permute.xlu0 %7256
    %7258 = vrot.lane.b32.xlu0 %v1340, 32
    %v7259 = vpop.permute.xlu0 %7258
    %7260 = vrot.lane.b32.xlu0 %v1344, 32
    %v7261 = vpop.permute.xlu0 %7260
    %7262 = vrot.lane.b32.xlu0 %v1348, 32
    %v7263 = vpop.permute.xlu0 %7262
    %7264 = vrot.lane.b32.xlu0 %v1352, 32
    %v7265 = vpop.permute.xlu0 %7264
    %v7267 = vsel %vm1423, %v7235, 0
    %v7270 = vsel %vm1423, %v7237, 0
    %v7273 = vsel %vm1423, %v7239, 0
    %v7276 = vsel %vm1423, %v7241, 0
    %v7279 = vsel %vm1423, %v7243, 0
    %v7282 = vsel %vm1423, %v7245, 0
    %v7285 = vsel %vm1423, %v7247, 0
    %v7288 = vsel %vm1423, %v7249, 0
    %v7291 = vsel %vm1423, %v7251, 0
    %v7294 = vsel %vm1423, %v7253, 0
    %v7297 = vsel %vm1423, %v7255, 0
    %v7300 = vsel %vm1423, %v7257, 0
    %v7303 = vsel %vm1423, %v7259, 0
    %v7306 = vsel %vm1423, %v7261, 0
    %v7309 = vsel %vm1423, %v7263, 0
    %v7312 = vsel %vm1423, %v7265, 0
    %7314 = vmatprep.subr.bf16.mxu0 0
    %7315 = vmatpush1.bf16.xpose.msra.mxu0 %v7312
    %7316 = vmatprep.subr.bf16.mxu0 0
    %7317 = vmatpush1.bf16.xpose.msra.mxu0 %v7309
    %7318 = vmatprep.subr.bf16.mxu0 0
    %7319 = vmatpush1.bf16.xpose.msra.mxu0 %v7306
    %7320 = vmatprep.subr.bf16.mxu0 0
    %7321 = vmatpush1.bf16.xpose.msra.mxu0 %v7303
    %7322 = vmatprep.subr.bf16.mxu0 0
    %7323 = vmatpush1.bf16.xpose.msra.mxu0 %v7300
    %7324 = vmatprep.subr.bf16.mxu0 0
    %7325 = vmatpush1.bf16.xpose.msra.mxu0 %v7297
    %7326 = vmatprep.subr.bf16.mxu0 0
    %7327 = vmatpush1.bf16.xpose.msra.mxu0 %v7294
    %7328 = vmatprep.subr.bf16.mxu0 0
    %7329 = vmatpush1.bf16.xpose.msra.mxu0 %v7291
    %7330 = vmatprep.subr.bf16.mxu0 0
    %7331 = vmatpush2.bf16.xpose.msra.mxu0 0
    %7332 = vmatprep.subr.bf16.mxu0 0
    %7333 = vmatpush2.bf16.xpose.msra.mxu0 0
    %7334 = vmatprep.subr.bf16.mxu0 0
    %7335 = vmatpush2.bf16.xpose.msra.mxu0 0
    %7336 = vmatprep.subr.bf16.mxu0 0
    %7337 = vmatpush2.bf16.xpose.msra.mxu0 0
    %7338 = vmatprep.subr.bf16.mxu0 0
    %7339 = vmatpush2.bf16.xpose.msra.mxu0 0
    %7340 = vmatprep.subr.bf16.mxu0 0
    %7341 = vmatpush2.bf16.xpose.msra.mxu0 0
    %7342 = vmatprep.subr.bf16.mxu0 0
    %7343 = vmatpush2.bf16.xpose.msra.mxu0 0
    %7344 = vmatprep.subr.bf16.mxu0 0
    %7345 = vmatpush2.bf16.xpose.msra.mxu0 0
    %7346 = vmatprep.mubr.bf16.mxu0 0
    %7347 = vmatmul.mubr.bf16.gmra.mxu0 %v7267
    %v7348 = vpop.f32.mrf.mxu0
    %v7349 = vadd.f32 0.0, %v7348
    %v7350 = vpop.f32.mrf.mxu0
    %v7351 = vpop.f32.mrf.mxu0
    %v7352 = vadd.f32 0.0, %v7351
    %v7353 = vpop.f32.mrf.mxu0
    %7354 = vmatprep.mubr.bf16.mxu0 0
    %7355 = vmatmul.mubr.bf16.gmra.mxu0 %v7270
    %v7356 = vpop.f32.mrf.mxu0
    %v7357 = vadd.f32 0.0, %v7356
    %v7358 = vpop.f32.mrf.mxu0
    %v7359 = vpop.f32.mrf.mxu0
    %v7360 = vadd.f32 0.0, %v7359
    %v7361 = vpop.f32.mrf.mxu0
    %7362 = vmatprep.mubr.bf16.mxu0 0
    %7363 = vmatmul.mubr.bf16.gmra.mxu0 %v7273
    %v7364 = vpop.f32.mrf.mxu0
    %v7365 = vadd.f32 0.0, %v7364
    %v7366 = vpop.f32.mrf.mxu0
    %v7367 = vpop.f32.mrf.mxu0
    %v7368 = vadd.f32 0.0, %v7367
    %v7369 = vpop.f32.mrf.mxu0
    %7370 = vmatprep.mubr.bf16.mxu0 0
    %7371 = vmatmul.mubr.bf16.gmra.mxu0 %v7276
    %v7372 = vpop.f32.mrf.mxu0
    %v7373 = vadd.f32 0.0, %v7372
    %v7374 = vpop.f32.mrf.mxu0
    %v7375 = vpop.f32.mrf.mxu0
    %v7376 = vadd.f32 0.0, %v7375
    %v7377 = vpop.f32.mrf.mxu0
    %7378 = vmatprep.mubr.bf16.mxu0 0
    %7379 = vmatmul.mubr.bf16.gmra.mxu0 %v7279
    %v7380 = vpop.f32.mrf.mxu0
    %v7381 = vadd.f32 0.0, %v7380
    %v7382 = vpop.f32.mrf.mxu0
    %v7383 = vpop.f32.mrf.mxu0
    %v7384 = vadd.f32 0.0, %v7383
    %v7385 = vpop.f32.mrf.mxu0
    %7386 = vmatprep.mubr.bf16.mxu0 0
    %7387 = vmatmul.mubr.bf16.gmra.mxu0 %v7282
    %v7388 = vpop.f32.mrf.mxu0
    %v7389 = vadd.f32 0.0, %v7388
    %v7390 = vpop.f32.mrf.mxu0
    %v7391 = vpop.f32.mrf.mxu0
    %v7392 = vadd.f32 0.0, %v7391
    %v7393 = vpop.f32.mrf.mxu0
    %7394 = vmatprep.mubr.bf16.mxu0 0
    %7395 = vmatmul.mubr.bf16.gmra.mxu0 %v7285
    %v7396 = vpop.f32.mrf.mxu0
    %v7397 = vadd.f32 0.0, %v7396
    %v7398 = vpop.f32.mrf.mxu0
    %v7399 = vpop.f32.mrf.mxu0
    %v7400 = vadd.f32 0.0, %v7399
    %v7401 = vpop.f32.mrf.mxu0
    %7402 = vmatprep.mubr.bf16.mxu0 0
    %7403 = vmatmul.mubr.bf16.gmra.mxu0 %v7288
    %v7404 = vpop.f32.mrf.mxu0
    %v7405 = vadd.f32 0.0, %v7404
    %v7406 = vpop.f32.mrf.mxu0
    %v7407 = vpop.f32.mrf.mxu0
    %v7408 = vadd.f32 0.0, %v7407
    %v7409 = vpop.f32.mrf.mxu0
    %7410 = vdwg.mxu0
    %v7411 = vsel %vm1407, %v7349, -inf
    %v7412 = vsel %vm1408, %v7352, -inf
    %v7413 = vsel %vm1409, %v7357, -inf
    %v7414 = vsel %vm1410, %v7360, -inf
    %v7415 = vsel %vm1411, %v7365, -inf
    %v7416 = vsel %vm1412, %v7368, -inf
    %v7417 = vsel %vm1413, %v7373, -inf
    %v7418 = vsel %vm1414, %v7376, -inf
    %v7419 = vsel %vm1415, %v7381, -inf
    %v7420 = vsel %vm1416, %v7384, -inf
    %v7421 = vsel %vm1417, %v7389, -inf
    %v7422 = vsel %vm1418, %v7392, -inf
    %v7423 = vsel %vm1419, %v7397, -inf
    %v7424 = vsel %vm1420, %v7400, -inf
    %v7425 = vsel %vm1421, %v7405, -inf
    %v7426 = vsel %vm1422, %v7408, -inf
    %7427 = vmax.xlane.f32.xlu0 %v7411
    %v7428 = vpop.xlane.xlu0 %7427
    %7429 = vmax.xlane.f32.xlu0 %v7412
    %v7430 = vpop.xlane.xlu0 %7429
    %7431 = vmax.xlane.f32.xlu0 %v7413
    %v7432 = vpop.xlane.xlu0 %7431
    %7433 = vmax.xlane.f32.xlu0 %v7414
    %v7434 = vpop.xlane.xlu0 %7433
    %7435 = vmax.xlane.f32.xlu0 %v7415
    %v7436 = vpop.xlane.xlu0 %7435
    %7437 = vmax.xlane.f32.xlu0 %v7416
    %v7438 = vpop.xlane.xlu0 %7437
    %7439 = vmax.xlane.f32.xlu0 %v7417
    %v7440 = vpop.xlane.xlu0 %7439
    %7441 = vmax.xlane.f32.xlu0 %v7418
    %v7442 = vpop.xlane.xlu0 %7441
    %7443 = vmax.xlane.f32.xlu0 %v7419
    %v7444 = vpop.xlane.xlu0 %7443
    %7445 = vmax.xlane.f32.xlu0 %v7420
    %v7446 = vpop.xlane.xlu0 %7445
    %7447 = vmax.xlane.f32.xlu0 %v7421
    %v7448 = vpop.xlane.xlu0 %7447
    %7449 = vmax.xlane.f32.xlu0 %v7422
    %v7450 = vpop.xlane.xlu0 %7449
    %7451 = vmax.xlane.f32.xlu0 %v7423
    %v7452 = vpop.xlane.xlu0 %7451
    %7453 = vmax.xlane.f32.xlu0 %v7424
    %v7454 = vpop.xlane.xlu0 %7453
    %7455 = vmax.xlane.f32.xlu0 %v7425
    %v7456 = vpop.xlane.xlu0 %7455
    %7457 = vmax.xlane.f32.xlu0 %v7426
    %v7458 = vpop.xlane.xlu0 %7457
    %v7459 = vsub.f32 %v7411, %v7428
    %v7460 = vsub.f32 %v7412, %v7430
    %v7461 = vsub.f32 %v7413, %v7432
    %v7462 = vsub.f32 %v7414, %v7434
    %v7463 = vsub.f32 %v7415, %v7436
    %v7464 = vsub.f32 %v7416, %v7438
    %v7465 = vsub.f32 %v7417, %v7440
    %v7466 = vsub.f32 %v7418, %v7442
    %v7467 = vsub.f32 %v7419, %v7444
    %v7468 = vsub.f32 %v7420, %v7446
    %v7469 = vsub.f32 %v7421, %v7448
    %v7470 = vsub.f32 %v7422, %v7450
    %v7471 = vsub.f32 %v7423, %v7452
    %v7472 = vsub.f32 %v7424, %v7454
    %v7473 = vsub.f32 %v7425, %v7456
    %v7474 = vsub.f32 %v7426, %v7458
    %v7475 = vpack.c.bf16 %v7460, %v7459
    %v7476 = vpack.c.bf16 %v7462, %v7461
    %v7477 = vpack.c.bf16 %v7464, %v7463
    %v7478 = vpack.c.bf16 %v7466, %v7465
    %v7479 = vpack.c.bf16 %v7468, %v7467
    %v7480 = vpack.c.bf16 %v7470, %v7469
    %v7481 = vpack.c.bf16 %v7472, %v7471
    %v7482 = vpack.c.bf16 %v7474, %v7473
    %v7484 = vmul.bf16 %v7475, 1069105081
    %v7485 = vpow.bf16.pop %v7484
    %v7487 = vmul.bf16 %v7476, 1069105081
    %v7488 = vpow.bf16.pop %v7487
    %v7490 = vmul.bf16 %v7477, 1069105081
    %v7491 = vpow.bf16.pop %v7490
    %v7493 = vmul.bf16 %v7478, 1069105081
    %v7494 = vpow.bf16.pop %v7493
    %v7496 = vmul.bf16 %v7479, 1069105081
    %v7497 = vpow.bf16.pop %v7496
    %v7499 = vmul.bf16 %v7480, 1069105081
    %v7500 = vpow.bf16.pop %v7499
    %v7502 = vmul.bf16 %v7481, 1069105081
    %v7503 = vpow.bf16.pop %v7502
    %v7505 = vmul.bf16 %v7482, 1069105081
    %v7506 = vpow.bf16.pop %v7505
    %v7507 = vunpack.c.l.bf16 %v7485
    %v7508 = vunpack.c.h.bf16 %v7485
    %v7509 = vunpack.c.l.bf16 %v7488
    %v7510 = vunpack.c.h.bf16 %v7488
    %v7511 = vunpack.c.l.bf16 %v7491
    %v7512 = vunpack.c.h.bf16 %v7491
    %v7513 = vunpack.c.l.bf16 %v7494
    %v7514 = vunpack.c.h.bf16 %v7494
    %v7515 = vunpack.c.l.bf16 %v7497
    %v7516 = vunpack.c.h.bf16 %v7497
    %v7517 = vunpack.c.l.bf16 %v7500
    %v7518 = vunpack.c.h.bf16 %v7500
    %v7519 = vunpack.c.l.bf16 %v7503
    %v7520 = vunpack.c.h.bf16 %v7503
    %v7521 = vunpack.c.l.bf16 %v7506
    %v7522 = vunpack.c.h.bf16 %v7506
    %7523 = vadd.xlane.f32.xlu0 %v7507
    %v7524 = vpop.xlane.xlu0 %7523
    %7525 = vadd.xlane.f32.xlu0 %v7508
    %v7526 = vpop.xlane.xlu0 %7525
    %7527 = vadd.xlane.f32.xlu0 %v7509
    %v7528 = vpop.xlane.xlu0 %7527
    %7529 = vadd.xlane.f32.xlu0 %v7510
    %v7530 = vpop.xlane.xlu0 %7529
    %7531 = vadd.xlane.f32.xlu0 %v7511
    %v7532 = vpop.xlane.xlu0 %7531
    %7533 = vadd.xlane.f32.xlu0 %v7512
    %v7534 = vpop.xlane.xlu0 %7533
    %7535 = vadd.xlane.f32.xlu0 %v7513
    %v7536 = vpop.xlane.xlu0 %7535
    %7537 = vadd.xlane.f32.xlu0 %v7514
    %v7538 = vpop.xlane.xlu0 %7537
    %7539 = vadd.xlane.f32.xlu0 %v7515
    %v7540 = vpop.xlane.xlu0 %7539
    %7541 = vadd.xlane.f32.xlu0 %v7516
    %v7542 = vpop.xlane.xlu0 %7541
    %7543 = vadd.xlane.f32.xlu0 %v7517
    %v7544 = vpop.xlane.xlu0 %7543
    %7545 = vadd.xlane.f32.xlu0 %v7518
    %v7546 = vpop.xlane.xlu0 %7545
    %7547 = vadd.xlane.f32.xlu0 %v7519
    %v7548 = vpop.xlane.xlu0 %7547
    %7549 = vadd.xlane.f32.xlu0 %v7520
    %v7550 = vpop.xlane.xlu0 %7549
    %7551 = vadd.xlane.f32.xlu0 %v7521
    %v7552 = vpop.xlane.xlu0 %7551
    %7553 = vadd.xlane.f32.xlu0 %v7522
    %v7554 = vpop.xlane.xlu0 %7553
    %v7555 = vrcp.pop %v7524
    %v7556 = vrcp.pop %v7526
    %v7557 = vrcp.pop %v7528
    %v7558 = vrcp.pop %v7530
    %v7559 = vrcp.pop %v7532
    %v7560 = vrcp.pop %v7534
    %v7561 = vrcp.pop %v7536
    %v7562 = vrcp.pop %v7538
    %v7563 = vrcp.pop %v7540
    %v7564 = vrcp.pop %v7542
    %v7565 = vrcp.pop %v7544
    %v7566 = vrcp.pop %v7546
    %v7567 = vrcp.pop %v7548
    %v7568 = vrcp.pop %v7550
    %v7569 = vrcp.pop %v7552
    %v7570 = vrcp.pop %v7554
    %7571 = vrot.lane.b32.xlu0 %v1372, 32
    %v7572 = vpop.permute.xlu0 %7571
    %7573 = vrot.lane.b32.xlu0 %v1374, 32
    %v7574 = vpop.permute.xlu0 %7573
    %7575 = vrot.lane.b32.xlu0 %v1376, 32
    %v7576 = vpop.permute.xlu0 %7575
    %7577 = vrot.lane.b32.xlu0 %v1378, 32
    %v7578 = vpop.permute.xlu0 %7577
    %7579 = vrot.lane.b32.xlu0 %v1380, 32
    %v7580 = vpop.permute.xlu0 %7579
    %7581 = vrot.lane.b32.xlu0 %v1382, 32
    %v7582 = vpop.permute.xlu0 %7581
    %7583 = vrot.lane.b32.xlu0 %v1384, 32
    %v7584 = vpop.permute.xlu0 %7583
    %7585 = vrot.lane.b32.xlu0 %v1386, 32
    %v7586 = vpop.permute.xlu0 %7585
    %7595 = vmatprep.subr.bf16.mxu0 0
    %7596 = vmatpush1.bf16.msra.mxu0 %v7586
    %7597 = vmatprep.subr.bf16.mxu0 0
    %7598 = vmatpush1.bf16.msra.mxu0 %v7584
    %7599 = vmatprep.subr.bf16.mxu0 0
    %7600 = vmatpush1.bf16.msra.mxu0 %v7582
    %7601 = vmatprep.subr.bf16.mxu0 0
    %7602 = vmatpush1.bf16.msra.mxu0 %v7580
    %7603 = vmatprep.subr.bf16.mxu0 0
    %7604 = vmatpush1.bf16.msra.mxu0 %v7578
    %7605 = vmatprep.subr.bf16.mxu0 0
    %7606 = vmatpush1.bf16.msra.mxu0 %v7576
    %7607 = vmatprep.subr.bf16.mxu0 0
    %7608 = vmatpush1.bf16.msra.mxu0 %v7574
    %7609 = vmatprep.subr.bf16.mxu0 0
    %7610 = vmatpush1.bf16.msra.mxu0 %v7572
    %7611 = vmatprep.subr.bf16.mxu0 0
    %7612 = vmatpush2.bf16.msra.mxu0 0
    %7613 = vmatprep.subr.bf16.mxu0 0
    %7614 = vmatpush2.bf16.msra.mxu0 0
    %7615 = vmatprep.subr.bf16.mxu0 0
    %7616 = vmatpush2.bf16.msra.mxu0 0
    %7617 = vmatprep.subr.bf16.mxu0 0
    %7618 = vmatpush2.bf16.msra.mxu0 0
    %7619 = vmatprep.subr.bf16.mxu0 0
    %7620 = vmatpush2.bf16.msra.mxu0 0
    %7621 = vmatprep.subr.bf16.mxu0 0
    %7622 = vmatpush2.bf16.msra.mxu0 0
    %7623 = vmatprep.subr.bf16.mxu0 0
    %7624 = vmatpush2.bf16.msra.mxu0 0
    %7625 = vmatprep.subr.bf16.mxu0 0
    %7626 = vmatpush2.bf16.msra.mxu0 0
    %7627 = vmatprep.mubr.bf16.mxu0 0
    %7628 = vmatmul.mubr.bf16.gmra.mxu0 %v7485
    %v7629 = vpop.f32.mrf.mxu0
    %v7630 = vadd.f32 0.0, %v7629
    %v7631 = vpop.f32.mrf.mxu0
    %v7632 = vpop.f32.mrf.mxu0
    %v7633 = vadd.f32 0.0, %v7632
    %v7634 = vpop.f32.mrf.mxu0
    %7635 = vmatprep.mubr.bf16.mxu0 0
    %7636 = vmatmul.mubr.bf16.gmra.mxu0 %v7488
    %v7637 = vpop.f32.mrf.mxu0
    %v7638 = vadd.f32 0.0, %v7637
    %v7639 = vpop.f32.mrf.mxu0
    %v7640 = vpop.f32.mrf.mxu0
    %v7641 = vadd.f32 0.0, %v7640
    %v7642 = vpop.f32.mrf.mxu0
    %7643 = vmatprep.mubr.bf16.mxu0 0
    %7644 = vmatmul.mubr.bf16.gmra.mxu0 %v7491
    %v7645 = vpop.f32.mrf.mxu0
    %v7646 = vadd.f32 0.0, %v7645
    %v7647 = vpop.f32.mrf.mxu0
    %v7648 = vpop.f32.mrf.mxu0
    %v7649 = vadd.f32 0.0, %v7648
    %v7650 = vpop.f32.mrf.mxu0
    %7651 = vmatprep.mubr.bf16.mxu0 0
    %7652 = vmatmul.mubr.bf16.gmra.mxu0 %v7494
    %v7653 = vpop.f32.mrf.mxu0
    %v7654 = vadd.f32 0.0, %v7653
    %v7655 = vpop.f32.mrf.mxu0
    %v7656 = vpop.f32.mrf.mxu0
    %v7657 = vadd.f32 0.0, %v7656
    %v7658 = vpop.f32.mrf.mxu0
    %7659 = vmatprep.mubr.bf16.mxu0 0
    %7660 = vmatmul.mubr.bf16.gmra.mxu0 %v7497
    %v7661 = vpop.f32.mrf.mxu0
    %v7662 = vadd.f32 0.0, %v7661
    %v7663 = vpop.f32.mrf.mxu0
    %v7664 = vpop.f32.mrf.mxu0
    %v7665 = vadd.f32 0.0, %v7664
    %v7666 = vpop.f32.mrf.mxu0
    %7667 = vmatprep.mubr.bf16.mxu0 0
    %7668 = vmatmul.mubr.bf16.gmra.mxu0 %v7500
    %v7669 = vpop.f32.mrf.mxu0
    %v7670 = vadd.f32 0.0, %v7669
    %v7671 = vpop.f32.mrf.mxu0
    %v7672 = vpop.f32.mrf.mxu0
    %v7673 = vadd.f32 0.0, %v7672
    %v7674 = vpop.f32.mrf.mxu0
    %7675 = vmatprep.mubr.bf16.mxu0 0
    %7676 = vmatmul.mubr.bf16.gmra.mxu0 %v7503
    %v7677 = vpop.f32.mrf.mxu0
    %v7678 = vadd.f32 0.0, %v7677
    %v7679 = vpop.f32.mrf.mxu0
    %v7680 = vpop.f32.mrf.mxu0
    %v7681 = vadd.f32 0.0, %v7680
    %v7682 = vpop.f32.mrf.mxu0
    %7683 = vmatprep.mubr.bf16.mxu0 0
    %7684 = vmatmul.mubr.bf16.gmra.mxu0 %v7506
    %v7685 = vpop.f32.mrf.mxu0
    %v7686 = vadd.f32 0.0, %v7685
    %v7687 = vpop.f32.mrf.mxu0
    %v7688 = vpop.f32.mrf.mxu0
    %v7689 = vadd.f32 0.0, %v7688
    %v7690 = vpop.f32.mrf.mxu0
    %7691 = vdwg.mxu0
    %v7692 = vmul.f32 %v7630, %v7555
    %v7693 = vmul.f32 %v7633, %v7556
    %v7694 = vmul.f32 %v7638, %v7557
    %v7695 = vmul.f32 %v7641, %v7558
    %v7696 = vmul.f32 %v7646, %v7559
    %v7697 = vmul.f32 %v7649, %v7560
    %v7698 = vmul.f32 %v7654, %v7561
    %v7699 = vmul.f32 %v7657, %v7562
    %v7700 = vmul.f32 %v7662, %v7563
    %v7701 = vmul.f32 %v7665, %v7564
    %v7702 = vmul.f32 %v7670, %v7565
    %v7703 = vmul.f32 %v7673, %v7566
    %v7704 = vmul.f32 %v7678, %v7567
    %v7705 = vmul.f32 %v7681, %v7568
    %v7706 = vmul.f32 %v7686, %v7569
    %v7707 = vmul.f32 %v7689, %v7570
    %7724 = vrot.lane.b32.xlu0 %v7692, 96
    %v7725 = vpop.permute.xlu0 %7724
    %7726 = vrot.lane.b32.xlu0 %v7693, 96
    %v7727 = vpop.permute.xlu0 %7726
    %7728 = vrot.lane.b32.xlu0 %v7694, 96
    %v7729 = vpop.permute.xlu0 %7728
    %7730 = vrot.lane.b32.xlu0 %v7695, 96
    %v7731 = vpop.permute.xlu0 %7730
    %7732 = vrot.lane.b32.xlu0 %v7696, 96
    %v7733 = vpop.permute.xlu0 %7732
    %7734 = vrot.lane.b32.xlu0 %v7697, 96
    %v7735 = vpop.permute.xlu0 %7734
    %7736 = vrot.lane.b32.xlu0 %v7698, 96
    %v7737 = vpop.permute.xlu0 %7736
    %7738 = vrot.lane.b32.xlu0 %v7699, 96
    %v7739 = vpop.permute.xlu0 %7738
    %7740 = vrot.lane.b32.xlu0 %v7700, 96
    %v7741 = vpop.permute.xlu0 %7740
    %7742 = vrot.lane.b32.xlu0 %v7701, 96
    %v7743 = vpop.permute.xlu0 %7742
    %7744 = vrot.lane.b32.xlu0 %v7702, 96
    %v7745 = vpop.permute.xlu0 %7744
    %7746 = vrot.lane.b32.xlu0 %v7703, 96
    %v7747 = vpop.permute.xlu0 %7746
    %7748 = vrot.lane.b32.xlu0 %v7704, 96
    %v7749 = vpop.permute.xlu0 %7748
    %7750 = vrot.lane.b32.xlu0 %v7705, 96
    %v7751 = vpop.permute.xlu0 %7750
    %7752 = vrot.lane.b32.xlu0 %v7706, 96
    %v7753 = vpop.permute.xlu0 %7752
    %7754 = vrot.lane.b32.xlu0 %v7707, 96
    %v7755 = vpop.permute.xlu0 %7754
    %7772 = vst.msk [vmem:[%s6085] sm:$0xff] %vm3530, %v7725
    %7773 = vst.msk [vmem:[%s6085 + $0x10] sm:$0xff] %vm3530, %v7727
    %7774 = vst.msk [vmem:[%s6085 + $0x20] sm:$0xff] %vm3530, %v7729
    %7775 = vst.msk [vmem:[%s6085 + $0x30] sm:$0xff] %vm3530, %v7731
    %7776 = vst.msk [vmem:[%s6085 + $0x40] sm:$0xff] %vm3530, %v7733
    %7777 = vst.msk [vmem:[%s6085 + $0x50] sm:$0xff] %vm3530, %v7735
    %7778 = vst.msk [vmem:[%s6085 + $0x60] sm:$0xff] %vm3530, %v7737
    %7779 = vst.msk [vmem:[%s6085 + $0x70] sm:$0xff] %vm3530, %v7739
    %7780 = vst.msk [vmem:[%s6085 + $0x80] sm:$0xff] %vm3530, %v7741
    %7781 = vst.msk [vmem:[%s6085 + $0x90] sm:$0xff] %vm3530, %v7743
    %7782 = vst.msk [vmem:[%s6085 + $0xa0] sm:$0xff] %vm3530, %v7745
    %7783 = vst.msk [vmem:[%s6085 + $0xb0] sm:$0xff] %vm3530, %v7747
    %7784 = vst.msk [vmem:[%s6085 + $0xc0] sm:$0xff] %vm3530, %v7749
    %7785 = vst.msk [vmem:[%s6085 + $0xd0] sm:$0xff] %vm3530, %v7751
    %7786 = vst.msk [vmem:[%s6085 + $0xe0] sm:$0xff] %vm3530, %v7753
    %7787 = vst.msk [vmem:[%s6085 + $0xf0] sm:$0xff] %vm3530, %v7755
    %v7789 = vsel %vm1423, %v1327, 0
    %v7792 = vsel %vm1423, %v1331, 0
    %v7795 = vsel %vm1423, %v1335, 0
    %v7798 = vsel %vm1423, %v1339, 0
    %v7801 = vsel %vm1423, %v1343, 0
    %v7804 = vsel %vm1423, %v1347, 0
    %v7807 = vsel %vm1423, %v1351, 0
    %v7810 = vsel %vm1423, %v1355, 0
    %v7813 = vsel %vm1423, %v1325, 0
    %v7816 = vsel %vm1423, %v1329, 0
    %v7819 = vsel %vm1423, %v1333, 0
    %v7822 = vsel %vm1423, %v1337, 0
    %v7825 = vsel %vm1423, %v1341, 0
    %v7828 = vsel %vm1423, %v1345, 0
    %v7831 = vsel %vm1423, %v1349, 0
    %v7834 = vsel %vm1423, %v1353, 0
    %7836 = vmatprep.subr.bf16.mxu0 0
    %7837 = vmatpush1.bf16.xpose.msra.mxu0 %v7834
    %7838 = vmatprep.subr.bf16.mxu0 0
    %7839 = vmatpush1.bf16.xpose.msra.mxu0 %v7831
    %7840 = vmatprep.subr.bf16.mxu0 0
    %7841 = vmatpush1.bf16.xpose.msra.mxu0 %v7828
    %7842 = vmatprep.subr.bf16.mxu0 0
    %7843 = vmatpush1.bf16.xpose.msra.mxu0 %v7825
    %7844 = vmatprep.subr.bf16.mxu0 0
    %7845 = vmatpush1.bf16.xpose.msra.mxu0 %v7822
    %7846 = vmatprep.subr.bf16.mxu0 0
    %7847 = vmatpush1.bf16.xpose.msra.mxu0 %v7819
    %7848 = vmatprep.subr.bf16.mxu0 0
    %7849 = vmatpush1.bf16.xpose.msra.mxu0 %v7816
    %7850 = vmatprep.subr.bf16.mxu0 0
    %7851 = vmatpush1.bf16.xpose.msra.mxu0 %v7813
    %7852 = vmatprep.subr.bf16.mxu0 0
    %7853 = vmatpush2.bf16.xpose.msra.mxu0 0
    %7854 = vmatprep.subr.bf16.mxu0 0
    %7855 = vmatpush2.bf16.xpose.msra.mxu0 0
    %7856 = vmatprep.subr.bf16.mxu0 0
    %7857 = vmatpush2.bf16.xpose.msra.mxu0 0
    %7858 = vmatprep.subr.bf16.mxu0 0
    %7859 = vmatpush2.bf16.xpose.msra.mxu0 0
    %7860 = vmatprep.subr.bf16.mxu0 0
    %7861 = vmatpush2.bf16.xpose.msra.mxu0 0
    %7862 = vmatprep.subr.bf16.mxu0 0
    %7863 = vmatpush2.bf16.xpose.msra.mxu0 0
    %7864 = vmatprep.subr.bf16.mxu0 0
    %7865 = vmatpush2.bf16.xpose.msra.mxu0 0
    %7866 = vmatprep.subr.bf16.mxu0 0
    %7867 = vmatpush2.bf16.xpose.msra.mxu0 0
    %7868 = vmatprep.mubr.bf16.mxu0 0
    %7869 = vmatmul.mubr.bf16.gmra.mxu0 %v7789
    %v7870 = vpop.f32.mrf.mxu0
    %v7871 = vadd.f32 0.0, %v7870
    %v7872 = vpop.f32.mrf.mxu0
    %v7873 = vpop.f32.mrf.mxu0
    %v7874 = vadd.f32 0.0, %v7873
    %v7875 = vpop.f32.mrf.mxu0
    %7876 = vmatprep.mubr.bf16.mxu0 0
    %7877 = vmatmul.mubr.bf16.gmra.mxu0 %v7792
    %v7878 = vpop.f32.mrf.mxu0
    %v7879 = vadd.f32 0.0, %v7878
    %v7880 = vpop.f32.mrf.mxu0
    %v7881 = vpop.f32.mrf.mxu0
    %v7882 = vadd.f32 0.0, %v7881
    %v7883 = vpop.f32.mrf.mxu0
    %7884 = vmatprep.mubr.bf16.mxu0 0
    %7885 = vmatmul.mubr.bf16.gmra.mxu0 %v7795
    %v7886 = vpop.f32.mrf.mxu0
    %v7887 = vadd.f32 0.0, %v7886
    %v7888 = vpop.f32.mrf.mxu0
    %v7889 = vpop.f32.mrf.mxu0
    %v7890 = vadd.f32 0.0, %v7889
    %v7891 = vpop.f32.mrf.mxu0
    %7892 = vmatprep.mubr.bf16.mxu0 0
    %7893 = vmatmul.mubr.bf16.gmra.mxu0 %v7798
    %v7894 = vpop.f32.mrf.mxu0
    %v7895 = vadd.f32 0.0, %v7894
    %v7896 = vpop.f32.mrf.mxu0
    %v7897 = vpop.f32.mrf.mxu0
    %v7898 = vadd.f32 0.0, %v7897
    %v7899 = vpop.f32.mrf.mxu0
    %7900 = vmatprep.mubr.bf16.mxu0 0
    %7901 = vmatmul.mubr.bf16.gmra.mxu0 %v7801
    %v7902 = vpop.f32.mrf.mxu0
    %v7903 = vadd.f32 0.0, %v7902
    %v7904 = vpop.f32.mrf.mxu0
    %v7905 = vpop.f32.mrf.mxu0
    %v7906 = vadd.f32 0.0, %v7905
    %v7907 = vpop.f32.mrf.mxu0
    %7908 = vmatprep.mubr.bf16.mxu0 0
    %7909 = vmatmul.mubr.bf16.gmra.mxu0 %v7804
    %v7910 = vpop.f32.mrf.mxu0
    %v7911 = vadd.f32 0.0, %v7910
    %v7912 = vpop.f32.mrf.mxu0
    %v7913 = vpop.f32.mrf.mxu0
    %v7914 = vadd.f32 0.0, %v7913
    %v7915 = vpop.f32.mrf.mxu0
    %7916 = vmatprep.mubr.bf16.mxu0 0
    %7917 = vmatmul.mubr.bf16.gmra.mxu0 %v7807
    %v7918 = vpop.f32.mrf.mxu0
    %v7919 = vadd.f32 0.0, %v7918
    %v7920 = vpop.f32.mrf.mxu0
    %v7921 = vpop.f32.mrf.mxu0
    %v7922 = vadd.f32 0.0, %v7921
    %v7923 = vpop.f32.mrf.mxu0
    %7924 = vmatprep.mubr.bf16.mxu0 0
    %7925 = vmatmul.mubr.bf16.gmra.mxu0 %v7810
    %v7926 = vpop.f32.mrf.mxu0
    %v7927 = vadd.f32 0.0, %v7926
    %v7928 = vpop.f32.mrf.mxu0
    %v7929 = vpop.f32.mrf.mxu0
    %v7930 = vadd.f32 0.0, %v7929
    %v7931 = vpop.f32.mrf.mxu0
    %7932 = vdwg.mxu0
    %v7933 = vsel %vm1407, %v7871, -inf
    %v7934 = vsel %vm1408, %v7874, -inf
    %v7935 = vsel %vm1409, %v7879, -inf
    %v7936 = vsel %vm1410, %v7882, -inf
    %v7937 = vsel %vm1411, %v7887, -inf
    %v7938 = vsel %vm1412, %v7890, -inf
    %v7939 = vsel %vm1413, %v7895, -inf
    %v7940 = vsel %vm1414, %v7898, -inf
    %v7941 = vsel %vm1415, %v7903, -inf
    %v7942 = vsel %vm1416, %v7906, -inf
    %v7943 = vsel %vm1417, %v7911, -inf
    %v7944 = vsel %vm1418, %v7914, -inf
    %v7945 = vsel %vm1419, %v7919, -inf
    %v7946 = vsel %vm1420, %v7922, -inf
    %v7947 = vsel %vm1421, %v7927, -inf
    %v7948 = vsel %vm1422, %v7930, -inf
    %7949 = vmax.xlane.f32.xlu0 %v7933
    %v7950 = vpop.xlane.xlu0 %7949
    %7951 = vmax.xlane.f32.xlu0 %v7934
    %v7952 = vpop.xlane.xlu0 %7951
    %7953 = vmax.xlane.f32.xlu0 %v7935
    %v7954 = vpop.xlane.xlu0 %7953
    %7955 = vmax.xlane.f32.xlu0 %v7936
    %v7956 = vpop.xlane.xlu0 %7955
    %7957 = vmax.xlane.f32.xlu0 %v7937
    %v7958 = vpop.xlane.xlu0 %7957
    %7959 = vmax.xlane.f32.xlu0 %v7938
    %v7960 = vpop.xlane.xlu0 %7959
    %7961 = vmax.xlane.f32.xlu0 %v7939
    %v7962 = vpop.xlane.xlu0 %7961
    %7963 = vmax.xlane.f32.xlu0 %v7940
    %v7964 = vpop.xlane.xlu0 %7963
    %7965 = vmax.xlane.f32.xlu0 %v7941
    %v7966 = vpop.xlane.xlu0 %7965
    %7967 = vmax.xlane.f32.xlu0 %v7942
    %v7968 = vpop.xlane.xlu0 %7967
    %7969 = vmax.xlane.f32.xlu0 %v7943
    %v7970 = vpop.xlane.xlu0 %7969
    %7971 = vmax.xlane.f32.xlu0 %v7944
    %v7972 = vpop.xlane.xlu0 %7971
    %7973 = vmax.xlane.f32.xlu0 %v7945
    %v7974 = vpop.xlane.xlu0 %7973
    %7975 = vmax.xlane.f32.xlu0 %v7946
    %v7976 = vpop.xlane.xlu0 %7975
    %7977 = vmax.xlane.f32.xlu0 %v7947
    %v7978 = vpop.xlane.xlu0 %7977
    %7979 = vmax.xlane.f32.xlu0 %v7948
    %v7980 = vpop.xlane.xlu0 %7979
    %v7981 = vsub.f32 %v7933, %v7950
    %v7982 = vsub.f32 %v7934, %v7952
    %v7983 = vsub.f32 %v7935, %v7954
    %v7984 = vsub.f32 %v7936, %v7956
    %v7985 = vsub.f32 %v7937, %v7958
    %v7986 = vsub.f32 %v7938, %v7960
    %v7987 = vsub.f32 %v7939, %v7962
    %v7988 = vsub.f32 %v7940, %v7964
    %v7989 = vsub.f32 %v7941, %v7966
    %v7990 = vsub.f32 %v7942, %v7968
    %v7991 = vsub.f32 %v7943, %v7970
    %v7992 = vsub.f32 %v7944, %v7972
    %v7993 = vsub.f32 %v7945, %v7974
    %v7994 = vsub.f32 %v7946, %v7976
    %v7995 = vsub.f32 %v7947, %v7978
    %v7996 = vsub.f32 %v7948, %v7980
    %v7997 = vpack.c.bf16 %v7982, %v7981
    %v7998 = vpack.c.bf16 %v7984, %v7983
    %v7999 = vpack.c.bf16 %v7986, %v7985
    %v8000 = vpack.c.bf16 %v7988, %v7987
    %v8001 = vpack.c.bf16 %v7990, %v7989
    %v8002 = vpack.c.bf16 %v7992, %v7991
    %v8003 = vpack.c.bf16 %v7994, %v7993
    %v8004 = vpack.c.bf16 %v7996, %v7995
    %v8006 = vmul.bf16 %v7997, 1069105081
    %v8007 = vpow.bf16.pop %v8006
    %v8009 = vmul.bf16 %v7998, 1069105081
    %v8010 = vpow.bf16.pop %v8009
    %v8012 = vmul.bf16 %v7999, 1069105081
    %v8013 = vpow.bf16.pop %v8012
    %v8015 = vmul.bf16 %v8000, 1069105081
    %v8016 = vpow.bf16.pop %v8015
    %v8018 = vmul.bf16 %v8001, 1069105081
    %v8019 = vpow.bf16.pop %v8018
    %v8021 = vmul.bf16 %v8002, 1069105081
    %v8022 = vpow.bf16.pop %v8021
    %v8024 = vmul.bf16 %v8003, 1069105081
    %v8025 = vpow.bf16.pop %v8024
    %v8027 = vmul.bf16 %v8004, 1069105081
    %v8028 = vpow.bf16.pop %v8027
    %v8029 = vunpack.c.l.bf16 %v8007
    %v8030 = vunpack.c.h.bf16 %v8007
    %v8031 = vunpack.c.l.bf16 %v8010
    %v8032 = vunpack.c.h.bf16 %v8010
    %v8033 = vunpack.c.l.bf16 %v8013
    %v8034 = vunpack.c.h.bf16 %v8013
    %v8035 = vunpack.c.l.bf16 %v8016
    %v8036 = vunpack.c.h.bf16 %v8016
    %v8037 = vunpack.c.l.bf16 %v8019
    %v8038 = vunpack.c.h.bf16 %v8019
    %v8039 = vunpack.c.l.bf16 %v8022
    %v8040 = vunpack.c.h.bf16 %v8022
    %v8041 = vunpack.c.l.bf16 %v8025
    %v8042 = vunpack.c.h.bf16 %v8025
    %v8043 = vunpack.c.l.bf16 %v8028
    %v8044 = vunpack.c.h.bf16 %v8028
    %8045 = vadd.xlane.f32.xlu0 %v8029
    %v8046 = vpop.xlane.xlu0 %8045
    %8047 = vadd.xlane.f32.xlu0 %v8030
    %v8048 = vpop.xlane.xlu0 %8047
    %8049 = vadd.xlane.f32.xlu0 %v8031
    %v8050 = vpop.xlane.xlu0 %8049
    %8051 = vadd.xlane.f32.xlu0 %v8032
    %v8052 = vpop.xlane.xlu0 %8051
    %8053 = vadd.xlane.f32.xlu0 %v8033
    %v8054 = vpop.xlane.xlu0 %8053
    %8055 = vadd.xlane.f32.xlu0 %v8034
    %v8056 = vpop.xlane.xlu0 %8055
    %8057 = vadd.xlane.f32.xlu0 %v8035
    %v8058 = vpop.xlane.xlu0 %8057
    %8059 = vadd.xlane.f32.xlu0 %v8036
    %v8060 = vpop.xlane.xlu0 %8059
    %8061 = vadd.xlane.f32.xlu0 %v8037
    %v8062 = vpop.xlane.xlu0 %8061
    %8063 = vadd.xlane.f32.xlu0 %v8038
    %v8064 = vpop.xlane.xlu0 %8063
    %8065 = vadd.xlane.f32.xlu0 %v8039
    %v8066 = vpop.xlane.xlu0 %8065
    %8067 = vadd.xlane.f32.xlu0 %v8040
    %v8068 = vpop.xlane.xlu0 %8067
    %8069 = vadd.xlane.f32.xlu0 %v8041
    %v8070 = vpop.xlane.xlu0 %8069
    %8071 = vadd.xlane.f32.xlu0 %v8042
    %v8072 = vpop.xlane.xlu0 %8071
    %8073 = vadd.xlane.f32.xlu0 %v8043
    %v8074 = vpop.xlane.xlu0 %8073
    %8075 = vadd.xlane.f32.xlu0 %v8044
    %v8076 = vpop.xlane.xlu0 %8075
    %v8077 = vrcp.pop %v8046
    %v8078 = vrcp.pop %v8048
    %v8079 = vrcp.pop %v8050
    %v8080 = vrcp.pop %v8052
    %v8081 = vrcp.pop %v8054
    %v8082 = vrcp.pop %v8056
    %v8083 = vrcp.pop %v8058
    %v8084 = vrcp.pop %v8060
    %v8085 = vrcp.pop %v8062
    %v8086 = vrcp.pop %v8064
    %v8087 = vrcp.pop %v8066
    %v8088 = vrcp.pop %v8068
    %v8089 = vrcp.pop %v8070
    %v8090 = vrcp.pop %v8072
    %v8091 = vrcp.pop %v8074
    %v8092 = vrcp.pop %v8076
    %8093 = vmatprep.subr.bf16.mxu0 0
    %8094 = vmatpush1.bf16.msra.mxu0 %v1387
    %8095 = vmatprep.subr.bf16.mxu0 0
    %8096 = vmatpush1.bf16.msra.mxu0 %v1385
    %8097 = vmatprep.subr.bf16.mxu0 0
    %8098 = vmatpush1.bf16.msra.mxu0 %v1383
    %8099 = vmatprep.subr.bf16.mxu0 0
    %8100 = vmatpush1.bf16.msra.mxu0 %v1381
    %8101 = vmatprep.subr.bf16.mxu0 0
    %8102 = vmatpush1.bf16.msra.mxu0 %v1379
    %8103 = vmatprep.subr.bf16.mxu0 0
    %8104 = vmatpush1.bf16.msra.mxu0 %v1377
    %8105 = vmatprep.subr.bf16.mxu0 0
    %8106 = vmatpush1.bf16.msra.mxu0 %v1375
    %8107 = vmatprep.subr.bf16.mxu0 0
    %8108 = vmatpush1.bf16.msra.mxu0 %v1373
    %8109 = vmatprep.subr.bf16.mxu0 0
    %8110 = vmatpush2.bf16.msra.mxu0 0
    %8111 = vmatprep.subr.bf16.mxu0 0
    %8112 = vmatpush2.bf16.msra.mxu0 0
    %8113 = vmatprep.subr.bf16.mxu0 0
    %8114 = vmatpush2.bf16.msra.mxu0 0
    %8115 = vmatprep.subr.bf16.mxu0 0
    %8116 = vmatpush2.bf16.msra.mxu0 0
    %8117 = vmatprep.subr.bf16.mxu0 0
    %8118 = vmatpush2.bf16.msra.mxu0 0
    %8119 = vmatprep.subr.bf16.mxu0 0
    %8120 = vmatpush2.bf16.msra.mxu0 0
    %8121 = vmatprep.subr.bf16.mxu0 0
    %8122 = vmatpush2.bf16.msra.mxu0 0
    %8123 = vmatprep.subr.bf16.mxu0 0
    %8124 = vmatpush2.bf16.msra.mxu0 0
    %8125 = vmatprep.mubr.bf16.mxu0 0
    %8126 = vmatmul.mubr.bf16.gmra.mxu0 %v8007
    %v8127 = vpop.f32.mrf.mxu0
    %v8128 = vadd.f32 0.0, %v8127
    %v8129 = vpop.f32.mrf.mxu0
    %v8130 = vpop.f32.mrf.mxu0
    %v8131 = vadd.f32 0.0, %v8130
    %v8132 = vpop.f32.mrf.mxu0
    %8133 = vmatprep.mubr.bf16.mxu0 0
    %8134 = vmatmul.mubr.bf16.gmra.mxu0 %v8010
    %v8135 = vpop.f32.mrf.mxu0
    %v8136 = vadd.f32 0.0, %v8135
    %v8137 = vpop.f32.mrf.mxu0
    %v8138 = vpop.f32.mrf.mxu0
    %v8139 = vadd.f32 0.0, %v8138
    %v8140 = vpop.f32.mrf.mxu0
    %8141 = vmatprep.mubr.bf16.mxu0 0
    %8142 = vmatmul.mubr.bf16.gmra.mxu0 %v8013
    %v8143 = vpop.f32.mrf.mxu0
    %v8144 = vadd.f32 0.0, %v8143
    %v8145 = vpop.f32.mrf.mxu0
    %v8146 = vpop.f32.mrf.mxu0
    %v8147 = vadd.f32 0.0, %v8146
    %v8148 = vpop.f32.mrf.mxu0
    %8149 = vmatprep.mubr.bf16.mxu0 0
    %8150 = vmatmul.mubr.bf16.gmra.mxu0 %v8016
    %v8151 = vpop.f32.mrf.mxu0
    %v8152 = vadd.f32 0.0, %v8151
    %v8153 = vpop.f32.mrf.mxu0
    %v8154 = vpop.f32.mrf.mxu0
    %v8155 = vadd.f32 0.0, %v8154
    %v8156 = vpop.f32.mrf.mxu0
    %8157 = vmatprep.mubr.bf16.mxu0 0
    %8158 = vmatmul.mubr.bf16.gmra.mxu0 %v8019
    %v8159 = vpop.f32.mrf.mxu0
    %v8160 = vadd.f32 0.0, %v8159
    %v8161 = vpop.f32.mrf.mxu0
    %v8162 = vpop.f32.mrf.mxu0
    %v8163 = vadd.f32 0.0, %v8162
    %v8164 = vpop.f32.mrf.mxu0
    %8165 = vmatprep.mubr.bf16.mxu0 0
    %8166 = vmatmul.mubr.bf16.gmra.mxu0 %v8022
    %v8167 = vpop.f32.mrf.mxu0
    %v8168 = vadd.f32 0.0, %v8167
    %v8169 = vpop.f32.mrf.mxu0
    %v8170 = vpop.f32.mrf.mxu0
    %v8171 = vadd.f32 0.0, %v8170
    %v8172 = vpop.f32.mrf.mxu0
    %8173 = vmatprep.mubr.bf16.mxu0 0
    %8174 = vmatmul.mubr.bf16.gmra.mxu0 %v8025
    %v8175 = vpop.f32.mrf.mxu0
    %v8176 = vadd.f32 0.0, %v8175
    %v8177 = vpop.f32.mrf.mxu0
    %v8178 = vpop.f32.mrf.mxu0
    %v8179 = vadd.f32 0.0, %v8178
    %v8180 = vpop.f32.mrf.mxu0
    %8181 = vmatprep.mubr.bf16.mxu0 0
    %8182 = vmatmul.mubr.bf16.gmra.mxu0 %v8028
    %v8183 = vpop.f32.mrf.mxu0
    %v8184 = vadd.f32 0.0, %v8183
    %v8185 = vpop.f32.mrf.mxu0
    %v8186 = vpop.f32.mrf.mxu0
    %v8187 = vadd.f32 0.0, %v8186
    %v8188 = vpop.f32.mrf.mxu0
    %8189 = vdwg.mxu0
    %v8190 = vmul.f32 %v8128, %v8077
    %v8191 = vmul.f32 %v8131, %v8078
    %v8192 = vmul.f32 %v8136, %v8079
    %v8193 = vmul.f32 %v8139, %v8080
    %v8194 = vmul.f32 %v8144, %v8081
    %v8195 = vmul.f32 %v8147, %v8082
    %v8196 = vmul.f32 %v8152, %v8083
    %v8197 = vmul.f32 %v8155, %v8084
    %v8198 = vmul.f32 %v8160, %v8085
    %v8199 = vmul.f32 %v8163, %v8086
    %v8200 = vmul.f32 %v8168, %v8087
    %v8201 = vmul.f32 %v8171, %v8088
    %v8202 = vmul.f32 %v8176, %v8089
    %v8203 = vmul.f32 %v8179, %v8090
    %v8204 = vmul.f32 %v8184, %v8091
    %v8205 = vmul.f32 %v8187, %v8092
    %8206 = vst.msk [vmem:[%s6085 + $0x8] sm:$0xff] %vm1423, %v8190
    %8207 = vst.msk [vmem:[%s6085 + $0x18] sm:$0xff] %vm1423, %v8191
    %8208 = vst.msk [vmem:[%s6085 + $0x28] sm:$0xff] %vm1423, %v8192
    %8209 = vst.msk [vmem:[%s6085 + $0x38] sm:$0xff] %vm1423, %v8193
    %8210 = vst.msk [vmem:[%s6085 + $0x48] sm:$0xff] %vm1423, %v8194
    %8211 = vst.msk [vmem:[%s6085 + $0x58] sm:$0xff] %vm1423, %v8195
    %8212 = vst.msk [vmem:[%s6085 + $0x68] sm:$0xff] %vm1423, %v8196
    %8213 = vst.msk [vmem:[%s6085 + $0x78] sm:$0xff] %vm1423, %v8197
    %8214 = vst.msk [vmem:[%s6085 + $0x88] sm:$0xff] %vm1423, %v8198
    %8215 = vst.msk [vmem:[%s6085 + $0x98] sm:$0xff] %vm1423, %v8199
    %8216 = vst.msk [vmem:[%s6085 + $0xa8] sm:$0xff] %vm1423, %v8200
    %8217 = vst.msk [vmem:[%s6085 + $0xb8] sm:$0xff] %vm1423, %v8201
    %8218 = vst.msk [vmem:[%s6085 + $0xc8] sm:$0xff] %vm1423, %v8202
    %8219 = vst.msk [vmem:[%s6085 + $0xd8] sm:$0xff] %vm1423, %v8203
    %8220 = vst.msk [vmem:[%s6085 + $0xe8] sm:$0xff] %vm1423, %v8204
    %8221 = vst.msk [vmem:[%s6085 + $0xf8] sm:$0xff] %vm1423, %v8205
    %8230 = vrot.lane.b32.xlu0 %v1327, 96
    %v8231 = vpop.permute.xlu0 %8230
    %8232 = vrot.lane.b32.xlu0 %v1331, 96
    %v8233 = vpop.permute.xlu0 %8232
    %8234 = vrot.lane.b32.xlu0 %v1335, 96
    %v8235 = vpop.permute.xlu0 %8234
    %8236 = vrot.lane.b32.xlu0 %v1339, 96
    %v8237 = vpop.permute.xlu0 %8236
    %8238 = vrot.lane.b32.xlu0 %v1343, 96
    %v8239 = vpop.permute.xlu0 %8238
    %8240 = vrot.lane.b32.xlu0 %v1347, 96
    %v8241 = vpop.permute.xlu0 %8240
    %8242 = vrot.lane.b32.xlu0 %v1351, 96
    %v8243 = vpop.permute.xlu0 %8242
    %8244 = vrot.lane.b32.xlu0 %v1355, 96
    %v8245 = vpop.permute.xlu0 %8244
    %8254 = vrot.lane.b32.xlu0 %v1325, 96
    %v8255 = vpop.permute.xlu0 %8254
    %8256 = vrot.lane.b32.xlu0 %v1329, 96
    %v8257 = vpop.permute.xlu0 %8256
    %8258 = vrot.lane.b32.xlu0 %v1333, 96
    %v8259 = vpop.permute.xlu0 %8258
    %8260 = vrot.lane.b32.xlu0 %v1337, 96
    %v8261 = vpop.permute.xlu0 %8260
    %8262 = vrot.lane.b32.xlu0 %v1341, 96
    %v8263 = vpop.permute.xlu0 %8262
    %8264 = vrot.lane.b32.xlu0 %v1345, 96
    %v8265 = vpop.permute.xlu0 %8264
    %8266 = vrot.lane.b32.xlu0 %v1349, 96
    %v8267 = vpop.permute.xlu0 %8266
    %8268 = vrot.lane.b32.xlu0 %v1353, 96
    %v8269 = vpop.permute.xlu0 %8268
    %v8271 = vsel %vm1423, %v8231, 0
    %v8274 = vsel %vm1423, %v8233, 0
    %v8277 = vsel %vm1423, %v8235, 0
    %v8280 = vsel %vm1423, %v8237, 0
    %v8283 = vsel %vm1423, %v8239, 0
    %v8286 = vsel %vm1423, %v8241, 0
    %v8289 = vsel %vm1423, %v8243, 0
    %v8292 = vsel %vm1423, %v8245, 0
    %v8295 = vsel %vm1423, %v8255, 0
    %v8298 = vsel %vm1423, %v8257, 0
    %v8301 = vsel %vm1423, %v8259, 0
    %v8304 = vsel %vm1423, %v8261, 0
    %v8307 = vsel %vm1423, %v8263, 0
    %v8310 = vsel %vm1423, %v8265, 0
    %v8313 = vsel %vm1423, %v8267, 0
    %v8316 = vsel %vm1423, %v8269, 0
    %8318 = vmatprep.subr.bf16.mxu0 0
    %8319 = vmatpush1.bf16.xpose.msra.mxu0 %v8316
    %8320 = vmatprep.subr.bf16.mxu0 0
    %8321 = vmatpush1.bf16.xpose.msra.mxu0 %v8313
    %8322 = vmatprep.subr.bf16.mxu0 0
    %8323 = vmatpush1.bf16.xpose.msra.mxu0 %v8310
    %8324 = vmatprep.subr.bf16.mxu0 0
    %8325 = vmatpush1.bf16.xpose.msra.mxu0 %v8307
    %8326 = vmatprep.subr.bf16.mxu0 0
    %8327 = vmatpush1.bf16.xpose.msra.mxu0 %v8304
    %8328 = vmatprep.subr.bf16.mxu0 0
    %8329 = vmatpush1.bf16.xpose.msra.mxu0 %v8301
    %8330 = vmatprep.subr.bf16.mxu0 0
    %8331 = vmatpush1.bf16.xpose.msra.mxu0 %v8298
    %8332 = vmatprep.subr.bf16.mxu0 0
    %8333 = vmatpush1.bf16.xpose.msra.mxu0 %v8295
    %8334 = vmatprep.subr.bf16.mxu0 0
    %8335 = vmatpush2.bf16.xpose.msra.mxu0 0
    %8336 = vmatprep.subr.bf16.mxu0 0
    %8337 = vmatpush2.bf16.xpose.msra.mxu0 0
    %8338 = vmatprep.subr.bf16.mxu0 0
    %8339 = vmatpush2.bf16.xpose.msra.mxu0 0
    %8340 = vmatprep.subr.bf16.mxu0 0
    %8341 = vmatpush2.bf16.xpose.msra.mxu0 0
    %8342 = vmatprep.subr.bf16.mxu0 0
    %8343 = vmatpush2.bf16.xpose.msra.mxu0 0
    %8344 = vmatprep.subr.bf16.mxu0 0
    %8345 = vmatpush2.bf16.xpose.msra.mxu0 0
    %8346 = vmatprep.subr.bf16.mxu0 0
    %8347 = vmatpush2.bf16.xpose.msra.mxu0 0
    %8348 = vmatprep.subr.bf16.mxu0 0
    %8349 = vmatpush2.bf16.xpose.msra.mxu0 0
    %8350 = vmatprep.mubr.bf16.mxu0 0
    %8351 = vmatmul.mubr.bf16.gmra.mxu0 %v8271
    %v8352 = vpop.f32.mrf.mxu0
    %v8353 = vadd.f32 0.0, %v8352
    %v8354 = vpop.f32.mrf.mxu0
    %v8355 = vpop.f32.mrf.mxu0
    %v8356 = vadd.f32 0.0, %v8355
    %v8357 = vpop.f32.mrf.mxu0
    %8358 = vmatprep.mubr.bf16.mxu0 0
    %8359 = vmatmul.mubr.bf16.gmra.mxu0 %v8274
    %v8360 = vpop.f32.mrf.mxu0
    %v8361 = vadd.f32 0.0, %v8360
    %v8362 = vpop.f32.mrf.mxu0
    %v8363 = vpop.f32.mrf.mxu0
    %v8364 = vadd.f32 0.0, %v8363
    %v8365 = vpop.f32.mrf.mxu0
    %8366 = vmatprep.mubr.bf16.mxu0 0
    %8367 = vmatmul.mubr.bf16.gmra.mxu0 %v8277
    %v8368 = vpop.f32.mrf.mxu0
    %v8369 = vadd.f32 0.0, %v8368
    %v8370 = vpop.f32.mrf.mxu0
    %v8371 = vpop.f32.mrf.mxu0
    %v8372 = vadd.f32 0.0, %v8371
    %v8373 = vpop.f32.mrf.mxu0
    %8374 = vmatprep.mubr.bf16.mxu0 0
    %8375 = vmatmul.mubr.bf16.gmra.mxu0 %v8280
    %v8376 = vpop.f32.mrf.mxu0
    %v8377 = vadd.f32 0.0, %v8376
    %v8378 = vpop.f32.mrf.mxu0
    %v8379 = vpop.f32.mrf.mxu0
    %v8380 = vadd.f32 0.0, %v8379
    %v8381 = vpop.f32.mrf.mxu0
    %8382 = vmatprep.mubr.bf16.mxu0 0
    %8383 = vmatmul.mubr.bf16.gmra.mxu0 %v8283
    %v8384 = vpop.f32.mrf.mxu0
    %v8385 = vadd.f32 0.0, %v8384
    %v8386 = vpop.f32.mrf.mxu0
    %v8387 = vpop.f32.mrf.mxu0
    %v8388 = vadd.f32 0.0, %v8387
    %v8389 = vpop.f32.mrf.mxu0
    %8390 = vmatprep.mubr.bf16.mxu0 0
    %8391 = vmatmul.mubr.bf16.gmra.mxu0 %v8286
    %v8392 = vpop.f32.mrf.mxu0
    %v8393 = vadd.f32 0.0, %v8392
    %v8394 = vpop.f32.mrf.mxu0
    %v8395 = vpop.f32.mrf.mxu0
    %v8396 = vadd.f32 0.0, %v8395
    %v8397 = vpop.f32.mrf.mxu0
    %8398 = vmatprep.mubr.bf16.mxu0 0
    %8399 = vmatmul.mubr.bf16.gmra.mxu0 %v8289
    %v8400 = vpop.f32.mrf.mxu0
    %v8401 = vadd.f32 0.0, %v8400
    %v8402 = vpop.f32.mrf.mxu0
    %v8403 = vpop.f32.mrf.mxu0
    %v8404 = vadd.f32 0.0, %v8403
    %v8405 = vpop.f32.mrf.mxu0
    %8406 = vmatprep.mubr.bf16.mxu0 0
    %8407 = vmatmul.mubr.bf16.gmra.mxu0 %v8292
    %v8408 = vpop.f32.mrf.mxu0
    %v8409 = vadd.f32 0.0, %v8408
    %v8410 = vpop.f32.mrf.mxu0
    %v8411 = vpop.f32.mrf.mxu0
    %v8412 = vadd.f32 0.0, %v8411
    %v8413 = vpop.f32.mrf.mxu0
    %8414 = vdwg.mxu0
    %v8415 = vsel %vm1407, %v8353, -inf
    %v8416 = vsel %vm1408, %v8356, -inf
    %v8417 = vsel %vm1409, %v8361, -inf
    %v8418 = vsel %vm1410, %v8364, -inf
    %v8419 = vsel %vm1411, %v8369, -inf
    %v8420 = vsel %vm1412, %v8372, -inf
    %v8421 = vsel %vm1413, %v8377, -inf
    %v8422 = vsel %vm1414, %v8380, -inf
    %v8423 = vsel %vm1415, %v8385, -inf
    %v8424 = vsel %vm1416, %v8388, -inf
    %v8425 = vsel %vm1417, %v8393, -inf
    %v8426 = vsel %vm1418, %v8396, -inf
    %v8427 = vsel %vm1419, %v8401, -inf
    %v8428 = vsel %vm1420, %v8404, -inf
    %v8429 = vsel %vm1421, %v8409, -inf
    %v8430 = vsel %vm1422, %v8412, -inf
    %8431 = vmax.xlane.f32.xlu0 %v8415
    %v8432 = vpop.xlane.xlu0 %8431
    %8433 = vmax.xlane.f32.xlu0 %v8416
    %v8434 = vpop.xlane.xlu0 %8433
    %8435 = vmax.xlane.f32.xlu0 %v8417
    %v8436 = vpop.xlane.xlu0 %8435
    %8437 = vmax.xlane.f32.xlu0 %v8418
    %v8438 = vpop.xlane.xlu0 %8437
    %8439 = vmax.xlane.f32.xlu0 %v8419
    %v8440 = vpop.xlane.xlu0 %8439
    %8441 = vmax.xlane.f32.xlu0 %v8420
    %v8442 = vpop.xlane.xlu0 %8441
    %8443 = vmax.xlane.f32.xlu0 %v8421
    %v8444 = vpop.xlane.xlu0 %8443
    %8445 = vmax.xlane.f32.xlu0 %v8422
    %v8446 = vpop.xlane.xlu0 %8445
    %8447 = vmax.xlane.f32.xlu0 %v8423
    %v8448 = vpop.xlane.xlu0 %8447
    %8449 = vmax.xlane.f32.xlu0 %v8424
    %v8450 = vpop.xlane.xlu0 %8449
    %8451 = vmax.xlane.f32.xlu0 %v8425
    %v8452 = vpop.xlane.xlu0 %8451
    %8453 = vmax.xlane.f32.xlu0 %v8426
    %v8454 = vpop.xlane.xlu0 %8453
    %8455 = vmax.xlane.f32.xlu0 %v8427
    %v8456 = vpop.xlane.xlu0 %8455
    %8457 = vmax.xlane.f32.xlu0 %v8428
    %v8458 = vpop.xlane.xlu0 %8457
    %8459 = vmax.xlane.f32.xlu0 %v8429
    %v8460 = vpop.xlane.xlu0 %8459
    %8461 = vmax.xlane.f32.xlu0 %v8430
    %v8462 = vpop.xlane.xlu0 %8461
    %v8463 = vsub.f32 %v8415, %v8432
    %v8464 = vsub.f32 %v8416, %v8434
    %v8465 = vsub.f32 %v8417, %v8436
    %v8466 = vsub.f32 %v8418, %v8438
    %v8467 = vsub.f32 %v8419, %v8440
    %v8468 = vsub.f32 %v8420, %v8442
    %v8469 = vsub.f32 %v8421, %v8444
    %v8470 = vsub.f32 %v8422, %v8446
    %v8471 = vsub.f32 %v8423, %v8448
    %v8472 = vsub.f32 %v8424, %v8450
    %v8473 = vsub.f32 %v8425, %v8452
    %v8474 = vsub.f32 %v8426, %v8454
    %v8475 = vsub.f32 %v8427, %v8456
    %v8476 = vsub.f32 %v8428, %v8458
    %v8477 = vsub.f32 %v8429, %v8460
    %v8478 = vsub.f32 %v8430, %v8462
    %v8479 = vpack.c.bf16 %v8464, %v8463
    %v8480 = vpack.c.bf16 %v8466, %v8465
    %v8481 = vpack.c.bf16 %v8468, %v8467
    %v8482 = vpack.c.bf16 %v8470, %v8469
    %v8483 = vpack.c.bf16 %v8472, %v8471
    %v8484 = vpack.c.bf16 %v8474, %v8473
    %v8485 = vpack.c.bf16 %v8476, %v8475
    %v8486 = vpack.c.bf16 %v8478, %v8477
    %v8488 = vmul.bf16 %v8479, 1069105081
    %v8489 = vpow.bf16.pop %v8488
    %v8491 = vmul.bf16 %v8480, 1069105081
    %v8492 = vpow.bf16.pop %v8491
    %v8494 = vmul.bf16 %v8481, 1069105081
    %v8495 = vpow.bf16.pop %v8494
    %v8497 = vmul.bf16 %v8482, 1069105081
    %v8498 = vpow.bf16.pop %v8497
    %v8500 = vmul.bf16 %v8483, 1069105081
    %v8501 = vpow.bf16.pop %v8500
    %v8503 = vmul.bf16 %v8484, 1069105081
    %v8504 = vpow.bf16.pop %v8503
    %v8506 = vmul.bf16 %v8485, 1069105081
    %v8507 = vpow.bf16.pop %v8506
    %v8509 = vmul.bf16 %v8486, 1069105081
    %v8510 = vpow.bf16.pop %v8509
    %v8511 = vunpack.c.l.bf16 %v8489
    %v8512 = vunpack.c.h.bf16 %v8489
    %v8513 = vunpack.c.l.bf16 %v8492
    %v8514 = vunpack.c.h.bf16 %v8492
    %v8515 = vunpack.c.l.bf16 %v8495
    %v8516 = vunpack.c.h.bf16 %v8495
    %v8517 = vunpack.c.l.bf16 %v8498
    %v8518 = vunpack.c.h.bf16 %v8498
    %v8519 = vunpack.c.l.bf16 %v8501
    %v8520 = vunpack.c.h.bf16 %v8501
    %v8521 = vunpack.c.l.bf16 %v8504
    %v8522 = vunpack.c.h.bf16 %v8504
    %v8523 = vunpack.c.l.bf16 %v8507
    %v8524 = vunpack.c.h.bf16 %v8507
    %v8525 = vunpack.c.l.bf16 %v8510
    %v8526 = vunpack.c.h.bf16 %v8510
    %8527 = vadd.xlane.f32.xlu0 %v8511
    %v8528 = vpop.xlane.xlu0 %8527
    %8529 = vadd.xlane.f32.xlu0 %v8512
    %v8530 = vpop.xlane.xlu0 %8529
    %8531 = vadd.xlane.f32.xlu0 %v8513
    %v8532 = vpop.xlane.xlu0 %8531
    %8533 = vadd.xlane.f32.xlu0 %v8514
    %v8534 = vpop.xlane.xlu0 %8533
    %8535 = vadd.xlane.f32.xlu0 %v8515
    %v8536 = vpop.xlane.xlu0 %8535
    %8537 = vadd.xlane.f32.xlu0 %v8516
    %v8538 = vpop.xlane.xlu0 %8537
    %8539 = vadd.xlane.f32.xlu0 %v8517
    %v8540 = vpop.xlane.xlu0 %8539
    %8541 = vadd.xlane.f32.xlu0 %v8518
    %v8542 = vpop.xlane.xlu0 %8541
    %8543 = vadd.xlane.f32.xlu0 %v8519
    %v8544 = vpop.xlane.xlu0 %8543
    %8545 = vadd.xlane.f32.xlu0 %v8520
    %v8546 = vpop.xlane.xlu0 %8545
    %8547 = vadd.xlane.f32.xlu0 %v8521
    %v8548 = vpop.xlane.xlu0 %8547
    %8549 = vadd.xlane.f32.xlu0 %v8522
    %v8550 = vpop.xlane.xlu0 %8549
    %8551 = vadd.xlane.f32.xlu0 %v8523
    %v8552 = vpop.xlane.xlu0 %8551
    %8553 = vadd.xlane.f32.xlu0 %v8524
    %v8554 = vpop.xlane.xlu0 %8553
    %8555 = vadd.xlane.f32.xlu0 %v8525
    %v8556 = vpop.xlane.xlu0 %8555
    %8557 = vadd.xlane.f32.xlu0 %v8526
    %v8558 = vpop.xlane.xlu0 %8557
    %v8559 = vrcp.pop %v8528
    %v8560 = vrcp.pop %v8530
    %v8561 = vrcp.pop %v8532
    %v8562 = vrcp.pop %v8534
    %v8563 = vrcp.pop %v8536
    %v8564 = vrcp.pop %v8538
    %v8565 = vrcp.pop %v8540
    %v8566 = vrcp.pop %v8542
    %v8567 = vrcp.pop %v8544
    %v8568 = vrcp.pop %v8546
    %v8569 = vrcp.pop %v8548
    %v8570 = vrcp.pop %v8550
    %v8571 = vrcp.pop %v8552
    %v8572 = vrcp.pop %v8554
    %v8573 = vrcp.pop %v8556
    %v8574 = vrcp.pop %v8558
    %8583 = vrot.lane.b32.xlu0 %v1373, 96
    %v8584 = vpop.permute.xlu0 %8583
    %8585 = vrot.lane.b32.xlu0 %v1375, 96
    %v8586 = vpop.permute.xlu0 %8585
    %8587 = vrot.lane.b32.xlu0 %v1377, 96
    %v8588 = vpop.permute.xlu0 %8587
    %8589 = vrot.lane.b32.xlu0 %v1379, 96
    %v8590 = vpop.permute.xlu0 %8589
    %8591 = vrot.lane.b32.xlu0 %v1381, 96
    %v8592 = vpop.permute.xlu0 %8591
    %8593 = vrot.lane.b32.xlu0 %v1383, 96
    %v8594 = vpop.permute.xlu0 %8593
    %8595 = vrot.lane.b32.xlu0 %v1385, 96
    %v8596 = vpop.permute.xlu0 %8595
    %8597 = vrot.lane.b32.xlu0 %v1387, 96
    %v8598 = vpop.permute.xlu0 %8597
    %8607 = vmatprep.subr.bf16.mxu0 0
    %8608 = vmatpush1.bf16.msra.mxu0 %v8598
    %8609 = vmatprep.subr.bf16.mxu0 0
    %8610 = vmatpush1.bf16.msra.mxu0 %v8596
    %8611 = vmatprep.subr.bf16.mxu0 0
    %8612 = vmatpush1.bf16.msra.mxu0 %v8594
    %8613 = vmatprep.subr.bf16.mxu0 0
    %8614 = vmatpush1.bf16.msra.mxu0 %v8592
    %8615 = vmatprep.subr.bf16.mxu0 0
    %8616 = vmatpush1.bf16.msra.mxu0 %v8590
    %8617 = vmatprep.subr.bf16.mxu0 0
    %8618 = vmatpush1.bf16.msra.mxu0 %v8588
    %8619 = vmatprep.subr.bf16.mxu0 0
    %8620 = vmatpush1.bf16.msra.mxu0 %v8586
    %8621 = vmatprep.subr.bf16.mxu0 0
    %8622 = vmatpush1.bf16.msra.mxu0 %v8584
    %8623 = vmatprep.subr.bf16.mxu0 0
    %8624 = vmatpush2.bf16.msra.mxu0 0
    %8625 = vmatprep.subr.bf16.mxu0 0
    %8626 = vmatpush2.bf16.msra.mxu0 0
    %8627 = vmatprep.subr.bf16.mxu0 0
    %8628 = vmatpush2.bf16.msra.mxu0 0
    %8629 = vmatprep.subr.bf16.mxu0 0
    %8630 = vmatpush2.bf16.msra.mxu0 0
    %8631 = vmatprep.subr.bf16.mxu0 0
    %8632 = vmatpush2.bf16.msra.mxu0 0
    %8633 = vmatprep.subr.bf16.mxu0 0
    %8634 = vmatpush2.bf16.msra.mxu0 0
    %8635 = vmatprep.subr.bf16.mxu0 0
    %8636 = vmatpush2.bf16.msra.mxu0 0
    %8637 = vmatprep.subr.bf16.mxu0 0
    %8638 = vmatpush2.bf16.msra.mxu0 0
    %8639 = vmatprep.mubr.bf16.mxu0 0
    %8640 = vmatmul.mubr.bf16.gmra.mxu0 %v8489
    %v8641 = vpop.f32.mrf.mxu0
    %v8642 = vadd.f32 0.0, %v8641
    %v8643 = vpop.f32.mrf.mxu0
    %v8644 = vpop.f32.mrf.mxu0
    %v8645 = vadd.f32 0.0, %v8644
    %v8646 = vpop.f32.mrf.mxu0
    %8647 = vmatprep.mubr.bf16.mxu0 0
    %8648 = vmatmul.mubr.bf16.gmra.mxu0 %v8492
    %v8649 = vpop.f32.mrf.mxu0
    %v8650 = vadd.f32 0.0, %v8649
    %v8651 = vpop.f32.mrf.mxu0
    %v8652 = vpop.f32.mrf.mxu0
    %v8653 = vadd.f32 0.0, %v8652
    %v8654 = vpop.f32.mrf.mxu0
    %8655 = vmatprep.mubr.bf16.mxu0 0
    %8656 = vmatmul.mubr.bf16.gmra.mxu0 %v8495
    %v8657 = vpop.f32.mrf.mxu0
    %v8658 = vadd.f32 0.0, %v8657
    %v8659 = vpop.f32.mrf.mxu0
    %v8660 = vpop.f32.mrf.mxu0
    %v8661 = vadd.f32 0.0, %v8660
    %v8662 = vpop.f32.mrf.mxu0
    %8663 = vmatprep.mubr.bf16.mxu0 0
    %8664 = vmatmul.mubr.bf16.gmra.mxu0 %v8498
    %v8665 = vpop.f32.mrf.mxu0
    %v8666 = vadd.f32 0.0, %v8665
    %v8667 = vpop.f32.mrf.mxu0
    %v8668 = vpop.f32.mrf.mxu0
    %v8669 = vadd.f32 0.0, %v8668
    %v8670 = vpop.f32.mrf.mxu0
    %8671 = vmatprep.mubr.bf16.mxu0 0
    %8672 = vmatmul.mubr.bf16.gmra.mxu0 %v8501
    %v8673 = vpop.f32.mrf.mxu0
    %v8674 = vadd.f32 0.0, %v8673
    %v8675 = vpop.f32.mrf.mxu0
    %v8676 = vpop.f32.mrf.mxu0
    %v8677 = vadd.f32 0.0, %v8676
    %v8678 = vpop.f32.mrf.mxu0
    %8679 = vmatprep.mubr.bf16.mxu0 0
    %8680 = vmatmul.mubr.bf16.gmra.mxu0 %v8504
    %v8681 = vpop.f32.mrf.mxu0
    %v8682 = vadd.f32 0.0, %v8681
    %v8683 = vpop.f32.mrf.mxu0
    %v8684 = vpop.f32.mrf.mxu0
    %v8685 = vadd.f32 0.0, %v8684
    %v8686 = vpop.f32.mrf.mxu0
    %8687 = vmatprep.mubr.bf16.mxu0 0
    %8688 = vmatmul.mubr.bf16.gmra.mxu0 %v8507
    %v8689 = vpop.f32.mrf.mxu0
    %v8690 = vadd.f32 0.0, %v8689
    %v8691 = vpop.f32.mrf.mxu0
    %v8692 = vpop.f32.mrf.mxu0
    %v8693 = vadd.f32 0.0, %v8692
    %v8694 = vpop.f32.mrf.mxu0
    %8695 = vmatprep.mubr.bf16.mxu0 0
    %8696 = vmatmul.mubr.bf16.gmra.mxu0 %v8510
    %v8697 = vpop.f32.mrf.mxu0
    %v8698 = vadd.f32 0.0, %v8697
    %v8699 = vpop.f32.mrf.mxu0
    %v8700 = vpop.f32.mrf.mxu0
    %v8701 = vadd.f32 0.0, %v8700
    %v8702 = vpop.f32.mrf.mxu0
    %8703 = vdwg.mxu0
    %v8704 = vmul.f32 %v8642, %v8559
    %v8705 = vmul.f32 %v8645, %v8560
    %v8706 = vmul.f32 %v8650, %v8561
    %v8707 = vmul.f32 %v8653, %v8562
    %v8708 = vmul.f32 %v8658, %v8563
    %v8709 = vmul.f32 %v8661, %v8564
    %v8710 = vmul.f32 %v8666, %v8565
    %v8711 = vmul.f32 %v8669, %v8566
    %v8712 = vmul.f32 %v8674, %v8567
    %v8713 = vmul.f32 %v8677, %v8568
    %v8714 = vmul.f32 %v8682, %v8569
    %v8715 = vmul.f32 %v8685, %v8570
    %v8716 = vmul.f32 %v8690, %v8571
    %v8717 = vmul.f32 %v8693, %v8572
    %v8718 = vmul.f32 %v8698, %v8573
    %v8719 = vmul.f32 %v8701, %v8574
    %8736 = vrot.lane.b32.xlu0 %v8704, 32
    %v8737 = vpop.permute.xlu0 %8736
    %8738 = vrot.lane.b32.xlu0 %v8705, 32
    %v8739 = vpop.permute.xlu0 %8738
    %8740 = vrot.lane.b32.xlu0 %v8706, 32
    %v8741 = vpop.permute.xlu0 %8740
    %8742 = vrot.lane.b32.xlu0 %v8707, 32
    %v8743 = vpop.permute.xlu0 %8742
    %8744 = vrot.lane.b32.xlu0 %v8708, 32
    %v8745 = vpop.permute.xlu0 %8744
    %8746 = vrot.lane.b32.xlu0 %v8709, 32
    %v8747 = vpop.permute.xlu0 %8746
    %8748 = vrot.lane.b32.xlu0 %v8710, 32
    %v8749 = vpop.permute.xlu0 %8748
    %8750 = vrot.lane.b32.xlu0 %v8711, 32
    %v8751 = vpop.permute.xlu0 %8750
    %8752 = vrot.lane.b32.xlu0 %v8712, 32
    %v8753 = vpop.permute.xlu0 %8752
    %8754 = vrot.lane.b32.xlu0 %v8713, 32
    %v8755 = vpop.permute.xlu0 %8754
    %8756 = vrot.lane.b32.xlu0 %v8714, 32
    %v8757 = vpop.permute.xlu0 %8756
    %8758 = vrot.lane.b32.xlu0 %v8715, 32
    %v8759 = vpop.permute.xlu0 %8758
    %8760 = vrot.lane.b32.xlu0 %v8716, 32
    %v8761 = vpop.permute.xlu0 %8760
    %8762 = vrot.lane.b32.xlu0 %v8717, 32
    %v8763 = vpop.permute.xlu0 %8762
    %8764 = vrot.lane.b32.xlu0 %v8718, 32
    %v8765 = vpop.permute.xlu0 %8764
    %8766 = vrot.lane.b32.xlu0 %v8719, 32
    %v8767 = vpop.permute.xlu0 %8766
    %8784 = vst.msk [vmem:[%s6085 + $0x8] sm:$0xff] %vm2420, %v8737
    %8785 = vst.msk [vmem:[%s6085 + $0x18] sm:$0xff] %vm2420, %v8739
    %8786 = vst.msk [vmem:[%s6085 + $0x28] sm:$0xff] %vm2420, %v8741
    %8787 = vst.msk [vmem:[%s6085 + $0x38] sm:$0xff] %vm2420, %v8743
    %8788 = vst.msk [vmem:[%s6085 + $0x48] sm:$0xff] %vm2420, %v8745
    %8789 = vst.msk [vmem:[%s6085 + $0x58] sm:$0xff] %vm2420, %v8747
    %8790 = vst.msk [vmem:[%s6085 + $0x68] sm:$0xff] %vm2420, %v8749
    %8791 = vst.msk [vmem:[%s6085 + $0x78] sm:$0xff] %vm2420, %v8751
    %8792 = vst.msk [vmem:[%s6085 + $0x88] sm:$0xff] %vm2420, %v8753
    %8793 = vst.msk [vmem:[%s6085 + $0x98] sm:$0xff] %vm2420, %v8755
    %8794 = vst.msk [vmem:[%s6085 + $0xa8] sm:$0xff] %vm2420, %v8757
    %8795 = vst.msk [vmem:[%s6085 + $0xb8] sm:$0xff] %vm2420, %v8759
    %8796 = vst.msk [vmem:[%s6085 + $0xc8] sm:$0xff] %vm2420, %v8761
    %8797 = vst.msk [vmem:[%s6085 + $0xd8] sm:$0xff] %vm2420, %v8763
    %8798 = vst.msk [vmem:[%s6085 + $0xe8] sm:$0xff] %vm2420, %v8765
    %8799 = vst.msk [vmem:[%s6085 + $0xf8] sm:$0xff] %vm2420, %v8767
    %8800 = vrot.lane.b32.xlu0 %v1327, 64
    %v8801 = vpop.permute.xlu0 %8800
    %8802 = vrot.lane.b32.xlu0 %v1331, 64
    %v8803 = vpop.permute.xlu0 %8802
    %8804 = vrot.lane.b32.xlu0 %v1335, 64
    %v8805 = vpop.permute.xlu0 %8804
    %8806 = vrot.lane.b32.xlu0 %v1339, 64
    %v8807 = vpop.permute.xlu0 %8806
    %8808 = vrot.lane.b32.xlu0 %v1343, 64
    %v8809 = vpop.permute.xlu0 %8808
    %8810 = vrot.lane.b32.xlu0 %v1347, 64
    %v8811 = vpop.permute.xlu0 %8810
    %8812 = vrot.lane.b32.xlu0 %v1351, 64
    %v8813 = vpop.permute.xlu0 %8812
    %8814 = vrot.lane.b32.xlu0 %v1355, 64
    %v8815 = vpop.permute.xlu0 %8814
    %8816 = vrot.lane.b32.xlu0 %v1325, 64
    %v8817 = vpop.permute.xlu0 %8816
    %8818 = vrot.lane.b32.xlu0 %v1329, 64
    %v8819 = vpop.permute.xlu0 %8818
    %8820 = vrot.lane.b32.xlu0 %v1333, 64
    %v8821 = vpop.permute.xlu0 %8820
    %8822 = vrot.lane.b32.xlu0 %v1337, 64
    %v8823 = vpop.permute.xlu0 %8822
    %8824 = vrot.lane.b32.xlu0 %v1341, 64
    %v8825 = vpop.permute.xlu0 %8824
    %8826 = vrot.lane.b32.xlu0 %v1345, 64
    %v8827 = vpop.permute.xlu0 %8826
    %8828 = vrot.lane.b32.xlu0 %v1349, 64
    %v8829 = vpop.permute.xlu0 %8828
    %8830 = vrot.lane.b32.xlu0 %v1353, 64
    %v8831 = vpop.permute.xlu0 %8830
    %v8833 = vsel %vm1423, %v8801, 0
    %v8836 = vsel %vm1423, %v8803, 0
    %v8839 = vsel %vm1423, %v8805, 0
    %v8842 = vsel %vm1423, %v8807, 0
    %v8845 = vsel %vm1423, %v8809, 0
    %v8848 = vsel %vm1423, %v8811, 0
    %v8851 = vsel %vm1423, %v8813, 0
    %v8854 = vsel %vm1423, %v8815, 0
    %v8857 = vsel %vm1423, %v8817, 0
    %v8860 = vsel %vm1423, %v8819, 0
    %v8863 = vsel %vm1423, %v8821, 0
    %v8866 = vsel %vm1423, %v8823, 0
    %v8869 = vsel %vm1423, %v8825, 0
    %v8872 = vsel %vm1423, %v8827, 0
    %v8875 = vsel %vm1423, %v8829, 0
    %v8878 = vsel %vm1423, %v8831, 0
    %8880 = vmatprep.subr.bf16.mxu0 0
    %8881 = vmatpush1.bf16.xpose.msra.mxu0 %v8878
    %8882 = vmatprep.subr.bf16.mxu0 0
    %8883 = vmatpush1.bf16.xpose.msra.mxu0 %v8875
    %8884 = vmatprep.subr.bf16.mxu0 0
    %8885 = vmatpush1.bf16.xpose.msra.mxu0 %v8872
    %8886 = vmatprep.subr.bf16.mxu0 0
    %8887 = vmatpush1.bf16.xpose.msra.mxu0 %v8869
    %8888 = vmatprep.subr.bf16.mxu0 0
    %8889 = vmatpush1.bf16.xpose.msra.mxu0 %v8866
    %8890 = vmatprep.subr.bf16.mxu0 0
    %8891 = vmatpush1.bf16.xpose.msra.mxu0 %v8863
    %8892 = vmatprep.subr.bf16.mxu0 0
    %8893 = vmatpush1.bf16.xpose.msra.mxu0 %v8860
    %8894 = vmatprep.subr.bf16.mxu0 0
    %8895 = vmatpush1.bf16.xpose.msra.mxu0 %v8857
    %8896 = vmatprep.subr.bf16.mxu0 0
    %8897 = vmatpush2.bf16.xpose.msra.mxu0 0
    %8898 = vmatprep.subr.bf16.mxu0 0
    %8899 = vmatpush2.bf16.xpose.msra.mxu0 0
    %8900 = vmatprep.subr.bf16.mxu0 0
    %8901 = vmatpush2.bf16.xpose.msra.mxu0 0
    %8902 = vmatprep.subr.bf16.mxu0 0
    %8903 = vmatpush2.bf16.xpose.msra.mxu0 0
    %8904 = vmatprep.subr.bf16.mxu0 0
    %8905 = vmatpush2.bf16.xpose.msra.mxu0 0
    %8906 = vmatprep.subr.bf16.mxu0 0
    %8907 = vmatpush2.bf16.xpose.msra.mxu0 0
    %8908 = vmatprep.subr.bf16.mxu0 0
    %8909 = vmatpush2.bf16.xpose.msra.mxu0 0
    %8910 = vmatprep.subr.bf16.mxu0 0
    %8911 = vmatpush2.bf16.xpose.msra.mxu0 0
    %8912 = vmatprep.mubr.bf16.mxu0 0
    %8913 = vmatmul.mubr.bf16.gmra.mxu0 %v8833
    %v8914 = vpop.f32.mrf.mxu0
    %v8915 = vadd.f32 0.0, %v8914
    %v8916 = vpop.f32.mrf.mxu0
    %v8917 = vpop.f32.mrf.mxu0
    %v8918 = vadd.f32 0.0, %v8917
    %v8919 = vpop.f32.mrf.mxu0
    %8920 = vmatprep.mubr.bf16.mxu0 0
    %8921 = vmatmul.mubr.bf16.gmra.mxu0 %v8836
    %v8922 = vpop.f32.mrf.mxu0
    %v8923 = vadd.f32 0.0, %v8922
    %v8924 = vpop.f32.mrf.mxu0
    %v8925 = vpop.f32.mrf.mxu0
    %v8926 = vadd.f32 0.0, %v8925
    %v8927 = vpop.f32.mrf.mxu0
    %8928 = vmatprep.mubr.bf16.mxu0 0
    %8929 = vmatmul.mubr.bf16.gmra.mxu0 %v8839
    %v8930 = vpop.f32.mrf.mxu0
    %v8931 = vadd.f32 0.0, %v8930
    %v8932 = vpop.f32.mrf.mxu0
    %v8933 = vpop.f32.mrf.mxu0
    %v8934 = vadd.f32 0.0, %v8933
    %v8935 = vpop.f32.mrf.mxu0
    %8936 = vmatprep.mubr.bf16.mxu0 0
    %8937 = vmatmul.mubr.bf16.gmra.mxu0 %v8842
    %v8938 = vpop.f32.mrf.mxu0
    %v8939 = vadd.f32 0.0, %v8938
    %v8940 = vpop.f32.mrf.mxu0
    %v8941 = vpop.f32.mrf.mxu0
    %v8942 = vadd.f32 0.0, %v8941
    %v8943 = vpop.f32.mrf.mxu0
    %8944 = vmatprep.mubr.bf16.mxu0 0
    %8945 = vmatmul.mubr.bf16.gmra.mxu0 %v8845
    %v8946 = vpop.f32.mrf.mxu0
    %v8947 = vadd.f32 0.0, %v8946
    %v8948 = vpop.f32.mrf.mxu0
    %v8949 = vpop.f32.mrf.mxu0
    %v8950 = vadd.f32 0.0, %v8949
    %v8951 = vpop.f32.mrf.mxu0
    %8952 = vmatprep.mubr.bf16.mxu0 0
    %8953 = vmatmul.mubr.bf16.gmra.mxu0 %v8848
    %v8954 = vpop.f32.mrf.mxu0
    %v8955 = vadd.f32 0.0, %v8954
    %v8956 = vpop.f32.mrf.mxu0
    %v8957 = vpop.f32.mrf.mxu0
    %v8958 = vadd.f32 0.0, %v8957
    %v8959 = vpop.f32.mrf.mxu0
    %8960 = vmatprep.mubr.bf16.mxu0 0
    %8961 = vmatmul.mubr.bf16.gmra.mxu0 %v8851
    %v8962 = vpop.f32.mrf.mxu0
    %v8963 = vadd.f32 0.0, %v8962
    %v8964 = vpop.f32.mrf.mxu0
    %v8965 = vpop.f32.mrf.mxu0
    %v8966 = vadd.f32 0.0, %v8965
    %v8967 = vpop.f32.mrf.mxu0
    %8968 = vmatprep.mubr.bf16.mxu0 0
    %8969 = vmatmul.mubr.bf16.gmra.mxu0 %v8854
    %v8970 = vpop.f32.mrf.mxu0
    %v8971 = vadd.f32 0.0, %v8970
    %v8972 = vpop.f32.mrf.mxu0
    %v8973 = vpop.f32.mrf.mxu0
    %v8974 = vadd.f32 0.0, %v8973
    %v8975 = vpop.f32.mrf.mxu0
    %8976 = vdwg.mxu0
    %v8977 = vsel %vm1407, %v8915, -inf
    %v8978 = vsel %vm1408, %v8918, -inf
    %v8979 = vsel %vm1409, %v8923, -inf
    %v8980 = vsel %vm1410, %v8926, -inf
    %v8981 = vsel %vm1411, %v8931, -inf
    %v8982 = vsel %vm1412, %v8934, -inf
    %v8983 = vsel %vm1413, %v8939, -inf
    %v8984 = vsel %vm1414, %v8942, -inf
    %v8985 = vsel %vm1415, %v8947, -inf
    %v8986 = vsel %vm1416, %v8950, -inf
    %v8987 = vsel %vm1417, %v8955, -inf
    %v8988 = vsel %vm1418, %v8958, -inf
    %v8989 = vsel %vm1419, %v8963, -inf
    %v8990 = vsel %vm1420, %v8966, -inf
    %v8991 = vsel %vm1421, %v8971, -inf
    %v8992 = vsel %vm1422, %v8974, -inf
    %8993 = vmax.xlane.f32.xlu0 %v8977
    %v8994 = vpop.xlane.xlu0 %8993
    %8995 = vmax.xlane.f32.xlu0 %v8978
    %v8996 = vpop.xlane.xlu0 %8995
    %8997 = vmax.xlane.f32.xlu0 %v8979
    %v8998 = vpop.xlane.xlu0 %8997
    %8999 = vmax.xlane.f32.xlu0 %v8980
    %v9000 = vpop.xlane.xlu0 %8999
    %9001 = vmax.xlane.f32.xlu0 %v8981
    %v9002 = vpop.xlane.xlu0 %9001
    %9003 = vmax.xlane.f32.xlu0 %v8982
    %v9004 = vpop.xlane.xlu0 %9003
    %9005 = vmax.xlane.f32.xlu0 %v8983
    %v9006 = vpop.xlane.xlu0 %9005
    %9007 = vmax.xlane.f32.xlu0 %v8984
    %v9008 = vpop.xlane.xlu0 %9007
    %9009 = vmax.xlane.f32.xlu0 %v8985
    %v9010 = vpop.xlane.xlu0 %9009
    %9011 = vmax.xlane.f32.xlu0 %v8986
    %v9012 = vpop.xlane.xlu0 %9011
    %9013 = vmax.xlane.f32.xlu0 %v8987
    %v9014 = vpop.xlane.xlu0 %9013
    %9015 = vmax.xlane.f32.xlu0 %v8988
    %v9016 = vpop.xlane.xlu0 %9015
    %9017 = vmax.xlane.f32.xlu0 %v8989
    %v9018 = vpop.xlane.xlu0 %9017
    %9019 = vmax.xlane.f32.xlu0 %v8990
    %v9020 = vpop.xlane.xlu0 %9019
    %9021 = vmax.xlane.f32.xlu0 %v8991
    %v9022 = vpop.xlane.xlu0 %9021
    %9023 = vmax.xlane.f32.xlu0 %v8992
    %v9024 = vpop.xlane.xlu0 %9023
    %v9025 = vsub.f32 %v8977, %v8994
    %v9026 = vsub.f32 %v8978, %v8996
    %v9027 = vsub.f32 %v8979, %v8998
    %v9028 = vsub.f32 %v8980, %v9000
    %v9029 = vsub.f32 %v8981, %v9002
    %v9030 = vsub.f32 %v8982, %v9004
    %v9031 = vsub.f32 %v8983, %v9006
    %v9032 = vsub.f32 %v8984, %v9008
    %v9033 = vsub.f32 %v8985, %v9010
    %v9034 = vsub.f32 %v8986, %v9012
    %v9035 = vsub.f32 %v8987, %v9014
    %v9036 = vsub.f32 %v8988, %v9016
    %v9037 = vsub.f32 %v8989, %v9018
    %v9038 = vsub.f32 %v8990, %v9020
    %v9039 = vsub.f32 %v8991, %v9022
    %v9040 = vsub.f32 %v8992, %v9024
    %v9041 = vpack.c.bf16 %v9026, %v9025
    %v9042 = vpack.c.bf16 %v9028, %v9027
    %v9043 = vpack.c.bf16 %v9030, %v9029
    %v9044 = vpack.c.bf16 %v9032, %v9031
    %v9045 = vpack.c.bf16 %v9034, %v9033
    %v9046 = vpack.c.bf16 %v9036, %v9035
    %v9047 = vpack.c.bf16 %v9038, %v9037
    %v9048 = vpack.c.bf16 %v9040, %v9039
    %v9050 = vmul.bf16 %v9041, 1069105081
    %v9051 = vpow.bf16.pop %v9050
    %v9053 = vmul.bf16 %v9042, 1069105081
    %v9054 = vpow.bf16.pop %v9053
    %v9056 = vmul.bf16 %v9043, 1069105081
    %v9057 = vpow.bf16.pop %v9056
    %v9059 = vmul.bf16 %v9044, 1069105081
    %v9060 = vpow.bf16.pop %v9059
    %v9062 = vmul.bf16 %v9045, 1069105081
    %v9063 = vpow.bf16.pop %v9062
    %v9065 = vmul.bf16 %v9046, 1069105081
    %v9066 = vpow.bf16.pop %v9065
    %v9068 = vmul.bf16 %v9047, 1069105081
    %v9069 = vpow.bf16.pop %v9068
    %v9071 = vmul.bf16 %v9048, 1069105081
    %v9072 = vpow.bf16.pop %v9071
    %v9073 = vunpack.c.l.bf16 %v9051
    %v9074 = vunpack.c.h.bf16 %v9051
    %v9075 = vunpack.c.l.bf16 %v9054
    %v9076 = vunpack.c.h.bf16 %v9054
    %v9077 = vunpack.c.l.bf16 %v9057
    %v9078 = vunpack.c.h.bf16 %v9057
    %v9079 = vunpack.c.l.bf16 %v9060
    %v9080 = vunpack.c.h.bf16 %v9060
    %v9081 = vunpack.c.l.bf16 %v9063
    %v9082 = vunpack.c.h.bf16 %v9063
    %v9083 = vunpack.c.l.bf16 %v9066
    %v9084 = vunpack.c.h.bf16 %v9066
    %v9085 = vunpack.c.l.bf16 %v9069
    %v9086 = vunpack.c.h.bf16 %v9069
    %v9087 = vunpack.c.l.bf16 %v9072
    %v9088 = vunpack.c.h.bf16 %v9072
    %9089 = vadd.xlane.f32.xlu0 %v9073
    %v9090 = vpop.xlane.xlu0 %9089
    %9091 = vadd.xlane.f32.xlu0 %v9074
    %v9092 = vpop.xlane.xlu0 %9091
    %9093 = vadd.xlane.f32.xlu0 %v9075
    %v9094 = vpop.xlane.xlu0 %9093
    %9095 = vadd.xlane.f32.xlu0 %v9076
    %v9096 = vpop.xlane.xlu0 %9095
    %9097 = vadd.xlane.f32.xlu0 %v9077
    %v9098 = vpop.xlane.xlu0 %9097
    %9099 = vadd.xlane.f32.xlu0 %v9078
    %v9100 = vpop.xlane.xlu0 %9099
    %9101 = vadd.xlane.f32.xlu0 %v9079
    %v9102 = vpop.xlane.xlu0 %9101
    %9103 = vadd.xlane.f32.xlu0 %v9080
    %v9104 = vpop.xlane.xlu0 %9103
    %9105 = vadd.xlane.f32.xlu0 %v9081
    %v9106 = vpop.xlane.xlu0 %9105
    %9107 = vadd.xlane.f32.xlu0 %v9082
    %v9108 = vpop.xlane.xlu0 %9107
    %9109 = vadd.xlane.f32.xlu0 %v9083
    %v9110 = vpop.xlane.xlu0 %9109
    %9111 = vadd.xlane.f32.xlu0 %v9084
    %v9112 = vpop.xlane.xlu0 %9111
    %9113 = vadd.xlane.f32.xlu0 %v9085
    %v9114 = vpop.xlane.xlu0 %9113
    %9115 = vadd.xlane.f32.xlu0 %v9086
    %v9116 = vpop.xlane.xlu0 %9115
    %9117 = vadd.xlane.f32.xlu0 %v9087
    %v9118 = vpop.xlane.xlu0 %9117
    %9119 = vadd.xlane.f32.xlu0 %v9088
    %v9120 = vpop.xlane.xlu0 %9119
    %v9121 = vrcp.pop %v9090
    %v9122 = vrcp.pop %v9092
    %v9123 = vrcp.pop %v9094
    %v9124 = vrcp.pop %v9096
    %v9125 = vrcp.pop %v9098
    %v9126 = vrcp.pop %v9100
    %v9127 = vrcp.pop %v9102
    %v9128 = vrcp.pop %v9104
    %v9129 = vrcp.pop %v9106
    %v9130 = vrcp.pop %v9108
    %v9131 = vrcp.pop %v9110
    %v9132 = vrcp.pop %v9112
    %v9133 = vrcp.pop %v9114
    %v9134 = vrcp.pop %v9116
    %v9135 = vrcp.pop %v9118
    %v9136 = vrcp.pop %v9120
    %9137 = vrot.lane.b32.xlu0 %v1373, 64
    %v9138 = vpop.permute.xlu0 %9137
    %9139 = vrot.lane.b32.xlu0 %v1375, 64
    %v9140 = vpop.permute.xlu0 %9139
    %9141 = vrot.lane.b32.xlu0 %v1377, 64
    %v9142 = vpop.permute.xlu0 %9141
    %9143 = vrot.lane.b32.xlu0 %v1379, 64
    %v9144 = vpop.permute.xlu0 %9143
    %9145 = vrot.lane.b32.xlu0 %v1381, 64
    %v9146 = vpop.permute.xlu0 %9145
    %9147 = vrot.lane.b32.xlu0 %v1383, 64
    %v9148 = vpop.permute.xlu0 %9147
    %9149 = vrot.lane.b32.xlu0 %v1385, 64
    %v9150 = vpop.permute.xlu0 %9149
    %9151 = vrot.lane.b32.xlu0 %v1387, 64
    %v9152 = vpop.permute.xlu0 %9151
    %9161 = vmatprep.subr.bf16.mxu0 0
    %9162 = vmatpush1.bf16.msra.mxu0 %v9152
    %9163 = vmatprep.subr.bf16.mxu0 0
    %9164 = vmatpush1.bf16.msra.mxu0 %v9150
    %9165 = vmatprep.subr.bf16.mxu0 0
    %9166 = vmatpush1.bf16.msra.mxu0 %v9148
    %9167 = vmatprep.subr.bf16.mxu0 0
    %9168 = vmatpush1.bf16.msra.mxu0 %v9146
    %9169 = vmatprep.subr.bf16.mxu0 0
    %9170 = vmatpush1.bf16.msra.mxu0 %v9144
    %9171 = vmatprep.subr.bf16.mxu0 0
    %9172 = vmatpush1.bf16.msra.mxu0 %v9142
    %9173 = vmatprep.subr.bf16.mxu0 0
    %9174 = vmatpush1.bf16.msra.mxu0 %v9140
    %9175 = vmatprep.subr.bf16.mxu0 0
    %9176 = vmatpush1.bf16.msra.mxu0 %v9138
    %9177 = vmatprep.subr.bf16.mxu0 0
    %9178 = vmatpush2.bf16.msra.mxu0 0
    %9179 = vmatprep.subr.bf16.mxu0 0
    %9180 = vmatpush2.bf16.msra.mxu0 0
    %9181 = vmatprep.subr.bf16.mxu0 0
    %9182 = vmatpush2.bf16.msra.mxu0 0
    %9183 = vmatprep.subr.bf16.mxu0 0
    %9184 = vmatpush2.bf16.msra.mxu0 0
    %9185 = vmatprep.subr.bf16.mxu0 0
    %9186 = vmatpush2.bf16.msra.mxu0 0
    %9187 = vmatprep.subr.bf16.mxu0 0
    %9188 = vmatpush2.bf16.msra.mxu0 0
    %9189 = vmatprep.subr.bf16.mxu0 0
    %9190 = vmatpush2.bf16.msra.mxu0 0
    %9191 = vmatprep.subr.bf16.mxu0 0
    %9192 = vmatpush2.bf16.msra.mxu0 0
    %9193 = vmatprep.mubr.bf16.mxu0 0
    %9194 = vmatmul.mubr.bf16.gmra.mxu0 %v9051
    %v9195 = vpop.f32.mrf.mxu0
    %v9196 = vadd.f32 0.0, %v9195
    %v9197 = vpop.f32.mrf.mxu0
    %v9198 = vpop.f32.mrf.mxu0
    %v9199 = vadd.f32 0.0, %v9198
    %v9200 = vpop.f32.mrf.mxu0
    %9201 = vmatprep.mubr.bf16.mxu0 0
    %9202 = vmatmul.mubr.bf16.gmra.mxu0 %v9054
    %v9203 = vpop.f32.mrf.mxu0
    %v9204 = vadd.f32 0.0, %v9203
    %v9205 = vpop.f32.mrf.mxu0
    %v9206 = vpop.f32.mrf.mxu0
    %v9207 = vadd.f32 0.0, %v9206
    %v9208 = vpop.f32.mrf.mxu0
    %9209 = vmatprep.mubr.bf16.mxu0 0
    %9210 = vmatmul.mubr.bf16.gmra.mxu0 %v9057
    %v9211 = vpop.f32.mrf.mxu0
    %v9212 = vadd.f32 0.0, %v9211
    %v9213 = vpop.f32.mrf.mxu0
    %v9214 = vpop.f32.mrf.mxu0
    %v9215 = vadd.f32 0.0, %v9214
    %v9216 = vpop.f32.mrf.mxu0
    %9217 = vmatprep.mubr.bf16.mxu0 0
    %9218 = vmatmul.mubr.bf16.gmra.mxu0 %v9060
    %v9219 = vpop.f32.mrf.mxu0
    %v9220 = vadd.f32 0.0, %v9219
    %v9221 = vpop.f32.mrf.mxu0
    %v9222 = vpop.f32.mrf.mxu0
    %v9223 = vadd.f32 0.0, %v9222
    %v9224 = vpop.f32.mrf.mxu0
    %9225 = vmatprep.mubr.bf16.mxu0 0
    %9226 = vmatmul.mubr.bf16.gmra.mxu0 %v9063
    %v9227 = vpop.f32.mrf.mxu0
    %v9228 = vadd.f32 0.0, %v9227
    %v9229 = vpop.f32.mrf.mxu0
    %v9230 = vpop.f32.mrf.mxu0
    %v9231 = vadd.f32 0.0, %v9230
    %v9232 = vpop.f32.mrf.mxu0
    %9233 = vmatprep.mubr.bf16.mxu0 0
    %9234 = vmatmul.mubr.bf16.gmra.mxu0 %v9066
    %v9235 = vpop.f32.mrf.mxu0
    %v9236 = vadd.f32 0.0, %v9235
    %v9237 = vpop.f32.mrf.mxu0
    %v9238 = vpop.f32.mrf.mxu0
    %v9239 = vadd.f32 0.0, %v9238
    %v9240 = vpop.f32.mrf.mxu0
    %9241 = vmatprep.mubr.bf16.mxu0 0
    %9242 = vmatmul.mubr.bf16.gmra.mxu0 %v9069
    %v9243 = vpop.f32.mrf.mxu0
    %v9244 = vadd.f32 0.0, %v9243
    %v9245 = vpop.f32.mrf.mxu0
    %v9246 = vpop.f32.mrf.mxu0
    %v9247 = vadd.f32 0.0, %v9246
    %v9248 = vpop.f32.mrf.mxu0
    %9249 = vmatprep.mubr.bf16.mxu0 0
    %9250 = vmatmul.mubr.bf16.gmra.mxu0 %v9072
    %v9251 = vpop.f32.mrf.mxu0
    %v9252 = vadd.f32 0.0, %v9251
    %v9253 = vpop.f32.mrf.mxu0
    %v9254 = vpop.f32.mrf.mxu0
    %v9255 = vadd.f32 0.0, %v9254
    %v9256 = vpop.f32.mrf.mxu0
    %9257 = vdwg.mxu0
    %v9258 = vmul.f32 %v9196, %v9121
    %v9259 = vmul.f32 %v9199, %v9122
    %v9260 = vmul.f32 %v9204, %v9123
    %v9261 = vmul.f32 %v9207, %v9124
    %v9262 = vmul.f32 %v9212, %v9125
    %v9263 = vmul.f32 %v9215, %v9126
    %v9264 = vmul.f32 %v9220, %v9127
    %v9265 = vmul.f32 %v9223, %v9128
    %v9266 = vmul.f32 %v9228, %v9129
    %v9267 = vmul.f32 %v9231, %v9130
    %v9268 = vmul.f32 %v9236, %v9131
    %v9269 = vmul.f32 %v9239, %v9132
    %v9270 = vmul.f32 %v9244, %v9133
    %v9271 = vmul.f32 %v9247, %v9134
    %v9272 = vmul.f32 %v9252, %v9135
    %v9273 = vmul.f32 %v9255, %v9136
    %9290 = vrot.lane.b32.xlu0 %v9258, 64
    %v9291 = vpop.permute.xlu0 %9290
    %9292 = vrot.lane.b32.xlu0 %v9259, 64
    %v9293 = vpop.permute.xlu0 %9292
    %9294 = vrot.lane.b32.xlu0 %v9260, 64
    %v9295 = vpop.permute.xlu0 %9294
    %9296 = vrot.lane.b32.xlu0 %v9261, 64
    %v9297 = vpop.permute.xlu0 %9296
    %9298 = vrot.lane.b32.xlu0 %v9262, 64
    %v9299 = vpop.permute.xlu0 %9298
    %9300 = vrot.lane.b32.xlu0 %v9263, 64
    %v9301 = vpop.permute.xlu0 %9300
    %9302 = vrot.lane.b32.xlu0 %v9264, 64
    %v9303 = vpop.permute.xlu0 %9302
    %9304 = vrot.lane.b32.xlu0 %v9265, 64
    %v9305 = vpop.permute.xlu0 %9304
    %9306 = vrot.lane.b32.xlu0 %v9266, 64
    %v9307 = vpop.permute.xlu0 %9306
    %9308 = vrot.lane.b32.xlu0 %v9267, 64
    %v9309 = vpop.permute.xlu0 %9308
    %9310 = vrot.lane.b32.xlu0 %v9268, 64
    %v9311 = vpop.permute.xlu0 %9310
    %9312 = vrot.lane.b32.xlu0 %v9269, 64
    %v9313 = vpop.permute.xlu0 %9312
    %9314 = vrot.lane.b32.xlu0 %v9270, 64
    %v9315 = vpop.permute.xlu0 %9314
    %9316 = vrot.lane.b32.xlu0 %v9271, 64
    %v9317 = vpop.permute.xlu0 %9316
    %9318 = vrot.lane.b32.xlu0 %v9272, 64
    %v9319 = vpop.permute.xlu0 %9318
    %9320 = vrot.lane.b32.xlu0 %v9273, 64
    %v9321 = vpop.permute.xlu0 %9320
    %9338 = vst.msk [vmem:[%s6085 + $0x8] sm:$0xff] %vm2975, %v9291
    %9339 = vst.msk [vmem:[%s6085 + $0x18] sm:$0xff] %vm2975, %v9293
    %9340 = vst.msk [vmem:[%s6085 + $0x28] sm:$0xff] %vm2975, %v9295
    %9341 = vst.msk [vmem:[%s6085 + $0x38] sm:$0xff] %vm2975, %v9297
    %9342 = vst.msk [vmem:[%s6085 + $0x48] sm:$0xff] %vm2975, %v9299
    %9343 = vst.msk [vmem:[%s6085 + $0x58] sm:$0xff] %vm2975, %v9301
    %9344 = vst.msk [vmem:[%s6085 + $0x68] sm:$0xff] %vm2975, %v9303
    %9345 = vst.msk [vmem:[%s6085 + $0x78] sm:$0xff] %vm2975, %v9305
    %9346 = vst.msk [vmem:[%s6085 + $0x88] sm:$0xff] %vm2975, %v9307
    %9347 = vst.msk [vmem:[%s6085 + $0x98] sm:$0xff] %vm2975, %v9309
    %9348 = vst.msk [vmem:[%s6085 + $0xa8] sm:$0xff] %vm2975, %v9311
    %9349 = vst.msk [vmem:[%s6085 + $0xb8] sm:$0xff] %vm2975, %v9313
    %9350 = vst.msk [vmem:[%s6085 + $0xc8] sm:$0xff] %vm2975, %v9315
    %9351 = vst.msk [vmem:[%s6085 + $0xd8] sm:$0xff] %vm2975, %v9317
    %9352 = vst.msk [vmem:[%s6085 + $0xe8] sm:$0xff] %vm2975, %v9319
    %9353 = vst.msk [vmem:[%s6085 + $0xf8] sm:$0xff] %vm2975, %v9321
    %9354 = vrot.lane.b32.xlu0 %v1327, 32
    %v9355 = vpop.permute.xlu0 %9354
    %9356 = vrot.lane.b32.xlu0 %v1331, 32
    %v9357 = vpop.permute.xlu0 %9356
    %9358 = vrot.lane.b32.xlu0 %v1335, 32
    %v9359 = vpop.permute.xlu0 %9358
    %9360 = vrot.lane.b32.xlu0 %v1339, 32
    %v9361 = vpop.permute.xlu0 %9360
    %9362 = vrot.lane.b32.xlu0 %v1343, 32
    %v9363 = vpop.permute.xlu0 %9362
    %9364 = vrot.lane.b32.xlu0 %v1347, 32
    %v9365 = vpop.permute.xlu0 %9364
    %9366 = vrot.lane.b32.xlu0 %v1351, 32
    %v9367 = vpop.permute.xlu0 %9366
    %9368 = vrot.lane.b32.xlu0 %v1355, 32
    %v9369 = vpop.permute.xlu0 %9368
    %9370 = vrot.lane.b32.xlu0 %v1325, 32
    %v9371 = vpop.permute.xlu0 %9370
    %9372 = vrot.lane.b32.xlu0 %v1329, 32
    %v9373 = vpop.permute.xlu0 %9372
    %9374 = vrot.lane.b32.xlu0 %v1333, 32
    %v9375 = vpop.permute.xlu0 %9374
    %9376 = vrot.lane.b32.xlu0 %v1337, 32
    %v9377 = vpop.permute.xlu0 %9376
    %9378 = vrot.lane.b32.xlu0 %v1341, 32
    %v9379 = vpop.permute.xlu0 %9378
    %9380 = vrot.lane.b32.xlu0 %v1345, 32
    %v9381 = vpop.permute.xlu0 %9380
    %9382 = vrot.lane.b32.xlu0 %v1349, 32
    %v9383 = vpop.permute.xlu0 %9382
    %9384 = vrot.lane.b32.xlu0 %v1353, 32
    %v9385 = vpop.permute.xlu0 %9384
    %v9387 = vsel %vm1423, %v9355, 0
    %v9390 = vsel %vm1423, %v9357, 0
    %v9393 = vsel %vm1423, %v9359, 0
    %v9396 = vsel %vm1423, %v9361, 0
    %v9399 = vsel %vm1423, %v9363, 0
    %v9402 = vsel %vm1423, %v9365, 0
    %v9405 = vsel %vm1423, %v9367, 0
    %v9408 = vsel %vm1423, %v9369, 0
    %v9411 = vsel %vm1423, %v9371, 0
    %v9414 = vsel %vm1423, %v9373, 0
    %v9417 = vsel %vm1423, %v9375, 0
    %v9420 = vsel %vm1423, %v9377, 0
    %v9423 = vsel %vm1423, %v9379, 0
    %v9426 = vsel %vm1423, %v9381, 0
    %v9429 = vsel %vm1423, %v9383, 0
    %v9432 = vsel %vm1423, %v9385, 0
    %9434 = vmatprep.subr.bf16.mxu0 0
    %9435 = vmatpush1.bf16.xpose.msra.mxu0 %v9432
    %9436 = vmatprep.subr.bf16.mxu0 0
    %9437 = vmatpush1.bf16.xpose.msra.mxu0 %v9429
    %9438 = vmatprep.subr.bf16.mxu0 0
    %9439 = vmatpush1.bf16.xpose.msra.mxu0 %v9426
    %9440 = vmatprep.subr.bf16.mxu0 0
    %9441 = vmatpush1.bf16.xpose.msra.mxu0 %v9423
    %9442 = vmatprep.subr.bf16.mxu0 0
    %9443 = vmatpush1.bf16.xpose.msra.mxu0 %v9420
    %9444 = vmatprep.subr.bf16.mxu0 0
    %9445 = vmatpush1.bf16.xpose.msra.mxu0 %v9417
    %9446 = vmatprep.subr.bf16.mxu0 0
    %9447 = vmatpush1.bf16.xpose.msra.mxu0 %v9414
    %9448 = vmatprep.subr.bf16.mxu0 0
    %9449 = vmatpush1.bf16.xpose.msra.mxu0 %v9411
    %9450 = vmatprep.subr.bf16.mxu0 0
    %9451 = vmatpush2.bf16.xpose.msra.mxu0 0
    %9452 = vmatprep.subr.bf16.mxu0 0
    %9453 = vmatpush2.bf16.xpose.msra.mxu0 0
    %9454 = vmatprep.subr.bf16.mxu0 0
    %9455 = vmatpush2.bf16.xpose.msra.mxu0 0
    %9456 = vmatprep.subr.bf16.mxu0 0
    %9457 = vmatpush2.bf16.xpose.msra.mxu0 0
    %9458 = vmatprep.subr.bf16.mxu0 0
    %9459 = vmatpush2.bf16.xpose.msra.mxu0 0
    %9460 = vmatprep.subr.bf16.mxu0 0
    %9461 = vmatpush2.bf16.xpose.msra.mxu0 0
    %9462 = vmatprep.subr.bf16.mxu0 0
    %9463 = vmatpush2.bf16.xpose.msra.mxu0 0
    %9464 = vmatprep.subr.bf16.mxu0 0
    %9465 = vmatpush2.bf16.xpose.msra.mxu0 0
    %9466 = vmatprep.mubr.bf16.mxu0 0
    %9467 = vmatmul.mubr.bf16.gmra.mxu0 %v9387
    %v9468 = vpop.f32.mrf.mxu0
    %v9469 = vadd.f32 0.0, %v9468
    %v9470 = vpop.f32.mrf.mxu0
    %v9471 = vpop.f32.mrf.mxu0
    %v9472 = vadd.f32 0.0, %v9471
    %v9473 = vpop.f32.mrf.mxu0
    %9474 = vmatprep.mubr.bf16.mxu0 0
    %9475 = vmatmul.mubr.bf16.gmra.mxu0 %v9390
    %v9476 = vpop.f32.mrf.mxu0
    %v9477 = vadd.f32 0.0, %v9476
    %v9478 = vpop.f32.mrf.mxu0
    %v9479 = vpop.f32.mrf.mxu0
    %v9480 = vadd.f32 0.0, %v9479
    %v9481 = vpop.f32.mrf.mxu0
    %9482 = vmatprep.mubr.bf16.mxu0 0
    %9483 = vmatmul.mubr.bf16.gmra.mxu0 %v9393
    %v9484 = vpop.f32.mrf.mxu0
    %v9485 = vadd.f32 0.0, %v9484
    %v9486 = vpop.f32.mrf.mxu0
    %v9487 = vpop.f32.mrf.mxu0
    %v9488 = vadd.f32 0.0, %v9487
    %v9489 = vpop.f32.mrf.mxu0
    %9490 = vmatprep.mubr.bf16.mxu0 0
    %9491 = vmatmul.mubr.bf16.gmra.mxu0 %v9396
    %v9492 = vpop.f32.mrf.mxu0
    %v9493 = vadd.f32 0.0, %v9492
    %v9494 = vpop.f32.mrf.mxu0
    %v9495 = vpop.f32.mrf.mxu0
    %v9496 = vadd.f32 0.0, %v9495
    %v9497 = vpop.f32.mrf.mxu0
    %9498 = vmatprep.mubr.bf16.mxu0 0
    %9499 = vmatmul.mubr.bf16.gmra.mxu0 %v9399
    %v9500 = vpop.f32.mrf.mxu0
    %v9501 = vadd.f32 0.0, %v9500
    %v9502 = vpop.f32.mrf.mxu0
    %v9503 = vpop.f32.mrf.mxu0
    %v9504 = vadd.f32 0.0, %v9503
    %v9505 = vpop.f32.mrf.mxu0
    %9506 = vmatprep.mubr.bf16.mxu0 0
    %9507 = vmatmul.mubr.bf16.gmra.mxu0 %v9402
    %v9508 = vpop.f32.mrf.mxu0
    %v9509 = vadd.f32 0.0, %v9508
    %v9510 = vpop.f32.mrf.mxu0
    %v9511 = vpop.f32.mrf.mxu0
    %v9512 = vadd.f32 0.0, %v9511
    %v9513 = vpop.f32.mrf.mxu0
    %9514 = vmatprep.mubr.bf16.mxu0 0
    %9515 = vmatmul.mubr.bf16.gmra.mxu0 %v9405
    %v9516 = vpop.f32.mrf.mxu0
    %v9517 = vadd.f32 0.0, %v9516
    %v9518 = vpop.f32.mrf.mxu0
    %v9519 = vpop.f32.mrf.mxu0
    %v9520 = vadd.f32 0.0, %v9519
    %v9521 = vpop.f32.mrf.mxu0
    %9522 = vmatprep.mubr.bf16.mxu0 0
    %9523 = vmatmul.mubr.bf16.gmra.mxu0 %v9408
    %v9524 = vpop.f32.mrf.mxu0
    %v9525 = vadd.f32 0.0, %v9524
    %v9526 = vpop.f32.mrf.mxu0
    %v9527 = vpop.f32.mrf.mxu0
    %v9528 = vadd.f32 0.0, %v9527
    %v9529 = vpop.f32.mrf.mxu0
    %9530 = vdwg.mxu0
    %v9531 = vsel %vm1407, %v9469, -inf
    %v9532 = vsel %vm1408, %v9472, -inf
    %v9533 = vsel %vm1409, %v9477, -inf
    %v9534 = vsel %vm1410, %v9480, -inf
    %v9535 = vsel %vm1411, %v9485, -inf
    %v9536 = vsel %vm1412, %v9488, -inf
    %v9537 = vsel %vm1413, %v9493, -inf
    %v9538 = vsel %vm1414, %v9496, -inf
    %v9539 = vsel %vm1415, %v9501, -inf
    %v9540 = vsel %vm1416, %v9504, -inf
    %v9541 = vsel %vm1417, %v9509, -inf
    %v9542 = vsel %vm1418, %v9512, -inf
    %v9543 = vsel %vm1419, %v9517, -inf
    %v9544 = vsel %vm1420, %v9520, -inf
    %v9545 = vsel %vm1421, %v9525, -inf
    %v9546 = vsel %vm1422, %v9528, -inf
    %9547 = vmax.xlane.f32.xlu0 %v9531
    %v9548 = vpop.xlane.xlu0 %9547
    %9549 = vmax.xlane.f32.xlu0 %v9532
    %v9550 = vpop.xlane.xlu0 %9549
    %9551 = vmax.xlane.f32.xlu0 %v9533
    %v9552 = vpop.xlane.xlu0 %9551
    %9553 = vmax.xlane.f32.xlu0 %v9534
    %v9554 = vpop.xlane.xlu0 %9553
    %9555 = vmax.xlane.f32.xlu0 %v9535
    %v9556 = vpop.xlane.xlu0 %9555
    %9557 = vmax.xlane.f32.xlu0 %v9536
    %v9558 = vpop.xlane.xlu0 %9557
    %9559 = vmax.xlane.f32.xlu0 %v9537
    %v9560 = vpop.xlane.xlu0 %9559
    %9561 = vmax.xlane.f32.xlu0 %v9538
    %v9562 = vpop.xlane.xlu0 %9561
    %9563 = vmax.xlane.f32.xlu0 %v9539
    %v9564 = vpop.xlane.xlu0 %9563
    %9565 = vmax.xlane.f32.xlu0 %v9540
    %v9566 = vpop.xlane.xlu0 %9565
    %9567 = vmax.xlane.f32.xlu0 %v9541
    %v9568 = vpop.xlane.xlu0 %9567
    %9569 = vmax.xlane.f32.xlu0 %v9542
    %v9570 = vpop.xlane.xlu0 %9569
    %9571 = vmax.xlane.f32.xlu0 %v9543
    %v9572 = vpop.xlane.xlu0 %9571
    %9573 = vmax.xlane.f32.xlu0 %v9544
    %v9574 = vpop.xlane.xlu0 %9573
    %9575 = vmax.xlane.f32.xlu0 %v9545
    %v9576 = vpop.xlane.xlu0 %9575
    %9577 = vmax.xlane.f32.xlu0 %v9546
    %v9578 = vpop.xlane.xlu0 %9577
    %v9579 = vsub.f32 %v9531, %v9548
    %v9580 = vsub.f32 %v9532, %v9550
    %v9581 = vsub.f32 %v9533, %v9552
    %v9582 = vsub.f32 %v9534, %v9554
    %v9583 = vsub.f32 %v9535, %v9556
    %v9584 = vsub.f32 %v9536, %v9558
    %v9585 = vsub.f32 %v9537, %v9560
    %v9586 = vsub.f32 %v9538, %v9562
    %v9587 = vsub.f32 %v9539, %v9564
    %v9588 = vsub.f32 %v9540, %v9566
    %v9589 = vsub.f32 %v9541, %v9568
    %v9590 = vsub.f32 %v9542, %v9570
    %v9591 = vsub.f32 %v9543, %v9572
    %v9592 = vsub.f32 %v9544, %v9574
    %v9593 = vsub.f32 %v9545, %v9576
    %v9594 = vsub.f32 %v9546, %v9578
    %v9595 = vpack.c.bf16 %v9580, %v9579
    %v9596 = vpack.c.bf16 %v9582, %v9581
    %v9597 = vpack.c.bf16 %v9584, %v9583
    %v9598 = vpack.c.bf16 %v9586, %v9585
    %v9599 = vpack.c.bf16 %v9588, %v9587
    %v9600 = vpack.c.bf16 %v9590, %v9589
    %v9601 = vpack.c.bf16 %v9592, %v9591
    %v9602 = vpack.c.bf16 %v9594, %v9593
    %v9604 = vmul.bf16 %v9595, 1069105081
    %v9605 = vpow.bf16.pop %v9604
    %v9607 = vmul.bf16 %v9596, 1069105081
    %v9608 = vpow.bf16.pop %v9607
    %v9610 = vmul.bf16 %v9597, 1069105081
    %v9611 = vpow.bf16.pop %v9610
    %v9613 = vmul.bf16 %v9598, 1069105081
    %v9614 = vpow.bf16.pop %v9613
    %v9616 = vmul.bf16 %v9599, 1069105081
    %v9617 = vpow.bf16.pop %v9616
    %v9619 = vmul.bf16 %v9600, 1069105081
    %v9620 = vpow.bf16.pop %v9619
    %v9622 = vmul.bf16 %v9601, 1069105081
    %v9623 = vpow.bf16.pop %v9622
    %v9625 = vmul.bf16 %v9602, 1069105081
    %v9626 = vpow.bf16.pop %v9625
    %v9627 = vunpack.c.l.bf16 %v9605
    %v9628 = vunpack.c.h.bf16 %v9605
    %v9629 = vunpack.c.l.bf16 %v9608
    %v9630 = vunpack.c.h.bf16 %v9608
    %v9631 = vunpack.c.l.bf16 %v9611
    %v9632 = vunpack.c.h.bf16 %v9611
    %v9633 = vunpack.c.l.bf16 %v9614
    %v9634 = vunpack.c.h.bf16 %v9614
    %v9635 = vunpack.c.l.bf16 %v9617
    %v9636 = vunpack.c.h.bf16 %v9617
    %v9637 = vunpack.c.l.bf16 %v9620
    %v9638 = vunpack.c.h.bf16 %v9620
    %v9639 = vunpack.c.l.bf16 %v9623
    %v9640 = vunpack.c.h.bf16 %v9623
    %v9641 = vunpack.c.l.bf16 %v9626
    %v9642 = vunpack.c.h.bf16 %v9626
    %9643 = vadd.xlane.f32.xlu0 %v9627
    %v9644 = vpop.xlane.xlu0 %9643
    %9645 = vadd.xlane.f32.xlu0 %v9628
    %v9646 = vpop.xlane.xlu0 %9645
    %9647 = vadd.xlane.f32.xlu0 %v9629
    %v9648 = vpop.xlane.xlu0 %9647
    %9649 = vadd.xlane.f32.xlu0 %v9630
    %v9650 = vpop.xlane.xlu0 %9649
    %9651 = vadd.xlane.f32.xlu0 %v9631
    %v9652 = vpop.xlane.xlu0 %9651
    %9653 = vadd.xlane.f32.xlu0 %v9632
    %v9654 = vpop.xlane.xlu0 %9653
    %9655 = vadd.xlane.f32.xlu0 %v9633
    %v9656 = vpop.xlane.xlu0 %9655
    %9657 = vadd.xlane.f32.xlu0 %v9634
    %v9658 = vpop.xlane.xlu0 %9657
    %9659 = vadd.xlane.f32.xlu0 %v9635
    %v9660 = vpop.xlane.xlu0 %9659
    %9661 = vadd.xlane.f32.xlu0 %v9636
    %v9662 = vpop.xlane.xlu0 %9661
    %9663 = vadd.xlane.f32.xlu0 %v9637
    %v9664 = vpop.xlane.xlu0 %9663
    %9665 = vadd.xlane.f32.xlu0 %v9638
    %v9666 = vpop.xlane.xlu0 %9665
    %9667 = vadd.xlane.f32.xlu0 %v9639
    %v9668 = vpop.xlane.xlu0 %9667
    %9669 = vadd.xlane.f32.xlu0 %v9640
    %v9670 = vpop.xlane.xlu0 %9669
    %9671 = vadd.xlane.f32.xlu0 %v9641
    %v9672 = vpop.xlane.xlu0 %9671
    %9673 = vadd.xlane.f32.xlu0 %v9642
    %v9674 = vpop.xlane.xlu0 %9673
    %v9675 = vrcp.pop %v9644
    %v9676 = vrcp.pop %v9646
    %v9677 = vrcp.pop %v9648
    %v9678 = vrcp.pop %v9650
    %v9679 = vrcp.pop %v9652
    %v9680 = vrcp.pop %v9654
    %v9681 = vrcp.pop %v9656
    %v9682 = vrcp.pop %v9658
    %v9683 = vrcp.pop %v9660
    %v9684 = vrcp.pop %v9662
    %v9685 = vrcp.pop %v9664
    %v9686 = vrcp.pop %v9666
    %v9687 = vrcp.pop %v9668
    %v9688 = vrcp.pop %v9670
    %v9689 = vrcp.pop %v9672
    %v9690 = vrcp.pop %v9674
    %9691 = vrot.lane.b32.xlu0 %v1373, 32
    %v9692 = vpop.permute.xlu0 %9691
    %9693 = vrot.lane.b32.xlu0 %v1375, 32
    %v9694 = vpop.permute.xlu0 %9693
    %9695 = vrot.lane.b32.xlu0 %v1377, 32
    %v9696 = vpop.permute.xlu0 %9695
    %9697 = vrot.lane.b32.xlu0 %v1379, 32
    %v9698 = vpop.permute.xlu0 %9697
    %9699 = vrot.lane.b32.xlu0 %v1381, 32
    %v9700 = vpop.permute.xlu0 %9699
    %9701 = vrot.lane.b32.xlu0 %v1383, 32
    %v9702 = vpop.permute.xlu0 %9701
    %9703 = vrot.lane.b32.xlu0 %v1385, 32
    %v9704 = vpop.permute.xlu0 %9703
    %9705 = vrot.lane.b32.xlu0 %v1387, 32
    %v9706 = vpop.permute.xlu0 %9705
    %9715 = vmatprep.subr.bf16.mxu0 0
    %9716 = vmatpush1.bf16.msra.mxu0 %v9706
    %9717 = vmatprep.subr.bf16.mxu0 0
    %9718 = vmatpush1.bf16.msra.mxu0 %v9704
    %9719 = vmatprep.subr.bf16.mxu0 0
    %9720 = vmatpush1.bf16.msra.mxu0 %v9702
    %9721 = vmatprep.subr.bf16.mxu0 0
    %9722 = vmatpush1.bf16.msra.mxu0 %v9700
    %9723 = vmatprep.subr.bf16.mxu0 0
    %9724 = vmatpush1.bf16.msra.mxu0 %v9698
    %9725 = vmatprep.subr.bf16.mxu0 0
    %9726 = vmatpush1.bf16.msra.mxu0 %v9696
    %9727 = vmatprep.subr.bf16.mxu0 0
    %9728 = vmatpush1.bf16.msra.mxu0 %v9694
    %9729 = vmatprep.subr.bf16.mxu0 0
    %9730 = vmatpush1.bf16.msra.mxu0 %v9692
    %9731 = vmatprep.subr.bf16.mxu0 0
    %9732 = vmatpush2.bf16.msra.mxu0 0
    %9733 = vmatprep.subr.bf16.mxu0 0
    %9734 = vmatpush2.bf16.msra.mxu0 0
    %9735 = vmatprep.subr.bf16.mxu0 0
    %9736 = vmatpush2.bf16.msra.mxu0 0
    %9737 = vmatprep.subr.bf16.mxu0 0
    %9738 = vmatpush2.bf16.msra.mxu0 0
    %9739 = vmatprep.subr.bf16.mxu0 0
    %9740 = vmatpush2.bf16.msra.mxu0 0
    %9741 = vmatprep.subr.bf16.mxu0 0
    %9742 = vmatpush2.bf16.msra.mxu0 0
    %9743 = vmatprep.subr.bf16.mxu0 0
    %9744 = vmatpush2.bf16.msra.mxu0 0
    %9745 = vmatprep.subr.bf16.mxu0 0
    %9746 = vmatpush2.bf16.msra.mxu0 0
    %9747 = vmatprep.mubr.bf16.mxu0 0
    %9748 = vmatmul.mubr.bf16.gmra.mxu0 %v9605
    %v9749 = vpop.f32.mrf.mxu0
    %v9750 = vadd.f32 0.0, %v9749
    %v9751 = vpop.f32.mrf.mxu0
    %v9752 = vpop.f32.mrf.mxu0
    %v9753 = vadd.f32 0.0, %v9752
    %v9754 = vpop.f32.mrf.mxu0
    %9755 = vmatprep.mubr.bf16.mxu0 0
    %9756 = vmatmul.mubr.bf16.gmra.mxu0 %v9608
    %v9757 = vpop.f32.mrf.mxu0
    %v9758 = vadd.f32 0.0, %v9757
    %v9759 = vpop.f32.mrf.mxu0
    %v9760 = vpop.f32.mrf.mxu0
    %v9761 = vadd.f32 0.0, %v9760
    %v9762 = vpop.f32.mrf.mxu0
    %9763 = vmatprep.mubr.bf16.mxu0 0
    %9764 = vmatmul.mubr.bf16.gmra.mxu0 %v9611
    %v9765 = vpop.f32.mrf.mxu0
    %v9766 = vadd.f32 0.0, %v9765
    %v9767 = vpop.f32.mrf.mxu0
    %v9768 = vpop.f32.mrf.mxu0
    %v9769 = vadd.f32 0.0, %v9768
    %v9770 = vpop.f32.mrf.mxu0
    %9771 = vmatprep.mubr.bf16.mxu0 0
    %9772 = vmatmul.mubr.bf16.gmra.mxu0 %v9614
    %v9773 = vpop.f32.mrf.mxu0
    %v9774 = vadd.f32 0.0, %v9773
    %v9775 = vpop.f32.mrf.mxu0
    %v9776 = vpop.f32.mrf.mxu0
    %v9777 = vadd.f32 0.0, %v9776
    %v9778 = vpop.f32.mrf.mxu0
    %9779 = vmatprep.mubr.bf16.mxu0 0
    %9780 = vmatmul.mubr.bf16.gmra.mxu0 %v9617
    %v9781 = vpop.f32.mrf.mxu0
    %v9782 = vadd.f32 0.0, %v9781
    %v9783 = vpop.f32.mrf.mxu0
    %v9784 = vpop.f32.mrf.mxu0
    %v9785 = vadd.f32 0.0, %v9784
    %v9786 = vpop.f32.mrf.mxu0
    %9787 = vmatprep.mubr.bf16.mxu0 0
    %9788 = vmatmul.mubr.bf16.gmra.mxu0 %v9620
    %v9789 = vpop.f32.mrf.mxu0
    %v9790 = vadd.f32 0.0, %v9789
    %v9791 = vpop.f32.mrf.mxu0
    %v9792 = vpop.f32.mrf.mxu0
    %v9793 = vadd.f32 0.0, %v9792
    %v9794 = vpop.f32.mrf.mxu0
    %9795 = vmatprep.mubr.bf16.mxu0 0
    %9796 = vmatmul.mubr.bf16.gmra.mxu0 %v9623
    %v9797 = vpop.f32.mrf.mxu0
    %v9798 = vadd.f32 0.0, %v9797
    %v9799 = vpop.f32.mrf.mxu0
    %v9800 = vpop.f32.mrf.mxu0
    %v9801 = vadd.f32 0.0, %v9800
    %v9802 = vpop.f32.mrf.mxu0
    %9803 = vmatprep.mubr.bf16.mxu0 0
    %9804 = vmatmul.mubr.bf16.gmra.mxu0 %v9626
    %v9805 = vpop.f32.mrf.mxu0
    %v9806 = vadd.f32 0.0, %v9805
    %v9807 = vpop.f32.mrf.mxu0
    %v9808 = vpop.f32.mrf.mxu0
    %v9809 = vadd.f32 0.0, %v9808
    %v9810 = vpop.f32.mrf.mxu0
    %9811 = vdwg.mxu0
    %v9812 = vmul.f32 %v9750, %v9675
    %v9813 = vmul.f32 %v9753, %v9676
    %v9814 = vmul.f32 %v9758, %v9677
    %v9815 = vmul.f32 %v9761, %v9678
    %v9816 = vmul.f32 %v9766, %v9679
    %v9817 = vmul.f32 %v9769, %v9680
    %v9818 = vmul.f32 %v9774, %v9681
    %v9819 = vmul.f32 %v9777, %v9682
    %v9820 = vmul.f32 %v9782, %v9683
    %v9821 = vmul.f32 %v9785, %v9684
    %v9822 = vmul.f32 %v9790, %v9685
    %v9823 = vmul.f32 %v9793, %v9686
    %v9824 = vmul.f32 %v9798, %v9687
    %v9825 = vmul.f32 %v9801, %v9688
    %v9826 = vmul.f32 %v9806, %v9689
    %v9827 = vmul.f32 %v9809, %v9690
    %9844 = vrot.lane.b32.xlu0 %v9812, 96
    %v9845 = vpop.permute.xlu0 %9844
    %9846 = vrot.lane.b32.xlu0 %v9813, 96
    %v9847 = vpop.permute.xlu0 %9846
    %9848 = vrot.lane.b32.xlu0 %v9814, 96
    %v9849 = vpop.permute.xlu0 %9848
    %9850 = vrot.lane.b32.xlu0 %v9815, 96
    %v9851 = vpop.permute.xlu0 %9850
    %9852 = vrot.lane.b32.xlu0 %v9816, 96
    %v9853 = vpop.permute.xlu0 %9852
    %9854 = vrot.lane.b32.xlu0 %v9817, 96
    %v9855 = vpop.permute.xlu0 %9854
    %9856 = vrot.lane.b32.xlu0 %v9818, 96
    %v9857 = vpop.permute.xlu0 %9856
    %9858 = vrot.lane.b32.xlu0 %v9819, 96
    %v9859 = vpop.permute.xlu0 %9858
    %9860 = vrot.lane.b32.xlu0 %v9820, 96
    %v9861 = vpop.permute.xlu0 %9860
    %9862 = vrot.lane.b32.xlu0 %v9821, 96
    %v9863 = vpop.permute.xlu0 %9862
    %9864 = vrot.lane.b32.xlu0 %v9822, 96
    %v9865 = vpop.permute.xlu0 %9864
    %9866 = vrot.lane.b32.xlu0 %v9823, 96
    %v9867 = vpop.permute.xlu0 %9866
    %9868 = vrot.lane.b32.xlu0 %v9824, 96
    %v9869 = vpop.permute.xlu0 %9868
    %9870 = vrot.lane.b32.xlu0 %v9825, 96
    %v9871 = vpop.permute.xlu0 %9870
    %9872 = vrot.lane.b32.xlu0 %v9826, 96
    %v9873 = vpop.permute.xlu0 %9872
    %9874 = vrot.lane.b32.xlu0 %v9827, 96
    %v9875 = vpop.permute.xlu0 %9874
    %9892 = vst.msk [vmem:[%s6085 + $0x8] sm:$0xff] %vm3530, %v9845
    %9893 = vst.msk [vmem:[%s6085 + $0x18] sm:$0xff] %vm3530, %v9847
    %9894 = vst.msk [vmem:[%s6085 + $0x28] sm:$0xff] %vm3530, %v9849
    %9895 = vst.msk [vmem:[%s6085 + $0x38] sm:$0xff] %vm3530, %v9851
    %9896 = vst.msk [vmem:[%s6085 + $0x48] sm:$0xff] %vm3530, %v9853
    %9897 = vst.msk [vmem:[%s6085 + $0x58] sm:$0xff] %vm3530, %v9855
    %9898 = vst.msk [vmem:[%s6085 + $0x68] sm:$0xff] %vm3530, %v9857
    %9899 = vst.msk [vmem:[%s6085 + $0x78] sm:$0xff] %vm3530, %v9859
    %9900 = vst.msk [vmem:[%s6085 + $0x88] sm:$0xff] %vm3530, %v9861
    %9901 = vst.msk [vmem:[%s6085 + $0x98] sm:$0xff] %vm3530, %v9863
    %9902 = vst.msk [vmem:[%s6085 + $0xa8] sm:$0xff] %vm3530, %v9865
    %9903 = vst.msk [vmem:[%s6085 + $0xb8] sm:$0xff] %vm3530, %v9867
    %9904 = vst.msk [vmem:[%s6085 + $0xc8] sm:$0xff] %vm3530, %v9869
    %9905 = vst.msk [vmem:[%s6085 + $0xd8] sm:$0xff] %vm3530, %v9871
    %9906 = vst.msk [vmem:[%s6085 + $0xe8] sm:$0xff] %vm3530, %v9873
    %9907 = vst.msk [vmem:[%s6085 + $0xf8] sm:$0xff] %vm3530, %v9875
    // Predicated region
    $region18: #{tpu_custom_call.1} parent=1 // pred_check
      _
    $region19: #{tpu_custom_call.1} parent=1 // pred_check_branch
      %9909 = sbr.rel (0) target = $region21
    $region20: #{tpu_custom_call.1} parent=1 // pred_region
      %s9911 = ssub.s32 8192, 8192
      %9912 = vsyncadd [#allocation4], %s9911
      %s9913 = sshll.u32 [#allocation7], 4
      %s9914 = int_to_ptr.vmem [resolvable:$true] %s9913
      %9919 = dma.vmem_to_hbm [thread:$0]  %s9914, 8192, %s2, [#allocation4], 256, 256, 16
    $region21: #{tpu_custom_call.1} parent=1 // pred_fallthru
      _
    // Predicated region
    $region22: #{tpu_custom_call.1} parent=1 // pred_check
      _
    $region23: #{tpu_custom_call.1} parent=1 // pred_check_branch
      %9921 = sbr.rel (0) target = $region25
    $region24: #{tpu_custom_call.1} parent=1 // pred_region
      %9922 = dma.done [#allocation4], 8192
    $region25: #{tpu_custom_call.1} parent=1 // pred_fallthru
      _
    %9923 = vsyncpa [#allocation3], 1
    %9924 = vsyncpa [#allocation6], 1
    %9925 = vsyncpa [#allocation4], 1

</llo_original>
